<compile_context>
chip_gen: v7x
topology: tpu7x:2x2x1
jax: 0.10.0
libtpu: 0.0.40
codegen_flags: <defaults>
</compile_context>

<pallas_src>
import functools

import jax
import jax.numpy as jnp
from jax.experimental import pallas as pl
from jax.experimental.pallas import tpu as pltpu

LANE = 128


def _round_up(x, m):
    return (x + m - 1) // m * m


def _pick_row_tile(h, target=8):
    """Largest divisor of h that is <= target (so grid rows tile h exactly)."""
    for th in range(min(h, target), 0, -1):
        if h % th == 0:
            return th
    return h


# --------------------------------------------------------------------------------------
# Bilinear upsample (nn.Upsample(scale_factor=s, mode='bilinear'), align_corners=False)
# as a single (Hout*Wout, H*W) x (H*W, C) matmul in NHWC.
# --------------------------------------------------------------------------------------
def _interp_matrix(in_size: int, out_size: int) -> jnp.ndarray:
    """Dense (out_size, in_size) bilinear interp matrix, PyTorch align_corners=False."""
    scale = in_size / out_size
    dst = jnp.arange(out_size, dtype=jnp.float32)
    src = (dst + 0.5) * scale - 0.5
    src = jnp.maximum(src, 0.0)                      # PyTorch clamps negative src to 0
    i0 = jnp.floor(src).astype(jnp.int32)
    i0 = jnp.minimum(i0, in_size - 1)
    i1 = jnp.minimum(i0 + 1, in_size - 1)
    lam = src - i0.astype(jnp.float32)
    return (jax.nn.one_hot(i0, in_size, dtype=jnp.float32) * (1.0 - lam)[:, None]
            + jax.nn.one_hot(i1, in_size, dtype=jnp.float32) * lam[:, None])


def _upsample_kernel(x_ref, k_ref, o_ref, *, Hin, Win, Hout, Wout, Cp):
    # x_ref: (1, Hin, Win, Cp) bf16 ; k_ref: (Hout*Wout, Hin*Win) bf16
    x2d = x_ref[0].reshape(Hin * Win, Cp)
    y = jnp.dot(k_ref[...], x2d, preferred_element_type=jnp.float32)   # (Hout*Wout, Cp)
    o_ref[0] = y.reshape(Hout, Wout, Cp).astype(o_ref.dtype)


def bilinear_upsample_nhwc(x, scale: int):
    N, Hin, Win, Cp = x.shape
    Hout, Wout = Hin * scale, Win * scale
    k = jnp.kron(_interp_matrix(Hin, Hout),
                 _interp_matrix(Win, Wout)).astype(jnp.bfloat16)        # (Hout*Wout, Hin*Win)
    kernel = functools.partial(_upsample_kernel, Hin=Hin, Win=Win,
                               Hout=Hout, Wout=Wout, Cp=Cp)
    return pl.pallas_call(
        kernel,
        out_shape=jax.ShapeDtypeStruct((N, Hout, Wout, Cp), jnp.bfloat16),
        grid=(N,),
        in_specs=[
            pl.BlockSpec((1, Hin, Win, Cp), lambda n: (n, 0, 0, 0)),
            pl.BlockSpec((Hout * Wout, Hin * Win), lambda n: (0, 0)),
        ],
        out_specs=pl.BlockSpec((1, Hout, Wout, Cp), lambda n: (n, 0, 0, 0)),
        compiler_params=pltpu.CompilerParams(dimension_semantics=("parallel",)),
    )(x, k)


# --------------------------------------------------------------------------------------
# Fused Conv2d(3x3, pad=1) + BatchNorm(inference, scale folded into weights) + ReLU, NHWC.
# --------------------------------------------------------------------------------------
def _conv3x3_bn_relu_kernel(x_ref, w_ref, b_ref, o_ref, xpad_ref, *,
                            H, W, TH, Wpad, Cp, Coutp):
    # x_ref:    (1, H, W, Cp)        bf16  full image (same block for all row tiles)
    # w_ref:    (3, Cp, 3*Coutp)     bf16  per-dh tap-packed, BN scale folded in
    # b_ref:    (1, Coutp)           f32   folded conv-bias + BN bias
    # o_ref:    (1, TH, W, Coutp)    bf16  one row tile of the output
    # xpad_ref: (H+2, Wpad, Cp)      bf16  VMEM scratch: zero halo + interior copy
    t = pl.program_id(1)

    # Build the zero-padded image in VMEM once per image (row tiles reuse it).
    @pl.when(t == 0)
    def _():
        xpad_ref[...] = jnp.zeros(xpad_ref.shape, xpad_ref.dtype)
        xpad_ref[1:H + 1, 1:W + 1, :] = x_ref[0]

    row0 = t * TH
    acc = jnp.zeros((TH, W, Coutp), jnp.float32)
    for dh in range(3):                                   # 3 wide MXU matmuls per tile
        slab = xpad_ref[pl.ds(row0 + dh, TH), :, :]       # (TH, Wpad, Cp)
        z = jnp.dot(slab.reshape(TH * Wpad, Cp), w_ref[dh],
                    preferred_element_type=jnp.float32)   # (TH*Wpad, 3*Coutp)
        z = z.reshape(TH, Wpad, 3 * Coutp)
        for dw in range(3):                               # combine taps: slice + add
            acc = acc + z[:, dw:dw + W, dw * Coutp:(dw + 1) * Coutp]

    y = acc.reshape(TH * W, Coutp) + b_ref[...]           # fused bias (BN folded)
    y = jnp.maximum(y, 0.0)                               # ReLU
    o_ref[0] = y.reshape(TH, W, Coutp).astype(o_ref.dtype)


def conv3x3_bn_relu_nhwc(x, w_pack, bias):
    N, H, W, Cp = x.shape
    Coutp = w_pack.shape[-1] // 3
    TH = _pick_row_tile(H, 8)
    Wpad = _round_up(W + 2, 8)                            # sublane-aligned padded width
    kernel = functools.partial(_conv3x3_bn_relu_kernel, H=H, W=W, TH=TH,
                               Wpad=Wpad, Cp=Cp, Coutp=Coutp)
    return pl.pallas_call(
        kernel,
        out_shape=jax.ShapeDtypeStruct((N, H, W, Coutp), jnp.bfloat16),
        grid=(N, H // TH),
        in_specs=[
            pl.BlockSpec((1, H, W, Cp), lambda n, t: (n, 0, 0, 0)),     # constant over t
            pl.BlockSpec((3, Cp, 3 * Coutp), lambda n, t: (0, 0, 0)),   # resident weights
            pl.BlockSpec((1, Coutp), lambda n, t: (0, 0)),              # resident bias
        ],
        out_specs=pl.BlockSpec((1, TH, W, Coutp), lambda n, t: (n, t, 0, 0)),
        scratch_shapes=[pltpu.VMEM((H + 2, Wpad, Cp), jnp.bfloat16)],
        compiler_params=pltpu.CompilerParams(
            dimension_semantics=("parallel", "arbitrary")),
    )(x, w_pack, bias)


# --------------------------------------------------------------------------------------
# SegNetEnc with deterministic synthetic parameters (inference-mode BatchNorm, folded).
# --------------------------------------------------------------------------------------
class SegNetEncPallas:
    def __init__(self, in_channels, out_channels, scale, num_layers, key=None):
        if key is None:
            key = jax.random.PRNGKey(42)
        mid = in_channels // 2
        chan_pairs = [(in_channels, mid)] + [(mid, mid)] * num_layers + [(mid, out_channels)]
        self.scale = int(scale)
        self.out_channels = out_channels
        self.cin_pad = _round_up(in_channels, LANE)
        self.layers = []
        eps = 1e-5
        for cin, cout in chan_pairs:
            cin_p, cout_p = _round_up(cin, LANE), _round_up(cout, LANE)
            key, wk, bk = jax.random.split(key, 3)
            w = jax.random.normal(wk, (3, 3, cin, cout), jnp.float32) * (1.0 / (3.0 * cin ** 0.5))
            conv_b = jax.random.normal(bk, (cout,), jnp.float32) * 0.05
            # Deterministic, non-trivial inference BatchNorm parameters.
            gamma = 1.0 + 0.05 * jnp.arange(cout, dtype=jnp.float32)
            beta = 0.02 * jnp.arange(cout, dtype=jnp.float32)
            r_mean = 0.01 * jnp.arange(cout, dtype=jnp.float32)
            r_var = 1.0 + 0.03 * jnp.arange(cout, dtype=jnp.float32)
            bn_scale = gamma / jnp.sqrt(r_var + eps)
            bn_bias = beta + (conv_b - r_mean) * bn_scale      # conv bias folded into BN bias
            # Fold BN scale into conv weights; pad channels to lane multiples;
            # pack taps: (3, 3, Cp, Coutp) -> (3, Cp, 3*Coutp) (dw folded into N dim).
            w_fold = w * bn_scale
            w_pad = jnp.pad(w_fold, ((0, 0), (0, 0), (0, cin_p - cin), (0, cout_p - cout)))
            w_pack = jnp.transpose(w_pad, (0, 2, 1, 3)).reshape(
                3, cin_p, 3 * cout_p).astype(jnp.bfloat16)
            b_pad = jnp.pad(bn_bias, (0, cout_p - cout)).reshape(1, cout_p).astype(jnp.float32)
            self.layers.append((w_pack, b_pad))

    def __call__(self, x_nchw):
        N, C, H, W = x_nchw.shape
        # NCHW -> NHWC once, pad channels to 128-lane multiple, bf16 activations.
        x = jnp.transpose(x_nchw, (0, 2, 3, 1))
        x = jnp.pad(x, ((0, 0), (0, 0), (0, 0), (0, self.cin_pad - C))).astype(jnp.bfloat16)
        # Bilinear upsample (Pallas, NHWC, single Kron matmul per image).
        x = bilinear_upsample_nhwc(x, self.scale)
        # [Conv3x3 -> BN -> ReLU] stack (Pallas, NHWC, padded channels stay zero).
        for w_pack, b_pad in self.layers:
            x = conv3x3_bn_relu_nhwc(x, w_pack, b_pad)
        # Drop channel padding, back to NCHW f32 to match the PyTorch convention.
        x = x[..., :self.out_channels].astype(jnp.float32)
        return jnp.transpose(x, (0, 3, 1, 2))


if __name__ == "__main__":
    # Small shapes consistent with SegNetEnc(in_channels=4, out_channels=8, scale=2, num_layers=1)
    N, C, H, W = 2, 4, 16, 16
    out_channels, scale, num_layers = 8, 2, 1

    x = jax.random.normal(jax.random.PRNGKey(0), (N, C, H, W), jnp.float32)
    model = SegNetEncPallas(C, out_channels, scale, num_layers, key=jax.random.PRNGKey(1))

    fwd = jax.jit(model.__call__)
    y = jax.block_until_ready(fwd(x))

    assert y.shape == (N, out_channels, H * scale, W * scale), y.shape
    assert bool(jnp.all(jnp.isfinite(y)))
    assert bool(jnp.all(y >= 0.0))   # ReLU output is non-negative
    print("KERNEL_OK")
</pallas_src>

<mosaic_0001>
module attributes {stable_mosaic.version = 11 : i64} {
  func.func @_upsample_kernel(%arg0: i32, %arg1: memref<1x16x16x128xbf16, #tpu.memory_space<vmem>>, %arg2: memref<1024x256xbf16, #tpu.memory_space<vmem>>, %arg3: memref<1x32x32x128xbf16, #tpu.memory_space<vmem>>) attributes {dimension_semantics = [#tpu.dimension_semantics<parallel>], iteration_bounds = array<i64: 2>, scalar_prefetch = 0 : i64, scratch_operands = 0 : i64, tpu.core_type = #tpu.core_type<tc>, window_params = [{transform_indices = @transform_0, window_bounds = array<i64: 1, 16, 16, 128>}, {pipeline_mode = #tpu.pipeline_mode<synchronous>, transform_indices = @transform_1, window_bounds = array<i64: 1024, 256>}, {transform_indices = @transform_2, window_bounds = array<i64: 1, 32, 32, 128>}]} {
    %c0 = arith.constant 0 : index
    %c0_0 = arith.constant 0 : index
    %c0_1 = arith.constant 0 : index
    %c0_2 = arith.constant 0 : index
    %0 = vector.load %arg1[%c0, %c0_0, %c0_1, %c0_2] : memref<1x16x16x128xbf16, #tpu.memory_space<vmem>>, vector<1x16x16x128xbf16>
    %1 = vector.shape_cast %0 : vector<1x16x16x128xbf16> to vector<16x16x128xbf16>
    %2 = vector.shape_cast %1 : vector<16x16x128xbf16> to vector<256x128xbf16>
    %c0_3 = arith.constant 0 : index
    %c0_4 = arith.constant 0 : index
    %3 = vector.load %arg2[%c0_3, %c0_4] : memref<1024x256xbf16, #tpu.memory_space<vmem>>, vector<1024x256xbf16>
    %cst = arith.constant dense<0.000000e+00> : vector<1024x128xf32>
    %4 = tpu.matmul %3, %2, %cst {dimension_numbers = #tpu.dot_dimension_numbers<[1], [0], [0], [1], [0, 0, 1, 1], [], []>} : vector<1024x256xbf16>, vector<256x128xbf16>, vector<1024x128xf32> -> vector<1024x128xf32>
    %5 = vector.shape_cast %4 : vector<1024x128xf32> to vector<32x32x128xf32>
    %6 = arith.truncf %5 : vector<32x32x128xf32> to vector<32x32x128xbf16>
    %c0_5 = arith.constant 0 : index
    %c0_6 = arith.constant 0 : index
    %c0_7 = arith.constant 0 : index
    %c0_8 = arith.constant 0 : index
    %7 = vector.load %arg3[%c0_5, %c0_6, %c0_7, %c0_8] : memref<1x32x32x128xbf16, #tpu.memory_space<vmem>>, vector<1x32x32x128xbf16>
    %8 = vector.shape_cast %7 : vector<1x32x32x128xbf16> to vector<32x32x128xbf16>
    %9 = vector.shape_cast %6 : vector<32x32x128xbf16> to vector<1x32x32x128xbf16>
    tpu.vector_store %arg3[%c0_5, %c0_6, %c0_7, %c0_8], %9 {strides = array<i32>} : memref<1x32x32x128xbf16, #tpu.memory_space<vmem>>, vector<1x32x32x128xbf16>,
    return
  }
  func.func @transform_0(%arg0: i32) -> (i32, i32, i32, i32) {
    %c0_i32 = arith.constant 0 : i32
    %c0_i32_0 = arith.constant 0 : i32
    %c0_i32_1 = arith.constant 0 : i32
    %c0_i32_2 = arith.constant 0 : i32
    return %arg0, %c0_i32, %c0_i32_0, %c0_i32_1 : i32, i32, i32, i32
  }
  func.func @transform_1(%arg0: i32) -> (i32, i32) {
    %c0_i32 = arith.constant 0 : i32
    %c0_i32_0 = arith.constant 0 : i32
    %c0_i32_1 = arith.constant 0 : i32
    return %c0_i32, %c0_i32_0 : i32, i32
  }
  func.func @transform_2(%arg0: i32) -> (i32, i32, i32, i32) {
    %c0_i32 = arith.constant 0 : i32
    %c0_i32_0 = arith.constant 0 : i32
    %c0_i32_1 = arith.constant 0 : i32
    %c0_i32_2 = arith.constant 0 : i32
    return %arg0, %c0_i32, %c0_i32_0, %c0_i32_1 : i32, i32, i32, i32
  }
}

module attributes {stable_mosaic.version = 11 : i64} {
  func.func @_conv3x3_bn_relu_kernel(%arg0: i32, %arg1: i32, %arg2: memref<1x32x32x128xbf16, #tpu.memory_space<vmem>>, %arg3: memref<3x128x384xbf16, #tpu.memory_space<vmem>>, %arg4: memref<1x128xf32, #tpu.memory_space<vmem>>, %arg5: memref<1x8x32x128xbf16, #tpu.memory_space<vmem>>, %arg6: memref<34x40x128xbf16, #tpu.memory_space<vmem>>) attributes {dimension_semantics = [#tpu.dimension_semantics<parallel>, #tpu.dimension_semantics<arbitrary>], iteration_bounds = array<i64: 2, 4>, scalar_prefetch = 0 : i64, scratch_operands = 1 : i64, tpu.core_type = #tpu.core_type<tc>, window_params = [{transform_indices = @transform_0, window_bounds = array<i64: 1, 32, 32, 128>}, {pipeline_mode = #tpu.pipeline_mode<synchronous>, transform_indices = @transform_1, window_bounds = array<i64: 3, 128, 384>}, {pipeline_mode = #tpu.pipeline_mode<synchronous>, transform_indices = @transform_2, window_bounds = array<i64: 1, 128>}, {transform_indices = @transform_3, window_bounds = array<i64: 1, 8, 32, 128>}]} {
    %c0_i32 = arith.constant 0 : i32
    %0 = arith.cmpi eq, %arg1, %c0_i32 : i32
    %1 = arith.extui %0 : i1 to i32
    %c0_i32_0 = arith.constant 0 : i32
    %2 = arith.cmpi ne, %1, %c0_i32_0 : i32
    scf.if %2 {
      %cst_24 = arith.constant 0.000000e+00 : bf16
      %58 = vector.broadcast %cst_24 : bf16 to vector<34x40x128xbf16>
      %c0_25 = arith.constant 0 : index
      %c0_26 = arith.constant 0 : index
      %c0_27 = arith.constant 0 : index
      %59 = vector.load %arg6[%c0_25, %c0_26, %c0_27] : memref<34x40x128xbf16, #tpu.memory_space<vmem>>, vector<34x40x128xbf16>
      tpu.vector_store %arg6[%c0_25, %c0_26, %c0_27], %58 {strides = array<i32>} : memref<34x40x128xbf16, #tpu.memory_space<vmem>>, vector<34x40x128xbf16>,
      %c0_28 = arith.constant 0 : index
      %c0_29 = arith.constant 0 : index
      %c0_30 = arith.constant 0 : index
      %c0_31 = arith.constant 0 : index
      %60 = vector.load %arg2[%c0_28, %c0_29, %c0_30, %c0_31] : memref<1x32x32x128xbf16, #tpu.memory_space<vmem>>, vector<1x32x32x128xbf16>
      %61 = vector.shape_cast %60 : vector<1x32x32x128xbf16> to vector<32x32x128xbf16>
      %c1_32 = arith.constant 1 : index
      %c1_33 = arith.constant 1 : index
      %c0_34 = arith.constant 0 : index
      %62 = vector.load %arg6[%c1_32, %c1_33, %c0_34] : memref<34x40x128xbf16, #tpu.memory_space<vmem>>, vector<32x32x128xbf16>
      tpu.vector_store %arg6[%c1_32, %c1_33, %c0_34], %61 {strides = array<i32>} : memref<34x40x128xbf16, #tpu.memory_space<vmem>>, vector<32x32x128xbf16>,
    } else {
    }
    %c8_i32 = arith.constant 8 : i32
    %3 = arith.muli %arg1, %c8_i32 : i32
    %cst = arith.constant 0.000000e+00 : f32
    %4 = vector.broadcast %cst : f32 to vector<8x32x128xf32>
    %c0_i32_1 = arith.constant 0 : i32
    %5 = arith.addi %3, %c0_i32_1 : i32
    %6 = arith.index_cast %5 : i32 to index
    %c0 = arith.constant 0 : index
    %c0_2 = arith.constant 0 : index
    %7 = vector.load %arg6[%6, %c0, %c0_2] : memref<34x40x128xbf16, #tpu.memory_space<vmem>>, vector<8x40x128xbf16>
    %8 = vector.shape_cast %7 : vector<8x40x128xbf16> to vector<320x128xbf16>
    %c0_3 = arith.constant 0 : index
    %c0_4 = arith.constant 0 : index
    %c0_5 = arith.constant 0 : index
    %9 = vector.load %arg3[%c0_3, %c0_4, %c0_5] : memref<3x128x384xbf16, #tpu.memory_space<vmem>>, vector<1x128x384xbf16>
    %10 = vector.shape_cast %9 : vector<1x128x384xbf16> to vector<128x384xbf16>
    %cst_6 = arith.constant dense<0.000000e+00> : vector<320x384xf32>
    %11 = tpu.matmul %8, %10, %cst_6 {dimension_numbers = #tpu.dot_dimension_numbers<[1], [0], [0], [1], [0, 0, 1, 1], [], []>} : vector<320x128xbf16>, vector<128x384xbf16>, vector<320x384xf32> -> vector<320x384xf32>
    %12 = vector.shape_cast %11 : vector<320x384xf32> to vector<8x40x384xf32>
    %13 = vector.extract_strided_slice %12 {offsets = [0, 0, 0], sizes = [8, 32, 128], strides = [1, 1, 1]} : vector<8x40x384xf32> to vector<8x32x128xf32>
    %14 = arith.addf %4, %13 : vector<8x32x128xf32>
    %15 = vector.extract_strided_slice %12 {offsets = [0, 1, 128], sizes = [8, 32, 128], strides = [1, 1, 1]} : vector<8x40x384xf32> to vector<8x32x128xf32>
    %16 = arith.addf %14, %15 : vector<8x32x128xf32>
    %17 = vector.extract_strided_slice %12 {offsets = [0, 2, 256], sizes = [8, 32, 128], strides = [1, 1, 1]} : vector<8x40x384xf32> to vector<8x32x128xf32>
    %18 = arith.addf %16, %17 : vector<8x32x128xf32>
    %c1_i32 = arith.constant 1 : i32
    %19 = arith.addi %3, %c1_i32 : i32
    %20 = arith.index_cast %19 : i32 to index
    %c0_7 = arith.constant 0 : index
    %c0_8 = arith.constant 0 : index
    %21 = vector.load %arg6[%20, %c0_7, %c0_8] : memref<34x40x128xbf16, #tpu.memory_space<vmem>>, vector<8x40x128xbf16>
    %22 = vector.shape_cast %21 : vector<8x40x128xbf16> to vector<320x128xbf16>
    %c1 = arith.constant 1 : index
    %c0_9 = arith.constant 0 : index
    %c0_10 = arith.constant 0 : index
    %23 = vector.load %arg3[%c1, %c0_9, %c0_10] : memref<3x128x384xbf16, #tpu.memory_space<vmem>>, vector<1x128x384xbf16>
    %24 = vector.shape_cast %23 : vector<1x128x384xbf16> to vector<128x384xbf16>
    %cst_11 = arith.constant dense<0.000000e+00> : vector<320x384xf32>
    %25 = tpu.matmul %22, %24, %cst_11 {dimension_numbers = #tpu.dot_dimension_numbers<[1], [0], [0], [1], [0, 0, 1, 1], [], []>} : vector<320x128xbf16>, vector<128x384xbf16>, vector<320x384xf32> -> vector<320x384xf32>
    %26 = vector.shape_cast %25 : vector<320x384xf32> to vector<8x40x384xf32>
    %27 = vector.extract_strided_slice %26 {offsets = [0, 0, 0], sizes = [8, 32, 128], strides = [1, 1, 1]} : vector<8x40x384xf32> to vector<8x32x128xf32>
    %28 = arith.addf %18, %27 : vector<8x32x128xf32>
    %29 = vector.extract_strided_slice %26 {offsets = [0, 1, 128], sizes = [8, 32, 128], strides = [1, 1, 1]} : vector<8x40x384xf32> to vector<8x32x128xf32>
    %30 = arith.addf %28, %29 : vector<8x32x128xf32>
    %31 = vector.extract_strided_slice %26 {offsets = [0, 2, 256], sizes = [8, 32, 128], strides = [1, 1, 1]} : vector<8x40x384xf32> to vector<8x32x128xf32>
    %32 = arith.addf %30, %31 : vector<8x32x128xf32>
    %c2_i32 = arith.constant 2 : i32
    %33 = arith.addi %3, %c2_i32 : i32
    %34 = arith.index_cast %33 : i32 to index
    %c0_12 = arith.constant 0 : index
    %c0_13 = arith.constant 0 : index
    %35 = vector.load %arg6[%34, %c0_12, %c0_13] : memref<34x40x128xbf16, #tpu.memory_space<vmem>>, vector<8x40x128xbf16>
    %36 = vector.shape_cast %35 : vector<8x40x128xbf16> to vector<320x128xbf16>
    %c2 = arith.constant 2 : index
    %c0_14 = arith.constant 0 : index
    %c0_15 = arith.constant 0 : index
    %37 = vector.load %arg3[%c2, %c0_14, %c0_15] : memref<3x128x384xbf16, #tpu.memory_space<vmem>>, vector<1x128x384xbf16>
    %38 = vector.shape_cast %37 : vector<1x128x384xbf16> to vector<128x384xbf16>
    %cst_16 = arith.constant dense<0.000000e+00> : vector<320x384xf32>
    %39 = tpu.matmul %36, %38, %cst_16 {dimension_numbers = #tpu.dot_dimension_numbers<[1], [0], [0], [1], [0, 0, 1, 1], [], []>} : vector<320x128xbf16>, vector<128x384xbf16>, vector<320x384xf32> -> vector<320x384xf32>
    %40 = vector.shape_cast %39 : vector<320x384xf32> to vector<8x40x384xf32>
    %41 = vector.extract_strided_slice %40 {offsets = [0, 0, 0], sizes = [8, 32, 128], strides = [1, 1, 1]} : vector<8x40x384xf32> to vector<8x32x128xf32>
    %42 = arith.addf %32, %41 : vector<8x32x128xf32>
    %43 = vector.extract_strided_slice %40 {offsets = [0, 1, 128], sizes = [8, 32, 128], strides = [1, 1, 1]} : vector<8x40x384xf32> to vector<8x32x128xf32>
    %44 = arith.addf %42, %43 : vector<8x32x128xf32>
    %45 = vector.extract_strided_slice %40 {offsets = [0, 2, 256], sizes = [8, 32, 128], strides = [1, 1, 1]} : vector<8x40x384xf32> to vector<8x32x128xf32>
    %46 = arith.addf %44, %45 : vector<8x32x128xf32>
    %47 = vector.shape_cast %46 : vector<8x32x128xf32> to vector<256x128xf32>
    %c0_17 = arith.constant 0 : index
    %c0_18 = arith.constant 0 : index
    %48 = vector.load %arg4[%c0_17, %c0_18] : memref<1x128xf32, #tpu.memory_space<vmem>>, vector<1x128xf32>
    %49 = vector.broadcast %48 : vector<1x128xf32> to vector<256x128xf32>
    %50 = arith.addf %47, %49 : vector<256x128xf32>
    %cst_19 = arith.constant 0.000000e+00 : f32
    %51 = vector.broadcast %cst_19 : f32 to vector<256x128xf32>
    %52 = arith.maximumf %50, %51 : vector<256x128xf32>
    %53 = vector.shape_cast %52 : vector<256x128xf32> to vector<8x32x128xf32>
    %54 = arith.truncf %53 : vector<8x32x128xf32> to vector<8x32x128xbf16>
    %c0_20 = arith.constant 0 : index
    %c0_21 = arith.constant 0 : index
    %c0_22 = arith.constant 0 : index
    %c0_23 = arith.constant 0 : index
    %55 = vector.load %arg5[%c0_20, %c0_21, %c0_22, %c0_23] : memref<1x8x32x128xbf16, #tpu.memory_space<vmem>>, vector<1x8x32x128xbf16>
    %56 = vector.shape_cast %55 : vector<1x8x32x128xbf16> to vector<8x32x128xbf16>
    %57 = vector.shape_cast %54 : vector<8x32x128xbf16> to vector<1x8x32x128xbf16>
    tpu.vector_store %arg5[%c0_20, %c0_21, %c0_22, %c0_23], %57 {strides = array<i32>} : memref<1x8x32x128xbf16, #tpu.memory_space<vmem>>, vector<1x8x32x128xbf16>,
    return
  }
  func.func @transform_0(%arg0: i32, %arg1: i32) -> (i32, i32, i32, i32) {
    %c0_i32 = arith.constant 0 : i32
    %c0_i32_0 = arith.constant 0 : i32
    %c0_i32_1 = arith.constant 0 : i32
    %c0_i32_2 = arith.constant 0 : i32
    return %arg0, %c0_i32, %c0_i32_0, %c0_i32_1 : i32, i32, i32, i32
  }
  func.func @transform_1(%arg0: i32, %arg1: i32) -> (i32, i32, i32) {
    %c0_i32 = arith.constant 0 : i32
    %c0_i32_0 = arith.constant 0 : i32
    %c0_i32_1 = arith.constant 0 : i32
    %c0_i32_2 = arith.constant 0 : i32
    return %c0_i32, %c0_i32_0, %c0_i32_1 : i32, i32, i32
  }
  func.func @transform_2(%arg0: i32, %arg1: i32) -> (i32, i32) {
    %c0_i32 = arith.constant 0 : i32
    %c0_i32_0 = arith.constant 0 : i32
    %c0_i32_1 = arith.constant 0 : i32
    return %c0_i32, %c0_i32_0 : i32, i32
  }
  func.func @transform_3(%arg0: i32, %arg1: i32) -> (i32, i32, i32, i32) {
    %c0_i32 = arith.constant 0 : i32
    %c0_i32_0 = arith.constant 0 : i32
    %c0_i32_1 = arith.constant 0 : i32
    return %arg0, %arg1, %c0_i32, %c0_i32_0 : i32, i32, i32, i32
  }
}

</mosaic_0001>

<llo_original>
// kernel: a_call__.4
$region0: #{a_call__.4}
  #allocation0 [shape = 'u32[]', space=smem, size = 0x4, offset = 0x4, fixed_abs, tag = 'smem constant byte address 0x4 - core index']
  #allocation1 [shape = 'u32[144,128]{1,0:T(1,128)}', space=vmem, size = 0x12000, scoped, tag = 'internal scratch']
  %s0 = inlined_call_operand.vmem [shape: bf16[2,16,16,128], index: 0, kind: input, shape index: {}]
  %s1 = inlined_call_operand.vmem [shape: bf16[1024,256], index: 1, kind: input, shape index: {}]
  %s2 = inlined_call_operand.vmem [shape: bf16[2,32,32,128], index: 2, kind: output, shape index: {}]
  %s3 = sld [smem:[#allocation0]]
  $region41: #{a_call__.4} parent=0
    _
  %s5 = ssub.s32 1, %s3
  %s6 = scalar_select 0, %s5, %s3
  loop: start=0, step=1, limit=4
  $region2: #{a_call__.4} parent=0 // loop_pre_header
    _
  $region3: #{a_call__.4} parent=0 // loop_header
    %s8 = sphi 0, %s12
    %p9 = scmp.ge.s32.totalorder %s8, 4
    %s18 = sphi 0, %s20
    %s21 = sphi 0, %s18
    %s22 = sphi 0, %s21
    %s38 = sphi 0, %s22
    %s42 = sphi 0, %s42
    %s44 = sphi 0, %s42
    %s45 = sphi 0, %s44
    %s59 = sphi 0, %s45
    %s65 = sphi 0, %s67
    %s68 = sphi 0, %s65
    %s69 = sphi 0, %s68
    %s85 = sphi 0, %s69
  $region4: #{a_call__.4} parent=0 // loop_header_branch
    %11 = sbr.rel (%p9) target = $region8
  $region5: #{a_call__.4} parent=0 // loop_body
    %s13 = ssub.s32 %s8, 1
    %s14 = ssub.s32 %s8, 2
    %s15 = sadd.s32 %s8, 1
    %s16 = ssub.s32 %s8, %s15
    %p17 = scmp.eq.s32.totalorder %s16, 0
    %s19 = sadd.s32 %s18, 1
    %s20 = scalar_select %p17, %s18, %s19
    %p23 = pneg %p17
    %p24 = scmp.eq.s32.totalorder %s8, 1
    %p25 = por %p23, %p24
    %p26 = scmp.ne.s32.totalorder %s18, %s21
    %p27 = scmp.eq.s32.totalorder %s8, 0
    %p28 = por %p26, %p27
    %p29 = scmp.ne.s32.totalorder %s18, %s21
    %p30 = scmp.eq.s32.totalorder %s13, 1
    %p31 = por %p29, %p30
    %p32 = scmp.ne.s32.totalorder %s21, %s22
    %p33 = scmp.eq.s32.totalorder %s13, 0
    %p34 = por %p32, %p33
    %p35 = scmp.ne.s32.totalorder %s21, %s22
    %p36 = scmp.eq.s32.totalorder %s14, 1
    %p37 = por %p35, %p36
    %p39 = scmp.ne.s32.totalorder %s22, %s38
    %p40 = scmp.eq.s32.totalorder %s14, 0
    %p41 = por %p39, %p40
    %s43 = sadd.s32 %s42, 1
    %p46 = scmp.eq.s32.totalorder %s8, 1
    %p47 = scmp.ne.s32.totalorder %s42, %s44
    %p48 = scmp.eq.s32.totalorder %s8, 0
    %p49 = por %p47, %p48
    %p50 = scmp.ne.s32.totalorder %s42, %s44
    %p51 = scmp.eq.s32.totalorder %s13, 1
    %p52 = por %p50, %p51
    %p53 = scmp.ne.s32.totalorder %s44, %s45
    %p54 = scmp.eq.s32.totalorder %s13, 0
    %p55 = por %p53, %p54
    %p56 = scmp.ne.s32.totalorder %s44, %s45
    %p57 = scmp.eq.s32.totalorder %s14, 1
    %p58 = por %p56, %p57
    %p60 = scmp.ne.s32.totalorder %s45, %s59
    %p61 = scmp.eq.s32.totalorder %s14, 0
    %p62 = por %p60, %p61
    %s63 = ssub.s32 %s8, %s15
    %p64 = scmp.eq.s32.totalorder %s63, 0
    %s66 = sadd.s32 %s65, 1
    %s67 = scalar_select %p64, %s65, %s66
    %p70 = pneg %p64
    %p71 = scmp.eq.s32.totalorder %s8, 1
    %p72 = por %p70, %p71
    %p73 = scmp.ne.s32.totalorder %s65, %s68
    %p74 = scmp.eq.s32.totalorder %s8, 0
    %p75 = por %p73, %p74
    %p76 = scmp.ne.s32.totalorder %s65, %s68
    %p77 = scmp.eq.s32.totalorder %s13, 1
    %p78 = por %p76, %p77
    %p79 = scmp.ne.s32.totalorder %s68, %s69
    %p80 = scmp.eq.s32.totalorder %s13, 0
    %p81 = por %p79, %p80
    %p82 = scmp.ne.s32.totalorder %s68, %s69
    %p83 = scmp.eq.s32.totalorder %s14, 1
    %p84 = por %p82, %p83
    %p86 = scmp.ne.s32.totalorder %s69, %s85
    %p87 = scmp.eq.s32.totalorder %s14, 0
    %p88 = por %p86, %p87
    %p89 = scmp.le.s32.totalorder 1, %s8
    %p90 = scmp.lt.s32.totalorder %s8, 3
    %p91 = pnand %p89, %p90
    %p92 = pneg %p91
    // Predicated region
    $region9: #{a_call__.4} parent=5 // pred_check
      _
    $region10: #{a_call__.4} parent=5 // pred_check_branch
      %94 = sbr.rel (%p91) target = $region12
    $region11: #{a_call__.4} parent=5 // pred_region
      %s95 = ssub.s32 %s8, 1
      // Predicated region
      $region13: #{a_call__.4} parent=11 // pred_check
        %p96 = pneg %p55
      $region14: #{a_call__.4} parent=11 // pred_check_branch
        %98 = sbr.rel (%p96) target = $region16
      $region15: #{a_call__.4} parent=11 // pred_region
        _
      $region16: #{a_call__.4} parent=11 // pred_fallthru
        _
    $region12: #{a_call__.4} parent=5 // pred_fallthru
      _
    %p99 = scmp.lt.s32.totalorder %s8, 2
    // Predicated region
    $region17: #{a_call__.4} parent=5 // pred_check
      %p100 = pneg %p99
    $region18: #{a_call__.4} parent=5 // pred_check_branch
      %102 = sbr.rel (%p100) target = $region20
    $region19: #{a_call__.4} parent=5 // pred_region
      // Predicated region
      $region21: #{a_call__.4} parent=19 // pred_check
        %p103 = pneg %p28
      $region22: #{a_call__.4} parent=19 // pred_check_branch
        %105 = sbr.rel (%p103) target = $region24
      $region23: #{a_call__.4} parent=19 // pred_region
        %p106 = scmp.lt.s32.totalorder %s8, 1
        %s107 = scalar_select %p106, %s8, 1
        %s108 = smul.addr %s107, 32
        %s109 = smul.addr %s108, 4
        %s110 = scalar_lea.vmem %s0, %s109
      $region24: #{a_call__.4} parent=19 // pred_fallthru
        _
    $region20: #{a_call__.4} parent=5 // pred_fallthru
      _
    %p111 = scmp.le.s32.totalorder 1, %s8
    %p112 = scmp.lt.s32.totalorder %s8, 3
    %p113 = pnand %p111, %p112
    %p114 = pneg %p113
    // Predicated region
    $region25: #{a_call__.4} parent=5 // pred_check
      _
    $region26: #{a_call__.4} parent=5 // pred_check_branch
      %116 = sbr.rel (%p113) target = $region28
    $region27: #{a_call__.4} parent=5 // pred_region
      %s117 = ssub.s32 %s8, 1
      %p118 = scmp.lt.s32.totalorder %s13, 1
      %s119 = scalar_select %p118, %s13, 1
      %s120 = smul.addr %s119, 32
      %s121 = smul.addr %s120, 4
      %s122 = scalar_lea.vmem %s0, %s121
      %p123 = pneg %p34
      %p124 = pneg %p31
      %p125 = pneg %p55
      %p126 = pneg %p52
      %p127 = pneg %p81
      %p128 = pneg %p78
      %p129 = scmp.lt.s32.totalorder %s13, 1
      %s130 = scalar_select %p129, %s13, 1
      %s131 = smul.addr %s130, 128
      %s132 = smul.addr %s131, 4
      %s133 = scalar_lea.vmem %s2, %s132
      %p134 = scmp.lt.s32.totalorder %s13, 1
      %s135 = scalar_select %p134, %s13, 1
      %s136 = smul.addr %s135, 32
      %s137 = smul.addr %s136, 4
      %s138 = scalar_lea.vmem %s0, %s137
      %p139 = scmp.lt.s32.totalorder %s13, 1
      %s140 = scalar_select %p139, %s13, 1
      %s141 = smul.addr %s140, 128
      %s142 = smul.addr %s141, 4
      %s143 = scalar_lea.vmem %s2, %s142
      %v145 = vld [vmem:[%s138] sm:$0xf]
      %v146 = vld [vmem:[%s138 + $0x4] sm:$0xf]
      %v147 = vld [vmem:[%s138 + $0x8] sm:$0xf]
      %v148 = vld [vmem:[%s138 + $0xc] sm:$0xf]
      %v149 = vld [vmem:[%s138 + $0x10] sm:$0xf]
      %v150 = vld [vmem:[%s138 + $0x14] sm:$0xf]
      %v151 = vld [vmem:[%s138 + $0x18] sm:$0xf]
      %v152 = vld [vmem:[%s138 + $0x1c] sm:$0xf]
      %v153 = vld [vmem:[%s138 + $0x20] sm:$0xf]
      %v154 = vld [vmem:[%s138 + $0x24] sm:$0xf]
      %v155 = vld [vmem:[%s138 + $0x28] sm:$0xf]
      %v156 = vld [vmem:[%s138 + $0x2c] sm:$0xf]
      %v157 = vld [vmem:[%s138 + $0x30] sm:$0xf]
      %v158 = vld [vmem:[%s138 + $0x34] sm:$0xf]
      %v159 = vld [vmem:[%s138 + $0x38] sm:$0xf]
      %v160 = vld [vmem:[%s138 + $0x3c] sm:$0xf]
      %v161 = vld [vmem:[%s138 + $0x40] sm:$0xf]
      %v162 = vld [vmem:[%s138 + $0x44] sm:$0xf]
      %v163 = vld [vmem:[%s138 + $0x48] sm:$0xf]
      %v164 = vld [vmem:[%s138 + $0x4c] sm:$0xf]
      %v165 = vld [vmem:[%s138 + $0x50] sm:$0xf]
      %v166 = vld [vmem:[%s138 + $0x54] sm:$0xf]
      %v167 = vld [vmem:[%s138 + $0x58] sm:$0xf]
      %v168 = vld [vmem:[%s138 + $0x5c] sm:$0xf]
      %v169 = vld [vmem:[%s138 + $0x60] sm:$0xf]
      %v170 = vld [vmem:[%s138 + $0x64] sm:$0xf]
      %v171 = vld [vmem:[%s138 + $0x68] sm:$0xf]
      %v172 = vld [vmem:[%s138 + $0x6c] sm:$0xf]
      %v173 = vld [vmem:[%s138 + $0x70] sm:$0xf]
      %v174 = vld [vmem:[%s138 + $0x74] sm:$0xf]
      %v175 = vld [vmem:[%s138 + $0x78] sm:$0xf]
      %v176 = vld [vmem:[%s138 + $0x7c] sm:$0xf]
      %v177 = vld [vmem:[%s1] sm:$0xff]
      %v178 = vld [vmem:[%s1 + $0x8] sm:$0xff]
      %v179 = vld [vmem:[%s1 + $0x10] sm:$0xff]
      %v180 = vld [vmem:[%s1 + $0x18] sm:$0xff]
      %v181 = vld [vmem:[%s1 + $0x20] sm:$0xff]
      %v182 = vld [vmem:[%s1 + $0x28] sm:$0xff]
      %v183 = vld [vmem:[%s1 + $0x30] sm:$0xff]
      %v184 = vld [vmem:[%s1 + $0x38] sm:$0xff]
      %v185 = vld [vmem:[%s1 + $0x40] sm:$0xff]
      %v186 = vld [vmem:[%s1 + $0x48] sm:$0xff]
      %v187 = vld [vmem:[%s1 + $0x50] sm:$0xff]
      %v188 = vld [vmem:[%s1 + $0x58] sm:$0xff]
      %v189 = vld [vmem:[%s1 + $0x60] sm:$0xff]
      %v190 = vld [vmem:[%s1 + $0x68] sm:$0xff]
      %v191 = vld [vmem:[%s1 + $0x70] sm:$0xff]
      %v192 = vld [vmem:[%s1 + $0x78] sm:$0xff]
      %v193 = vld [vmem:[%s1 + $0x80] sm:$0xff]
      %v194 = vld [vmem:[%s1 + $0x88] sm:$0xff]
      %v195 = vld [vmem:[%s1 + $0x90] sm:$0xff]
      %v196 = vld [vmem:[%s1 + $0x98] sm:$0xff]
      %v197 = vld [vmem:[%s1 + $0xa0] sm:$0xff]
      %v198 = vld [vmem:[%s1 + $0xa8] sm:$0xff]
      %v199 = vld [vmem:[%s1 + $0xb0] sm:$0xff]
      %v200 = vld [vmem:[%s1 + $0xb8] sm:$0xff]
      %v201 = vld [vmem:[%s1 + $0xc0] sm:$0xff]
      %v202 = vld [vmem:[%s1 + $0xc8] sm:$0xff]
      %v203 = vld [vmem:[%s1 + $0xd0] sm:$0xff]
      %v204 = vld [vmem:[%s1 + $0xd8] sm:$0xff]
      %v205 = vld [vmem:[%s1 + $0xe0] sm:$0xff]
      %v206 = vld [vmem:[%s1 + $0xe8] sm:$0xff]
      %v207 = vld [vmem:[%s1 + $0xf0] sm:$0xff]
      %v208 = vld [vmem:[%s1 + $0xf8] sm:$0xff]
      %v209 = vld [vmem:[%s1 + $0x100] sm:$0xff]
      %v210 = vld [vmem:[%s1 + $0x108] sm:$0xff]
      %v211 = vld [vmem:[%s1 + $0x110] sm:$0xff]
      %v212 = vld [vmem:[%s1 + $0x118] sm:$0xff]
      %v213 = vld [vmem:[%s1 + $0x120] sm:$0xff]
      %v214 = vld [vmem:[%s1 + $0x128] sm:$0xff]
      %v215 = vld [vmem:[%s1 + $0x130] sm:$0xff]
      %v216 = vld [vmem:[%s1 + $0x138] sm:$0xff]
      %v217 = vld [vmem:[%s1 + $0x140] sm:$0xff]
      %v218 = vld [vmem:[%s1 + $0x148] sm:$0xff]
      %v219 = vld [vmem:[%s1 + $0x150] sm:$0xff]
      %v220 = vld [vmem:[%s1 + $0x158] sm:$0xff]
      %v221 = vld [vmem:[%s1 + $0x160] sm:$0xff]
      %v222 = vld [vmem:[%s1 + $0x168] sm:$0xff]
      %v223 = vld [vmem:[%s1 + $0x170] sm:$0xff]
      %v224 = vld [vmem:[%s1 + $0x178] sm:$0xff]
      %v225 = vld [vmem:[%s1 + $0x180] sm:$0xff]
      %v226 = vld [vmem:[%s1 + $0x188] sm:$0xff]
      %v227 = vld [vmem:[%s1 + $0x190] sm:$0xff]
      %v228 = vld [vmem:[%s1 + $0x198] sm:$0xff]
      %v229 = vld [vmem:[%s1 + $0x1a0] sm:$0xff]
      %v230 = vld [vmem:[%s1 + $0x1a8] sm:$0xff]
      %v231 = vld [vmem:[%s1 + $0x1b0] sm:$0xff]
      %v232 = vld [vmem:[%s1 + $0x1b8] sm:$0xff]
      %v233 = vld [vmem:[%s1 + $0x1c0] sm:$0xff]
      %v234 = vld [vmem:[%s1 + $0x1c8] sm:$0xff]
      %v235 = vld [vmem:[%s1 + $0x1d0] sm:$0xff]
      %v236 = vld [vmem:[%s1 + $0x1d8] sm:$0xff]
      %v237 = vld [vmem:[%s1 + $0x1e0] sm:$0xff]
      %v238 = vld [vmem:[%s1 + $0x1e8] sm:$0xff]
      %v239 = vld [vmem:[%s1 + $0x1f0] sm:$0xff]
      %v240 = vld [vmem:[%s1 + $0x1f8] sm:$0xff]
      %v241 = vld [vmem:[%s1 + $0x200] sm:$0xff]
      %v242 = vld [vmem:[%s1 + $0x208] sm:$0xff]
      %v243 = vld [vmem:[%s1 + $0x210] sm:$0xff]
      %v244 = vld [vmem:[%s1 + $0x218] sm:$0xff]
      %v245 = vld [vmem:[%s1 + $0x220] sm:$0xff]
      %v246 = vld [vmem:[%s1 + $0x228] sm:$0xff]
      %v247 = vld [vmem:[%s1 + $0x230] sm:$0xff]
      %v248 = vld [vmem:[%s1 + $0x238] sm:$0xff]
      %v249 = vld [vmem:[%s1 + $0x240] sm:$0xff]
      %v250 = vld [vmem:[%s1 + $0x248] sm:$0xff]
      %v251 = vld [vmem:[%s1 + $0x250] sm:$0xff]
      %v252 = vld [vmem:[%s1 + $0x258] sm:$0xff]
      %v253 = vld [vmem:[%s1 + $0x260] sm:$0xff]
      %v254 = vld [vmem:[%s1 + $0x268] sm:$0xff]
      %v255 = vld [vmem:[%s1 + $0x270] sm:$0xff]
      %v256 = vld [vmem:[%s1 + $0x278] sm:$0xff]
      %v257 = vld [vmem:[%s1 + $0x280] sm:$0xff]
      %v258 = vld [vmem:[%s1 + $0x288] sm:$0xff]
      %v259 = vld [vmem:[%s1 + $0x290] sm:$0xff]
      %v260 = vld [vmem:[%s1 + $0x298] sm:$0xff]
      %v261 = vld [vmem:[%s1 + $0x2a0] sm:$0xff]
      %v262 = vld [vmem:[%s1 + $0x2a8] sm:$0xff]
      %v263 = vld [vmem:[%s1 + $0x2b0] sm:$0xff]
      %v264 = vld [vmem:[%s1 + $0x2b8] sm:$0xff]
      %v265 = vld [vmem:[%s1 + $0x2c0] sm:$0xff]
      %v266 = vld [vmem:[%s1 + $0x2c8] sm:$0xff]
      %v267 = vld [vmem:[%s1 + $0x2d0] sm:$0xff]
      %v268 = vld [vmem:[%s1 + $0x2d8] sm:$0xff]
      %v269 = vld [vmem:[%s1 + $0x2e0] sm:$0xff]
      %v270 = vld [vmem:[%s1 + $0x2e8] sm:$0xff]
      %v271 = vld [vmem:[%s1 + $0x2f0] sm:$0xff]
      %v272 = vld [vmem:[%s1 + $0x2f8] sm:$0xff]
      %v273 = vld [vmem:[%s1 + $0x300] sm:$0xff]
      %v274 = vld [vmem:[%s1 + $0x308] sm:$0xff]
      %v275 = vld [vmem:[%s1 + $0x310] sm:$0xff]
      %v276 = vld [vmem:[%s1 + $0x318] sm:$0xff]
      %v277 = vld [vmem:[%s1 + $0x320] sm:$0xff]
      %v278 = vld [vmem:[%s1 + $0x328] sm:$0xff]
      %v279 = vld [vmem:[%s1 + $0x330] sm:$0xff]
      %v280 = vld [vmem:[%s1 + $0x338] sm:$0xff]
      %v281 = vld [vmem:[%s1 + $0x340] sm:$0xff]
      %v282 = vld [vmem:[%s1 + $0x348] sm:$0xff]
      %v283 = vld [vmem:[%s1 + $0x350] sm:$0xff]
      %v284 = vld [vmem:[%s1 + $0x358] sm:$0xff]
      %v285 = vld [vmem:[%s1 + $0x360] sm:$0xff]
      %v286 = vld [vmem:[%s1 + $0x368] sm:$0xff]
      %v287 = vld [vmem:[%s1 + $0x370] sm:$0xff]
      %v288 = vld [vmem:[%s1 + $0x378] sm:$0xff]
      %v289 = vld [vmem:[%s1 + $0x380] sm:$0xff]
      %v290 = vld [vmem:[%s1 + $0x388] sm:$0xff]
      %v291 = vld [vmem:[%s1 + $0x390] sm:$0xff]
      %v292 = vld [vmem:[%s1 + $0x398] sm:$0xff]
      %v293 = vld [vmem:[%s1 + $0x3a0] sm:$0xff]
      %v294 = vld [vmem:[%s1 + $0x3a8] sm:$0xff]
      %v295 = vld [vmem:[%s1 + $0x3b0] sm:$0xff]
      %v296 = vld [vmem:[%s1 + $0x3b8] sm:$0xff]
      %v297 = vld [vmem:[%s1 + $0x3c0] sm:$0xff]
      %v298 = vld [vmem:[%s1 + $0x3c8] sm:$0xff]
      %v299 = vld [vmem:[%s1 + $0x3d0] sm:$0xff]
      %v300 = vld [vmem:[%s1 + $0x3d8] sm:$0xff]
      %v301 = vld [vmem:[%s1 + $0x3e0] sm:$0xff]
      %v302 = vld [vmem:[%s1 + $0x3e8] sm:$0xff]
      %v303 = vld [vmem:[%s1 + $0x3f0] sm:$0xff]
      %v304 = vld [vmem:[%s1 + $0x3f8] sm:$0xff]
      %v433 = vunpack.c.l.b16 %v177
      %v434 = vunpack.c.h.b16 %v177
      %v435 = vunpack.c.l.b16 %v178
      %v436 = vunpack.c.h.b16 %v178
      %v437 = vunpack.c.l.b16 %v179
      %v438 = vunpack.c.h.b16 %v179
      %v439 = vunpack.c.l.b16 %v180
      %v440 = vunpack.c.h.b16 %v180
      %v441 = vunpack.c.l.b16 %v181
      %v442 = vunpack.c.h.b16 %v181
      %v443 = vunpack.c.l.b16 %v182
      %v444 = vunpack.c.h.b16 %v182
      %v445 = vunpack.c.l.b16 %v183
      %v446 = vunpack.c.h.b16 %v183
      %v447 = vunpack.c.l.b16 %v184
      %v448 = vunpack.c.h.b16 %v184
      %v449 = vunpack.c.l.b16 %v185
      %v450 = vunpack.c.h.b16 %v185
      %v451 = vunpack.c.l.b16 %v186
      %v452 = vunpack.c.h.b16 %v186
      %v453 = vunpack.c.l.b16 %v187
      %v454 = vunpack.c.h.b16 %v187
      %v455 = vunpack.c.l.b16 %v188
      %v456 = vunpack.c.h.b16 %v188
      %v457 = vunpack.c.l.b16 %v189
      %v458 = vunpack.c.h.b16 %v189
      %v459 = vunpack.c.l.b16 %v190
      %v460 = vunpack.c.h.b16 %v190
      %v461 = vunpack.c.l.b16 %v191
      %v462 = vunpack.c.h.b16 %v191
      %v463 = vunpack.c.l.b16 %v192
      %v464 = vunpack.c.h.b16 %v192
      %v465 = vunpack.c.l.b16 %v193
      %v466 = vunpack.c.h.b16 %v193
      %v467 = vunpack.c.l.b16 %v194
      %v468 = vunpack.c.h.b16 %v194
      %v469 = vunpack.c.l.b16 %v195
      %v470 = vunpack.c.h.b16 %v195
      %v471 = vunpack.c.l.b16 %v196
      %v472 = vunpack.c.h.b16 %v196
      %v473 = vunpack.c.l.b16 %v197
      %v474 = vunpack.c.h.b16 %v197
      %v475 = vunpack.c.l.b16 %v198
      %v476 = vunpack.c.h.b16 %v198
      %v477 = vunpack.c.l.b16 %v199
      %v478 = vunpack.c.h.b16 %v199
      %v479 = vunpack.c.l.b16 %v200
      %v480 = vunpack.c.h.b16 %v200
      %v481 = vunpack.c.l.b16 %v201
      %v482 = vunpack.c.h.b16 %v201
      %v483 = vunpack.c.l.b16 %v202
      %v484 = vunpack.c.h.b16 %v202
      %v485 = vunpack.c.l.b16 %v203
      %v486 = vunpack.c.h.b16 %v203
      %v487 = vunpack.c.l.b16 %v204
      %v488 = vunpack.c.h.b16 %v204
      %v489 = vunpack.c.l.b16 %v205
      %v490 = vunpack.c.h.b16 %v205
      %v491 = vunpack.c.l.b16 %v206
      %v492 = vunpack.c.h.b16 %v206
      %v493 = vunpack.c.l.b16 %v207
      %v494 = vunpack.c.h.b16 %v207
      %v495 = vunpack.c.l.b16 %v208
      %v496 = vunpack.c.h.b16 %v208
      %v497 = vunpack.c.l.b16 %v209
      %v498 = vunpack.c.h.b16 %v209
      %v499 = vunpack.c.l.b16 %v210
      %v500 = vunpack.c.h.b16 %v210
      %v501 = vunpack.c.l.b16 %v211
      %v502 = vunpack.c.h.b16 %v211
      %v503 = vunpack.c.l.b16 %v212
      %v504 = vunpack.c.h.b16 %v212
      %v505 = vunpack.c.l.b16 %v213
      %v506 = vunpack.c.h.b16 %v213
      %v507 = vunpack.c.l.b16 %v214
      %v508 = vunpack.c.h.b16 %v214
      %v509 = vunpack.c.l.b16 %v215
      %v510 = vunpack.c.h.b16 %v215
      %v511 = vunpack.c.l.b16 %v216
      %v512 = vunpack.c.h.b16 %v216
      %v513 = vunpack.c.l.b16 %v217
      %v514 = vunpack.c.h.b16 %v217
      %v515 = vunpack.c.l.b16 %v218
      %v516 = vunpack.c.h.b16 %v218
      %v517 = vunpack.c.l.b16 %v219
      %v518 = vunpack.c.h.b16 %v219
      %v519 = vunpack.c.l.b16 %v220
      %v520 = vunpack.c.h.b16 %v220
      %v521 = vunpack.c.l.b16 %v221
      %v522 = vunpack.c.h.b16 %v221
      %v523 = vunpack.c.l.b16 %v222
      %v524 = vunpack.c.h.b16 %v222
      %v525 = vunpack.c.l.b16 %v223
      %v526 = vunpack.c.h.b16 %v223
      %v527 = vunpack.c.l.b16 %v224
      %v528 = vunpack.c.h.b16 %v224
      %v529 = vunpack.c.l.b16 %v225
      %v530 = vunpack.c.h.b16 %v225
      %v531 = vunpack.c.l.b16 %v226
      %v532 = vunpack.c.h.b16 %v226
      %v533 = vunpack.c.l.b16 %v227
      %v534 = vunpack.c.h.b16 %v227
      %v535 = vunpack.c.l.b16 %v228
      %v536 = vunpack.c.h.b16 %v228
      %v537 = vunpack.c.l.b16 %v229
      %v538 = vunpack.c.h.b16 %v229
      %v539 = vunpack.c.l.b16 %v230
      %v540 = vunpack.c.h.b16 %v230
      %v541 = vunpack.c.l.b16 %v231
      %v542 = vunpack.c.h.b16 %v231
      %v543 = vunpack.c.l.b16 %v232
      %v544 = vunpack.c.h.b16 %v232
      %v545 = vunpack.c.l.b16 %v233
      %v546 = vunpack.c.h.b16 %v233
      %v547 = vunpack.c.l.b16 %v234
      %v548 = vunpack.c.h.b16 %v234
      %v549 = vunpack.c.l.b16 %v235
      %v550 = vunpack.c.h.b16 %v235
      %v551 = vunpack.c.l.b16 %v236
      %v552 = vunpack.c.h.b16 %v236
      %v553 = vunpack.c.l.b16 %v237
      %v554 = vunpack.c.h.b16 %v237
      %v555 = vunpack.c.l.b16 %v238
      %v556 = vunpack.c.h.b16 %v238
      %v557 = vunpack.c.l.b16 %v239
      %v558 = vunpack.c.h.b16 %v239
      %v559 = vunpack.c.l.b16 %v240
      %v560 = vunpack.c.h.b16 %v240
      %v561 = vunpack.c.l.b16 %v241
      %v562 = vunpack.c.h.b16 %v241
      %v563 = vunpack.c.l.b16 %v242
      %v564 = vunpack.c.h.b16 %v242
      %v565 = vunpack.c.l.b16 %v243
      %v566 = vunpack.c.h.b16 %v243
      %v567 = vunpack.c.l.b16 %v244
      %v568 = vunpack.c.h.b16 %v244
      %v569 = vunpack.c.l.b16 %v245
      %v570 = vunpack.c.h.b16 %v245
      %v571 = vunpack.c.l.b16 %v246
      %v572 = vunpack.c.h.b16 %v246
      %v573 = vunpack.c.l.b16 %v247
      %v574 = vunpack.c.h.b16 %v247
      %v575 = vunpack.c.l.b16 %v248
      %v576 = vunpack.c.h.b16 %v248
      %v577 = vunpack.c.l.b16 %v249
      %v578 = vunpack.c.h.b16 %v249
      %v579 = vunpack.c.l.b16 %v250
      %v580 = vunpack.c.h.b16 %v250
      %v581 = vunpack.c.l.b16 %v251
      %v582 = vunpack.c.h.b16 %v251
      %v583 = vunpack.c.l.b16 %v252
      %v584 = vunpack.c.h.b16 %v252
      %v585 = vunpack.c.l.b16 %v253
      %v586 = vunpack.c.h.b16 %v253
      %v587 = vunpack.c.l.b16 %v254
      %v588 = vunpack.c.h.b16 %v254
      %v589 = vunpack.c.l.b16 %v255
      %v590 = vunpack.c.h.b16 %v255
      %v591 = vunpack.c.l.b16 %v256
      %v592 = vunpack.c.h.b16 %v256
      %v593 = vunpack.c.l.b16 %v257
      %v594 = vunpack.c.h.b16 %v257
      %v595 = vunpack.c.l.b16 %v258
      %v596 = vunpack.c.h.b16 %v258
      %v597 = vunpack.c.l.b16 %v259
      %v598 = vunpack.c.h.b16 %v259
      %v599 = vunpack.c.l.b16 %v260
      %v600 = vunpack.c.h.b16 %v260
      %v601 = vunpack.c.l.b16 %v261
      %v602 = vunpack.c.h.b16 %v261
      %v603 = vunpack.c.l.b16 %v262
      %v604 = vunpack.c.h.b16 %v262
      %v605 = vunpack.c.l.b16 %v263
      %v606 = vunpack.c.h.b16 %v263
      %v607 = vunpack.c.l.b16 %v264
      %v608 = vunpack.c.h.b16 %v264
      %v609 = vunpack.c.l.b16 %v265
      %v610 = vunpack.c.h.b16 %v265
      %v611 = vunpack.c.l.b16 %v266
      %v612 = vunpack.c.h.b16 %v266
      %v613 = vunpack.c.l.b16 %v267
      %v614 = vunpack.c.h.b16 %v267
      %v615 = vunpack.c.l.b16 %v268
      %v616 = vunpack.c.h.b16 %v268
      %v617 = vunpack.c.l.b16 %v269
      %v618 = vunpack.c.h.b16 %v269
      %v619 = vunpack.c.l.b16 %v270
      %v620 = vunpack.c.h.b16 %v270
      %v621 = vunpack.c.l.b16 %v271
      %v622 = vunpack.c.h.b16 %v271
      %v623 = vunpack.c.l.b16 %v272
      %v624 = vunpack.c.h.b16 %v272
      %v625 = vunpack.c.l.b16 %v273
      %v626 = vunpack.c.h.b16 %v273
      %v627 = vunpack.c.l.b16 %v274
      %v628 = vunpack.c.h.b16 %v274
      %v629 = vunpack.c.l.b16 %v275
      %v630 = vunpack.c.h.b16 %v275
      %v631 = vunpack.c.l.b16 %v276
      %v632 = vunpack.c.h.b16 %v276
      %v633 = vunpack.c.l.b16 %v277
      %v634 = vunpack.c.h.b16 %v277
      %v635 = vunpack.c.l.b16 %v278
      %v636 = vunpack.c.h.b16 %v278
      %v637 = vunpack.c.l.b16 %v279
      %v638 = vunpack.c.h.b16 %v279
      %v639 = vunpack.c.l.b16 %v280
      %v640 = vunpack.c.h.b16 %v280
      %v641 = vunpack.c.l.b16 %v281
      %v642 = vunpack.c.h.b16 %v281
      %v643 = vunpack.c.l.b16 %v282
      %v644 = vunpack.c.h.b16 %v282
      %v645 = vunpack.c.l.b16 %v283
      %v646 = vunpack.c.h.b16 %v283
      %v647 = vunpack.c.l.b16 %v284
      %v648 = vunpack.c.h.b16 %v284
      %v649 = vunpack.c.l.b16 %v285
      %v650 = vunpack.c.h.b16 %v285
      %v651 = vunpack.c.l.b16 %v286
      %v652 = vunpack.c.h.b16 %v286
      %v653 = vunpack.c.l.b16 %v287
      %v654 = vunpack.c.h.b16 %v287
      %v655 = vunpack.c.l.b16 %v288
      %v656 = vunpack.c.h.b16 %v288
      %v657 = vunpack.c.l.b16 %v289
      %v658 = vunpack.c.h.b16 %v289
      %v659 = vunpack.c.l.b16 %v290
      %v660 = vunpack.c.h.b16 %v290
      %v661 = vunpack.c.l.b16 %v291
      %v662 = vunpack.c.h.b16 %v291
      %v663 = vunpack.c.l.b16 %v292
      %v664 = vunpack.c.h.b16 %v292
      %v665 = vunpack.c.l.b16 %v293
      %v666 = vunpack.c.h.b16 %v293
      %v667 = vunpack.c.l.b16 %v294
      %v668 = vunpack.c.h.b16 %v294
      %v669 = vunpack.c.l.b16 %v295
      %v670 = vunpack.c.h.b16 %v295
      %v671 = vunpack.c.l.b16 %v296
      %v672 = vunpack.c.h.b16 %v296
      %v673 = vunpack.c.l.b16 %v297
      %v674 = vunpack.c.h.b16 %v297
      %v675 = vunpack.c.l.b16 %v298
      %v676 = vunpack.c.h.b16 %v298
      %v677 = vunpack.c.l.b16 %v299
      %v678 = vunpack.c.h.b16 %v299
      %v679 = vunpack.c.l.b16 %v300
      %v680 = vunpack.c.h.b16 %v300
      %v681 = vunpack.c.l.b16 %v301
      %v682 = vunpack.c.h.b16 %v301
      %v683 = vunpack.c.l.b16 %v302
      %v684 = vunpack.c.h.b16 %v302
      %v685 = vunpack.c.l.b16 %v303
      %v686 = vunpack.c.h.b16 %v303
      %v687 = vunpack.c.l.b16 %v304
      %v688 = vunpack.c.h.b16 %v304
      %v689 = vpack.c.b16 %v435, %v433
      %v690 = vpack.c.b16 %v436, %v434
      %v691 = vpack.c.b16 %v439, %v437
      %v692 = vpack.c.b16 %v440, %v438
      %v693 = vpack.c.b16 %v443, %v441
      %v694 = vpack.c.b16 %v444, %v442
      %v695 = vpack.c.b16 %v447, %v445
      %v696 = vpack.c.b16 %v448, %v446
      %v697 = vpack.c.b16 %v451, %v449
      %v698 = vpack.c.b16 %v452, %v450
      %v699 = vpack.c.b16 %v455, %v453
      %v700 = vpack.c.b16 %v456, %v454
      %v701 = vpack.c.b16 %v459, %v457
      %v702 = vpack.c.b16 %v460, %v458
      %v703 = vpack.c.b16 %v463, %v461
      %v704 = vpack.c.b16 %v464, %v462
      %v705 = vpack.c.b16 %v467, %v465
      %v706 = vpack.c.b16 %v468, %v466
      %v707 = vpack.c.b16 %v471, %v469
      %v708 = vpack.c.b16 %v472, %v470
      %v709 = vpack.c.b16 %v475, %v473
      %v710 = vpack.c.b16 %v476, %v474
      %v711 = vpack.c.b16 %v479, %v477
      %v712 = vpack.c.b16 %v480, %v478
      %v713 = vpack.c.b16 %v483, %v481
      %v714 = vpack.c.b16 %v484, %v482
      %v715 = vpack.c.b16 %v487, %v485
      %v716 = vpack.c.b16 %v488, %v486
      %v717 = vpack.c.b16 %v491, %v489
      %v718 = vpack.c.b16 %v492, %v490
      %v719 = vpack.c.b16 %v495, %v493
      %v720 = vpack.c.b16 %v496, %v494
      %v721 = vpack.c.b16 %v499, %v497
      %v722 = vpack.c.b16 %v500, %v498
      %v723 = vpack.c.b16 %v503, %v501
      %v724 = vpack.c.b16 %v504, %v502
      %v725 = vpack.c.b16 %v507, %v505
      %v726 = vpack.c.b16 %v508, %v506
      %v727 = vpack.c.b16 %v511, %v509
      %v728 = vpack.c.b16 %v512, %v510
      %v729 = vpack.c.b16 %v515, %v513
      %v730 = vpack.c.b16 %v516, %v514
      %v731 = vpack.c.b16 %v519, %v517
      %v732 = vpack.c.b16 %v520, %v518
      %v733 = vpack.c.b16 %v523, %v521
      %v734 = vpack.c.b16 %v524, %v522
      %v735 = vpack.c.b16 %v527, %v525
      %v736 = vpack.c.b16 %v528, %v526
      %v737 = vpack.c.b16 %v531, %v529
      %v738 = vpack.c.b16 %v532, %v530
      %v739 = vpack.c.b16 %v535, %v533
      %v740 = vpack.c.b16 %v536, %v534
      %v741 = vpack.c.b16 %v539, %v537
      %v742 = vpack.c.b16 %v540, %v538
      %v743 = vpack.c.b16 %v543, %v541
      %v744 = vpack.c.b16 %v544, %v542
      %v745 = vpack.c.b16 %v547, %v545
      %v746 = vpack.c.b16 %v548, %v546
      %v747 = vpack.c.b16 %v551, %v549
      %v748 = vpack.c.b16 %v552, %v550
      %v749 = vpack.c.b16 %v555, %v553
      %v750 = vpack.c.b16 %v556, %v554
      %v751 = vpack.c.b16 %v559, %v557
      %v752 = vpack.c.b16 %v560, %v558
      %v753 = vpack.c.b16 %v563, %v561
      %v754 = vpack.c.b16 %v564, %v562
      %v755 = vpack.c.b16 %v567, %v565
      %v756 = vpack.c.b16 %v568, %v566
      %v757 = vpack.c.b16 %v571, %v569
      %v758 = vpack.c.b16 %v572, %v570
      %v759 = vpack.c.b16 %v575, %v573
      %v760 = vpack.c.b16 %v576, %v574
      %v761 = vpack.c.b16 %v579, %v577
      %v762 = vpack.c.b16 %v580, %v578
      %v763 = vpack.c.b16 %v583, %v581
      %v764 = vpack.c.b16 %v584, %v582
      %v765 = vpack.c.b16 %v587, %v585
      %v766 = vpack.c.b16 %v588, %v586
      %v767 = vpack.c.b16 %v591, %v589
      %v768 = vpack.c.b16 %v592, %v590
      %v769 = vpack.c.b16 %v595, %v593
      %v770 = vpack.c.b16 %v596, %v594
      %v771 = vpack.c.b16 %v599, %v597
      %v772 = vpack.c.b16 %v600, %v598
      %v773 = vpack.c.b16 %v603, %v601
      %v774 = vpack.c.b16 %v604, %v602
      %v775 = vpack.c.b16 %v607, %v605
      %v776 = vpack.c.b16 %v608, %v606
      %v777 = vpack.c.b16 %v611, %v609
      %v778 = vpack.c.b16 %v612, %v610
      %v779 = vpack.c.b16 %v615, %v613
      %v780 = vpack.c.b16 %v616, %v614
      %v781 = vpack.c.b16 %v619, %v617
      %v782 = vpack.c.b16 %v620, %v618
      %v783 = vpack.c.b16 %v623, %v621
      %v784 = vpack.c.b16 %v624, %v622
      %v785 = vpack.c.b16 %v627, %v625
      %v786 = vpack.c.b16 %v628, %v626
      %v787 = vpack.c.b16 %v631, %v629
      %v788 = vpack.c.b16 %v632, %v630
      %v789 = vpack.c.b16 %v635, %v633
      %v790 = vpack.c.b16 %v636, %v634
      %v791 = vpack.c.b16 %v639, %v637
      %v792 = vpack.c.b16 %v640, %v638
      %v793 = vpack.c.b16 %v643, %v641
      %v794 = vpack.c.b16 %v644, %v642
      %v795 = vpack.c.b16 %v647, %v645
      %v796 = vpack.c.b16 %v648, %v646
      %v797 = vpack.c.b16 %v651, %v649
      %v798 = vpack.c.b16 %v652, %v650
      %v799 = vpack.c.b16 %v655, %v653
      %v800 = vpack.c.b16 %v656, %v654
      %v801 = vpack.c.b16 %v659, %v657
      %v802 = vpack.c.b16 %v660, %v658
      %v803 = vpack.c.b16 %v663, %v661
      %v804 = vpack.c.b16 %v664, %v662
      %v805 = vpack.c.b16 %v667, %v665
      %v806 = vpack.c.b16 %v668, %v666
      %v807 = vpack.c.b16 %v671, %v669
      %v808 = vpack.c.b16 %v672, %v670
      %v809 = vpack.c.b16 %v675, %v673
      %v810 = vpack.c.b16 %v676, %v674
      %v811 = vpack.c.b16 %v679, %v677
      %v812 = vpack.c.b16 %v680, %v678
      %v813 = vpack.c.b16 %v683, %v681
      %v814 = vpack.c.b16 %v684, %v682
      %v815 = vpack.c.b16 %v687, %v685
      %v816 = vpack.c.b16 %v688, %v686
      %v977 = vunpack.c.l.b16 %v145
      %v978 = vunpack.c.l.b16 %v146
      %v979 = vunpack.c.l.b16 %v147
      %v980 = vunpack.c.l.b16 %v148
      %v981 = vunpack.c.l.b16 %v149
      %v982 = vunpack.c.l.b16 %v150
      %v983 = vunpack.c.l.b16 %v151
      %v984 = vunpack.c.l.b16 %v152
      %v985 = vunpack.c.l.b16 %v153
      %v986 = vunpack.c.l.b16 %v154
      %v987 = vunpack.c.l.b16 %v155
      %v988 = vunpack.c.l.b16 %v156
      %v989 = vunpack.c.l.b16 %v157
      %v990 = vunpack.c.l.b16 %v158
      %v991 = vunpack.c.l.b16 %v159
      %v992 = vunpack.c.l.b16 %v160
      %v993 = vunpack.c.l.b16 %v161
      %v994 = vunpack.c.l.b16 %v162
      %v995 = vunpack.c.l.b16 %v163
      %v996 = vunpack.c.l.b16 %v164
      %v997 = vunpack.c.l.b16 %v165
      %v998 = vunpack.c.l.b16 %v166
      %v999 = vunpack.c.l.b16 %v167
      %v1000 = vunpack.c.l.b16 %v168
      %v1001 = vunpack.c.l.b16 %v169
      %v1002 = vunpack.c.l.b16 %v170
      %v1003 = vunpack.c.l.b16 %v171
      %v1004 = vunpack.c.l.b16 %v172
      %v1005 = vunpack.c.l.b16 %v173
      %v1006 = vunpack.c.l.b16 %v174
      %v1007 = vunpack.c.l.b16 %v175
      %v1008 = vunpack.c.l.b16 %v176
      %v1009 = vpack.c.b16 %v978, %v977
      %v1010 = vpack.c.b16 %v980, %v979
      %v1011 = vpack.c.b16 %v982, %v981
      %v1012 = vpack.c.b16 %v984, %v983
      %v1013 = vpack.c.b16 %v986, %v985
      %v1014 = vpack.c.b16 %v988, %v987
      %v1015 = vpack.c.b16 %v990, %v989
      %v1016 = vpack.c.b16 %v992, %v991
      %v1017 = vpack.c.b16 %v994, %v993
      %v1018 = vpack.c.b16 %v996, %v995
      %v1019 = vpack.c.b16 %v998, %v997
      %v1020 = vpack.c.b16 %v1000, %v999
      %v1021 = vpack.c.b16 %v1002, %v1001
      %v1022 = vpack.c.b16 %v1004, %v1003
      %v1023 = vpack.c.b16 %v1006, %v1005
      %v1024 = vpack.c.b16 %v1008, %v1007
      %1041 = vmatprep.subr.bf16.mxu0 0
      %1042 = vmatpush1.bf16.msra.mxu0 %v1009
      %1043 = vmatprep.subr.bf16.mxu0 0
      %1044 = vmatpush1.bf16.msra.mxu0 %v1010
      %1045 = vmatprep.subr.bf16.mxu0 0
      %1046 = vmatpush1.bf16.msra.mxu0 %v1011
      %1047 = vmatprep.subr.bf16.mxu0 0
      %1048 = vmatpush1.bf16.msra.mxu0 %v1012
      %1049 = vmatprep.subr.bf16.mxu0 0
      %1050 = vmatpush1.bf16.msra.mxu0 %v1013
      %1051 = vmatprep.subr.bf16.mxu0 0
      %1052 = vmatpush1.bf16.msra.mxu0 %v1014
      %1053 = vmatprep.subr.bf16.mxu0 0
      %1054 = vmatpush1.bf16.msra.mxu0 %v1015
      %1055 = vmatprep.subr.bf16.mxu0 0
      %1056 = vmatpush1.bf16.msra.mxu0 %v1016
      %1057 = vmatprep.subr.bf16.mxu0 0
      %1058 = vmatpush1.bf16.msra.mxu0 %v1017
      %1059 = vmatprep.subr.bf16.mxu0 0
      %1060 = vmatpush1.bf16.msra.mxu0 %v1018
      %1061 = vmatprep.subr.bf16.mxu0 0
      %1062 = vmatpush1.bf16.msra.mxu0 %v1019
      %1063 = vmatprep.subr.bf16.mxu0 0
      %1064 = vmatpush1.bf16.msra.mxu0 %v1020
      %1065 = vmatprep.subr.bf16.mxu0 0
      %1066 = vmatpush1.bf16.msra.mxu0 %v1021
      %1067 = vmatprep.subr.bf16.mxu0 0
      %1068 = vmatpush1.bf16.msra.mxu0 %v1022
      %1069 = vmatprep.subr.bf16.mxu0 0
      %1070 = vmatpush1.bf16.msra.mxu0 %v1023
      %1071 = vmatprep.subr.bf16.mxu0 0
      %1072 = vmatpush1.bf16.msra.mxu0 %v1024
      %1073 = vmatprep.mubr.bf16.mxu0 %v690
      %1074 = vmatmul.mubr.bf16.gmra.mrb[0].mxu0 %v689
      %v1075 = vpop.f32.mrb[0].mxu0
      %v1076 = vadd.f32 0.0, %v1075
      %v1077 = vpop.f32.mrb[0].mxu0
      %v1078 = vpop.f32.mrb[0].mxu0
      %v1079 = vadd.f32 0.0, %v1078
      %v1080 = vpop.f32.mrb[0].mxu0
      %1081 = vmatprep.mubr.bf16.mxu0 %v692
      %1082 = vmatmul.mubr.bf16.gmra.mrb[0].mxu0 %v691
      %v1083 = vpop.f32.mrb[0].mxu0
      %v1084 = vadd.f32 0.0, %v1083
      %v1085 = vpop.f32.mrb[0].mxu0
      %v1086 = vpop.f32.mrb[0].mxu0
      %v1087 = vadd.f32 0.0, %v1086
      %v1088 = vpop.f32.mrb[0].mxu0
      %1089 = vmatprep.mubr.bf16.mxu0 %v694
      %1090 = vmatmul.mubr.bf16.gmra.mrb[0].mxu0 %v693
      %v1091 = vpop.f32.mrb[0].mxu0
      %v1092 = vadd.f32 0.0, %v1091
      %v1093 = vpop.f32.mrb[0].mxu0
      %v1094 = vpop.f32.mrb[0].mxu0
      %v1095 = vadd.f32 0.0, %v1094
      %v1096 = vpop.f32.mrb[0].mxu0
      %1097 = vmatprep.mubr.bf16.mxu0 %v696
      %1098 = vmatmul.mubr.bf16.gmra.mrb[0].mxu0 %v695
      %v1099 = vpop.f32.mrb[0].mxu0
      %v1100 = vadd.f32 0.0, %v1099
      %v1101 = vpop.f32.mrb[0].mxu0
      %v1102 = vpop.f32.mrb[0].mxu0
      %v1103 = vadd.f32 0.0, %v1102
      %v1104 = vpop.f32.mrb[0].mxu0
      %1105 = vmatprep.mubr.bf16.mxu0 %v698
      %1106 = vmatmul.mubr.bf16.gmra.mrb[0].mxu0 %v697
      %v1107 = vpop.f32.mrb[0].mxu0
      %v1108 = vadd.f32 0.0, %v1107
      %v1109 = vpop.f32.mrb[0].mxu0
      %v1110 = vpop.f32.mrb[0].mxu0
      %v1111 = vadd.f32 0.0, %v1110
      %v1112 = vpop.f32.mrb[0].mxu0
      %1113 = vmatprep.mubr.bf16.mxu0 %v700
      %1114 = vmatmul.mubr.bf16.gmra.mrb[0].mxu0 %v699
      %v1115 = vpop.f32.mrb[0].mxu0
      %v1116 = vadd.f32 0.0, %v1115
      %v1117 = vpop.f32.mrb[0].mxu0
      %v1118 = vpop.f32.mrb[0].mxu0
      %v1119 = vadd.f32 0.0, %v1118
      %v1120 = vpop.f32.mrb[0].mxu0
      %1121 = vmatprep.mubr.bf16.mxu0 %v702
      %1122 = vmatmul.mubr.bf16.gmra.mrb[0].mxu0 %v701
      %v1123 = vpop.f32.mrb[0].mxu0
      %v1124 = vadd.f32 0.0, %v1123
      %v1125 = vpop.f32.mrb[0].mxu0
      %v1126 = vpop.f32.mrb[0].mxu0
      %v1127 = vadd.f32 0.0, %v1126
      %v1128 = vpop.f32.mrb[0].mxu0
      %1129 = vmatprep.mubr.bf16.mxu0 %v704
      %1130 = vmatmul.mubr.bf16.gmra.mrb[0].mxu0 %v703
      %v1131 = vpop.f32.mrb[0].mxu0
      %v1132 = vadd.f32 0.0, %v1131
      %v1133 = vpop.f32.mrb[0].mxu0
      %v1134 = vpop.f32.mrb[0].mxu0
      %v1135 = vadd.f32 0.0, %v1134
      %v1136 = vpop.f32.mrb[0].mxu0
      %1137 = vmatprep.mubr.bf16.mxu0 %v706
      %1138 = vmatmul.mubr.bf16.gmra.mrb[0].mxu0 %v705
      %v1139 = vpop.f32.mrb[0].mxu0
      %v1140 = vadd.f32 0.0, %v1139
      %v1141 = vpop.f32.mrb[0].mxu0
      %v1142 = vpop.f32.mrb[0].mxu0
      %v1143 = vadd.f32 0.0, %v1142
      %v1144 = vpop.f32.mrb[0].mxu0
      %1145 = vmatprep.mubr.bf16.mxu0 %v708
      %1146 = vmatmul.mubr.bf16.gmra.mrb[0].mxu0 %v707
      %v1147 = vpop.f32.mrb[0].mxu0
      %v1148 = vadd.f32 0.0, %v1147
      %v1149 = vpop.f32.mrb[0].mxu0
      %v1150 = vpop.f32.mrb[0].mxu0
      %v1151 = vadd.f32 0.0, %v1150
      %v1152 = vpop.f32.mrb[0].mxu0
      %1153 = vmatprep.mubr.bf16.mxu0 %v710
      %1154 = vmatmul.mubr.bf16.gmra.mrb[0].mxu0 %v709
      %v1155 = vpop.f32.mrb[0].mxu0
      %v1156 = vadd.f32 0.0, %v1155
      %v1157 = vpop.f32.mrb[0].mxu0
      %v1158 = vpop.f32.mrb[0].mxu0
      %v1159 = vadd.f32 0.0, %v1158
      %v1160 = vpop.f32.mrb[0].mxu0
      %1161 = vmatprep.mubr.bf16.mxu0 %v712
      %1162 = vmatmul.mubr.bf16.gmra.mrb[0].mxu0 %v711
      %v1163 = vpop.f32.mrb[0].mxu0
      %v1164 = vadd.f32 0.0, %v1163
      %v1165 = vpop.f32.mrb[0].mxu0
      %v1166 = vpop.f32.mrb[0].mxu0
      %v1167 = vadd.f32 0.0, %v1166
      %v1168 = vpop.f32.mrb[0].mxu0
      %1169 = vmatprep.mubr.bf16.mxu0 %v714
      %1170 = vmatmul.mubr.bf16.gmra.mrb[0].mxu0 %v713
      %v1171 = vpop.f32.mrb[0].mxu0
      %v1172 = vadd.f32 0.0, %v1171
      %v1173 = vpop.f32.mrb[0].mxu0
      %v1174 = vpop.f32.mrb[0].mxu0
      %v1175 = vadd.f32 0.0, %v1174
      %v1176 = vpop.f32.mrb[0].mxu0
      %1177 = vmatprep.mubr.bf16.mxu0 %v716
      %1178 = vmatmul.mubr.bf16.gmra.mrb[0].mxu0 %v715
      %v1179 = vpop.f32.mrb[0].mxu0
      %v1180 = vadd.f32 0.0, %v1179
      %v1181 = vpop.f32.mrb[0].mxu0
      %v1182 = vpop.f32.mrb[0].mxu0
      %v1183 = vadd.f32 0.0, %v1182
      %v1184 = vpop.f32.mrb[0].mxu0
      %1185 = vmatprep.mubr.bf16.mxu0 %v718
      %1186 = vmatmul.mubr.bf16.gmra.mrb[0].mxu0 %v717
      %v1187 = vpop.f32.mrb[0].mxu0
      %v1188 = vadd.f32 0.0, %v1187
      %v1189 = vpop.f32.mrb[0].mxu0
      %v1190 = vpop.f32.mrb[0].mxu0
      %v1191 = vadd.f32 0.0, %v1190
      %v1192 = vpop.f32.mrb[0].mxu0
      %1193 = vmatprep.mubr.bf16.mxu0 %v720
      %1194 = vmatmul.mubr.bf16.gmra.mrb[0].mxu0 %v719
      %v1195 = vpop.f32.mrb[0].mxu0
      %v1196 = vadd.f32 0.0, %v1195
      %v1197 = vpop.f32.mrb[0].mxu0
      %v1198 = vpop.f32.mrb[0].mxu0
      %v1199 = vadd.f32 0.0, %v1198
      %v1200 = vpop.f32.mrb[0].mxu0
      %1201 = vmatprep.mubr.bf16.mxu0 %v722
      %1202 = vmatmul.mubr.bf16.gmra.mrb[0].mxu0 %v721
      %v1203 = vpop.f32.mrb[0].mxu0
      %v1204 = vadd.f32 0.0, %v1203
      %v1205 = vpop.f32.mrb[0].mxu0
      %v1206 = vpop.f32.mrb[0].mxu0
      %v1207 = vadd.f32 0.0, %v1206
      %v1208 = vpop.f32.mrb[0].mxu0
      %1209 = vmatprep.mubr.bf16.mxu0 %v724
      %1210 = vmatmul.mubr.bf16.gmra.mrb[0].mxu0 %v723
      %v1211 = vpop.f32.mrb[0].mxu0
      %v1212 = vadd.f32 0.0, %v1211
      %v1213 = vpop.f32.mrb[0].mxu0
      %v1214 = vpop.f32.mrb[0].mxu0
      %v1215 = vadd.f32 0.0, %v1214
      %v1216 = vpop.f32.mrb[0].mxu0
      %1217 = vmatprep.mubr.bf16.mxu0 %v726
      %1218 = vmatmul.mubr.bf16.gmra.mrb[0].mxu0 %v725
      %v1219 = vpop.f32.mrb[0].mxu0
      %v1220 = vadd.f32 0.0, %v1219
      %v1221 = vpop.f32.mrb[0].mxu0
      %v1222 = vpop.f32.mrb[0].mxu0
      %v1223 = vadd.f32 0.0, %v1222
      %v1224 = vpop.f32.mrb[0].mxu0
      %1225 = vmatprep.mubr.bf16.mxu0 %v728
      %1226 = vmatmul.mubr.bf16.gmra.mrb[0].mxu0 %v727
      %v1227 = vpop.f32.mrb[0].mxu0
      %v1228 = vadd.f32 0.0, %v1227
      %v1229 = vpop.f32.mrb[0].mxu0
      %v1230 = vpop.f32.mrb[0].mxu0
      %v1231 = vadd.f32 0.0, %v1230
      %v1232 = vpop.f32.mrb[0].mxu0
      %1233 = vmatprep.mubr.bf16.mxu0 %v730
      %1234 = vmatmul.mubr.bf16.gmra.mrb[0].mxu0 %v729
      %v1235 = vpop.f32.mrb[0].mxu0
      %v1236 = vadd.f32 0.0, %v1235
      %v1237 = vpop.f32.mrb[0].mxu0
      %v1238 = vpop.f32.mrb[0].mxu0
      %v1239 = vadd.f32 0.0, %v1238
      %v1240 = vpop.f32.mrb[0].mxu0
      %1241 = vmatprep.mubr.bf16.mxu0 %v732
      %1242 = vmatmul.mubr.bf16.gmra.mrb[0].mxu0 %v731
      %v1243 = vpop.f32.mrb[0].mxu0
      %v1244 = vadd.f32 0.0, %v1243
      %v1245 = vpop.f32.mrb[0].mxu0
      %v1246 = vpop.f32.mrb[0].mxu0
      %v1247 = vadd.f32 0.0, %v1246
      %v1248 = vpop.f32.mrb[0].mxu0
      %1249 = vmatprep.mubr.bf16.mxu0 %v734
      %1250 = vmatmul.mubr.bf16.gmra.mrb[0].mxu0 %v733
      %v1251 = vpop.f32.mrb[0].mxu0
      %v1252 = vadd.f32 0.0, %v1251
      %v1253 = vpop.f32.mrb[0].mxu0
      %v1254 = vpop.f32.mrb[0].mxu0
      %v1255 = vadd.f32 0.0, %v1254
      %v1256 = vpop.f32.mrb[0].mxu0
      %1257 = vmatprep.mubr.bf16.mxu0 %v736
      %1258 = vmatmul.mubr.bf16.gmra.mrb[0].mxu0 %v735
      %v1259 = vpop.f32.mrb[0].mxu0
      %v1260 = vadd.f32 0.0, %v1259
      %v1261 = vpop.f32.mrb[0].mxu0
      %v1262 = vpop.f32.mrb[0].mxu0
      %v1263 = vadd.f32 0.0, %v1262
      %v1264 = vpop.f32.mrb[0].mxu0
      %1265 = vmatprep.mubr.bf16.mxu0 %v738
      %1266 = vmatmul.mubr.bf16.gmra.mrb[0].mxu0 %v737
      %v1267 = vpop.f32.mrb[0].mxu0
      %v1268 = vadd.f32 0.0, %v1267
      %v1269 = vpop.f32.mrb[0].mxu0
      %v1270 = vpop.f32.mrb[0].mxu0
      %v1271 = vadd.f32 0.0, %v1270
      %v1272 = vpop.f32.mrb[0].mxu0
      %1273 = vmatprep.mubr.bf16.mxu0 %v740
      %1274 = vmatmul.mubr.bf16.gmra.mrb[0].mxu0 %v739
      %v1275 = vpop.f32.mrb[0].mxu0
      %v1276 = vadd.f32 0.0, %v1275
      %v1277 = vpop.f32.mrb[0].mxu0
      %v1278 = vpop.f32.mrb[0].mxu0
      %v1279 = vadd.f32 0.0, %v1278
      %v1280 = vpop.f32.mrb[0].mxu0
      %1281 = vmatprep.mubr.bf16.mxu0 %v742
      %1282 = vmatmul.mubr.bf16.gmra.mrb[0].mxu0 %v741
      %v1283 = vpop.f32.mrb[0].mxu0
      %v1284 = vadd.f32 0.0, %v1283
      %v1285 = vpop.f32.mrb[0].mxu0
      %v1286 = vpop.f32.mrb[0].mxu0
      %v1287 = vadd.f32 0.0, %v1286
      %v1288 = vpop.f32.mrb[0].mxu0
      %1289 = vmatprep.mubr.bf16.mxu0 %v744
      %1290 = vmatmul.mubr.bf16.gmra.mrb[0].mxu0 %v743
      %v1291 = vpop.f32.mrb[0].mxu0
      %v1292 = vadd.f32 0.0, %v1291
      %v1293 = vpop.f32.mrb[0].mxu0
      %v1294 = vpop.f32.mrb[0].mxu0
      %v1295 = vadd.f32 0.0, %v1294
      %v1296 = vpop.f32.mrb[0].mxu0
      %1297 = vmatprep.mubr.bf16.mxu0 %v746
      %1298 = vmatmul.mubr.bf16.gmra.mrb[0].mxu0 %v745
      %v1299 = vpop.f32.mrb[0].mxu0
      %v1300 = vadd.f32 0.0, %v1299
      %v1301 = vpop.f32.mrb[0].mxu0
      %v1302 = vpop.f32.mrb[0].mxu0
      %v1303 = vadd.f32 0.0, %v1302
      %v1304 = vpop.f32.mrb[0].mxu0
      %1305 = vmatprep.mubr.bf16.mxu0 %v748
      %1306 = vmatmul.mubr.bf16.gmra.mrb[0].mxu0 %v747
      %v1307 = vpop.f32.mrb[0].mxu0
      %v1308 = vadd.f32 0.0, %v1307
      %v1309 = vpop.f32.mrb[0].mxu0
      %v1310 = vpop.f32.mrb[0].mxu0
      %v1311 = vadd.f32 0.0, %v1310
      %v1312 = vpop.f32.mrb[0].mxu0
      %1313 = vmatprep.mubr.bf16.mxu0 %v750
      %1314 = vmatmul.mubr.bf16.gmra.mrb[0].mxu0 %v749
      %v1315 = vpop.f32.mrb[0].mxu0
      %v1316 = vadd.f32 0.0, %v1315
      %v1317 = vpop.f32.mrb[0].mxu0
      %v1318 = vpop.f32.mrb[0].mxu0
      %v1319 = vadd.f32 0.0, %v1318
      %v1320 = vpop.f32.mrb[0].mxu0
      %1321 = vmatprep.mubr.bf16.mxu0 %v752
      %1322 = vmatmul.mubr.bf16.gmra.mrb[0].mxu0 %v751
      %v1323 = vpop.f32.mrb[0].mxu0
      %v1324 = vadd.f32 0.0, %v1323
      %v1325 = vpop.f32.mrb[0].mxu0
      %v1326 = vpop.f32.mrb[0].mxu0
      %v1327 = vadd.f32 0.0, %v1326
      %v1328 = vpop.f32.mrb[0].mxu0
      %1329 = vmatprep.mubr.bf16.mxu0 %v754
      %1330 = vmatmul.mubr.bf16.gmra.mrb[0].mxu0 %v753
      %v1331 = vpop.f32.mrb[0].mxu0
      %v1332 = vadd.f32 0.0, %v1331
      %v1333 = vpop.f32.mrb[0].mxu0
      %v1334 = vpop.f32.mrb[0].mxu0
      %v1335 = vadd.f32 0.0, %v1334
      %v1336 = vpop.f32.mrb[0].mxu0
      %1337 = vmatprep.mubr.bf16.mxu0 %v756
      %1338 = vmatmul.mubr.bf16.gmra.mrb[0].mxu0 %v755
      %v1339 = vpop.f32.mrb[0].mxu0
      %v1340 = vadd.f32 0.0, %v1339
      %v1341 = vpop.f32.mrb[0].mxu0
      %v1342 = vpop.f32.mrb[0].mxu0
      %v1343 = vadd.f32 0.0, %v1342
      %v1344 = vpop.f32.mrb[0].mxu0
      %1345 = vmatprep.mubr.bf16.mxu0 %v758
      %1346 = vmatmul.mubr.bf16.gmra.mrb[0].mxu0 %v757
      %v1347 = vpop.f32.mrb[0].mxu0
      %v1348 = vadd.f32 0.0, %v1347
      %v1349 = vpop.f32.mrb[0].mxu0
      %v1350 = vpop.f32.mrb[0].mxu0
      %v1351 = vadd.f32 0.0, %v1350
      %v1352 = vpop.f32.mrb[0].mxu0
      %1353 = vmatprep.mubr.bf16.mxu0 %v760
      %1354 = vmatmul.mubr.bf16.gmra.mrb[0].mxu0 %v759
      %v1355 = vpop.f32.mrb[0].mxu0
      %v1356 = vadd.f32 0.0, %v1355
      %v1357 = vpop.f32.mrb[0].mxu0
      %v1358 = vpop.f32.mrb[0].mxu0
      %v1359 = vadd.f32 0.0, %v1358
      %v1360 = vpop.f32.mrb[0].mxu0
      %1361 = vmatprep.mubr.bf16.mxu0 %v762
      %1362 = vmatmul.mubr.bf16.gmra.mrb[0].mxu0 %v761
      %v1363 = vpop.f32.mrb[0].mxu0
      %v1364 = vadd.f32 0.0, %v1363
      %v1365 = vpop.f32.mrb[0].mxu0
      %v1366 = vpop.f32.mrb[0].mxu0
      %v1367 = vadd.f32 0.0, %v1366
      %v1368 = vpop.f32.mrb[0].mxu0
      %1369 = vmatprep.mubr.bf16.mxu0 %v764
      %1370 = vmatmul.mubr.bf16.gmra.mrb[0].mxu0 %v763
      %v1371 = vpop.f32.mrb[0].mxu0
      %v1372 = vadd.f32 0.0, %v1371
      %v1373 = vpop.f32.mrb[0].mxu0
      %v1374 = vpop.f32.mrb[0].mxu0
      %v1375 = vadd.f32 0.0, %v1374
      %v1376 = vpop.f32.mrb[0].mxu0
      %1377 = vmatprep.mubr.bf16.mxu0 %v766
      %1378 = vmatmul.mubr.bf16.gmra.mrb[0].mxu0 %v765
      %v1379 = vpop.f32.mrb[0].mxu0
      %v1380 = vadd.f32 0.0, %v1379
      %v1381 = vpop.f32.mrb[0].mxu0
      %v1382 = vpop.f32.mrb[0].mxu0
      %v1383 = vadd.f32 0.0, %v1382
      %v1384 = vpop.f32.mrb[0].mxu0
      %1385 = vmatprep.mubr.bf16.mxu0 %v768
      %1386 = vmatmul.mubr.bf16.gmra.mrb[0].mxu0 %v767
      %v1387 = vpop.f32.mrb[0].mxu0
      %v1388 = vadd.f32 0.0, %v1387
      %v1389 = vpop.f32.mrb[0].mxu0
      %v1390 = vpop.f32.mrb[0].mxu0
      %v1391 = vadd.f32 0.0, %v1390
      %v1392 = vpop.f32.mrb[0].mxu0
      %1393 = vmatprep.mubr.bf16.mxu0 %v770
      %1394 = vmatmul.mubr.bf16.gmra.mrb[0].mxu0 %v769
      %v1395 = vpop.f32.mrb[0].mxu0
      %v1396 = vadd.f32 0.0, %v1395
      %v1397 = vpop.f32.mrb[0].mxu0
      %v1398 = vpop.f32.mrb[0].mxu0
      %v1399 = vadd.f32 0.0, %v1398
      %v1400 = vpop.f32.mrb[0].mxu0
      %1401 = vmatprep.mubr.bf16.mxu0 %v772
      %1402 = vmatmul.mubr.bf16.gmra.mrb[0].mxu0 %v771
      %v1403 = vpop.f32.mrb[0].mxu0
      %v1404 = vadd.f32 0.0, %v1403
      %v1405 = vpop.f32.mrb[0].mxu0
      %v1406 = vpop.f32.mrb[0].mxu0
      %v1407 = vadd.f32 0.0, %v1406
      %v1408 = vpop.f32.mrb[0].mxu0
      %1409 = vmatprep.mubr.bf16.mxu0 %v774
      %1410 = vmatmul.mubr.bf16.gmra.mrb[0].mxu0 %v773
      %v1411 = vpop.f32.mrb[0].mxu0
      %v1412 = vadd.f32 0.0, %v1411
      %v1413 = vpop.f32.mrb[0].mxu0
      %v1414 = vpop.f32.mrb[0].mxu0
      %v1415 = vadd.f32 0.0, %v1414
      %v1416 = vpop.f32.mrb[0].mxu0
      %1417 = vmatprep.mubr.bf16.mxu0 %v776
      %1418 = vmatmul.mubr.bf16.gmra.mrb[0].mxu0 %v775
      %v1419 = vpop.f32.mrb[0].mxu0
      %v1420 = vadd.f32 0.0, %v1419
      %v1421 = vpop.f32.mrb[0].mxu0
      %v1422 = vpop.f32.mrb[0].mxu0
      %v1423 = vadd.f32 0.0, %v1422
      %v1424 = vpop.f32.mrb[0].mxu0
      %1425 = vmatprep.mubr.bf16.mxu0 %v778
      %1426 = vmatmul.mubr.bf16.gmra.mrb[0].mxu0 %v777
      %v1427 = vpop.f32.mrb[0].mxu0
      %v1428 = vadd.f32 0.0, %v1427
      %v1429 = vpop.f32.mrb[0].mxu0
      %v1430 = vpop.f32.mrb[0].mxu0
      %v1431 = vadd.f32 0.0, %v1430
      %v1432 = vpop.f32.mrb[0].mxu0
      %1433 = vmatprep.mubr.bf16.mxu0 %v780
      %1434 = vmatmul.mubr.bf16.gmra.mrb[0].mxu0 %v779
      %v1435 = vpop.f32.mrb[0].mxu0
      %v1436 = vadd.f32 0.0, %v1435
      %v1437 = vpop.f32.mrb[0].mxu0
      %v1438 = vpop.f32.mrb[0].mxu0
      %v1439 = vadd.f32 0.0, %v1438
      %v1440 = vpop.f32.mrb[0].mxu0
      %1441 = vmatprep.mubr.bf16.mxu0 %v782
      %1442 = vmatmul.mubr.bf16.gmra.mrb[0].mxu0 %v781
      %v1443 = vpop.f32.mrb[0].mxu0
      %v1444 = vadd.f32 0.0, %v1443
      %v1445 = vpop.f32.mrb[0].mxu0
      %v1446 = vpop.f32.mrb[0].mxu0
      %v1447 = vadd.f32 0.0, %v1446
      %v1448 = vpop.f32.mrb[0].mxu0
      %1449 = vmatprep.mubr.bf16.mxu0 %v784
      %1450 = vmatmul.mubr.bf16.gmra.mrb[0].mxu0 %v783
      %v1451 = vpop.f32.mrb[0].mxu0
      %v1452 = vadd.f32 0.0, %v1451
      %v1453 = vpop.f32.mrb[0].mxu0
      %v1454 = vpop.f32.mrb[0].mxu0
      %v1455 = vadd.f32 0.0, %v1454
      %v1456 = vpop.f32.mrb[0].mxu0
      %1457 = vmatprep.mubr.bf16.mxu0 %v786
      %1458 = vmatmul.mubr.bf16.gmra.mrb[0].mxu0 %v785
      %v1459 = vpop.f32.mrb[0].mxu0
      %v1460 = vadd.f32 0.0, %v1459
      %v1461 = vpop.f32.mrb[0].mxu0
      %v1462 = vpop.f32.mrb[0].mxu0
      %v1463 = vadd.f32 0.0, %v1462
      %v1464 = vpop.f32.mrb[0].mxu0
      %1465 = vmatprep.mubr.bf16.mxu0 %v788
      %1466 = vmatmul.mubr.bf16.gmra.mrb[0].mxu0 %v787
      %v1467 = vpop.f32.mrb[0].mxu0
      %v1468 = vadd.f32 0.0, %v1467
      %v1469 = vpop.f32.mrb[0].mxu0
      %v1470 = vpop.f32.mrb[0].mxu0
      %v1471 = vadd.f32 0.0, %v1470
      %v1472 = vpop.f32.mrb[0].mxu0
      %1473 = vmatprep.mubr.bf16.mxu0 %v790
      %1474 = vmatmul.mubr.bf16.gmra.mrb[0].mxu0 %v789
      %v1475 = vpop.f32.mrb[0].mxu0
      %v1476 = vadd.f32 0.0, %v1475
      %v1477 = vpop.f32.mrb[0].mxu0
      %v1478 = vpop.f32.mrb[0].mxu0
      %v1479 = vadd.f32 0.0, %v1478
      %v1480 = vpop.f32.mrb[0].mxu0
      %1481 = vmatprep.mubr.bf16.mxu0 %v792
      %1482 = vmatmul.mubr.bf16.gmra.mrb[0].mxu0 %v791
      %v1483 = vpop.f32.mrb[0].mxu0
      %v1484 = vadd.f32 0.0, %v1483
      %v1485 = vpop.f32.mrb[0].mxu0
      %v1486 = vpop.f32.mrb[0].mxu0
      %v1487 = vadd.f32 0.0, %v1486
      %v1488 = vpop.f32.mrb[0].mxu0
      %1489 = vmatprep.mubr.bf16.mxu0 %v794
      %1490 = vmatmul.mubr.bf16.gmra.mrb[0].mxu0 %v793
      %v1491 = vpop.f32.mrb[0].mxu0
      %v1492 = vadd.f32 0.0, %v1491
      %v1493 = vpop.f32.mrb[0].mxu0
      %v1494 = vpop.f32.mrb[0].mxu0
      %v1495 = vadd.f32 0.0, %v1494
      %v1496 = vpop.f32.mrb[0].mxu0
      %1497 = vmatprep.mubr.bf16.mxu0 %v796
      %1498 = vmatmul.mubr.bf16.gmra.mrb[0].mxu0 %v795
      %v1499 = vpop.f32.mrb[0].mxu0
      %v1500 = vadd.f32 0.0, %v1499
      %v1501 = vpop.f32.mrb[0].mxu0
      %v1502 = vpop.f32.mrb[0].mxu0
      %v1503 = vadd.f32 0.0, %v1502
      %v1504 = vpop.f32.mrb[0].mxu0
      %1505 = vmatprep.mubr.bf16.mxu0 %v798
      %1506 = vmatmul.mubr.bf16.gmra.mrb[0].mxu0 %v797
      %v1507 = vpop.f32.mrb[0].mxu0
      %v1508 = vadd.f32 0.0, %v1507
      %v1509 = vpop.f32.mrb[0].mxu0
      %v1510 = vpop.f32.mrb[0].mxu0
      %v1511 = vadd.f32 0.0, %v1510
      %v1512 = vpop.f32.mrb[0].mxu0
      %1513 = vmatprep.mubr.bf16.mxu0 %v800
      %1514 = vmatmul.mubr.bf16.gmra.mrb[0].mxu0 %v799
      %v1515 = vpop.f32.mrb[0].mxu0
      %v1516 = vadd.f32 0.0, %v1515
      %v1517 = vpop.f32.mrb[0].mxu0
      %v1518 = vpop.f32.mrb[0].mxu0
      %v1519 = vadd.f32 0.0, %v1518
      %v1520 = vpop.f32.mrb[0].mxu0
      %1521 = vmatprep.mubr.bf16.mxu0 %v802
      %1522 = vmatmul.mubr.bf16.gmra.mrb[0].mxu0 %v801
      %v1523 = vpop.f32.mrb[0].mxu0
      %v1524 = vadd.f32 0.0, %v1523
      %v1525 = vpop.f32.mrb[0].mxu0
      %v1526 = vpop.f32.mrb[0].mxu0
      %v1527 = vadd.f32 0.0, %v1526
      %v1528 = vpop.f32.mrb[0].mxu0
      %1529 = vmatprep.mubr.bf16.mxu0 %v804
      %1530 = vmatmul.mubr.bf16.gmra.mrb[0].mxu0 %v803
      %v1531 = vpop.f32.mrb[0].mxu0
      %v1532 = vadd.f32 0.0, %v1531
      %v1533 = vpop.f32.mrb[0].mxu0
      %v1534 = vpop.f32.mrb[0].mxu0
      %v1535 = vadd.f32 0.0, %v1534
      %v1536 = vpop.f32.mrb[0].mxu0
      %1537 = vmatprep.mubr.bf16.mxu0 %v806
      %1538 = vmatmul.mubr.bf16.gmra.mrb[0].mxu0 %v805
      %v1539 = vpop.f32.mrb[0].mxu0
      %v1540 = vadd.f32 0.0, %v1539
      %v1541 = vpop.f32.mrb[0].mxu0
      %v1542 = vpop.f32.mrb[0].mxu0
      %v1543 = vadd.f32 0.0, %v1542
      %v1544 = vpop.f32.mrb[0].mxu0
      %1545 = vmatprep.mubr.bf16.mxu0 %v808
      %1546 = vmatmul.mubr.bf16.gmra.mrb[0].mxu0 %v807
      %v1547 = vpop.f32.mrb[0].mxu0
      %v1548 = vadd.f32 0.0, %v1547
      %v1549 = vpop.f32.mrb[0].mxu0
      %v1550 = vpop.f32.mrb[0].mxu0
      %v1551 = vadd.f32 0.0, %v1550
      %v1552 = vpop.f32.mrb[0].mxu0
      %1553 = vmatprep.mubr.bf16.mxu0 %v810
      %1554 = vmatmul.mubr.bf16.gmra.mrb[0].mxu0 %v809
      %v1555 = vpop.f32.mrb[0].mxu0
      %v1556 = vadd.f32 0.0, %v1555
      %v1557 = vpop.f32.mrb[0].mxu0
      %v1558 = vpop.f32.mrb[0].mxu0
      %v1559 = vadd.f32 0.0, %v1558
      %v1560 = vpop.f32.mrb[0].mxu0
      %1561 = vmatprep.mubr.bf16.mxu0 %v812
      %1562 = vmatmul.mubr.bf16.gmra.mrb[0].mxu0 %v811
      %v1563 = vpop.f32.mrb[0].mxu0
      %v1564 = vadd.f32 0.0, %v1563
      %v1565 = vpop.f32.mrb[0].mxu0
      %v1566 = vpop.f32.mrb[0].mxu0
      %v1567 = vadd.f32 0.0, %v1566
      %v1568 = vpop.f32.mrb[0].mxu0
      %1569 = vmatprep.mubr.bf16.mxu0 %v814
      %1570 = vmatmul.mubr.bf16.gmra.mrb[0].mxu0 %v813
      %v1571 = vpop.f32.mrb[0].mxu0
      %v1572 = vadd.f32 0.0, %v1571
      %v1573 = vpop.f32.mrb[0].mxu0
      %v1574 = vpop.f32.mrb[0].mxu0
      %v1575 = vadd.f32 0.0, %v1574
      %v1576 = vpop.f32.mrb[0].mxu0
      %1577 = vmatprep.mubr.bf16.mxu0 %v816
      %1578 = vmatmul.mubr.bf16.gmra.mrb[0].mxu0 %v815
      %v1579 = vpop.f32.mrb[0].mxu0
      %v1580 = vadd.f32 0.0, %v1579
      %v1581 = vpop.f32.mrb[0].mxu0
      %v1582 = vpop.f32.mrb[0].mxu0
      %v1583 = vadd.f32 0.0, %v1582
      %v1584 = vpop.f32.mrb[0].mxu0
      %1585 = vdwg.mxu0
      %v1586 = vpack.c.bf16 %v1079, %v1076
      %v1587 = vpack.c.bf16 %v1087, %v1084
      %v1588 = vpack.c.bf16 %v1095, %v1092
      %v1589 = vpack.c.bf16 %v1103, %v1100
      %v1590 = vpack.c.bf16 %v1111, %v1108
      %v1591 = vpack.c.bf16 %v1119, %v1116
      %v1592 = vpack.c.bf16 %v1127, %v1124
      %v1593 = vpack.c.bf16 %v1135, %v1132
      %v1594 = vpack.c.bf16 %v1143, %v1140
      %v1595 = vpack.c.bf16 %v1151, %v1148
      %v1596 = vpack.c.bf16 %v1159, %v1156
      %v1597 = vpack.c.bf16 %v1167, %v1164
      %v1598 = vpack.c.bf16 %v1175, %v1172
      %v1599 = vpack.c.bf16 %v1183, %v1180
      %v1600 = vpack.c.bf16 %v1191, %v1188
      %v1601 = vpack.c.bf16 %v1199, %v1196
      %v1602 = vpack.c.bf16 %v1207, %v1204
      %v1603 = vpack.c.bf16 %v1215, %v1212
      %v1604 = vpack.c.bf16 %v1223, %v1220
      %v1605 = vpack.c.bf16 %v1231, %v1228
      %v1606 = vpack.c.bf16 %v1239, %v1236
      %v1607 = vpack.c.bf16 %v1247, %v1244
      %v1608 = vpack.c.bf16 %v1255, %v1252
      %v1609 = vpack.c.bf16 %v1263, %v1260
      %v1610 = vpack.c.bf16 %v1271, %v1268
      %v1611 = vpack.c.bf16 %v1279, %v1276
      %v1612 = vpack.c.bf16 %v1287, %v1284
      %v1613 = vpack.c.bf16 %v1295, %v1292
      %v1614 = vpack.c.bf16 %v1303, %v1300
      %v1615 = vpack.c.bf16 %v1311, %v1308
      %v1616 = vpack.c.bf16 %v1319, %v1316
      %v1617 = vpack.c.bf16 %v1327, %v1324
      %v1618 = vpack.c.bf16 %v1335, %v1332
      %v1619 = vpack.c.bf16 %v1343, %v1340
      %v1620 = vpack.c.bf16 %v1351, %v1348
      %v1621 = vpack.c.bf16 %v1359, %v1356
      %v1622 = vpack.c.bf16 %v1367, %v1364
      %v1623 = vpack.c.bf16 %v1375, %v1372
      %v1624 = vpack.c.bf16 %v1383, %v1380
      %v1625 = vpack.c.bf16 %v1391, %v1388
      %v1626 = vpack.c.bf16 %v1399, %v1396
      %v1627 = vpack.c.bf16 %v1407, %v1404
      %v1628 = vpack.c.bf16 %v1415, %v1412
      %v1629 = vpack.c.bf16 %v1423, %v1420
      %v1630 = vpack.c.bf16 %v1431, %v1428
      %v1631 = vpack.c.bf16 %v1439, %v1436
      %v1632 = vpack.c.bf16 %v1447, %v1444
      %v1633 = vpack.c.bf16 %v1455, %v1452
      %v1634 = vpack.c.bf16 %v1463, %v1460
      %v1635 = vpack.c.bf16 %v1471, %v1468
      %v1636 = vpack.c.bf16 %v1479, %v1476
      %v1637 = vpack.c.bf16 %v1487, %v1484
      %v1638 = vpack.c.bf16 %v1495, %v1492
      %v1639 = vpack.c.bf16 %v1503, %v1500
      %v1640 = vpack.c.bf16 %v1511, %v1508
      %v1641 = vpack.c.bf16 %v1519, %v1516
      %v1642 = vpack.c.bf16 %v1527, %v1524
      %v1643 = vpack.c.bf16 %v1535, %v1532
      %v1644 = vpack.c.bf16 %v1543, %v1540
      %v1645 = vpack.c.bf16 %v1551, %v1548
      %v1646 = vpack.c.bf16 %v1559, %v1556
      %v1647 = vpack.c.bf16 %v1567, %v1564
      %v1648 = vpack.c.bf16 %v1575, %v1572
      %v1649 = vpack.c.bf16 %v1583, %v1580
      %v1714 = vunpack.c.l.b16 %v1586
      %v1715 = vunpack.c.h.b16 %v1586
      %v1716 = vunpack.c.l.b16 %v1587
      %v1717 = vunpack.c.h.b16 %v1587
      %v1718 = vunpack.c.l.b16 %v1588
      %v1719 = vunpack.c.h.b16 %v1588
      %v1720 = vunpack.c.l.b16 %v1589
      %v1721 = vunpack.c.h.b16 %v1589
      %v1722 = vunpack.c.l.b16 %v1590
      %v1723 = vunpack.c.h.b16 %v1590
      %v1724 = vunpack.c.l.b16 %v1591
      %v1725 = vunpack.c.h.b16 %v1591
      %v1726 = vunpack.c.l.b16 %v1592
      %v1727 = vunpack.c.h.b16 %v1592
      %v1728 = vunpack.c.l.b16 %v1593
      %v1729 = vunpack.c.h.b16 %v1593
      %v1730 = vunpack.c.l.b16 %v1594
      %v1731 = vunpack.c.h.b16 %v1594
      %v1732 = vunpack.c.l.b16 %v1595
      %v1733 = vunpack.c.h.b16 %v1595
      %v1734 = vunpack.c.l.b16 %v1596
      %v1735 = vunpack.c.h.b16 %v1596
      %v1736 = vunpack.c.l.b16 %v1597
      %v1737 = vunpack.c.h.b16 %v1597
      %v1738 = vunpack.c.l.b16 %v1598
      %v1739 = vunpack.c.h.b16 %v1598
      %v1740 = vunpack.c.l.b16 %v1599
      %v1741 = vunpack.c.h.b16 %v1599
      %v1742 = vunpack.c.l.b16 %v1600
      %v1743 = vunpack.c.h.b16 %v1600
      %v1744 = vunpack.c.l.b16 %v1601
      %v1745 = vunpack.c.h.b16 %v1601
      %v1746 = vunpack.c.l.b16 %v1602
      %v1747 = vunpack.c.h.b16 %v1602
      %v1748 = vunpack.c.l.b16 %v1603
      %v1749 = vunpack.c.h.b16 %v1603
      %v1750 = vunpack.c.l.b16 %v1604
      %v1751 = vunpack.c.h.b16 %v1604
      %v1752 = vunpack.c.l.b16 %v1605
      %v1753 = vunpack.c.h.b16 %v1605
      %v1754 = vunpack.c.l.b16 %v1606
      %v1755 = vunpack.c.h.b16 %v1606
      %v1756 = vunpack.c.l.b16 %v1607
      %v1757 = vunpack.c.h.b16 %v1607
      %v1758 = vunpack.c.l.b16 %v1608
      %v1759 = vunpack.c.h.b16 %v1608
      %v1760 = vunpack.c.l.b16 %v1609
      %v1761 = vunpack.c.h.b16 %v1609
      %v1762 = vunpack.c.l.b16 %v1610
      %v1763 = vunpack.c.h.b16 %v1610
      %v1764 = vunpack.c.l.b16 %v1611
      %v1765 = vunpack.c.h.b16 %v1611
      %v1766 = vunpack.c.l.b16 %v1612
      %v1767 = vunpack.c.h.b16 %v1612
      %v1768 = vunpack.c.l.b16 %v1613
      %v1769 = vunpack.c.h.b16 %v1613
      %v1770 = vunpack.c.l.b16 %v1614
      %v1771 = vunpack.c.h.b16 %v1614
      %v1772 = vunpack.c.l.b16 %v1615
      %v1773 = vunpack.c.h.b16 %v1615
      %v1774 = vunpack.c.l.b16 %v1616
      %v1775 = vunpack.c.h.b16 %v1616
      %v1776 = vunpack.c.l.b16 %v1617
      %v1777 = vunpack.c.h.b16 %v1617
      %v1778 = vunpack.c.l.b16 %v1618
      %v1779 = vunpack.c.h.b16 %v1618
      %v1780 = vunpack.c.l.b16 %v1619
      %v1781 = vunpack.c.h.b16 %v1619
      %v1782 = vunpack.c.l.b16 %v1620
      %v1783 = vunpack.c.h.b16 %v1620
      %v1784 = vunpack.c.l.b16 %v1621
      %v1785 = vunpack.c.h.b16 %v1621
      %v1786 = vunpack.c.l.b16 %v1622
      %v1787 = vunpack.c.h.b16 %v1622
      %v1788 = vunpack.c.l.b16 %v1623
      %v1789 = vunpack.c.h.b16 %v1623
      %v1790 = vunpack.c.l.b16 %v1624
      %v1791 = vunpack.c.h.b16 %v1624
      %v1792 = vunpack.c.l.b16 %v1625
      %v1793 = vunpack.c.h.b16 %v1625
      %v1794 = vunpack.c.l.b16 %v1626
      %v1795 = vunpack.c.h.b16 %v1626
      %v1796 = vunpack.c.l.b16 %v1627
      %v1797 = vunpack.c.h.b16 %v1627
      %v1798 = vunpack.c.l.b16 %v1628
      %v1799 = vunpack.c.h.b16 %v1628
      %v1800 = vunpack.c.l.b16 %v1629
      %v1801 = vunpack.c.h.b16 %v1629
      %v1802 = vunpack.c.l.b16 %v1630
      %v1803 = vunpack.c.h.b16 %v1630
      %v1804 = vunpack.c.l.b16 %v1631
      %v1805 = vunpack.c.h.b16 %v1631
      %v1806 = vunpack.c.l.b16 %v1632
      %v1807 = vunpack.c.h.b16 %v1632
      %v1808 = vunpack.c.l.b16 %v1633
      %v1809 = vunpack.c.h.b16 %v1633
      %v1810 = vunpack.c.l.b16 %v1634
      %v1811 = vunpack.c.h.b16 %v1634
      %v1812 = vunpack.c.l.b16 %v1635
      %v1813 = vunpack.c.h.b16 %v1635
      %v1814 = vunpack.c.l.b16 %v1636
      %v1815 = vunpack.c.h.b16 %v1636
      %v1816 = vunpack.c.l.b16 %v1637
      %v1817 = vunpack.c.h.b16 %v1637
      %v1818 = vunpack.c.l.b16 %v1638
      %v1819 = vunpack.c.h.b16 %v1638
      %v1820 = vunpack.c.l.b16 %v1639
      %v1821 = vunpack.c.h.b16 %v1639
      %v1822 = vunpack.c.l.b16 %v1640
      %v1823 = vunpack.c.h.b16 %v1640
      %v1824 = vunpack.c.l.b16 %v1641
      %v1825 = vunpack.c.h.b16 %v1641
      %v1826 = vunpack.c.l.b16 %v1642
      %v1827 = vunpack.c.h.b16 %v1642
      %v1828 = vunpack.c.l.b16 %v1643
      %v1829 = vunpack.c.h.b16 %v1643
      %v1830 = vunpack.c.l.b16 %v1644
      %v1831 = vunpack.c.h.b16 %v1644
      %v1832 = vunpack.c.l.b16 %v1645
      %v1833 = vunpack.c.h.b16 %v1645
      %v1834 = vunpack.c.l.b16 %v1646
      %v1835 = vunpack.c.h.b16 %v1646
      %v1836 = vunpack.c.l.b16 %v1647
      %v1837 = vunpack.c.h.b16 %v1647
      %v1838 = vunpack.c.l.b16 %v1648
      %v1839 = vunpack.c.h.b16 %v1648
      %v1840 = vunpack.c.l.b16 %v1649
      %v1841 = vunpack.c.h.b16 %v1649
      %v1842 = vpack.c.b16 %v1714, %v1714
      %v1843 = vpack.c.b16 %v1715, %v1715
      %v1844 = vpack.c.b16 %v1716, %v1716
      %v1845 = vpack.c.b16 %v1717, %v1717
      %v1846 = vpack.c.b16 %v1718, %v1718
      %v1847 = vpack.c.b16 %v1719, %v1719
      %v1848 = vpack.c.b16 %v1720, %v1720
      %v1849 = vpack.c.b16 %v1721, %v1721
      %v1850 = vpack.c.b16 %v1722, %v1722
      %v1851 = vpack.c.b16 %v1723, %v1723
      %v1852 = vpack.c.b16 %v1724, %v1724
      %v1853 = vpack.c.b16 %v1725, %v1725
      %v1854 = vpack.c.b16 %v1726, %v1726
      %v1855 = vpack.c.b16 %v1727, %v1727
      %v1856 = vpack.c.b16 %v1728, %v1728
      %v1857 = vpack.c.b16 %v1729, %v1729
      %v1858 = vpack.c.b16 %v1730, %v1730
      %v1859 = vpack.c.b16 %v1731, %v1731
      %v1860 = vpack.c.b16 %v1732, %v1732
      %v1861 = vpack.c.b16 %v1733, %v1733
      %v1862 = vpack.c.b16 %v1734, %v1734
      %v1863 = vpack.c.b16 %v1735, %v1735
      %v1864 = vpack.c.b16 %v1736, %v1736
      %v1865 = vpack.c.b16 %v1737, %v1737
      %v1866 = vpack.c.b16 %v1738, %v1738
      %v1867 = vpack.c.b16 %v1739, %v1739
      %v1868 = vpack.c.b16 %v1740, %v1740
      %v1869 = vpack.c.b16 %v1741, %v1741
      %v1870 = vpack.c.b16 %v1742, %v1742
      %v1871 = vpack.c.b16 %v1743, %v1743
      %v1872 = vpack.c.b16 %v1744, %v1744
      %v1873 = vpack.c.b16 %v1745, %v1745
      %v1874 = vpack.c.b16 %v1746, %v1746
      %v1875 = vpack.c.b16 %v1747, %v1747
      %v1876 = vpack.c.b16 %v1748, %v1748
      %v1877 = vpack.c.b16 %v1749, %v1749
      %v1878 = vpack.c.b16 %v1750, %v1750
      %v1879 = vpack.c.b16 %v1751, %v1751
      %v1880 = vpack.c.b16 %v1752, %v1752
      %v1881 = vpack.c.b16 %v1753, %v1753
      %v1882 = vpack.c.b16 %v1754, %v1754
      %v1883 = vpack.c.b16 %v1755, %v1755
      %v1884 = vpack.c.b16 %v1756, %v1756
      %v1885 = vpack.c.b16 %v1757, %v1757
      %v1886 = vpack.c.b16 %v1758, %v1758
      %v1887 = vpack.c.b16 %v1759, %v1759
      %v1888 = vpack.c.b16 %v1760, %v1760
      %v1889 = vpack.c.b16 %v1761, %v1761
      %v1890 = vpack.c.b16 %v1762, %v1762
      %v1891 = vpack.c.b16 %v1763, %v1763
      %v1892 = vpack.c.b16 %v1764, %v1764
      %v1893 = vpack.c.b16 %v1765, %v1765
      %v1894 = vpack.c.b16 %v1766, %v1766
      %v1895 = vpack.c.b16 %v1767, %v1767
      %v1896 = vpack.c.b16 %v1768, %v1768
      %v1897 = vpack.c.b16 %v1769, %v1769
      %v1898 = vpack.c.b16 %v1770, %v1770
      %v1899 = vpack.c.b16 %v1771, %v1771
      %v1900 = vpack.c.b16 %v1772, %v1772
      %v1901 = vpack.c.b16 %v1773, %v1773
      %v1902 = vpack.c.b16 %v1774, %v1774
      %v1903 = vpack.c.b16 %v1775, %v1775
      %v1904 = vpack.c.b16 %v1776, %v1776
      %v1905 = vpack.c.b16 %v1777, %v1777
      %v1906 = vpack.c.b16 %v1778, %v1778
      %v1907 = vpack.c.b16 %v1779, %v1779
      %v1908 = vpack.c.b16 %v1780, %v1780
      %v1909 = vpack.c.b16 %v1781, %v1781
      %v1910 = vpack.c.b16 %v1782, %v1782
      %v1911 = vpack.c.b16 %v1783, %v1783
      %v1912 = vpack.c.b16 %v1784, %v1784
      %v1913 = vpack.c.b16 %v1785, %v1785
      %v1914 = vpack.c.b16 %v1786, %v1786
      %v1915 = vpack.c.b16 %v1787, %v1787
      %v1916 = vpack.c.b16 %v1788, %v1788
      %v1917 = vpack.c.b16 %v1789, %v1789
      %v1918 = vpack.c.b16 %v1790, %v1790
      %v1919 = vpack.c.b16 %v1791, %v1791
      %v1920 = vpack.c.b16 %v1792, %v1792
      %v1921 = vpack.c.b16 %v1793, %v1793
      %v1922 = vpack.c.b16 %v1794, %v1794
      %v1923 = vpack.c.b16 %v1795, %v1795
      %v1924 = vpack.c.b16 %v1796, %v1796
      %v1925 = vpack.c.b16 %v1797, %v1797
      %v1926 = vpack.c.b16 %v1798, %v1798
      %v1927 = vpack.c.b16 %v1799, %v1799
      %v1928 = vpack.c.b16 %v1800, %v1800
      %v1929 = vpack.c.b16 %v1801, %v1801
      %v1930 = vpack.c.b16 %v1802, %v1802
      %v1931 = vpack.c.b16 %v1803, %v1803
      %v1932 = vpack.c.b16 %v1804, %v1804
      %v1933 = vpack.c.b16 %v1805, %v1805
      %v1934 = vpack.c.b16 %v1806, %v1806
      %v1935 = vpack.c.b16 %v1807, %v1807
      %v1936 = vpack.c.b16 %v1808, %v1808
      %v1937 = vpack.c.b16 %v1809, %v1809
      %v1938 = vpack.c.b16 %v1810, %v1810
      %v1939 = vpack.c.b16 %v1811, %v1811
      %v1940 = vpack.c.b16 %v1812, %v1812
      %v1941 = vpack.c.b16 %v1813, %v1813
      %v1942 = vpack.c.b16 %v1814, %v1814
      %v1943 = vpack.c.b16 %v1815, %v1815
      %v1944 = vpack.c.b16 %v1816, %v1816
      %v1945 = vpack.c.b16 %v1817, %v1817
      %v1946 = vpack.c.b16 %v1818, %v1818
      %v1947 = vpack.c.b16 %v1819, %v1819
      %v1948 = vpack.c.b16 %v1820, %v1820
      %v1949 = vpack.c.b16 %v1821, %v1821
      %v1950 = vpack.c.b16 %v1822, %v1822
      %v1951 = vpack.c.b16 %v1823, %v1823
      %v1952 = vpack.c.b16 %v1824, %v1824
      %v1953 = vpack.c.b16 %v1825, %v1825
      %v1954 = vpack.c.b16 %v1826, %v1826
      %v1955 = vpack.c.b16 %v1827, %v1827
      %v1956 = vpack.c.b16 %v1828, %v1828
      %v1957 = vpack.c.b16 %v1829, %v1829
      %v1958 = vpack.c.b16 %v1830, %v1830
      %v1959 = vpack.c.b16 %v1831, %v1831
      %v1960 = vpack.c.b16 %v1832, %v1832
      %v1961 = vpack.c.b16 %v1833, %v1833
      %v1962 = vpack.c.b16 %v1834, %v1834
      %v1963 = vpack.c.b16 %v1835, %v1835
      %v1964 = vpack.c.b16 %v1836, %v1836
      %v1965 = vpack.c.b16 %v1837, %v1837
      %v1966 = vpack.c.b16 %v1838, %v1838
      %v1967 = vpack.c.b16 %v1839, %v1839
      %v1968 = vpack.c.b16 %v1840, %v1840
      %v1969 = vpack.c.b16 %v1841, %v1841
      %2098 = vst [vmem:[%s143] sm:$0xf] %v1842
      %2099 = vst [vmem:[%s143 + $0x4] sm:$0xf] %v1843
      %2100 = vst [vmem:[%s143 + $0x8] sm:$0xf] %v1844
      %2101 = vst [vmem:[%s143 + $0xc] sm:$0xf] %v1845
      %2102 = vst [vmem:[%s143 + $0x10] sm:$0xf] %v1846
      %2103 = vst [vmem:[%s143 + $0x14] sm:$0xf] %v1847
      %2104 = vst [vmem:[%s143 + $0x18] sm:$0xf] %v1848
      %2105 = vst [vmem:[%s143 + $0x1c] sm:$0xf] %v1849
      %2106 = vst [vmem:[%s143 + $0x20] sm:$0xf] %v1850
      %2107 = vst [vmem:[%s143 + $0x24] sm:$0xf] %v1851
      %2108 = vst [vmem:[%s143 + $0x28] sm:$0xf] %v1852
      %2109 = vst [vmem:[%s143 + $0x2c] sm:$0xf] %v1853
      %2110 = vst [vmem:[%s143 + $0x30] sm:$0xf] %v1854
      %2111 = vst [vmem:[%s143 + $0x34] sm:$0xf] %v1855
      %2112 = vst [vmem:[%s143 + $0x38] sm:$0xf] %v1856
      %2113 = vst [vmem:[%s143 + $0x3c] sm:$0xf] %v1857
      %2114 = vst [vmem:[%s143 + $0x40] sm:$0xf] %v1858
      %2115 = vst [vmem:[%s143 + $0x44] sm:$0xf] %v1859
      %2116 = vst [vmem:[%s143 + $0x48] sm:$0xf] %v1860
      %2117 = vst [vmem:[%s143 + $0x4c] sm:$0xf] %v1861
      %2118 = vst [vmem:[%s143 + $0x50] sm:$0xf] %v1862
      %2119 = vst [vmem:[%s143 + $0x54] sm:$0xf] %v1863
      %2120 = vst [vmem:[%s143 + $0x58] sm:$0xf] %v1864
      %2121 = vst [vmem:[%s143 + $0x5c] sm:$0xf] %v1865
      %2122 = vst [vmem:[%s143 + $0x60] sm:$0xf] %v1866
      %2123 = vst [vmem:[%s143 + $0x64] sm:$0xf] %v1867
      %2124 = vst [vmem:[%s143 + $0x68] sm:$0xf] %v1868
      %2125 = vst [vmem:[%s143 + $0x6c] sm:$0xf] %v1869
      %2126 = vst [vmem:[%s143 + $0x70] sm:$0xf] %v1870
      %2127 = vst [vmem:[%s143 + $0x74] sm:$0xf] %v1871
      %2128 = vst [vmem:[%s143 + $0x78] sm:$0xf] %v1872
      %2129 = vst [vmem:[%s143 + $0x7c] sm:$0xf] %v1873
      %2130 = vst [vmem:[%s143 + $0x80] sm:$0xf] %v1874
      %2131 = vst [vmem:[%s143 + $0x84] sm:$0xf] %v1875
      %2132 = vst [vmem:[%s143 + $0x88] sm:$0xf] %v1876
      %2133 = vst [vmem:[%s143 + $0x8c] sm:$0xf] %v1877
      %2134 = vst [vmem:[%s143 + $0x90] sm:$0xf] %v1878
      %2135 = vst [vmem:[%s143 + $0x94] sm:$0xf] %v1879
      %2136 = vst [vmem:[%s143 + $0x98] sm:$0xf] %v1880
      %2137 = vst [vmem:[%s143 + $0x9c] sm:$0xf] %v1881
      %2138 = vst [vmem:[%s143 + $0xa0] sm:$0xf] %v1882
      %2139 = vst [vmem:[%s143 + $0xa4] sm:$0xf] %v1883
      %2140 = vst [vmem:[%s143 + $0xa8] sm:$0xf] %v1884
      %2141 = vst [vmem:[%s143 + $0xac] sm:$0xf] %v1885
      %2142 = vst [vmem:[%s143 + $0xb0] sm:$0xf] %v1886
      %2143 = vst [vmem:[%s143 + $0xb4] sm:$0xf] %v1887
      %2144 = vst [vmem:[%s143 + $0xb8] sm:$0xf] %v1888
      %2145 = vst [vmem:[%s143 + $0xbc] sm:$0xf] %v1889
      %2146 = vst [vmem:[%s143 + $0xc0] sm:$0xf] %v1890
      %2147 = vst [vmem:[%s143 + $0xc4] sm:$0xf] %v1891
      %2148 = vst [vmem:[%s143 + $0xc8] sm:$0xf] %v1892
      %2149 = vst [vmem:[%s143 + $0xcc] sm:$0xf] %v1893
      %2150 = vst [vmem:[%s143 + $0xd0] sm:$0xf] %v1894
      %2151 = vst [vmem:[%s143 + $0xd4] sm:$0xf] %v1895
      %2152 = vst [vmem:[%s143 + $0xd8] sm:$0xf] %v1896
      %2153 = vst [vmem:[%s143 + $0xdc] sm:$0xf] %v1897
      %2154 = vst [vmem:[%s143 + $0xe0] sm:$0xf] %v1898
      %2155 = vst [vmem:[%s143 + $0xe4] sm:$0xf] %v1899
      %2156 = vst [vmem:[%s143 + $0xe8] sm:$0xf] %v1900
      %2157 = vst [vmem:[%s143 + $0xec] sm:$0xf] %v1901
      %2158 = vst [vmem:[%s143 + $0xf0] sm:$0xf] %v1902
      %2159 = vst [vmem:[%s143 + $0xf4] sm:$0xf] %v1903
      %2160 = vst [vmem:[%s143 + $0xf8] sm:$0xf] %v1904
      %2161 = vst [vmem:[%s143 + $0xfc] sm:$0xf] %v1905
      %2162 = vst [vmem:[%s143 + $0x100] sm:$0xf] %v1906
      %2163 = vst [vmem:[%s143 + $0x104] sm:$0xf] %v1907
      %2164 = vst [vmem:[%s143 + $0x108] sm:$0xf] %v1908
      %2165 = vst [vmem:[%s143 + $0x10c] sm:$0xf] %v1909
      %2166 = vst [vmem:[%s143 + $0x110] sm:$0xf] %v1910
      %2167 = vst [vmem:[%s143 + $0x114] sm:$0xf] %v1911
      %2168 = vst [vmem:[%s143 + $0x118] sm:$0xf] %v1912
      %2169 = vst [vmem:[%s143 + $0x11c] sm:$0xf] %v1913
      %2170 = vst [vmem:[%s143 + $0x120] sm:$0xf] %v1914
      %2171 = vst [vmem:[%s143 + $0x124] sm:$0xf] %v1915
      %2172 = vst [vmem:[%s143 + $0x128] sm:$0xf] %v1916
      %2173 = vst [vmem:[%s143 + $0x12c] sm:$0xf] %v1917
      %2174 = vst [vmem:[%s143 + $0x130] sm:$0xf] %v1918
      %2175 = vst [vmem:[%s143 + $0x134] sm:$0xf] %v1919
      %2176 = vst [vmem:[%s143 + $0x138] sm:$0xf] %v1920
      %2177 = vst [vmem:[%s143 + $0x13c] sm:$0xf] %v1921
      %2178 = vst [vmem:[%s143 + $0x140] sm:$0xf] %v1922
      %2179 = vst [vmem:[%s143 + $0x144] sm:$0xf] %v1923
      %2180 = vst [vmem:[%s143 + $0x148] sm:$0xf] %v1924
      %2181 = vst [vmem:[%s143 + $0x14c] sm:$0xf] %v1925
      %2182 = vst [vmem:[%s143 + $0x150] sm:$0xf] %v1926
      %2183 = vst [vmem:[%s143 + $0x154] sm:$0xf] %v1927
      %2184 = vst [vmem:[%s143 + $0x158] sm:$0xf] %v1928
      %2185 = vst [vmem:[%s143 + $0x15c] sm:$0xf] %v1929
      %2186 = vst [vmem:[%s143 + $0x160] sm:$0xf] %v1930
      %2187 = vst [vmem:[%s143 + $0x164] sm:$0xf] %v1931
      %2188 = vst [vmem:[%s143 + $0x168] sm:$0xf] %v1932
      %2189 = vst [vmem:[%s143 + $0x16c] sm:$0xf] %v1933
      %2190 = vst [vmem:[%s143 + $0x170] sm:$0xf] %v1934
      %2191 = vst [vmem:[%s143 + $0x174] sm:$0xf] %v1935
      %2192 = vst [vmem:[%s143 + $0x178] sm:$0xf] %v1936
      %2193 = vst [vmem:[%s143 + $0x17c] sm:$0xf] %v1937
      %2194 = vst [vmem:[%s143 + $0x180] sm:$0xf] %v1938
      %2195 = vst [vmem:[%s143 + $0x184] sm:$0xf] %v1939
      %2196 = vst [vmem:[%s143 + $0x188] sm:$0xf] %v1940
      %2197 = vst [vmem:[%s143 + $0x18c] sm:$0xf] %v1941
      %2198 = vst [vmem:[%s143 + $0x190] sm:$0xf] %v1942
      %2199 = vst [vmem:[%s143 + $0x194] sm:$0xf] %v1943
      %2200 = vst [vmem:[%s143 + $0x198] sm:$0xf] %v1944
      %2201 = vst [vmem:[%s143 + $0x19c] sm:$0xf] %v1945
      %2202 = vst [vmem:[%s143 + $0x1a0] sm:$0xf] %v1946
      %2203 = vst [vmem:[%s143 + $0x1a4] sm:$0xf] %v1947
      %2204 = vst [vmem:[%s143 + $0x1a8] sm:$0xf] %v1948
      %2205 = vst [vmem:[%s143 + $0x1ac] sm:$0xf] %v1949
      %2206 = vst [vmem:[%s143 + $0x1b0] sm:$0xf] %v1950
      %2207 = vst [vmem:[%s143 + $0x1b4] sm:$0xf] %v1951
      %2208 = vst [vmem:[%s143 + $0x1b8] sm:$0xf] %v1952
      %2209 = vst [vmem:[%s143 + $0x1bc] sm:$0xf] %v1953
      %2210 = vst [vmem:[%s143 + $0x1c0] sm:$0xf] %v1954
      %2211 = vst [vmem:[%s143 + $0x1c4] sm:$0xf] %v1955
      %2212 = vst [vmem:[%s143 + $0x1c8] sm:$0xf] %v1956
      %2213 = vst [vmem:[%s143 + $0x1cc] sm:$0xf] %v1957
      %2214 = vst [vmem:[%s143 + $0x1d0] sm:$0xf] %v1958
      %2215 = vst [vmem:[%s143 + $0x1d4] sm:$0xf] %v1959
      %2216 = vst [vmem:[%s143 + $0x1d8] sm:$0xf] %v1960
      %2217 = vst [vmem:[%s143 + $0x1dc] sm:$0xf] %v1961
      %2218 = vst [vmem:[%s143 + $0x1e0] sm:$0xf] %v1962
      %2219 = vst [vmem:[%s143 + $0x1e4] sm:$0xf] %v1963
      %2220 = vst [vmem:[%s143 + $0x1e8] sm:$0xf] %v1964
      %2221 = vst [vmem:[%s143 + $0x1ec] sm:$0xf] %v1965
      %2222 = vst [vmem:[%s143 + $0x1f0] sm:$0xf] %v1966
      %2223 = vst [vmem:[%s143 + $0x1f4] sm:$0xf] %v1967
      %2224 = vst [vmem:[%s143 + $0x1f8] sm:$0xf] %v1968
      %2225 = vst [vmem:[%s143 + $0x1fc] sm:$0xf] %v1969
      %p2226 = scmp.lt.s32.totalorder %s13, 1
      %s2227 = scalar_select %p2226, %s13, 1
      %s2228 = smul.addr %s2227, 128
      %s2229 = smul.addr %s2228, 4
      %s2230 = scalar_lea.vmem %s2, %s2229
      // Predicated region
      $region29: #{a_call__.4} parent=27 // pred_check
        %p2231 = pneg %p78
      $region30: #{a_call__.4} parent=27 // pred_check_branch
        %2233 = sbr.rel (%p2231) target = $region32
      $region31: #{a_call__.4} parent=27 // pred_region
        _
      $region32: #{a_call__.4} parent=27 // pred_fallthru
        _
    $region28: #{a_call__.4} parent=5 // pred_fallthru
      _
    %p2234 = scmp.le.s32.totalorder 2, %s8
    // Predicated region
    $region33: #{a_call__.4} parent=5 // pred_check
      %p2235 = pneg %p2234
    $region34: #{a_call__.4} parent=5 // pred_check_branch
      %2237 = sbr.rel (%p2235) target = $region36
    $region35: #{a_call__.4} parent=5 // pred_region
      %s2238 = ssub.s32 %s8, 2
      // Predicated region
      $region37: #{a_call__.4} parent=35 // pred_check
        %p2239 = pneg %p84
      $region38: #{a_call__.4} parent=35 // pred_check_branch
        %2241 = sbr.rel (%p2239) target = $region40
      $region39: #{a_call__.4} parent=35 // pred_region
        %p2242 = scmp.lt.s32.totalorder %s14, 1
        %s2243 = scalar_select %p2242, %s14, 1
        %s2244 = smul.addr %s2243, 128
        %s2245 = smul.addr %s2244, 4
        %s2246 = scalar_lea.vmem %s2, %s2245
      $region40: #{a_call__.4} parent=35 // pred_fallthru
        _
    $region36: #{a_call__.4} parent=5 // pred_fallthru
      _
  $region6: #{a_call__.4} parent=0 // loop_footer
    %s12 = sadd.s32 1, %s8
  $region7: #{a_call__.4} parent=0 // loop_footer_branch
    %7 = sbr.rel target = $region3
  $region8: #{a_call__.4} parent=0 // loop_exit
    _

// kernel: a_call__.5
$region0: #{a_call__.5}
  #allocation0 [shape = 'u32[]', space=smem, size = 0x4, offset = 0x4, fixed_abs, tag = 'smem constant byte address 0x4 - core index']
  #allocation1 [shape = 'u32[144,128]{1,0:T(1,128)}', space=vmem, size = 0x12000, scoped, tag = 'internal scratch']
  #allocation2 [shape = 'bf16[34,40,128]{2,1,0:T(8,128)(2,1)}', space=vmem, size = 0x55000, scoped, tag = 'scratch operand']
  %s0 = inlined_call_operand.vmem [shape: bf16[2,32,32,128], index: 0, kind: input, shape index: {}]
  %s1 = inlined_call_operand.vmem [shape: bf16[3,128,384], index: 1, kind: input, shape index: {}]
  %s2 = inlined_call_operand.vmem [shape: f32[1,128], index: 2, kind: input, shape index: {}]
  %s3 = inlined_call_operand.vmem [shape: bf16[2,32,32,128], index: 3, kind: output, shape index: {}]
  %s4 = sld [smem:[#allocation0]]
  $region49: #{a_call__.5} parent=0
    _
  %s6 = ssub.s32 1, %s4
  %s7 = scalar_select 0, %s6, %s4
  loop: start=0, step=1, limit=10
  $region2: #{a_call__.5} parent=0 // loop_pre_header
    _
  $region3: #{a_call__.5} parent=0 // loop_header
    %s9 = sphi 0, %s13
    %p10 = scmp.ge.s32.totalorder %s9, 10
    %s16 = sphi 0, %s28
    %s17 = sphi 0, %s24
    %s18 = sphi 0, %s16
    %s19 = sphi 0, %s17
    %s20 = sphi 0, %s18
    %s21 = sphi 0, %s19
    %s31 = sphi 0, %s33
    %s34 = sphi 0, %s31
    %s35 = sphi 0, %s34
    %s51 = sphi 0, %s35
    %s55 = sphi 0, %s55
    %s57 = sphi 0, %s55
    %s58 = sphi 0, %s57
    %s72 = sphi 0, %s58
    %s76 = sphi 0, %s76
    %s78 = sphi 0, %s76
    %s79 = sphi 0, %s78
    %s93 = sphi 0, %s79
    %s101 = sphi 0, %s103
    %s104 = sphi 0, %s101
    %s105 = sphi 0, %s104
    %s121 = sphi 0, %s105
  $region4: #{a_call__.5} parent=0 // loop_header_branch
    %12 = sbr.rel (%p10) target = $region8
  $region5: #{a_call__.5} parent=0 // loop_body
    %s14 = ssub.s32 %s9, 1
    %s15 = ssub.s32 %s9, 2
    %s22 = sadd.s32 1, %s17
    %p23 = scmp.ge.s32.totalorder %s22, 4
    %s24 = scalar_select %p23, 0, %s22
    %s25 = sadd.s32 1, %s16
    %s26 = scalar_select %p23, %s25, %s16
    %p27 = scmp.ge.s32.totalorder %s26, 2
    %s28 = scalar_select %p27, 0, %s26
    %s29 = ssub.s32 %s16, %s28
    %p30 = scmp.eq.s32.totalorder %s29, 0
    %s32 = sadd.s32 %s31, 1
    %s33 = scalar_select %p30, %s31, %s32
    %p36 = pneg %p30
    %p37 = scmp.eq.s32.totalorder %s9, 7
    %p38 = por %p36, %p37
    %p39 = scmp.ne.s32.totalorder %s31, %s34
    %p40 = scmp.eq.s32.totalorder %s9, 0
    %p41 = por %p39, %p40
    %p42 = scmp.ne.s32.totalorder %s31, %s34
    %p43 = scmp.eq.s32.totalorder %s14, 7
    %p44 = por %p42, %p43
    %p45 = scmp.ne.s32.totalorder %s34, %s35
    %p46 = scmp.eq.s32.totalorder %s14, 0
    %p47 = por %p45, %p46
    %p48 = scmp.ne.s32.totalorder %s34, %s35
    %p49 = scmp.eq.s32.totalorder %s15, 7
    %p50 = por %p48, %p49
    %p52 = scmp.ne.s32.totalorder %s35, %s51
    %p53 = scmp.eq.s32.totalorder %s15, 0
    %p54 = por %p52, %p53
    %s56 = sadd.s32 %s55, 1
    %p59 = scmp.eq.s32.totalorder %s9, 7
    %p60 = scmp.ne.s32.totalorder %s55, %s57
    %p61 = scmp.eq.s32.totalorder %s9, 0
    %p62 = por %p60, %p61
    %p63 = scmp.ne.s32.totalorder %s55, %s57
    %p64 = scmp.eq.s32.totalorder %s14, 7
    %p65 = por %p63, %p64
    %p66 = scmp.ne.s32.totalorder %s57, %s58
    %p67 = scmp.eq.s32.totalorder %s14, 0
    %p68 = por %p66, %p67
    %p69 = scmp.ne.s32.totalorder %s57, %s58
    %p70 = scmp.eq.s32.totalorder %s15, 7
    %p71 = por %p69, %p70
    %p73 = scmp.ne.s32.totalorder %s58, %s72
    %p74 = scmp.eq.s32.totalorder %s15, 0
    %p75 = por %p73, %p74
    %s77 = sadd.s32 %s76, 1
    %p80 = scmp.eq.s32.totalorder %s9, 7
    %p81 = scmp.ne.s32.totalorder %s76, %s78
    %p82 = scmp.eq.s32.totalorder %s9, 0
    %p83 = por %p81, %p82
    %p84 = scmp.ne.s32.totalorder %s76, %s78
    %p85 = scmp.eq.s32.totalorder %s14, 7
    %p86 = por %p84, %p85
    %p87 = scmp.ne.s32.totalorder %s78, %s79
    %p88 = scmp.eq.s32.totalorder %s14, 0
    %p89 = por %p87, %p88
    %p90 = scmp.ne.s32.totalorder %s78, %s79
    %p91 = scmp.eq.s32.totalorder %s15, 7
    %p92 = por %p90, %p91
    %p94 = scmp.ne.s32.totalorder %s79, %s93
    %p95 = scmp.eq.s32.totalorder %s15, 0
    %p96 = por %p94, %p95
    %s97 = ssub.s32 %s16, %s28
    %s98 = ssub.s32 %s17, %s24
    %s99 = sor.u32 %s97, %s98
    %p100 = scmp.eq.s32.totalorder %s99, 0
    %s102 = sadd.s32 %s101, 1
    %s103 = scalar_select %p100, %s101, %s102
    %p106 = pneg %p100
    %p107 = scmp.eq.s32.totalorder %s9, 7
    %p108 = por %p106, %p107
    %p109 = scmp.ne.s32.totalorder %s101, %s104
    %p110 = scmp.eq.s32.totalorder %s9, 0
    %p111 = por %p109, %p110
    %p112 = scmp.ne.s32.totalorder %s101, %s104
    %p113 = scmp.eq.s32.totalorder %s14, 7
    %p114 = por %p112, %p113
    %p115 = scmp.ne.s32.totalorder %s104, %s105
    %p116 = scmp.eq.s32.totalorder %s14, 0
    %p117 = por %p115, %p116
    %p118 = scmp.ne.s32.totalorder %s104, %s105
    %p119 = scmp.eq.s32.totalorder %s15, 7
    %p120 = por %p118, %p119
    %p122 = scmp.ne.s32.totalorder %s105, %s121
    %p123 = scmp.eq.s32.totalorder %s15, 0
    %p124 = por %p122, %p123
    %p125 = scmp.le.s32.totalorder 1, %s9
    %p126 = scmp.lt.s32.totalorder %s9, 9
    %p127 = pnand %p125, %p126
    %p128 = pneg %p127
    // Predicated region
    $region9: #{a_call__.5} parent=5 // pred_check
      _
    $region10: #{a_call__.5} parent=5 // pred_check_branch
      %130 = sbr.rel (%p127) target = $region12
    $region11: #{a_call__.5} parent=5 // pred_region
      %s131 = ssub.s32 %s9, 1
      // Predicated region
      $region13: #{a_call__.5} parent=11 // pred_check
        %p132 = pneg %p68
      $region14: #{a_call__.5} parent=11 // pred_check_branch
        %134 = sbr.rel (%p132) target = $region16
      $region15: #{a_call__.5} parent=11 // pred_region
        _
      $region16: #{a_call__.5} parent=11 // pred_fallthru
        _
      // Predicated region
      $region17: #{a_call__.5} parent=11 // pred_check
        %p135 = pneg %p89
      $region18: #{a_call__.5} parent=11 // pred_check_branch
        %137 = sbr.rel (%p135) target = $region20
      $region19: #{a_call__.5} parent=11 // pred_region
        _
      $region20: #{a_call__.5} parent=11 // pred_fallthru
        _
    $region12: #{a_call__.5} parent=5 // pred_fallthru
      _
    %p138 = scmp.lt.s32.totalorder %s9, 8
    // Predicated region
    $region21: #{a_call__.5} parent=5 // pred_check
      %p139 = pneg %p138
    $region22: #{a_call__.5} parent=5 // pred_check_branch
      %141 = sbr.rel (%p139) target = $region24
    $region23: #{a_call__.5} parent=5 // pred_region
      // Predicated region
      $region25: #{a_call__.5} parent=23 // pred_check
        %p142 = pneg %p41
      $region26: #{a_call__.5} parent=23 // pred_check_branch
        %144 = sbr.rel (%p142) target = $region28
      $region27: #{a_call__.5} parent=23 // pred_region
        %p145 = scmp.lt.s32.totalorder %s16, 1
        %s146 = scalar_select %p145, %s16, 1
        %s147 = smul.addr %s146, 128
        %s148 = smul.addr %s147, 4
        %s149 = scalar_lea.vmem %s0, %s148
      $region28: #{a_call__.5} parent=23 // pred_fallthru
        _
    $region24: #{a_call__.5} parent=5 // pred_fallthru
      _
    %p150 = scmp.le.s32.totalorder 1, %s9
    %p151 = scmp.lt.s32.totalorder %s9, 9
    %p152 = pnand %p150, %p151
    %p153 = pneg %p152
    // Predicated region
    $region29: #{a_call__.5} parent=5 // pred_check
      _
    $region30: #{a_call__.5} parent=5 // pred_check_branch
      %155 = sbr.rel (%p152) target = $region32
    $region31: #{a_call__.5} parent=5 // pred_region
      %s156 = ssub.s32 %s9, 1
      %p157 = scmp.lt.s32.totalorder %s18, 1
      %s158 = scalar_select %p157, %s18, 1
      %s159 = smul.addr %s158, 128
      %s160 = smul.addr %s159, 4
      %s161 = scalar_lea.vmem %s0, %s160
      %p162 = pneg %p47
      %p163 = pneg %p44
      %p164 = pneg %p68
      %p165 = pneg %p65
      %p166 = pneg %p89
      %p167 = pneg %p86
      %p168 = pneg %p117
      %p169 = pneg %p114
      %s170 = smul.u32 8, %s19
      %p171 = scmp.lt.s32.totalorder %s18, 1
      %s172 = scalar_select %p171, %s18, 1
      %p173 = scmp.lt.s32.totalorder %s170, 31
      %s174 = scalar_select %p173, %s170, 31
      %s175 = smul.addr %s174, 4
      %s176 = smul.addr %s172, 128
      %s177 = sadd.s32 %s175, %s176
      %s178 = smul.addr %s177, 4
      %s179 = scalar_lea.vmem %s3, %s178
      %p180 = scmp.lt.s32.totalorder %s18, 1
      %s181 = scalar_select %p180, %s18, 1
      %s182 = smul.addr %s181, 128
      %s183 = smul.addr %s182, 4
      %s184 = scalar_lea.vmem %s0, %s183
      %s185 = smul.u32 8, %s19
      %p186 = scmp.lt.s32.totalorder %s18, 1
      %s187 = scalar_select %p186, %s18, 1
      %p188 = scmp.lt.s32.totalorder %s185, 31
      %s189 = scalar_select %p188, %s185, 31
      %s190 = smul.addr %s189, 4
      %s191 = smul.addr %s187, 128
      %s192 = sadd.s32 %s190, %s191
      %s193 = smul.addr %s192, 4
      %s194 = scalar_lea.vmem %s3, %s193
      %s195 = smul.u32 8, %s19
      %p197 = scmp.eq.s32.totalorder %s19, 0
      // Predicated region
      $region33: #{a_call__.5} parent=31 // pred_check
        %p198 = pneg %p197
      $region34: #{a_call__.5} parent=31 // pred_check_branch
        %200 = sbr.rel (%p198) target = $region36
      $region35: #{a_call__.5} parent=31 // pred_region
        %201 = vst [vmem:[#allocation2] sm:$0xf] 0
        %202 = vst [vmem:[#allocation2 + $0x4] sm:$0xf] 0
        %203 = vst [vmem:[#allocation2 + $0x8] sm:$0xf] 0
        %204 = vst [vmem:[#allocation2 + $0xc] sm:$0xf] 0
        %205 = vst [vmem:[#allocation2 + $0x10] sm:$0xf] 0
        %206 = vst [vmem:[#allocation2 + $0x14] sm:$0xf] 0
        %207 = vst [vmem:[#allocation2 + $0x18] sm:$0xf] 0
        %208 = vst [vmem:[#allocation2 + $0x1c] sm:$0xf] 0
        %209 = vst [vmem:[#allocation2 + $0x20] sm:$0xf] 0
        %210 = vst [vmem:[#allocation2 + $0x24] sm:$0xf] 0
        %211 = vst [vmem:[#allocation2 + $0x28] sm:$0xf] 0
        %212 = vst [vmem:[#allocation2 + $0x2c] sm:$0xf] 0
        %213 = vst [vmem:[#allocation2 + $0x30] sm:$0xf] 0
        %214 = vst [vmem:[#allocation2 + $0x34] sm:$0xf] 0
        %215 = vst [vmem:[#allocation2 + $0x38] sm:$0xf] 0
        %216 = vst [vmem:[#allocation2 + $0x3c] sm:$0xf] 0
        %217 = vst [vmem:[#allocation2 + $0x40] sm:$0xf] 0
        %218 = vst [vmem:[#allocation2 + $0x44] sm:$0xf] 0
        %219 = vst [vmem:[#allocation2 + $0x48] sm:$0xf] 0
        %220 = vst [vmem:[#allocation2 + $0x4c] sm:$0xf] 0
        %221 = vst [vmem:[#allocation2 + $0x50] sm:$0xf] 0
        %222 = vst [vmem:[#allocation2 + $0x54] sm:$0xf] 0
        %223 = vst [vmem:[#allocation2 + $0x58] sm:$0xf] 0
        %224 = vst [vmem:[#allocation2 + $0x5c] sm:$0xf] 0
        %225 = vst [vmem:[#allocation2 + $0x60] sm:$0xf] 0
        %226 = vst [vmem:[#allocation2 + $0x64] sm:$0xf] 0
        %227 = vst [vmem:[#allocation2 + $0x68] sm:$0xf] 0
        %228 = vst [vmem:[#allocation2 + $0x6c] sm:$0xf] 0
        %229 = vst [vmem:[#allocation2 + $0x70] sm:$0xf] 0
        %230 = vst [vmem:[#allocation2 + $0x74] sm:$0xf] 0
        %231 = vst [vmem:[#allocation2 + $0x78] sm:$0xf] 0
        %232 = vst [vmem:[#allocation2 + $0x7c] sm:$0xf] 0
        %233 = vst [vmem:[#allocation2 + $0x80] sm:$0xf] 0
        %234 = vst [vmem:[#allocation2 + $0x84] sm:$0xf] 0
        %235 = vst [vmem:[#allocation2 + $0x88] sm:$0xf] 0
        %236 = vst [vmem:[#allocation2 + $0x8c] sm:$0xf] 0
        %237 = vst [vmem:[#allocation2 + $0x90] sm:$0xf] 0
        %238 = vst [vmem:[#allocation2 + $0x94] sm:$0xf] 0
        %239 = vst [vmem:[#allocation2 + $0x98] sm:$0xf] 0
        %240 = vst [vmem:[#allocation2 + $0x9c] sm:$0xf] 0
        %241 = vst [vmem:[#allocation2 + $0xa0] sm:$0xf] 0
        %242 = vst [vmem:[#allocation2 + $0xa4] sm:$0xf] 0
        %243 = vst [vmem:[#allocation2 + $0xa8] sm:$0xf] 0
        %244 = vst [vmem:[#allocation2 + $0xac] sm:$0xf] 0
        %245 = vst [vmem:[#allocation2 + $0xb0] sm:$0xf] 0
        %246 = vst [vmem:[#allocation2 + $0xb4] sm:$0xf] 0
        %247 = vst [vmem:[#allocation2 + $0xb8] sm:$0xf] 0
        %248 = vst [vmem:[#allocation2 + $0xbc] sm:$0xf] 0
        %249 = vst [vmem:[#allocation2 + $0xc0] sm:$0xf] 0
        %250 = vst [vmem:[#allocation2 + $0xc4] sm:$0xf] 0
        %251 = vst [vmem:[#allocation2 + $0xc8] sm:$0xf] 0
        %252 = vst [vmem:[#allocation2 + $0xcc] sm:$0xf] 0
        %253 = vst [vmem:[#allocation2 + $0xd0] sm:$0xf] 0
        %254 = vst [vmem:[#allocation2 + $0xd4] sm:$0xf] 0
        %255 = vst [vmem:[#allocation2 + $0xd8] sm:$0xf] 0
        %256 = vst [vmem:[#allocation2 + $0xdc] sm:$0xf] 0
        %257 = vst [vmem:[#allocation2 + $0xe0] sm:$0xf] 0
        %258 = vst [vmem:[#allocation2 + $0xe4] sm:$0xf] 0
        %259 = vst [vmem:[#allocation2 + $0xe8] sm:$0xf] 0
        %260 = vst [vmem:[#allocation2 + $0xec] sm:$0xf] 0
        %261 = vst [vmem:[#allocation2 + $0xf0] sm:$0xf] 0
        %262 = vst [vmem:[#allocation2 + $0xf4] sm:$0xf] 0
        %263 = vst [vmem:[#allocation2 + $0xf8] sm:$0xf] 0
        %264 = vst [vmem:[#allocation2 + $0xfc] sm:$0xf] 0
        %265 = vst [vmem:[#allocation2 + $0x100] sm:$0xf] 0
        %266 = vst [vmem:[#allocation2 + $0x104] sm:$0xf] 0
        %267 = vst [vmem:[#allocation2 + $0x108] sm:$0xf] 0
        %268 = vst [vmem:[#allocation2 + $0x10c] sm:$0xf] 0
        %269 = vst [vmem:[#allocation2 + $0x110] sm:$0xf] 0
        %270 = vst [vmem:[#allocation2 + $0x114] sm:$0xf] 0
        %271 = vst [vmem:[#allocation2 + $0x118] sm:$0xf] 0
        %272 = vst [vmem:[#allocation2 + $0x11c] sm:$0xf] 0
        %273 = vst [vmem:[#allocation2 + $0x120] sm:$0xf] 0
        %274 = vst [vmem:[#allocation2 + $0x124] sm:$0xf] 0
        %275 = vst [vmem:[#allocation2 + $0x128] sm:$0xf] 0
        %276 = vst [vmem:[#allocation2 + $0x12c] sm:$0xf] 0
        %277 = vst [vmem:[#allocation2 + $0x130] sm:$0xf] 0
        %278 = vst [vmem:[#allocation2 + $0x134] sm:$0xf] 0
        %279 = vst [vmem:[#allocation2 + $0x138] sm:$0xf] 0
        %280 = vst [vmem:[#allocation2 + $0x13c] sm:$0xf] 0
        %281 = vst [vmem:[#allocation2 + $0x140] sm:$0xf] 0
        %282 = vst [vmem:[#allocation2 + $0x144] sm:$0xf] 0
        %283 = vst [vmem:[#allocation2 + $0x148] sm:$0xf] 0
        %284 = vst [vmem:[#allocation2 + $0x14c] sm:$0xf] 0
        %285 = vst [vmem:[#allocation2 + $0x150] sm:$0xf] 0
        %286 = vst [vmem:[#allocation2 + $0x154] sm:$0xf] 0
        %287 = vst [vmem:[#allocation2 + $0x158] sm:$0xf] 0
        %288 = vst [vmem:[#allocation2 + $0x15c] sm:$0xf] 0
        %289 = vst [vmem:[#allocation2 + $0x160] sm:$0xf] 0
        %290 = vst [vmem:[#allocation2 + $0x164] sm:$0xf] 0
        %291 = vst [vmem:[#allocation2 + $0x168] sm:$0xf] 0
        %292 = vst [vmem:[#allocation2 + $0x16c] sm:$0xf] 0
        %293 = vst [vmem:[#allocation2 + $0x170] sm:$0xf] 0
        %294 = vst [vmem:[#allocation2 + $0x174] sm:$0xf] 0
        %295 = vst [vmem:[#allocation2 + $0x178] sm:$0xf] 0
        %296 = vst [vmem:[#allocation2 + $0x17c] sm:$0xf] 0
        %297 = vst [vmem:[#allocation2 + $0x180] sm:$0xf] 0
        %298 = vst [vmem:[#allocation2 + $0x184] sm:$0xf] 0
        %299 = vst [vmem:[#allocation2 + $0x188] sm:$0xf] 0
        %300 = vst [vmem:[#allocation2 + $0x18c] sm:$0xf] 0
        %301 = vst [vmem:[#allocation2 + $0x190] sm:$0xf] 0
        %302 = vst [vmem:[#allocation2 + $0x194] sm:$0xf] 0
        %303 = vst [vmem:[#allocation2 + $0x198] sm:$0xf] 0
        %304 = vst [vmem:[#allocation2 + $0x19c] sm:$0xf] 0
        %305 = vst [vmem:[#allocation2 + $0x1a0] sm:$0xf] 0
        %306 = vst [vmem:[#allocation2 + $0x1a4] sm:$0xf] 0
        %307 = vst [vmem:[#allocation2 + $0x1a8] sm:$0xf] 0
        %308 = vst [vmem:[#allocation2 + $0x1ac] sm:$0xf] 0
        %309 = vst [vmem:[#allocation2 + $0x1b0] sm:$0xf] 0
        %310 = vst [vmem:[#allocation2 + $0x1b4] sm:$0xf] 0
        %311 = vst [vmem:[#allocation2 + $0x1b8] sm:$0xf] 0
        %312 = vst [vmem:[#allocation2 + $0x1bc] sm:$0xf] 0
        %313 = vst [vmem:[#allocation2 + $0x1c0] sm:$0xf] 0
        %314 = vst [vmem:[#allocation2 + $0x1c4] sm:$0xf] 0
        %315 = vst [vmem:[#allocation2 + $0x1c8] sm:$0xf] 0
        %316 = vst [vmem:[#allocation2 + $0x1cc] sm:$0xf] 0
        %317 = vst [vmem:[#allocation2 + $0x1d0] sm:$0xf] 0
        %318 = vst [vmem:[#allocation2 + $0x1d4] sm:$0xf] 0
        %319 = vst [vmem:[#allocation2 + $0x1d8] sm:$0xf] 0
        %320 = vst [vmem:[#allocation2 + $0x1dc] sm:$0xf] 0
        %321 = vst [vmem:[#allocation2 + $0x1e0] sm:$0xf] 0
        %322 = vst [vmem:[#allocation2 + $0x1e4] sm:$0xf] 0
        %323 = vst [vmem:[#allocation2 + $0x1e8] sm:$0xf] 0
        %324 = vst [vmem:[#allocation2 + $0x1ec] sm:$0xf] 0
        %325 = vst [vmem:[#allocation2 + $0x1f0] sm:$0xf] 0
        %326 = vst [vmem:[#allocation2 + $0x1f4] sm:$0xf] 0
        %327 = vst [vmem:[#allocation2 + $0x1f8] sm:$0xf] 0
        %328 = vst [vmem:[#allocation2 + $0x1fc] sm:$0xf] 0
        %329 = vst [vmem:[#allocation2 + $0x200] sm:$0xf] 0
        %330 = vst [vmem:[#allocation2 + $0x204] sm:$0xf] 0
        %331 = vst [vmem:[#allocation2 + $0x208] sm:$0xf] 0
        %332 = vst [vmem:[#allocation2 + $0x20c] sm:$0xf] 0
        %333 = vst [vmem:[#allocation2 + $0x210] sm:$0xf] 0
        %334 = vst [vmem:[#allocation2 + $0x214] sm:$0xf] 0
        %335 = vst [vmem:[#allocation2 + $0x218] sm:$0xf] 0
        %336 = vst [vmem:[#allocation2 + $0x21c] sm:$0xf] 0
        %337 = vst [vmem:[#allocation2 + $0x220] sm:$0xf] 0
        %338 = vst [vmem:[#allocation2 + $0x224] sm:$0xf] 0
        %339 = vst [vmem:[#allocation2 + $0x228] sm:$0xf] 0
        %340 = vst [vmem:[#allocation2 + $0x22c] sm:$0xf] 0
        %341 = vst [vmem:[#allocation2 + $0x230] sm:$0xf] 0
        %342 = vst [vmem:[#allocation2 + $0x234] sm:$0xf] 0
        %343 = vst [vmem:[#allocation2 + $0x238] sm:$0xf] 0
        %344 = vst [vmem:[#allocation2 + $0x23c] sm:$0xf] 0
        %345 = vst [vmem:[#allocation2 + $0x240] sm:$0xf] 0
        %346 = vst [vmem:[#allocation2 + $0x244] sm:$0xf] 0
        %347 = vst [vmem:[#allocation2 + $0x248] sm:$0xf] 0
        %348 = vst [vmem:[#allocation2 + $0x24c] sm:$0xf] 0
        %349 = vst [vmem:[#allocation2 + $0x250] sm:$0xf] 0
        %350 = vst [vmem:[#allocation2 + $0x254] sm:$0xf] 0
        %351 = vst [vmem:[#allocation2 + $0x258] sm:$0xf] 0
        %352 = vst [vmem:[#allocation2 + $0x25c] sm:$0xf] 0
        %353 = vst [vmem:[#allocation2 + $0x260] sm:$0xf] 0
        %354 = vst [vmem:[#allocation2 + $0x264] sm:$0xf] 0
        %355 = vst [vmem:[#allocation2 + $0x268] sm:$0xf] 0
        %356 = vst [vmem:[#allocation2 + $0x26c] sm:$0xf] 0
        %357 = vst [vmem:[#allocation2 + $0x270] sm:$0xf] 0
        %358 = vst [vmem:[#allocation2 + $0x274] sm:$0xf] 0
        %359 = vst [vmem:[#allocation2 + $0x278] sm:$0xf] 0
        %360 = vst [vmem:[#allocation2 + $0x27c] sm:$0xf] 0
        %361 = vst [vmem:[#allocation2 + $0x280] sm:$0xf] 0
        %362 = vst [vmem:[#allocation2 + $0x284] sm:$0xf] 0
        %363 = vst [vmem:[#allocation2 + $0x288] sm:$0xf] 0
        %364 = vst [vmem:[#allocation2 + $0x28c] sm:$0xf] 0
        %365 = vst [vmem:[#allocation2 + $0x290] sm:$0xf] 0
        %366 = vst [vmem:[#allocation2 + $0x294] sm:$0xf] 0
        %367 = vst [vmem:[#allocation2 + $0x298] sm:$0xf] 0
        %368 = vst [vmem:[#allocation2 + $0x29c] sm:$0xf] 0
        %369 = vst [vmem:[#allocation2 + $0x2a0] sm:$0xf] 0
        %370 = vst [vmem:[#allocation2 + $0x2a4] sm:$0xf] 0
        %v371 = vld [vmem:[%s184] sm:$0xf]
        %v372 = vld [vmem:[%s184 + $0x4] sm:$0xf]
        %v373 = vld [vmem:[%s184 + $0x8] sm:$0xf]
        %v374 = vld [vmem:[%s184 + $0xc] sm:$0xf]
        %v375 = vld [vmem:[%s184 + $0x10] sm:$0xf]
        %v376 = vld [vmem:[%s184 + $0x14] sm:$0xf]
        %v377 = vld [vmem:[%s184 + $0x18] sm:$0xf]
        %v378 = vld [vmem:[%s184 + $0x1c] sm:$0xf]
        %v379 = vld [vmem:[%s184 + $0x20] sm:$0xf]
        %v380 = vld [vmem:[%s184 + $0x24] sm:$0xf]
        %v381 = vld [vmem:[%s184 + $0x28] sm:$0xf]
        %v382 = vld [vmem:[%s184 + $0x2c] sm:$0xf]
        %v383 = vld [vmem:[%s184 + $0x30] sm:$0xf]
        %v384 = vld [vmem:[%s184 + $0x34] sm:$0xf]
        %v385 = vld [vmem:[%s184 + $0x38] sm:$0xf]
        %v386 = vld [vmem:[%s184 + $0x3c] sm:$0xf]
        %v387 = vld [vmem:[%s184 + $0x40] sm:$0xf]
        %v388 = vld [vmem:[%s184 + $0x44] sm:$0xf]
        %v389 = vld [vmem:[%s184 + $0x48] sm:$0xf]
        %v390 = vld [vmem:[%s184 + $0x4c] sm:$0xf]
        %v391 = vld [vmem:[%s184 + $0x50] sm:$0xf]
        %v392 = vld [vmem:[%s184 + $0x54] sm:$0xf]
        %v393 = vld [vmem:[%s184 + $0x58] sm:$0xf]
        %v394 = vld [vmem:[%s184 + $0x5c] sm:$0xf]
        %v395 = vld [vmem:[%s184 + $0x60] sm:$0xf]
        %v396 = vld [vmem:[%s184 + $0x64] sm:$0xf]
        %v397 = vld [vmem:[%s184 + $0x68] sm:$0xf]
        %v398 = vld [vmem:[%s184 + $0x6c] sm:$0xf]
        %v399 = vld [vmem:[%s184 + $0x70] sm:$0xf]
        %v400 = vld [vmem:[%s184 + $0x74] sm:$0xf]
        %v401 = vld [vmem:[%s184 + $0x78] sm:$0xf]
        %v402 = vld [vmem:[%s184 + $0x7c] sm:$0xf]
        %v403 = vld [vmem:[%s184 + $0x80] sm:$0xf]
        %v404 = vld [vmem:[%s184 + $0x84] sm:$0xf]
        %v405 = vld [vmem:[%s184 + $0x88] sm:$0xf]
        %v406 = vld [vmem:[%s184 + $0x8c] sm:$0xf]
        %v407 = vld [vmem:[%s184 + $0x90] sm:$0xf]
        %v408 = vld [vmem:[%s184 + $0x94] sm:$0xf]
        %v409 = vld [vmem:[%s184 + $0x98] sm:$0xf]
        %v410 = vld [vmem:[%s184 + $0x9c] sm:$0xf]
        %v411 = vld [vmem:[%s184 + $0xa0] sm:$0xf]
        %v412 = vld [vmem:[%s184 + $0xa4] sm:$0xf]
        %v413 = vld [vmem:[%s184 + $0xa8] sm:$0xf]
        %v414 = vld [vmem:[%s184 + $0xac] sm:$0xf]
        %v415 = vld [vmem:[%s184 + $0xb0] sm:$0xf]
        %v416 = vld [vmem:[%s184 + $0xb4] sm:$0xf]
        %v417 = vld [vmem:[%s184 + $0xb8] sm:$0xf]
        %v418 = vld [vmem:[%s184 + $0xbc] sm:$0xf]
        %v419 = vld [vmem:[%s184 + $0xc0] sm:$0xf]
        %v420 = vld [vmem:[%s184 + $0xc4] sm:$0xf]
        %v421 = vld [vmem:[%s184 + $0xc8] sm:$0xf]
        %v422 = vld [vmem:[%s184 + $0xcc] sm:$0xf]
        %v423 = vld [vmem:[%s184 + $0xd0] sm:$0xf]
        %v424 = vld [vmem:[%s184 + $0xd4] sm:$0xf]
        %v425 = vld [vmem:[%s184 + $0xd8] sm:$0xf]
        %v426 = vld [vmem:[%s184 + $0xdc] sm:$0xf]
        %v427 = vld [vmem:[%s184 + $0xe0] sm:$0xf]
        %v428 = vld [vmem:[%s184 + $0xe4] sm:$0xf]
        %v429 = vld [vmem:[%s184 + $0xe8] sm:$0xf]
        %v430 = vld [vmem:[%s184 + $0xec] sm:$0xf]
        %v431 = vld [vmem:[%s184 + $0xf0] sm:$0xf]
        %v432 = vld [vmem:[%s184 + $0xf4] sm:$0xf]
        %v433 = vld [vmem:[%s184 + $0xf8] sm:$0xf]
        %v434 = vld [vmem:[%s184 + $0xfc] sm:$0xf]
        %v435 = vld [vmem:[%s184 + $0x100] sm:$0xf]
        %v436 = vld [vmem:[%s184 + $0x104] sm:$0xf]
        %v437 = vld [vmem:[%s184 + $0x108] sm:$0xf]
        %v438 = vld [vmem:[%s184 + $0x10c] sm:$0xf]
        %v439 = vld [vmem:[%s184 + $0x110] sm:$0xf]
        %v440 = vld [vmem:[%s184 + $0x114] sm:$0xf]
        %v441 = vld [vmem:[%s184 + $0x118] sm:$0xf]
        %v442 = vld [vmem:[%s184 + $0x11c] sm:$0xf]
        %v443 = vld [vmem:[%s184 + $0x120] sm:$0xf]
        %v444 = vld [vmem:[%s184 + $0x124] sm:$0xf]
        %v445 = vld [vmem:[%s184 + $0x128] sm:$0xf]
        %v446 = vld [vmem:[%s184 + $0x12c] sm:$0xf]
        %v447 = vld [vmem:[%s184 + $0x130] sm:$0xf]
        %v448 = vld [vmem:[%s184 + $0x134] sm:$0xf]
        %v449 = vld [vmem:[%s184 + $0x138] sm:$0xf]
        %v450 = vld [vmem:[%s184 + $0x13c] sm:$0xf]
        %v451 = vld [vmem:[%s184 + $0x140] sm:$0xf]
        %v452 = vld [vmem:[%s184 + $0x144] sm:$0xf]
        %v453 = vld [vmem:[%s184 + $0x148] sm:$0xf]
        %v454 = vld [vmem:[%s184 + $0x14c] sm:$0xf]
        %v455 = vld [vmem:[%s184 + $0x150] sm:$0xf]
        %v456 = vld [vmem:[%s184 + $0x154] sm:$0xf]
        %v457 = vld [vmem:[%s184 + $0x158] sm:$0xf]
        %v458 = vld [vmem:[%s184 + $0x15c] sm:$0xf]
        %v459 = vld [vmem:[%s184 + $0x160] sm:$0xf]
        %v460 = vld [vmem:[%s184 + $0x164] sm:$0xf]
        %v461 = vld [vmem:[%s184 + $0x168] sm:$0xf]
        %v462 = vld [vmem:[%s184 + $0x16c] sm:$0xf]
        %v463 = vld [vmem:[%s184 + $0x170] sm:$0xf]
        %v464 = vld [vmem:[%s184 + $0x174] sm:$0xf]
        %v465 = vld [vmem:[%s184 + $0x178] sm:$0xf]
        %v466 = vld [vmem:[%s184 + $0x17c] sm:$0xf]
        %v467 = vld [vmem:[%s184 + $0x180] sm:$0xf]
        %v468 = vld [vmem:[%s184 + $0x184] sm:$0xf]
        %v469 = vld [vmem:[%s184 + $0x188] sm:$0xf]
        %v470 = vld [vmem:[%s184 + $0x18c] sm:$0xf]
        %v471 = vld [vmem:[%s184 + $0x190] sm:$0xf]
        %v472 = vld [vmem:[%s184 + $0x194] sm:$0xf]
        %v473 = vld [vmem:[%s184 + $0x198] sm:$0xf]
        %v474 = vld [vmem:[%s184 + $0x19c] sm:$0xf]
        %v475 = vld [vmem:[%s184 + $0x1a0] sm:$0xf]
        %v476 = vld [vmem:[%s184 + $0x1a4] sm:$0xf]
        %v477 = vld [vmem:[%s184 + $0x1a8] sm:$0xf]
        %v478 = vld [vmem:[%s184 + $0x1ac] sm:$0xf]
        %v479 = vld [vmem:[%s184 + $0x1b0] sm:$0xf]
        %v480 = vld [vmem:[%s184 + $0x1b4] sm:$0xf]
        %v481 = vld [vmem:[%s184 + $0x1b8] sm:$0xf]
        %v482 = vld [vmem:[%s184 + $0x1bc] sm:$0xf]
        %v483 = vld [vmem:[%s184 + $0x1c0] sm:$0xf]
        %v484 = vld [vmem:[%s184 + $0x1c4] sm:$0xf]
        %v485 = vld [vmem:[%s184 + $0x1c8] sm:$0xf]
        %v486 = vld [vmem:[%s184 + $0x1cc] sm:$0xf]
        %v487 = vld [vmem:[%s184 + $0x1d0] sm:$0xf]
        %v488 = vld [vmem:[%s184 + $0x1d4] sm:$0xf]
        %v489 = vld [vmem:[%s184 + $0x1d8] sm:$0xf]
        %v490 = vld [vmem:[%s184 + $0x1dc] sm:$0xf]
        %v491 = vld [vmem:[%s184 + $0x1e0] sm:$0xf]
        %v492 = vld [vmem:[%s184 + $0x1e4] sm:$0xf]
        %v493 = vld [vmem:[%s184 + $0x1e8] sm:$0xf]
        %v494 = vld [vmem:[%s184 + $0x1ec] sm:$0xf]
        %v495 = vld [vmem:[%s184 + $0x1f0] sm:$0xf]
        %v496 = vld [vmem:[%s184 + $0x1f4] sm:$0xf]
        %v497 = vld [vmem:[%s184 + $0x1f8] sm:$0xf]
        %v498 = vld [vmem:[%s184 + $0x1fc] sm:$0xf]
        %vm499 = vsmask.f32 256
        %vm500 = vsmask.f32 4368
        %vm501 = vmor %vm499, %vm500
        %v503 = vshrl.u32 %v371, 16
        %v505 = vrot.slane %v503, 7
        %v506 = vshll.u32 %v371, 16
        %v508 = vor.u32 %v505, %v506
        %v509 = vrot.slane %v505, 4
        %v511 = vshrl.u32 %v372, 16
        %v513 = vrot.slane %v511, 7
        %v514 = vshll.u32 %v372, 16
        %v516 = vor.u32 %v513, %v514
        %v517 = vsel %vm501, %v509, %v516
        %v518 = vrot.slane %v513, 4
        %v520 = vshrl.u32 %v373, 16
        %v522 = vrot.slane %v520, 7
        %v523 = vshll.u32 %v373, 16
        %v525 = vor.u32 %v522, %v523
        %v526 = vsel %vm501, %v518, %v525
        %v527 = vrot.slane %v522, 4
        %v529 = vshrl.u32 %v374, 16
        %v531 = vrot.slane %v529, 7
        %v532 = vshll.u32 %v374, 16
        %v534 = vor.u32 %v531, %v532
        %v535 = vsel %vm501, %v527, %v534
        %v536 = vrot.slane %v531, 4
        %v538 = vshrl.u32 %v375, 16
        %v540 = vrot.slane %v538, 7
        %v541 = vshll.u32 %v375, 16
        %v543 = vor.u32 %v540, %v541
        %v544 = vrot.slane %v540, 4
        %v546 = vshrl.u32 %v376, 16
        %v548 = vrot.slane %v546, 7
        %v549 = vshll.u32 %v376, 16
        %v551 = vor.u32 %v548, %v549
        %v552 = vsel %vm501, %v544, %v551
        %v553 = vrot.slane %v548, 4
        %v555 = vshrl.u32 %v377, 16
        %v557 = vrot.slane %v555, 7
        %v558 = vshll.u32 %v377, 16
        %v560 = vor.u32 %v557, %v558
        %v561 = vsel %vm501, %v553, %v560
        %v562 = vrot.slane %v557, 4
        %v564 = vshrl.u32 %v378, 16
        %v566 = vrot.slane %v564, 7
        %v567 = vshll.u32 %v378, 16
        %v569 = vor.u32 %v566, %v567
        %v570 = vsel %vm501, %v562, %v569
        %v571 = vrot.slane %v566, 4
        %v573 = vshrl.u32 %v379, 16
        %v575 = vrot.slane %v573, 7
        %v576 = vshll.u32 %v379, 16
        %v578 = vor.u32 %v575, %v576
        %v579 = vrot.slane %v575, 4
        %v581 = vshrl.u32 %v380, 16
        %v583 = vrot.slane %v581, 7
        %v584 = vshll.u32 %v380, 16
        %v586 = vor.u32 %v583, %v584
        %v587 = vsel %vm501, %v579, %v586
        %v588 = vrot.slane %v583, 4
        %v590 = vshrl.u32 %v381, 16
        %v592 = vrot.slane %v590, 7
        %v593 = vshll.u32 %v381, 16
        %v595 = vor.u32 %v592, %v593
        %v596 = vsel %vm501, %v588, %v595
        %v597 = vrot.slane %v592, 4
        %v599 = vshrl.u32 %v382, 16
        %v601 = vrot.slane %v599, 7
        %v602 = vshll.u32 %v382, 16
        %v604 = vor.u32 %v601, %v602
        %v605 = vsel %vm501, %v597, %v604
        %v606 = vrot.slane %v601, 4
        %v608 = vshrl.u32 %v383, 16
        %v610 = vrot.slane %v608, 7
        %v611 = vshll.u32 %v383, 16
        %v613 = vor.u32 %v610, %v611
        %v614 = vrot.slane %v610, 4
        %v616 = vshrl.u32 %v384, 16
        %v618 = vrot.slane %v616, 7
        %v619 = vshll.u32 %v384, 16
        %v621 = vor.u32 %v618, %v619
        %v622 = vsel %vm501, %v614, %v621
        %v623 = vrot.slane %v618, 4
        %v625 = vshrl.u32 %v385, 16
        %v627 = vrot.slane %v625, 7
        %v628 = vshll.u32 %v385, 16
        %v630 = vor.u32 %v627, %v628
        %v631 = vsel %vm501, %v623, %v630
        %v632 = vrot.slane %v627, 4
        %v634 = vshrl.u32 %v386, 16
        %v636 = vrot.slane %v634, 7
        %v637 = vshll.u32 %v386, 16
        %v639 = vor.u32 %v636, %v637
        %v640 = vsel %vm501, %v632, %v639
        %v641 = vrot.slane %v636, 4
        %v643 = vshrl.u32 %v387, 16
        %v645 = vrot.slane %v643, 7
        %v646 = vshll.u32 %v387, 16
        %v648 = vor.u32 %v645, %v646
        %v649 = vrot.slane %v645, 4
        %v651 = vshrl.u32 %v388, 16
        %v653 = vrot.slane %v651, 7
        %v654 = vshll.u32 %v388, 16
        %v656 = vor.u32 %v653, %v654
        %v657 = vsel %vm501, %v649, %v656
        %v658 = vrot.slane %v653, 4
        %v660 = vshrl.u32 %v389, 16
        %v662 = vrot.slane %v660, 7
        %v663 = vshll.u32 %v389, 16
        %v665 = vor.u32 %v662, %v663
        %v666 = vsel %vm501, %v658, %v665
        %v667 = vrot.slane %v662, 4
        %v669 = vshrl.u32 %v390, 16
        %v671 = vrot.slane %v669, 7
        %v672 = vshll.u32 %v390, 16
        %v674 = vor.u32 %v671, %v672
        %v675 = vsel %vm501, %v667, %v674
        %v676 = vrot.slane %v671, 4
        %v678 = vshrl.u32 %v391, 16
        %v680 = vrot.slane %v678, 7
        %v681 = vshll.u32 %v391, 16
        %v683 = vor.u32 %v680, %v681
        %v684 = vrot.slane %v680, 4
        %v686 = vshrl.u32 %v392, 16
        %v688 = vrot.slane %v686, 7
        %v689 = vshll.u32 %v392, 16
        %v691 = vor.u32 %v688, %v689
        %v692 = vsel %vm501, %v684, %v691
        %v693 = vrot.slane %v688, 4
        %v695 = vshrl.u32 %v393, 16
        %v697 = vrot.slane %v695, 7
        %v698 = vshll.u32 %v393, 16
        %v700 = vor.u32 %v697, %v698
        %v701 = vsel %vm501, %v693, %v700
        %v702 = vrot.slane %v697, 4
        %v704 = vshrl.u32 %v394, 16
        %v706 = vrot.slane %v704, 7
        %v707 = vshll.u32 %v394, 16
        %v709 = vor.u32 %v706, %v707
        %v710 = vsel %vm501, %v702, %v709
        %v711 = vrot.slane %v706, 4
        %v713 = vshrl.u32 %v395, 16
        %v715 = vrot.slane %v713, 7
        %v716 = vshll.u32 %v395, 16
        %v718 = vor.u32 %v715, %v716
        %v719 = vrot.slane %v715, 4
        %v721 = vshrl.u32 %v396, 16
        %v723 = vrot.slane %v721, 7
        %v724 = vshll.u32 %v396, 16
        %v726 = vor.u32 %v723, %v724
        %v727 = vsel %vm501, %v719, %v726
        %v728 = vrot.slane %v723, 4
        %v730 = vshrl.u32 %v397, 16
        %v732 = vrot.slane %v730, 7
        %v733 = vshll.u32 %v397, 16
        %v735 = vor.u32 %v732, %v733
        %v736 = vsel %vm501, %v728, %v735
        %v737 = vrot.slane %v732, 4
        %v739 = vshrl.u32 %v398, 16
        %v741 = vrot.slane %v739, 7
        %v742 = vshll.u32 %v398, 16
        %v744 = vor.u32 %v741, %v742
        %v745 = vsel %vm501, %v737, %v744
        %v746 = vrot.slane %v741, 4
        %v748 = vshrl.u32 %v399, 16
        %v750 = vrot.slane %v748, 7
        %v751 = vshll.u32 %v399, 16
        %v753 = vor.u32 %v750, %v751
        %v754 = vrot.slane %v750, 4
        %v756 = vshrl.u32 %v400, 16
        %v758 = vrot.slane %v756, 7
        %v759 = vshll.u32 %v400, 16
        %v761 = vor.u32 %v758, %v759
        %v762 = vsel %vm501, %v754, %v761
        %v763 = vrot.slane %v758, 4
        %v765 = vshrl.u32 %v401, 16
        %v767 = vrot.slane %v765, 7
        %v768 = vshll.u32 %v401, 16
        %v770 = vor.u32 %v767, %v768
        %v771 = vsel %vm501, %v763, %v770
        %v772 = vrot.slane %v767, 4
        %v774 = vshrl.u32 %v402, 16
        %v776 = vrot.slane %v774, 7
        %v777 = vshll.u32 %v402, 16
        %v779 = vor.u32 %v776, %v777
        %v780 = vsel %vm501, %v772, %v779
        %v781 = vrot.slane %v776, 4
        %v783 = vshrl.u32 %v403, 16
        %v785 = vrot.slane %v783, 7
        %v786 = vshll.u32 %v403, 16
        %v788 = vor.u32 %v785, %v786
        %v789 = vrot.slane %v785, 4
        %v791 = vshrl.u32 %v404, 16
        %v793 = vrot.slane %v791, 7
        %v794 = vshll.u32 %v404, 16
        %v796 = vor.u32 %v793, %v794
        %v797 = vsel %vm501, %v789, %v796
        %v798 = vrot.slane %v793, 4
        %v800 = vshrl.u32 %v405, 16
        %v802 = vrot.slane %v800, 7
        %v803 = vshll.u32 %v405, 16
        %v805 = vor.u32 %v802, %v803
        %v806 = vsel %vm501, %v798, %v805
        %v807 = vrot.slane %v802, 4
        %v809 = vshrl.u32 %v406, 16
        %v811 = vrot.slane %v809, 7
        %v812 = vshll.u32 %v406, 16
        %v814 = vor.u32 %v811, %v812
        %v815 = vsel %vm501, %v807, %v814
        %v816 = vrot.slane %v811, 4
        %v818 = vshrl.u32 %v407, 16
        %v820 = vrot.slane %v818, 7
        %v821 = vshll.u32 %v407, 16
        %v823 = vor.u32 %v820, %v821
        %v824 = vrot.slane %v820, 4
        %v826 = vshrl.u32 %v408, 16
        %v828 = vrot.slane %v826, 7
        %v829 = vshll.u32 %v408, 16
        %v831 = vor.u32 %v828, %v829
        %v832 = vsel %vm501, %v824, %v831
        %v833 = vrot.slane %v828, 4
        %v835 = vshrl.u32 %v409, 16
        %v837 = vrot.slane %v835, 7
        %v838 = vshll.u32 %v409, 16
        %v840 = vor.u32 %v837, %v838
        %v841 = vsel %vm501, %v833, %v840
        %v842 = vrot.slane %v837, 4
        %v844 = vshrl.u32 %v410, 16
        %v846 = vrot.slane %v844, 7
        %v847 = vshll.u32 %v410, 16
        %v849 = vor.u32 %v846, %v847
        %v850 = vsel %vm501, %v842, %v849
        %v851 = vrot.slane %v846, 4
        %v853 = vshrl.u32 %v411, 16
        %v855 = vrot.slane %v853, 7
        %v856 = vshll.u32 %v411, 16
        %v858 = vor.u32 %v855, %v856
        %v859 = vrot.slane %v855, 4
        %v861 = vshrl.u32 %v412, 16
        %v863 = vrot.slane %v861, 7
        %v864 = vshll.u32 %v412, 16
        %v866 = vor.u32 %v863, %v864
        %v867 = vsel %vm501, %v859, %v866
        %v868 = vrot.slane %v863, 4
        %v870 = vshrl.u32 %v413, 16
        %v872 = vrot.slane %v870, 7
        %v873 = vshll.u32 %v413, 16
        %v875 = vor.u32 %v872, %v873
        %v876 = vsel %vm501, %v868, %v875
        %v877 = vrot.slane %v872, 4
        %v879 = vshrl.u32 %v414, 16
        %v881 = vrot.slane %v879, 7
        %v882 = vshll.u32 %v414, 16
        %v884 = vor.u32 %v881, %v882
        %v885 = vsel %vm501, %v877, %v884
        %v886 = vrot.slane %v881, 4
        %v888 = vshrl.u32 %v415, 16
        %v890 = vrot.slane %v888, 7
        %v891 = vshll.u32 %v415, 16
        %v893 = vor.u32 %v890, %v891
        %v894 = vrot.slane %v890, 4
        %v896 = vshrl.u32 %v416, 16
        %v898 = vrot.slane %v896, 7
        %v899 = vshll.u32 %v416, 16
        %v901 = vor.u32 %v898, %v899
        %v902 = vsel %vm501, %v894, %v901
        %v903 = vrot.slane %v898, 4
        %v905 = vshrl.u32 %v417, 16
        %v907 = vrot.slane %v905, 7
        %v908 = vshll.u32 %v417, 16
        %v910 = vor.u32 %v907, %v908
        %v911 = vsel %vm501, %v903, %v910
        %v912 = vrot.slane %v907, 4
        %v914 = vshrl.u32 %v418, 16
        %v916 = vrot.slane %v914, 7
        %v917 = vshll.u32 %v418, 16
        %v919 = vor.u32 %v916, %v917
        %v920 = vsel %vm501, %v912, %v919
        %v921 = vrot.slane %v916, 4
        %v923 = vshrl.u32 %v419, 16
        %v925 = vrot.slane %v923, 7
        %v926 = vshll.u32 %v419, 16
        %v928 = vor.u32 %v925, %v926
        %v929 = vrot.slane %v925, 4
        %v931 = vshrl.u32 %v420, 16
        %v933 = vrot.slane %v931, 7
        %v934 = vshll.u32 %v420, 16
        %v936 = vor.u32 %v933, %v934
        %v937 = vsel %vm501, %v929, %v936
        %v938 = vrot.slane %v933, 4
        %v940 = vshrl.u32 %v421, 16
        %v942 = vrot.slane %v940, 7
        %v943 = vshll.u32 %v421, 16
        %v945 = vor.u32 %v942, %v943
        %v946 = vsel %vm501, %v938, %v945
        %v947 = vrot.slane %v942, 4
        %v949 = vshrl.u32 %v422, 16
        %v951 = vrot.slane %v949, 7
        %v952 = vshll.u32 %v422, 16
        %v954 = vor.u32 %v951, %v952
        %v955 = vsel %vm501, %v947, %v954
        %v956 = vrot.slane %v951, 4
        %v958 = vshrl.u32 %v423, 16
        %v960 = vrot.slane %v958, 7
        %v961 = vshll.u32 %v423, 16
        %v963 = vor.u32 %v960, %v961
        %v964 = vrot.slane %v960, 4
        %v966 = vshrl.u32 %v424, 16
        %v968 = vrot.slane %v966, 7
        %v969 = vshll.u32 %v424, 16
        %v971 = vor.u32 %v968, %v969
        %v972 = vsel %vm501, %v964, %v971
        %v973 = vrot.slane %v968, 4
        %v975 = vshrl.u32 %v425, 16
        %v977 = vrot.slane %v975, 7
        %v978 = vshll.u32 %v425, 16
        %v980 = vor.u32 %v977, %v978
        %v981 = vsel %vm501, %v973, %v980
        %v982 = vrot.slane %v977, 4
        %v984 = vshrl.u32 %v426, 16
        %v986 = vrot.slane %v984, 7
        %v987 = vshll.u32 %v426, 16
        %v989 = vor.u32 %v986, %v987
        %v990 = vsel %vm501, %v982, %v989
        %v991 = vrot.slane %v986, 4
        %v993 = vshrl.u32 %v427, 16
        %v995 = vrot.slane %v993, 7
        %v996 = vshll.u32 %v427, 16
        %v998 = vor.u32 %v995, %v996
        %v999 = vrot.slane %v995, 4
        %v1001 = vshrl.u32 %v428, 16
        %v1003 = vrot.slane %v1001, 7
        %v1004 = vshll.u32 %v428, 16
        %v1006 = vor.u32 %v1003, %v1004
        %v1007 = vsel %vm501, %v999, %v1006
        %v1008 = vrot.slane %v1003, 4
        %v1010 = vshrl.u32 %v429, 16
        %v1012 = vrot.slane %v1010, 7
        %v1013 = vshll.u32 %v429, 16
        %v1015 = vor.u32 %v1012, %v1013
        %v1016 = vsel %vm501, %v1008, %v1015
        %v1017 = vrot.slane %v1012, 4
        %v1019 = vshrl.u32 %v430, 16
        %v1021 = vrot.slane %v1019, 7
        %v1022 = vshll.u32 %v430, 16
        %v1024 = vor.u32 %v1021, %v1022
        %v1025 = vsel %vm501, %v1017, %v1024
        %v1026 = vrot.slane %v1021, 4
        %v1028 = vshrl.u32 %v431, 16
        %v1030 = vrot.slane %v1028, 7
        %v1031 = vshll.u32 %v431, 16
        %v1033 = vor.u32 %v1030, %v1031
        %v1034 = vrot.slane %v1030, 4
        %v1036 = vshrl.u32 %v432, 16
        %v1038 = vrot.slane %v1036, 7
        %v1039 = vshll.u32 %v432, 16
        %v1041 = vor.u32 %v1038, %v1039
        %v1042 = vsel %vm501, %v1034, %v1041
        %v1043 = vrot.slane %v1038, 4
        %v1045 = vshrl.u32 %v433, 16
        %v1047 = vrot.slane %v1045, 7
        %v1048 = vshll.u32 %v433, 16
        %v1050 = vor.u32 %v1047, %v1048
        %v1051 = vsel %vm501, %v1043, %v1050
        %v1052 = vrot.slane %v1047, 4
        %v1054 = vshrl.u32 %v434, 16
        %v1056 = vrot.slane %v1054, 7
        %v1057 = vshll.u32 %v434, 16
        %v1059 = vor.u32 %v1056, %v1057
        %v1060 = vsel %vm501, %v1052, %v1059
        %v1061 = vrot.slane %v1056, 4
        %v1063 = vshrl.u32 %v435, 16
        %v1065 = vrot.slane %v1063, 7
        %v1066 = vshll.u32 %v435, 16
        %v1068 = vor.u32 %v1065, %v1066
        %v1069 = vrot.slane %v1065, 4
        %v1071 = vshrl.u32 %v436, 16
        %v1073 = vrot.slane %v1071, 7
        %v1074 = vshll.u32 %v436, 16
        %v1076 = vor.u32 %v1073, %v1074
        %v1077 = vsel %vm501, %v1069, %v1076
        %v1078 = vrot.slane %v1073, 4
        %v1080 = vshrl.u32 %v437, 16
        %v1082 = vrot.slane %v1080, 7
        %v1083 = vshll.u32 %v437, 16
        %v1085 = vor.u32 %v1082, %v1083
        %v1086 = vsel %vm501, %v1078, %v1085
        %v1087 = vrot.slane %v1082, 4
        %v1089 = vshrl.u32 %v438, 16
        %v1091 = vrot.slane %v1089, 7
        %v1092 = vshll.u32 %v438, 16
        %v1094 = vor.u32 %v1091, %v1092
        %v1095 = vsel %vm501, %v1087, %v1094
        %v1096 = vrot.slane %v1091, 4
        %v1098 = vshrl.u32 %v439, 16
        %v1100 = vrot.slane %v1098, 7
        %v1101 = vshll.u32 %v439, 16
        %v1103 = vor.u32 %v1100, %v1101
        %v1104 = vrot.slane %v1100, 4
        %v1106 = vshrl.u32 %v440, 16
        %v1108 = vrot.slane %v1106, 7
        %v1109 = vshll.u32 %v440, 16
        %v1111 = vor.u32 %v1108, %v1109
        %v1112 = vsel %vm501, %v1104, %v1111
        %v1113 = vrot.slane %v1108, 4
        %v1115 = vshrl.u32 %v441, 16
        %v1117 = vrot.slane %v1115, 7
        %v1118 = vshll.u32 %v441, 16
        %v1120 = vor.u32 %v1117, %v1118
        %v1121 = vsel %vm501, %v1113, %v1120
        %v1122 = vrot.slane %v1117, 4
        %v1124 = vshrl.u32 %v442, 16
        %v1126 = vrot.slane %v1124, 7
        %v1127 = vshll.u32 %v442, 16
        %v1129 = vor.u32 %v1126, %v1127
        %v1130 = vsel %vm501, %v1122, %v1129
        %v1131 = vrot.slane %v1126, 4
        %v1133 = vshrl.u32 %v443, 16
        %v1135 = vrot.slane %v1133, 7
        %v1136 = vshll.u32 %v443, 16
        %v1138 = vor.u32 %v1135, %v1136
        %v1139 = vrot.slane %v1135, 4
        %v1141 = vshrl.u32 %v444, 16
        %v1143 = vrot.slane %v1141, 7
        %v1144 = vshll.u32 %v444, 16
        %v1146 = vor.u32 %v1143, %v1144
        %v1147 = vsel %vm501, %v1139, %v1146
        %v1148 = vrot.slane %v1143, 4
        %v1150 = vshrl.u32 %v445, 16
        %v1152 = vrot.slane %v1150, 7
        %v1153 = vshll.u32 %v445, 16
        %v1155 = vor.u32 %v1152, %v1153
        %v1156 = vsel %vm501, %v1148, %v1155
        %v1157 = vrot.slane %v1152, 4
        %v1159 = vshrl.u32 %v446, 16
        %v1161 = vrot.slane %v1159, 7
        %v1162 = vshll.u32 %v446, 16
        %v1164 = vor.u32 %v1161, %v1162
        %v1165 = vsel %vm501, %v1157, %v1164
        %v1166 = vrot.slane %v1161, 4
        %v1168 = vshrl.u32 %v447, 16
        %v1170 = vrot.slane %v1168, 7
        %v1171 = vshll.u32 %v447, 16
        %v1173 = vor.u32 %v1170, %v1171
        %v1174 = vrot.slane %v1170, 4
        %v1176 = vshrl.u32 %v448, 16
        %v1178 = vrot.slane %v1176, 7
        %v1179 = vshll.u32 %v448, 16
        %v1181 = vor.u32 %v1178, %v1179
        %v1182 = vsel %vm501, %v1174, %v1181
        %v1183 = vrot.slane %v1178, 4
        %v1185 = vshrl.u32 %v449, 16
        %v1187 = vrot.slane %v1185, 7
        %v1188 = vshll.u32 %v449, 16
        %v1190 = vor.u32 %v1187, %v1188
        %v1191 = vsel %vm501, %v1183, %v1190
        %v1192 = vrot.slane %v1187, 4
        %v1194 = vshrl.u32 %v450, 16
        %v1196 = vrot.slane %v1194, 7
        %v1197 = vshll.u32 %v450, 16
        %v1199 = vor.u32 %v1196, %v1197
        %v1200 = vsel %vm501, %v1192, %v1199
        %v1201 = vrot.slane %v1196, 4
        %v1203 = vshrl.u32 %v451, 16
        %v1205 = vrot.slane %v1203, 7
        %v1206 = vshll.u32 %v451, 16
        %v1208 = vor.u32 %v1205, %v1206
        %v1209 = vrot.slane %v1205, 4
        %v1211 = vshrl.u32 %v452, 16
        %v1213 = vrot.slane %v1211, 7
        %v1214 = vshll.u32 %v452, 16
        %v1216 = vor.u32 %v1213, %v1214
        %v1217 = vsel %vm501, %v1209, %v1216
        %v1218 = vrot.slane %v1213, 4
        %v1220 = vshrl.u32 %v453, 16
        %v1222 = vrot.slane %v1220, 7
        %v1223 = vshll.u32 %v453, 16
        %v1225 = vor.u32 %v1222, %v1223
        %v1226 = vsel %vm501, %v1218, %v1225
        %v1227 = vrot.slane %v1222, 4
        %v1229 = vshrl.u32 %v454, 16
        %v1231 = vrot.slane %v1229, 7
        %v1232 = vshll.u32 %v454, 16
        %v1234 = vor.u32 %v1231, %v1232
        %v1235 = vsel %vm501, %v1227, %v1234
        %v1236 = vrot.slane %v1231, 4
        %v1238 = vshrl.u32 %v455, 16
        %v1240 = vrot.slane %v1238, 7
        %v1241 = vshll.u32 %v455, 16
        %v1243 = vor.u32 %v1240, %v1241
        %v1244 = vrot.slane %v1240, 4
        %v1246 = vshrl.u32 %v456, 16
        %v1248 = vrot.slane %v1246, 7
        %v1249 = vshll.u32 %v456, 16
        %v1251 = vor.u32 %v1248, %v1249
        %v1252 = vsel %vm501, %v1244, %v1251
        %v1253 = vrot.slane %v1248, 4
        %v1255 = vshrl.u32 %v457, 16
        %v1257 = vrot.slane %v1255, 7
        %v1258 = vshll.u32 %v457, 16
        %v1260 = vor.u32 %v1257, %v1258
        %v1261 = vsel %vm501, %v1253, %v1260
        %v1262 = vrot.slane %v1257, 4
        %v1264 = vshrl.u32 %v458, 16
        %v1266 = vrot.slane %v1264, 7
        %v1267 = vshll.u32 %v458, 16
        %v1269 = vor.u32 %v1266, %v1267
        %v1270 = vsel %vm501, %v1262, %v1269
        %v1271 = vrot.slane %v1266, 4
        %v1273 = vshrl.u32 %v459, 16
        %v1275 = vrot.slane %v1273, 7
        %v1276 = vshll.u32 %v459, 16
        %v1278 = vor.u32 %v1275, %v1276
        %v1279 = vrot.slane %v1275, 4
        %v1281 = vshrl.u32 %v460, 16
        %v1283 = vrot.slane %v1281, 7
        %v1284 = vshll.u32 %v460, 16
        %v1286 = vor.u32 %v1283, %v1284
        %v1287 = vsel %vm501, %v1279, %v1286
        %v1288 = vrot.slane %v1283, 4
        %v1290 = vshrl.u32 %v461, 16
        %v1292 = vrot.slane %v1290, 7
        %v1293 = vshll.u32 %v461, 16
        %v1295 = vor.u32 %v1292, %v1293
        %v1296 = vsel %vm501, %v1288, %v1295
        %v1297 = vrot.slane %v1292, 4
        %v1299 = vshrl.u32 %v462, 16
        %v1301 = vrot.slane %v1299, 7
        %v1302 = vshll.u32 %v462, 16
        %v1304 = vor.u32 %v1301, %v1302
        %v1305 = vsel %vm501, %v1297, %v1304
        %v1306 = vrot.slane %v1301, 4
        %v1308 = vshrl.u32 %v463, 16
        %v1310 = vrot.slane %v1308, 7
        %v1311 = vshll.u32 %v463, 16
        %v1313 = vor.u32 %v1310, %v1311
        %v1314 = vrot.slane %v1310, 4
        %v1316 = vshrl.u32 %v464, 16
        %v1318 = vrot.slane %v1316, 7
        %v1319 = vshll.u32 %v464, 16
        %v1321 = vor.u32 %v1318, %v1319
        %v1322 = vsel %vm501, %v1314, %v1321
        %v1323 = vrot.slane %v1318, 4
        %v1325 = vshrl.u32 %v465, 16
        %v1327 = vrot.slane %v1325, 7
        %v1328 = vshll.u32 %v465, 16
        %v1330 = vor.u32 %v1327, %v1328
        %v1331 = vsel %vm501, %v1323, %v1330
        %v1332 = vrot.slane %v1327, 4
        %v1334 = vshrl.u32 %v466, 16
        %v1336 = vrot.slane %v1334, 7
        %v1337 = vshll.u32 %v466, 16
        %v1339 = vor.u32 %v1336, %v1337
        %v1340 = vsel %vm501, %v1332, %v1339
        %v1341 = vrot.slane %v1336, 4
        %v1343 = vshrl.u32 %v467, 16
        %v1345 = vrot.slane %v1343, 7
        %v1346 = vshll.u32 %v467, 16
        %v1348 = vor.u32 %v1345, %v1346
        %v1349 = vrot.slane %v1345, 4
        %v1351 = vshrl.u32 %v468, 16
        %v1353 = vrot.slane %v1351, 7
        %v1354 = vshll.u32 %v468, 16
        %v1356 = vor.u32 %v1353, %v1354
        %v1357 = vsel %vm501, %v1349, %v1356
        %v1358 = vrot.slane %v1353, 4
        %v1360 = vshrl.u32 %v469, 16
        %v1362 = vrot.slane %v1360, 7
        %v1363 = vshll.u32 %v469, 16
        %v1365 = vor.u32 %v1362, %v1363
        %v1366 = vsel %vm501, %v1358, %v1365
        %v1367 = vrot.slane %v1362, 4
        %v1369 = vshrl.u32 %v470, 16
        %v1371 = vrot.slane %v1369, 7
        %v1372 = vshll.u32 %v470, 16
        %v1374 = vor.u32 %v1371, %v1372
        %v1375 = vsel %vm501, %v1367, %v1374
        %v1376 = vrot.slane %v1371, 4
        %v1378 = vshrl.u32 %v471, 16
        %v1380 = vrot.slane %v1378, 7
        %v1381 = vshll.u32 %v471, 16
        %v1383 = vor.u32 %v1380, %v1381
        %v1384 = vrot.slane %v1380, 4
        %v1386 = vshrl.u32 %v472, 16
        %v1388 = vrot.slane %v1386, 7
        %v1389 = vshll.u32 %v472, 16
        %v1391 = vor.u32 %v1388, %v1389
        %v1392 = vsel %vm501, %v1384, %v1391
        %v1393 = vrot.slane %v1388, 4
        %v1395 = vshrl.u32 %v473, 16
        %v1397 = vrot.slane %v1395, 7
        %v1398 = vshll.u32 %v473, 16
        %v1400 = vor.u32 %v1397, %v1398
        %v1401 = vsel %vm501, %v1393, %v1400
        %v1402 = vrot.slane %v1397, 4
        %v1404 = vshrl.u32 %v474, 16
        %v1406 = vrot.slane %v1404, 7
        %v1407 = vshll.u32 %v474, 16
        %v1409 = vor.u32 %v1406, %v1407
        %v1410 = vsel %vm501, %v1402, %v1409
        %v1411 = vrot.slane %v1406, 4
        %v1413 = vshrl.u32 %v475, 16
        %v1415 = vrot.slane %v1413, 7
        %v1416 = vshll.u32 %v475, 16
        %v1418 = vor.u32 %v1415, %v1416
        %v1419 = vrot.slane %v1415, 4
        %v1421 = vshrl.u32 %v476, 16
        %v1423 = vrot.slane %v1421, 7
        %v1424 = vshll.u32 %v476, 16
        %v1426 = vor.u32 %v1423, %v1424
        %v1427 = vsel %vm501, %v1419, %v1426
        %v1428 = vrot.slane %v1423, 4
        %v1430 = vshrl.u32 %v477, 16
        %v1432 = vrot.slane %v1430, 7
        %v1433 = vshll.u32 %v477, 16
        %v1435 = vor.u32 %v1432, %v1433
        %v1436 = vsel %vm501, %v1428, %v1435
        %v1437 = vrot.slane %v1432, 4
        %v1439 = vshrl.u32 %v478, 16
        %v1441 = vrot.slane %v1439, 7
        %v1442 = vshll.u32 %v478, 16
        %v1444 = vor.u32 %v1441, %v1442
        %v1445 = vsel %vm501, %v1437, %v1444
        %v1446 = vrot.slane %v1441, 4
        %v1448 = vshrl.u32 %v479, 16
        %v1450 = vrot.slane %v1448, 7
        %v1451 = vshll.u32 %v479, 16
        %v1453 = vor.u32 %v1450, %v1451
        %v1454 = vrot.slane %v1450, 4
        %v1456 = vshrl.u32 %v480, 16
        %v1458 = vrot.slane %v1456, 7
        %v1459 = vshll.u32 %v480, 16
        %v1461 = vor.u32 %v1458, %v1459
        %v1462 = vsel %vm501, %v1454, %v1461
        %v1463 = vrot.slane %v1458, 4
        %v1465 = vshrl.u32 %v481, 16
        %v1467 = vrot.slane %v1465, 7
        %v1468 = vshll.u32 %v481, 16
        %v1470 = vor.u32 %v1467, %v1468
        %v1471 = vsel %vm501, %v1463, %v1470
        %v1472 = vrot.slane %v1467, 4
        %v1474 = vshrl.u32 %v482, 16
        %v1476 = vrot.slane %v1474, 7
        %v1477 = vshll.u32 %v482, 16
        %v1479 = vor.u32 %v1476, %v1477
        %v1480 = vsel %vm501, %v1472, %v1479
        %v1481 = vrot.slane %v1476, 4
        %v1483 = vshrl.u32 %v483, 16
        %v1485 = vrot.slane %v1483, 7
        %v1486 = vshll.u32 %v483, 16
        %v1488 = vor.u32 %v1485, %v1486
        %v1489 = vrot.slane %v1485, 4
        %v1491 = vshrl.u32 %v484, 16
        %v1493 = vrot.slane %v1491, 7
        %v1494 = vshll.u32 %v484, 16
        %v1496 = vor.u32 %v1493, %v1494
        %v1497 = vsel %vm501, %v1489, %v1496
        %v1498 = vrot.slane %v1493, 4
        %v1500 = vshrl.u32 %v485, 16
        %v1502 = vrot.slane %v1500, 7
        %v1503 = vshll.u32 %v485, 16
        %v1505 = vor.u32 %v1502, %v1503
        %v1506 = vsel %vm501, %v1498, %v1505
        %v1507 = vrot.slane %v1502, 4
        %v1509 = vshrl.u32 %v486, 16
        %v1511 = vrot.slane %v1509, 7
        %v1512 = vshll.u32 %v486, 16
        %v1514 = vor.u32 %v1511, %v1512
        %v1515 = vsel %vm501, %v1507, %v1514
        %v1516 = vrot.slane %v1511, 4
        %v1518 = vshrl.u32 %v487, 16
        %v1520 = vrot.slane %v1518, 7
        %v1521 = vshll.u32 %v487, 16
        %v1523 = vor.u32 %v1520, %v1521
        %v1524 = vrot.slane %v1520, 4
        %v1526 = vshrl.u32 %v488, 16
        %v1528 = vrot.slane %v1526, 7
        %v1529 = vshll.u32 %v488, 16
        %v1531 = vor.u32 %v1528, %v1529
        %v1532 = vsel %vm501, %v1524, %v1531
        %v1533 = vrot.slane %v1528, 4
        %v1535 = vshrl.u32 %v489, 16
        %v1537 = vrot.slane %v1535, 7
        %v1538 = vshll.u32 %v489, 16
        %v1540 = vor.u32 %v1537, %v1538
        %v1541 = vsel %vm501, %v1533, %v1540
        %v1542 = vrot.slane %v1537, 4
        %v1544 = vshrl.u32 %v490, 16
        %v1546 = vrot.slane %v1544, 7
        %v1547 = vshll.u32 %v490, 16
        %v1549 = vor.u32 %v1546, %v1547
        %v1550 = vsel %vm501, %v1542, %v1549
        %v1551 = vrot.slane %v1546, 4
        %v1553 = vshrl.u32 %v491, 16
        %v1555 = vrot.slane %v1553, 7
        %v1556 = vshll.u32 %v491, 16
        %v1558 = vor.u32 %v1555, %v1556
        %v1559 = vrot.slane %v1555, 4
        %v1561 = vshrl.u32 %v492, 16
        %v1563 = vrot.slane %v1561, 7
        %v1564 = vshll.u32 %v492, 16
        %v1566 = vor.u32 %v1563, %v1564
        %v1567 = vsel %vm501, %v1559, %v1566
        %v1568 = vrot.slane %v1563, 4
        %v1570 = vshrl.u32 %v493, 16
        %v1572 = vrot.slane %v1570, 7
        %v1573 = vshll.u32 %v493, 16
        %v1575 = vor.u32 %v1572, %v1573
        %v1576 = vsel %vm501, %v1568, %v1575
        %v1577 = vrot.slane %v1572, 4
        %v1579 = vshrl.u32 %v494, 16
        %v1581 = vrot.slane %v1579, 7
        %v1582 = vshll.u32 %v494, 16
        %v1584 = vor.u32 %v1581, %v1582
        %v1585 = vsel %vm501, %v1577, %v1584
        %v1586 = vrot.slane %v1581, 4
        %v1588 = vshrl.u32 %v495, 16
        %v1590 = vrot.slane %v1588, 7
        %v1591 = vshll.u32 %v495, 16
        %v1593 = vor.u32 %v1590, %v1591
        %v1594 = vrot.slane %v1590, 4
        %v1596 = vshrl.u32 %v496, 16
        %v1598 = vrot.slane %v1596, 7
        %v1599 = vshll.u32 %v496, 16
        %v1601 = vor.u32 %v1598, %v1599
        %v1602 = vsel %vm501, %v1594, %v1601
        %v1603 = vrot.slane %v1598, 4
        %v1605 = vshrl.u32 %v497, 16
        %v1607 = vrot.slane %v1605, 7
        %v1608 = vshll.u32 %v497, 16
        %v1610 = vor.u32 %v1607, %v1608
        %v1611 = vsel %vm501, %v1603, %v1610
        %v1612 = vrot.slane %v1607, 4
        %v1614 = vshrl.u32 %v498, 16
        %v1616 = vrot.slane %v1614, 7
        %v1617 = vshll.u32 %v498, 16
        %v1619 = vor.u32 %v1616, %v1617
        %v1620 = vsel %vm501, %v1612, %v1619
        %v1621 = vrot.slane %v1616, 4
        %s1782 = scalar_lea.vmem [#allocation2], 20
        %vm1783 = vcmask 1043456
        %vm1784 = vsmask.f32 7938
        %vm1785 = vmand %vm1783, %vm1784
        %v1786 = vld [vmem:[%s1782] sm:$0xf]
        %v1787 = vsel %vm1785, %v508, %v1786
        %1788 = vst [vmem:[%s1782] sm:$0xf] %v1787
        %1789 = vst [vmem:[%s1782 + $0x4] sm:$0xf] %v517
        %1790 = vst [vmem:[%s1782 + $0x8] sm:$0xf] %v526
        %1791 = vst [vmem:[%s1782 + $0xc] sm:$0xf] %v535
        %vm1792 = vcmask 1040384
        %vm1793 = vmand %vm1792, %vm499
        %v1794 = vld [vmem:[%s1782 + $0x10] sm:$0x1]
        %v1795 = vsel %vm1793, %v536, %v1794
        %1796 = vst [vmem:[%s1782 + $0x10] sm:$0x1] %v1795
        %v1797 = vld [vmem:[%s1782 + $0x14] sm:$0xf]
        %v1798 = vsel %vm1785, %v543, %v1797
        %1799 = vst [vmem:[%s1782 + $0x14] sm:$0xf] %v1798
        %1800 = vst [vmem:[%s1782 + $0x18] sm:$0xf] %v552
        %1801 = vst [vmem:[%s1782 + $0x1c] sm:$0xf] %v561
        %1802 = vst [vmem:[%s1782 + $0x20] sm:$0xf] %v570
        %v1803 = vld [vmem:[%s1782 + $0x24] sm:$0x1]
        %v1804 = vsel %vm1793, %v571, %v1803
        %1805 = vst [vmem:[%s1782 + $0x24] sm:$0x1] %v1804
        %v1806 = vld [vmem:[%s1782 + $0x28] sm:$0xf]
        %v1807 = vsel %vm1785, %v578, %v1806
        %1808 = vst [vmem:[%s1782 + $0x28] sm:$0xf] %v1807
        %1809 = vst [vmem:[%s1782 + $0x2c] sm:$0xf] %v587
        %1810 = vst [vmem:[%s1782 + $0x30] sm:$0xf] %v596
        %1811 = vst [vmem:[%s1782 + $0x34] sm:$0xf] %v605
        %v1812 = vld [vmem:[%s1782 + $0x38] sm:$0x1]
        %v1813 = vsel %vm1793, %v606, %v1812
        %1814 = vst [vmem:[%s1782 + $0x38] sm:$0x1] %v1813
        %v1815 = vld [vmem:[%s1782 + $0x3c] sm:$0xf]
        %v1816 = vsel %vm1785, %v613, %v1815
        %1817 = vst [vmem:[%s1782 + $0x3c] sm:$0xf] %v1816
        %1818 = vst [vmem:[%s1782 + $0x40] sm:$0xf] %v622
        %1819 = vst [vmem:[%s1782 + $0x44] sm:$0xf] %v631
        %1820 = vst [vmem:[%s1782 + $0x48] sm:$0xf] %v640
        %v1821 = vld [vmem:[%s1782 + $0x4c] sm:$0x1]
        %v1822 = vsel %vm1793, %v641, %v1821
        %1823 = vst [vmem:[%s1782 + $0x4c] sm:$0x1] %v1822
        %v1824 = vld [vmem:[%s1782 + $0x50] sm:$0xf]
        %v1825 = vsel %vm1785, %v648, %v1824
        %1826 = vst [vmem:[%s1782 + $0x50] sm:$0xf] %v1825
        %1827 = vst [vmem:[%s1782 + $0x54] sm:$0xf] %v657
        %1828 = vst [vmem:[%s1782 + $0x58] sm:$0xf] %v666
        %1829 = vst [vmem:[%s1782 + $0x5c] sm:$0xf] %v675
        %v1830 = vld [vmem:[%s1782 + $0x60] sm:$0x1]
        %v1831 = vsel %vm1793, %v676, %v1830
        %1832 = vst [vmem:[%s1782 + $0x60] sm:$0x1] %v1831
        %v1833 = vld [vmem:[%s1782 + $0x64] sm:$0xf]
        %v1834 = vsel %vm1785, %v683, %v1833
        %1835 = vst [vmem:[%s1782 + $0x64] sm:$0xf] %v1834
        %1836 = vst [vmem:[%s1782 + $0x68] sm:$0xf] %v692
        %1837 = vst [vmem:[%s1782 + $0x6c] sm:$0xf] %v701
        %1838 = vst [vmem:[%s1782 + $0x70] sm:$0xf] %v710
        %v1839 = vld [vmem:[%s1782 + $0x74] sm:$0x1]
        %v1840 = vsel %vm1793, %v711, %v1839
        %1841 = vst [vmem:[%s1782 + $0x74] sm:$0x1] %v1840
        %v1842 = vld [vmem:[%s1782 + $0x78] sm:$0xf]
        %v1843 = vsel %vm1785, %v718, %v1842
        %1844 = vst [vmem:[%s1782 + $0x78] sm:$0xf] %v1843
        %1845 = vst [vmem:[%s1782 + $0x7c] sm:$0xf] %v727
        %1846 = vst [vmem:[%s1782 + $0x80] sm:$0xf] %v736
        %1847 = vst [vmem:[%s1782 + $0x84] sm:$0xf] %v745
        %v1848 = vld [vmem:[%s1782 + $0x88] sm:$0x1]
        %v1849 = vsel %vm1793, %v746, %v1848
        %1850 = vst [vmem:[%s1782 + $0x88] sm:$0x1] %v1849
        %v1851 = vld [vmem:[%s1782 + $0x8c] sm:$0xf]
        %v1852 = vsel %vm1785, %v753, %v1851
        %1853 = vst [vmem:[%s1782 + $0x8c] sm:$0xf] %v1852
        %1854 = vst [vmem:[%s1782 + $0x90] sm:$0xf] %v762
        %1855 = vst [vmem:[%s1782 + $0x94] sm:$0xf] %v771
        %1856 = vst [vmem:[%s1782 + $0x98] sm:$0xf] %v780
        %v1857 = vld [vmem:[%s1782 + $0x9c] sm:$0x1]
        %v1858 = vsel %vm1793, %v781, %v1857
        %1859 = vst [vmem:[%s1782 + $0x9c] sm:$0x1] %v1858
        %v1860 = vld [vmem:[%s1782 + $0xa0] sm:$0xf]
        %v1861 = vsel %vm1785, %v788, %v1860
        %1862 = vst [vmem:[%s1782 + $0xa0] sm:$0xf] %v1861
        %1863 = vst [vmem:[%s1782 + $0xa4] sm:$0xf] %v797
        %1864 = vst [vmem:[%s1782 + $0xa8] sm:$0xf] %v806
        %1865 = vst [vmem:[%s1782 + $0xac] sm:$0xf] %v815
        %v1866 = vld [vmem:[%s1782 + $0xb0] sm:$0x1]
        %v1867 = vsel %vm1793, %v816, %v1866
        %1868 = vst [vmem:[%s1782 + $0xb0] sm:$0x1] %v1867
        %v1869 = vld [vmem:[%s1782 + $0xb4] sm:$0xf]
        %v1870 = vsel %vm1785, %v823, %v1869
        %1871 = vst [vmem:[%s1782 + $0xb4] sm:$0xf] %v1870
        %1872 = vst [vmem:[%s1782 + $0xb8] sm:$0xf] %v832
        %1873 = vst [vmem:[%s1782 + $0xbc] sm:$0xf] %v841
        %1874 = vst [vmem:[%s1782 + $0xc0] sm:$0xf] %v850
        %v1875 = vld [vmem:[%s1782 + $0xc4] sm:$0x1]
        %v1876 = vsel %vm1793, %v851, %v1875
        %1877 = vst [vmem:[%s1782 + $0xc4] sm:$0x1] %v1876
        %v1878 = vld [vmem:[%s1782 + $0xc8] sm:$0xf]
        %v1879 = vsel %vm1785, %v858, %v1878
        %1880 = vst [vmem:[%s1782 + $0xc8] sm:$0xf] %v1879
        %1881 = vst [vmem:[%s1782 + $0xcc] sm:$0xf] %v867
        %1882 = vst [vmem:[%s1782 + $0xd0] sm:$0xf] %v876
        %1883 = vst [vmem:[%s1782 + $0xd4] sm:$0xf] %v885
        %v1884 = vld [vmem:[%s1782 + $0xd8] sm:$0x1]
        %v1885 = vsel %vm1793, %v886, %v1884
        %1886 = vst [vmem:[%s1782 + $0xd8] sm:$0x1] %v1885
        %v1887 = vld [vmem:[%s1782 + $0xdc] sm:$0xf]
        %v1888 = vsel %vm1785, %v893, %v1887
        %1889 = vst [vmem:[%s1782 + $0xdc] sm:$0xf] %v1888
        %1890 = vst [vmem:[%s1782 + $0xe0] sm:$0xf] %v902
        %1891 = vst [vmem:[%s1782 + $0xe4] sm:$0xf] %v911
        %1892 = vst [vmem:[%s1782 + $0xe8] sm:$0xf] %v920
        %v1893 = vld [vmem:[%s1782 + $0xec] sm:$0x1]
        %v1894 = vsel %vm1793, %v921, %v1893
        %1895 = vst [vmem:[%s1782 + $0xec] sm:$0x1] %v1894
        %v1896 = vld [vmem:[%s1782 + $0xf0] sm:$0xf]
        %v1897 = vsel %vm1785, %v928, %v1896
        %1898 = vst [vmem:[%s1782 + $0xf0] sm:$0xf] %v1897
        %1899 = vst [vmem:[%s1782 + $0xf4] sm:$0xf] %v937
        %1900 = vst [vmem:[%s1782 + $0xf8] sm:$0xf] %v946
        %1901 = vst [vmem:[%s1782 + $0xfc] sm:$0xf] %v955
        %v1902 = vld [vmem:[%s1782 + $0x100] sm:$0x1]
        %v1903 = vsel %vm1793, %v956, %v1902
        %1904 = vst [vmem:[%s1782 + $0x100] sm:$0x1] %v1903
        %v1905 = vld [vmem:[%s1782 + $0x104] sm:$0xf]
        %v1906 = vsel %vm1785, %v963, %v1905
        %1907 = vst [vmem:[%s1782 + $0x104] sm:$0xf] %v1906
        %1908 = vst [vmem:[%s1782 + $0x108] sm:$0xf] %v972
        %1909 = vst [vmem:[%s1782 + $0x10c] sm:$0xf] %v981
        %1910 = vst [vmem:[%s1782 + $0x110] sm:$0xf] %v990
        %v1911 = vld [vmem:[%s1782 + $0x114] sm:$0x1]
        %v1912 = vsel %vm1793, %v991, %v1911
        %1913 = vst [vmem:[%s1782 + $0x114] sm:$0x1] %v1912
        %v1914 = vld [vmem:[%s1782 + $0x118] sm:$0xf]
        %v1915 = vsel %vm1785, %v998, %v1914
        %1916 = vst [vmem:[%s1782 + $0x118] sm:$0xf] %v1915
        %1917 = vst [vmem:[%s1782 + $0x11c] sm:$0xf] %v1007
        %1918 = vst [vmem:[%s1782 + $0x120] sm:$0xf] %v1016
        %1919 = vst [vmem:[%s1782 + $0x124] sm:$0xf] %v1025
        %v1920 = vld [vmem:[%s1782 + $0x128] sm:$0x1]
        %v1921 = vsel %vm1793, %v1026, %v1920
        %1922 = vst [vmem:[%s1782 + $0x128] sm:$0x1] %v1921
        %v1923 = vld [vmem:[%s1782 + $0x12c] sm:$0xf]
        %v1924 = vsel %vm1785, %v1033, %v1923
        %1925 = vst [vmem:[%s1782 + $0x12c] sm:$0xf] %v1924
        %1926 = vst [vmem:[%s1782 + $0x130] sm:$0xf] %v1042
        %1927 = vst [vmem:[%s1782 + $0x134] sm:$0xf] %v1051
        %1928 = vst [vmem:[%s1782 + $0x138] sm:$0xf] %v1060
        %v1929 = vld [vmem:[%s1782 + $0x13c] sm:$0x1]
        %v1930 = vsel %vm1793, %v1061, %v1929
        %1931 = vst [vmem:[%s1782 + $0x13c] sm:$0x1] %v1930
        %v1932 = vld [vmem:[%s1782 + $0x140] sm:$0xf]
        %v1933 = vsel %vm1785, %v1068, %v1932
        %1934 = vst [vmem:[%s1782 + $0x140] sm:$0xf] %v1933
        %1935 = vst [vmem:[%s1782 + $0x144] sm:$0xf] %v1077
        %1936 = vst [vmem:[%s1782 + $0x148] sm:$0xf] %v1086
        %1937 = vst [vmem:[%s1782 + $0x14c] sm:$0xf] %v1095
        %v1938 = vld [vmem:[%s1782 + $0x150] sm:$0x1]
        %v1939 = vsel %vm1793, %v1096, %v1938
        %1940 = vst [vmem:[%s1782 + $0x150] sm:$0x1] %v1939
        %v1941 = vld [vmem:[%s1782 + $0x154] sm:$0xf]
        %v1942 = vsel %vm1785, %v1103, %v1941
        %1943 = vst [vmem:[%s1782 + $0x154] sm:$0xf] %v1942
        %1944 = vst [vmem:[%s1782 + $0x158] sm:$0xf] %v1112
        %1945 = vst [vmem:[%s1782 + $0x15c] sm:$0xf] %v1121
        %1946 = vst [vmem:[%s1782 + $0x160] sm:$0xf] %v1130
        %v1947 = vld [vmem:[%s1782 + $0x164] sm:$0x1]
        %v1948 = vsel %vm1793, %v1131, %v1947
        %1949 = vst [vmem:[%s1782 + $0x164] sm:$0x1] %v1948
        %v1950 = vld [vmem:[%s1782 + $0x168] sm:$0xf]
        %v1951 = vsel %vm1785, %v1138, %v1950
        %1952 = vst [vmem:[%s1782 + $0x168] sm:$0xf] %v1951
        %1953 = vst [vmem:[%s1782 + $0x16c] sm:$0xf] %v1147
        %1954 = vst [vmem:[%s1782 + $0x170] sm:$0xf] %v1156
        %1955 = vst [vmem:[%s1782 + $0x174] sm:$0xf] %v1165
        %v1956 = vld [vmem:[%s1782 + $0x178] sm:$0x1]
        %v1957 = vsel %vm1793, %v1166, %v1956
        %1958 = vst [vmem:[%s1782 + $0x178] sm:$0x1] %v1957
        %v1959 = vld [vmem:[%s1782 + $0x17c] sm:$0xf]
        %v1960 = vsel %vm1785, %v1173, %v1959
        %1961 = vst [vmem:[%s1782 + $0x17c] sm:$0xf] %v1960
        %1962 = vst [vmem:[%s1782 + $0x180] sm:$0xf] %v1182
        %1963 = vst [vmem:[%s1782 + $0x184] sm:$0xf] %v1191
        %1964 = vst [vmem:[%s1782 + $0x188] sm:$0xf] %v1200
        %v1965 = vld [vmem:[%s1782 + $0x18c] sm:$0x1]
        %v1966 = vsel %vm1793, %v1201, %v1965
        %1967 = vst [vmem:[%s1782 + $0x18c] sm:$0x1] %v1966
        %v1968 = vld [vmem:[%s1782 + $0x190] sm:$0xf]
        %v1969 = vsel %vm1785, %v1208, %v1968
        %1970 = vst [vmem:[%s1782 + $0x190] sm:$0xf] %v1969
        %1971 = vst [vmem:[%s1782 + $0x194] sm:$0xf] %v1217
        %1972 = vst [vmem:[%s1782 + $0x198] sm:$0xf] %v1226
        %1973 = vst [vmem:[%s1782 + $0x19c] sm:$0xf] %v1235
        %v1974 = vld [vmem:[%s1782 + $0x1a0] sm:$0x1]
        %v1975 = vsel %vm1793, %v1236, %v1974
        %1976 = vst [vmem:[%s1782 + $0x1a0] sm:$0x1] %v1975
        %v1977 = vld [vmem:[%s1782 + $0x1a4] sm:$0xf]
        %v1978 = vsel %vm1785, %v1243, %v1977
        %1979 = vst [vmem:[%s1782 + $0x1a4] sm:$0xf] %v1978
        %1980 = vst [vmem:[%s1782 + $0x1a8] sm:$0xf] %v1252
        %1981 = vst [vmem:[%s1782 + $0x1ac] sm:$0xf] %v1261
        %1982 = vst [vmem:[%s1782 + $0x1b0] sm:$0xf] %v1270
        %v1983 = vld [vmem:[%s1782 + $0x1b4] sm:$0x1]
        %v1984 = vsel %vm1793, %v1271, %v1983
        %1985 = vst [vmem:[%s1782 + $0x1b4] sm:$0x1] %v1984
        %v1986 = vld [vmem:[%s1782 + $0x1b8] sm:$0xf]
        %v1987 = vsel %vm1785, %v1278, %v1986
        %1988 = vst [vmem:[%s1782 + $0x1b8] sm:$0xf] %v1987
        %1989 = vst [vmem:[%s1782 + $0x1bc] sm:$0xf] %v1287
        %1990 = vst [vmem:[%s1782 + $0x1c0] sm:$0xf] %v1296
        %1991 = vst [vmem:[%s1782 + $0x1c4] sm:$0xf] %v1305
        %v1992 = vld [vmem:[%s1782 + $0x1c8] sm:$0x1]
        %v1993 = vsel %vm1793, %v1306, %v1992
        %1994 = vst [vmem:[%s1782 + $0x1c8] sm:$0x1] %v1993
        %v1995 = vld [vmem:[%s1782 + $0x1cc] sm:$0xf]
        %v1996 = vsel %vm1785, %v1313, %v1995
        %1997 = vst [vmem:[%s1782 + $0x1cc] sm:$0xf] %v1996
        %1998 = vst [vmem:[%s1782 + $0x1d0] sm:$0xf] %v1322
        %1999 = vst [vmem:[%s1782 + $0x1d4] sm:$0xf] %v1331
        %2000 = vst [vmem:[%s1782 + $0x1d8] sm:$0xf] %v1340
        %v2001 = vld [vmem:[%s1782 + $0x1dc] sm:$0x1]
        %v2002 = vsel %vm1793, %v1341, %v2001
        %2003 = vst [vmem:[%s1782 + $0x1dc] sm:$0x1] %v2002
        %v2004 = vld [vmem:[%s1782 + $0x1e0] sm:$0xf]
        %v2005 = vsel %vm1785, %v1348, %v2004
        %2006 = vst [vmem:[%s1782 + $0x1e0] sm:$0xf] %v2005
        %2007 = vst [vmem:[%s1782 + $0x1e4] sm:$0xf] %v1357
        %2008 = vst [vmem:[%s1782 + $0x1e8] sm:$0xf] %v1366
        %2009 = vst [vmem:[%s1782 + $0x1ec] sm:$0xf] %v1375
        %v2010 = vld [vmem:[%s1782 + $0x1f0] sm:$0x1]
        %v2011 = vsel %vm1793, %v1376, %v2010
        %2012 = vst [vmem:[%s1782 + $0x1f0] sm:$0x1] %v2011
        %v2013 = vld [vmem:[%s1782 + $0x1f4] sm:$0xf]
        %v2014 = vsel %vm1785, %v1383, %v2013
        %2015 = vst [vmem:[%s1782 + $0x1f4] sm:$0xf] %v2014
        %2016 = vst [vmem:[%s1782 + $0x1f8] sm:$0xf] %v1392
        %2017 = vst [vmem:[%s1782 + $0x1fc] sm:$0xf] %v1401
        %2018 = vst [vmem:[%s1782 + $0x200] sm:$0xf] %v1410
        %v2019 = vld [vmem:[%s1782 + $0x204] sm:$0x1]
        %v2020 = vsel %vm1793, %v1411, %v2019
        %2021 = vst [vmem:[%s1782 + $0x204] sm:$0x1] %v2020
        %v2022 = vld [vmem:[%s1782 + $0x208] sm:$0xf]
        %v2023 = vsel %vm1785, %v1418, %v2022
        %2024 = vst [vmem:[%s1782 + $0x208] sm:$0xf] %v2023
        %2025 = vst [vmem:[%s1782 + $0x20c] sm:$0xf] %v1427
        %2026 = vst [vmem:[%s1782 + $0x210] sm:$0xf] %v1436
        %2027 = vst [vmem:[%s1782 + $0x214] sm:$0xf] %v1445
        %v2028 = vld [vmem:[%s1782 + $0x218] sm:$0x1]
        %v2029 = vsel %vm1793, %v1446, %v2028
        %2030 = vst [vmem:[%s1782 + $0x218] sm:$0x1] %v2029
        %v2031 = vld [vmem:[%s1782 + $0x21c] sm:$0xf]
        %v2032 = vsel %vm1785, %v1453, %v2031
        %2033 = vst [vmem:[%s1782 + $0x21c] sm:$0xf] %v2032
        %2034 = vst [vmem:[%s1782 + $0x220] sm:$0xf] %v1462
        %2035 = vst [vmem:[%s1782 + $0x224] sm:$0xf] %v1471
        %2036 = vst [vmem:[%s1782 + $0x228] sm:$0xf] %v1480
        %v2037 = vld [vmem:[%s1782 + $0x22c] sm:$0x1]
        %v2038 = vsel %vm1793, %v1481, %v2037
        %2039 = vst [vmem:[%s1782 + $0x22c] sm:$0x1] %v2038
        %v2040 = vld [vmem:[%s1782 + $0x230] sm:$0xf]
        %v2041 = vsel %vm1785, %v1488, %v2040
        %2042 = vst [vmem:[%s1782 + $0x230] sm:$0xf] %v2041
        %2043 = vst [vmem:[%s1782 + $0x234] sm:$0xf] %v1497
        %2044 = vst [vmem:[%s1782 + $0x238] sm:$0xf] %v1506
        %2045 = vst [vmem:[%s1782 + $0x23c] sm:$0xf] %v1515
        %v2046 = vld [vmem:[%s1782 + $0x240] sm:$0x1]
        %v2047 = vsel %vm1793, %v1516, %v2046
        %2048 = vst [vmem:[%s1782 + $0x240] sm:$0x1] %v2047
        %v2049 = vld [vmem:[%s1782 + $0x244] sm:$0xf]
        %v2050 = vsel %vm1785, %v1523, %v2049
        %2051 = vst [vmem:[%s1782 + $0x244] sm:$0xf] %v2050
        %2052 = vst [vmem:[%s1782 + $0x248] sm:$0xf] %v1532
        %2053 = vst [vmem:[%s1782 + $0x24c] sm:$0xf] %v1541
        %2054 = vst [vmem:[%s1782 + $0x250] sm:$0xf] %v1550
        %v2055 = vld [vmem:[%s1782 + $0x254] sm:$0x1]
        %v2056 = vsel %vm1793, %v1551, %v2055
        %2057 = vst [vmem:[%s1782 + $0x254] sm:$0x1] %v2056
        %v2058 = vld [vmem:[%s1782 + $0x258] sm:$0xf]
        %v2059 = vsel %vm1785, %v1558, %v2058
        %2060 = vst [vmem:[%s1782 + $0x258] sm:$0xf] %v2059
        %2061 = vst [vmem:[%s1782 + $0x25c] sm:$0xf] %v1567
        %2062 = vst [vmem:[%s1782 + $0x260] sm:$0xf] %v1576
        %2063 = vst [vmem:[%s1782 + $0x264] sm:$0xf] %v1585
        %v2064 = vld [vmem:[%s1782 + $0x268] sm:$0x1]
        %v2065 = vsel %vm1793, %v1586, %v2064
        %2066 = vst [vmem:[%s1782 + $0x268] sm:$0x1] %v2065
        %v2067 = vld [vmem:[%s1782 + $0x26c] sm:$0xf]
        %v2068 = vsel %vm1785, %v1593, %v2067
        %2069 = vst [vmem:[%s1782 + $0x26c] sm:$0xf] %v2068
        %2070 = vst [vmem:[%s1782 + $0x270] sm:$0xf] %v1602
        %2071 = vst [vmem:[%s1782 + $0x274] sm:$0xf] %v1611
        %2072 = vst [vmem:[%s1782 + $0x278] sm:$0xf] %v1620
        %v2073 = vld [vmem:[%s1782 + $0x27c] sm:$0x1]
        %v2074 = vsel %vm1793, %v1621, %v2073
        %2075 = vst [vmem:[%s1782 + $0x27c] sm:$0x1] %v2074
      $region36: #{a_call__.5} parent=31 // pred_fallthru
        _
      %s2076 = smul.u32 %s19, 8
      %s2077 = smul.u32 %s2076, 5
      %s2078 = smul.addr %s2077, 4
      %s2079 = scalar_lea.vmem [#allocation2], %s2078
      %v2080 = vld [vmem:[%s2079] sm:$0xf]
      %v2081 = vld [vmem:[%s2079 + $0x4] sm:$0xf]
      %v2082 = vld [vmem:[%s2079 + $0x8] sm:$0xf]
      %v2083 = vld [vmem:[%s2079 + $0xc] sm:$0xf]
      %v2084 = vld [vmem:[%s2079 + $0x10] sm:$0xf]
      %v2085 = vld [vmem:[%s2079 + $0x14] sm:$0xf]
      %v2086 = vld [vmem:[%s2079 + $0x18] sm:$0xf]
      %v2087 = vld [vmem:[%s2079 + $0x1c] sm:$0xf]
      %v2088 = vld [vmem:[%s2079 + $0x20] sm:$0xf]
      %v2089 = vld [vmem:[%s2079 + $0x24] sm:$0xf]
      %v2090 = vld [vmem:[%s2079 + $0x28] sm:$0xf]
      %v2091 = vld [vmem:[%s2079 + $0x2c] sm:$0xf]
      %v2092 = vld [vmem:[%s2079 + $0x30] sm:$0xf]
      %v2093 = vld [vmem:[%s2079 + $0x34] sm:$0xf]
      %v2094 = vld [vmem:[%s2079 + $0x38] sm:$0xf]
      %v2095 = vld [vmem:[%s2079 + $0x3c] sm:$0xf]
      %v2096 = vld [vmem:[%s2079 + $0x40] sm:$0xf]
      %v2097 = vld [vmem:[%s2079 + $0x44] sm:$0xf]
      %v2098 = vld [vmem:[%s2079 + $0x48] sm:$0xf]
      %v2099 = vld [vmem:[%s2079 + $0x4c] sm:$0xf]
      %v2100 = vld [vmem:[%s2079 + $0x50] sm:$0xf]
      %v2101 = vld [vmem:[%s2079 + $0x54] sm:$0xf]
      %v2102 = vld [vmem:[%s2079 + $0x58] sm:$0xf]
      %v2103 = vld [vmem:[%s2079 + $0x5c] sm:$0xf]
      %v2104 = vld [vmem:[%s2079 + $0x60] sm:$0xf]
      %v2105 = vld [vmem:[%s2079 + $0x64] sm:$0xf]
      %v2106 = vld [vmem:[%s2079 + $0x68] sm:$0xf]
      %v2107 = vld [vmem:[%s2079 + $0x6c] sm:$0xf]
      %v2108 = vld [vmem:[%s2079 + $0x70] sm:$0xf]
      %v2109 = vld [vmem:[%s2079 + $0x74] sm:$0xf]
      %v2110 = vld [vmem:[%s2079 + $0x78] sm:$0xf]
      %v2111 = vld [vmem:[%s2079 + $0x7c] sm:$0xf]
      %v2112 = vld [vmem:[%s2079 + $0x80] sm:$0xf]
      %v2113 = vld [vmem:[%s2079 + $0x84] sm:$0xf]
      %v2114 = vld [vmem:[%s2079 + $0x88] sm:$0xf]
      %v2115 = vld [vmem:[%s2079 + $0x8c] sm:$0xf]
      %v2116 = vld [vmem:[%s2079 + $0x90] sm:$0xf]
      %v2117 = vld [vmem:[%s2079 + $0x94] sm:$0xf]
      %v2118 = vld [vmem:[%s2079 + $0x98] sm:$0xf]
      %v2119 = vld [vmem:[%s2079 + $0x9c] sm:$0xf]
      %v2120 = vld [vmem:[%s1] sm:$0xff]
      %v2121 = vld [vmem:[%s1 + $0x8] sm:$0xf]
      %v2122 = vld [vmem:[%s1 + $0xc] sm:$0xff]
      %v2123 = vld [vmem:[%s1 + $0x14] sm:$0xf]
      %v2124 = vld [vmem:[%s1 + $0x18] sm:$0xff]
      %v2125 = vld [vmem:[%s1 + $0x20] sm:$0xf]
      %v2126 = vld [vmem:[%s1 + $0x24] sm:$0xff]
      %v2127 = vld [vmem:[%s1 + $0x2c] sm:$0xf]
      %v2128 = vld [vmem:[%s1 + $0x30] sm:$0xff]
      %v2129 = vld [vmem:[%s1 + $0x38] sm:$0xf]
      %v2130 = vld [vmem:[%s1 + $0x3c] sm:$0xff]
      %v2131 = vld [vmem:[%s1 + $0x44] sm:$0xf]
      %v2132 = vld [vmem:[%s1 + $0x48] sm:$0xff]
      %v2133 = vld [vmem:[%s1 + $0x50] sm:$0xf]
      %v2134 = vld [vmem:[%s1 + $0x54] sm:$0xff]
      %v2135 = vld [vmem:[%s1 + $0x5c] sm:$0xf]
      %v2136 = vld [vmem:[%s1 + $0x60] sm:$0xff]
      %v2137 = vld [vmem:[%s1 + $0x68] sm:$0xf]
      %v2138 = vld [vmem:[%s1 + $0x6c] sm:$0xff]
      %v2139 = vld [vmem:[%s1 + $0x74] sm:$0xf]
      %v2140 = vld [vmem:[%s1 + $0x78] sm:$0xff]
      %v2141 = vld [vmem:[%s1 + $0x80] sm:$0xf]
      %v2142 = vld [vmem:[%s1 + $0x84] sm:$0xff]
      %v2143 = vld [vmem:[%s1 + $0x8c] sm:$0xf]
      %v2144 = vld [vmem:[%s1 + $0x90] sm:$0xff]
      %v2145 = vld [vmem:[%s1 + $0x98] sm:$0xf]
      %v2146 = vld [vmem:[%s1 + $0x9c] sm:$0xff]
      %v2147 = vld [vmem:[%s1 + $0xa4] sm:$0xf]
      %v2148 = vld [vmem:[%s1 + $0xa8] sm:$0xff]
      %v2149 = vld [vmem:[%s1 + $0xb0] sm:$0xf]
      %v2150 = vld [vmem:[%s1 + $0xb4] sm:$0xff]
      %v2151 = vld [vmem:[%s1 + $0xbc] sm:$0xf]
      %v2192 = vunpack.c.l.b16 %v2080
      %v2193 = vunpack.c.l.b16 %v2081
      %v2194 = vunpack.c.l.b16 %v2082
      %v2195 = vunpack.c.l.b16 %v2083
      %v2196 = vunpack.c.l.b16 %v2084
      %v2197 = vunpack.c.l.b16 %v2085
      %v2198 = vunpack.c.l.b16 %v2086
      %v2199 = vunpack.c.l.b16 %v2087
      %v2200 = vunpack.c.l.b16 %v2088
      %v2201 = vunpack.c.l.b16 %v2089
      %v2202 = vunpack.c.l.b16 %v2090
      %v2203 = vunpack.c.l.b16 %v2091
      %v2204 = vunpack.c.l.b16 %v2092
      %v2205 = vunpack.c.l.b16 %v2093
      %v2206 = vunpack.c.l.b16 %v2094
      %v2207 = vunpack.c.l.b16 %v2095
      %v2208 = vunpack.c.l.b16 %v2096
      %v2209 = vunpack.c.l.b16 %v2097
      %v2210 = vunpack.c.l.b16 %v2098
      %v2211 = vunpack.c.l.b16 %v2099
      %v2212 = vunpack.c.l.b16 %v2100
      %v2213 = vunpack.c.l.b16 %v2101
      %v2214 = vunpack.c.l.b16 %v2102
      %v2215 = vunpack.c.l.b16 %v2103
      %v2216 = vunpack.c.l.b16 %v2104
      %v2217 = vunpack.c.l.b16 %v2105
      %v2218 = vunpack.c.l.b16 %v2106
      %v2219 = vunpack.c.l.b16 %v2107
      %v2220 = vunpack.c.l.b16 %v2108
      %v2221 = vunpack.c.l.b16 %v2109
      %v2222 = vunpack.c.l.b16 %v2110
      %v2223 = vunpack.c.l.b16 %v2111
      %v2224 = vunpack.c.l.b16 %v2112
      %v2225 = vunpack.c.l.b16 %v2113
      %v2226 = vunpack.c.l.b16 %v2114
      %v2227 = vunpack.c.l.b16 %v2115
      %v2228 = vunpack.c.l.b16 %v2116
      %v2229 = vunpack.c.l.b16 %v2117
      %v2230 = vunpack.c.l.b16 %v2118
      %v2231 = vunpack.c.l.b16 %v2119
      %v2232 = vpack.c.b16 %v2193, %v2192
      %v2233 = vpack.c.b16 %v2195, %v2194
      %v2234 = vpack.c.b16 %v2197, %v2196
      %v2235 = vpack.c.b16 %v2199, %v2198
      %v2236 = vpack.c.b16 %v2201, %v2200
      %v2237 = vpack.c.b16 %v2203, %v2202
      %v2238 = vpack.c.b16 %v2205, %v2204
      %v2239 = vpack.c.b16 %v2207, %v2206
      %v2240 = vpack.c.b16 %v2209, %v2208
      %v2241 = vpack.c.b16 %v2211, %v2210
      %v2242 = vpack.c.b16 %v2213, %v2212
      %v2243 = vpack.c.b16 %v2215, %v2214
      %v2244 = vpack.c.b16 %v2217, %v2216
      %v2245 = vpack.c.b16 %v2219, %v2218
      %v2246 = vpack.c.b16 %v2221, %v2220
      %v2247 = vpack.c.b16 %v2223, %v2222
      %v2248 = vpack.c.b16 %v2225, %v2224
      %v2249 = vpack.c.b16 %v2227, %v2226
      %v2250 = vpack.c.b16 %v2229, %v2228
      %v2251 = vpack.c.b16 %v2231, %v2230
      %v2304 = vunpack.c.l.b16 %v2120
      %v2305 = vunpack.c.h.b16 %v2120
      %v2306 = vunpack.c.l.b16 %v2121
      %v2307 = vunpack.c.l.b16 %v2122
      %v2308 = vunpack.c.h.b16 %v2122
      %v2309 = vunpack.c.l.b16 %v2123
      %v2310 = vunpack.c.l.b16 %v2124
      %v2311 = vunpack.c.h.b16 %v2124
      %v2312 = vunpack.c.l.b16 %v2125
      %v2313 = vunpack.c.l.b16 %v2126
      %v2314 = vunpack.c.h.b16 %v2126
      %v2315 = vunpack.c.l.b16 %v2127
      %v2316 = vunpack.c.l.b16 %v2128
      %v2317 = vunpack.c.h.b16 %v2128
      %v2318 = vunpack.c.l.b16 %v2129
      %v2319 = vunpack.c.l.b16 %v2130
      %v2320 = vunpack.c.h.b16 %v2130
      %v2321 = vunpack.c.l.b16 %v2131
      %v2322 = vunpack.c.l.b16 %v2132
      %v2323 = vunpack.c.h.b16 %v2132
      %v2324 = vunpack.c.l.b16 %v2133
      %v2325 = vunpack.c.l.b16 %v2134
      %v2326 = vunpack.c.h.b16 %v2134
      %v2327 = vunpack.c.l.b16 %v2135
      %v2328 = vunpack.c.l.b16 %v2136
      %v2329 = vunpack.c.h.b16 %v2136
      %v2330 = vunpack.c.l.b16 %v2137
      %v2331 = vunpack.c.l.b16 %v2138
      %v2332 = vunpack.c.h.b16 %v2138
      %v2333 = vunpack.c.l.b16 %v2139
      %v2334 = vunpack.c.l.b16 %v2140
      %v2335 = vunpack.c.h.b16 %v2140
      %v2336 = vunpack.c.l.b16 %v2141
      %v2337 = vunpack.c.l.b16 %v2142
      %v2338 = vunpack.c.h.b16 %v2142
      %v2339 = vunpack.c.l.b16 %v2143
      %v2340 = vunpack.c.l.b16 %v2144
      %v2341 = vunpack.c.h.b16 %v2144
      %v2342 = vunpack.c.l.b16 %v2145
      %v2343 = vunpack.c.l.b16 %v2146
      %v2344 = vunpack.c.h.b16 %v2146
      %v2345 = vunpack.c.l.b16 %v2147
      %v2346 = vunpack.c.l.b16 %v2148
      %v2347 = vunpack.c.h.b16 %v2148
      %v2348 = vunpack.c.l.b16 %v2149
      %v2349 = vunpack.c.l.b16 %v2150
      %v2350 = vunpack.c.h.b16 %v2150
      %v2351 = vunpack.c.l.b16 %v2151
      %v2352 = vpack.c.b16 %v2307, %v2304
      %v2353 = vpack.c.b16 %v2308, %v2305
      %v2354 = vpack.c.b16 %v2309, %v2306
      %v2355 = vpack.c.b16 %v2313, %v2310
      %v2356 = vpack.c.b16 %v2314, %v2311
      %v2357 = vpack.c.b16 %v2315, %v2312
      %v2358 = vpack.c.b16 %v2319, %v2316
      %v2359 = vpack.c.b16 %v2320, %v2317
      %v2360 = vpack.c.b16 %v2321, %v2318
      %v2361 = vpack.c.b16 %v2325, %v2322
      %v2362 = vpack.c.b16 %v2326, %v2323
      %v2363 = vpack.c.b16 %v2327, %v2324
      %v2364 = vpack.c.b16 %v2331, %v2328
      %v2365 = vpack.c.b16 %v2332, %v2329
      %v2366 = vpack.c.b16 %v2333, %v2330
      %v2367 = vpack.c.b16 %v2337, %v2334
      %v2368 = vpack.c.b16 %v2338, %v2335
      %v2369 = vpack.c.b16 %v2339, %v2336
      %v2370 = vpack.c.b16 %v2343, %v2340
      %v2371 = vpack.c.b16 %v2344, %v2341
      %v2372 = vpack.c.b16 %v2345, %v2342
      %v2373 = vpack.c.b16 %v2349, %v2346
      %v2374 = vpack.c.b16 %v2350, %v2347
      %v2375 = vpack.c.b16 %v2351, %v2348
      %2400 = vmatprep.subr.bf16.mxu0 %v2353
      %2401 = vmatpush1.bf16.msra.mxu0 %v2352
      %2402 = vmatprep.subr.bf16.mxu0 %v2356
      %2403 = vmatpush1.bf16.msra.mxu0 %v2355
      %2404 = vmatprep.subr.bf16.mxu0 %v2359
      %2405 = vmatpush1.bf16.msra.mxu0 %v2358
      %2406 = vmatprep.subr.bf16.mxu0 %v2362
      %2407 = vmatpush1.bf16.msra.mxu0 %v2361
      %2408 = vmatprep.subr.bf16.mxu0 %v2365
      %2409 = vmatpush1.bf16.msra.mxu0 %v2364
      %2410 = vmatprep.subr.bf16.mxu0 %v2368
      %2411 = vmatpush1.bf16.msra.mxu0 %v2367
      %2412 = vmatprep.subr.bf16.mxu0 %v2371
      %2413 = vmatpush1.bf16.msra.mxu0 %v2370
      %2414 = vmatprep.subr.bf16.mxu0 %v2374
      %2415 = vmatpush1.bf16.msra.mxu0 %v2373
      %2416 = vmatprep.subr.bf16.mxu0 0
      %2417 = vmatpush1.bf16.msra.mxu0 0
      %2418 = vmatprep.subr.bf16.mxu0 0
      %2419 = vmatpush1.bf16.msra.mxu0 0
      %2420 = vmatprep.subr.bf16.mxu0 0
      %2421 = vmatpush1.bf16.msra.mxu0 0
      %2422 = vmatprep.subr.bf16.mxu0 0
      %2423 = vmatpush1.bf16.msra.mxu0 0
      %2424 = vmatprep.subr.bf16.mxu0 0
      %2425 = vmatpush1.bf16.msra.mxu0 0
      %2426 = vmatprep.subr.bf16.mxu0 0
      %2427 = vmatpush1.bf16.msra.mxu0 0
      %2428 = vmatprep.subr.bf16.mxu0 0
      %2429 = vmatpush1.bf16.msra.mxu0 0
      %2430 = vmatprep.subr.bf16.mxu0 0
      %2431 = vmatpush1.bf16.msra.mxu0 0
      %2432 = vmatprep.mubr.bf16.mxu0 0
      %2433 = vmatmul.mubr.bf16.gmra.mrb[0].mxu0 %v2232
      %v2434 = vpop.f32.mrb[0].mxu0
      %v2435 = vadd.f32 0.0, %v2434
      %v2436 = vpop.f32.mrb[0].mxu0
      %v2437 = vadd.f32 0.0, %v2436
      %v2438 = vpop.f32.mrb[0].mxu0
      %v2439 = vadd.f32 0.0, %v2438
      %v2440 = vpop.f32.mrb[0].mxu0
      %v2441 = vadd.f32 0.0, %v2440
      %2442 = vmatprep.mubr.bf16.mxu0 0
      %2443 = vmatmul.mubr.bf16.gmra.mrb[0].mxu0 %v2233
      %v2444 = vpop.f32.mrb[0].mxu0
      %v2445 = vadd.f32 0.0, %v2444
      %v2446 = vpop.f32.mrb[0].mxu0
      %v2447 = vadd.f32 0.0, %v2446
      %v2448 = vpop.f32.mrb[0].mxu0
      %v2449 = vadd.f32 0.0, %v2448
      %v2450 = vpop.f32.mrb[0].mxu0
      %v2451 = vadd.f32 0.0, %v2450
      %2452 = vmatprep.mubr.bf16.mxu0 0
      %2453 = vmatmul.mubr.bf16.gmra.mrb[0].mxu0 %v2234
      %v2454 = vpop.f32.mrb[0].mxu0
      %v2455 = vpop.f32.mrb[0].mxu0
      %v2456 = vadd.f32 0.0, %v2455
      %v2457 = vpop.f32.mrb[0].mxu0
      %v2458 = vadd.f32 0.0, %v2457
      %v2459 = vpop.f32.mrb[0].mxu0
      %v2460 = vadd.f32 0.0, %v2459
      %2461 = vmatprep.mubr.bf16.mxu0 0
      %2462 = vmatmul.mubr.bf16.gmra.mrb[0].mxu0 %v2235
      %v2463 = vpop.f32.mrb[0].mxu0
      %v2464 = vadd.f32 0.0, %v2463
      %v2465 = vpop.f32.mrb[0].mxu0
      %v2466 = vadd.f32 0.0, %v2465
      %v2467 = vpop.f32.mrb[0].mxu0
      %v2468 = vadd.f32 0.0, %v2467
      %v2469 = vpop.f32.mrb[0].mxu0
      %v2470 = vadd.f32 0.0, %v2469
      %2471 = vmatprep.mubr.bf16.mxu0 0
      %2472 = vmatmul.mubr.bf16.gmra.mrb[0].mxu0 %v2236
      %v2473 = vpop.f32.mrb[0].mxu0
      %v2474 = vadd.f32 0.0, %v2473
      %v2475 = vpop.f32.mrb[0].mxu0
      %v2476 = vadd.f32 0.0, %v2475
      %v2477 = vpop.f32.mrb[0].mxu0
      %v2478 = vpop.f32.mrb[0].mxu0
      %v2479 = vadd.f32 0.0, %v2478
      %2480 = vmatprep.mubr.bf16.mxu0 0
      %2481 = vmatmul.mubr.bf16.gmra.mrb[0].mxu0 %v2237
      %v2482 = vpop.f32.mrb[0].mxu0
      %v2483 = vadd.f32 0.0, %v2482
      %v2484 = vpop.f32.mrb[0].mxu0
      %v2485 = vadd.f32 0.0, %v2484
      %v2486 = vpop.f32.mrb[0].mxu0
      %v2487 = vadd.f32 0.0, %v2486
      %v2488 = vpop.f32.mrb[0].mxu0
      %v2489 = vadd.f32 0.0, %v2488
      %2490 = vmatprep.mubr.bf16.mxu0 0
      %2491 = vmatmul.mubr.bf16.gmra.mrb[0].mxu0 %v2238
      %v2492 = vpop.f32.mrb[0].mxu0
      %v2493 = vadd.f32 0.0, %v2492
      %v2494 = vpop.f32.mrb[0].mxu0
      %v2495 = vadd.f32 0.0, %v2494
      %v2496 = vpop.f32.mrb[0].mxu0
      %v2497 = vadd.f32 0.0, %v2496
      %v2498 = vpop.f32.mrb[0].mxu0
      %v2499 = vadd.f32 0.0, %v2498
      %2500 = vmatprep.mubr.bf16.mxu0 0
      %2501 = vmatmul.mubr.bf16.gmra.mrb[0].mxu0 %v2239
      %v2502 = vpop.f32.mrb[0].mxu0
      %v2503 = vpop.f32.mrb[0].mxu0
      %v2504 = vadd.f32 0.0, %v2503
      %v2505 = vpop.f32.mrb[0].mxu0
      %v2506 = vadd.f32 0.0, %v2505
      %v2507 = vpop.f32.mrb[0].mxu0
      %v2508 = vadd.f32 0.0, %v2507
      %2509 = vmatprep.mubr.bf16.mxu0 0
      %2510 = vmatmul.mubr.bf16.gmra.mrb[0].mxu0 %v2240
      %v2511 = vpop.f32.mrb[0].mxu0
      %v2512 = vadd.f32 0.0, %v2511
      %v2513 = vpop.f32.mrb[0].mxu0
      %v2514 = vadd.f32 0.0, %v2513
      %v2515 = vpop.f32.mrb[0].mxu0
      %v2516 = vadd.f32 0.0, %v2515
      %v2517 = vpop.f32.mrb[0].mxu0
      %v2518 = vadd.f32 0.0, %v2517
      %2519 = vmatprep.mubr.bf16.mxu0 0
      %2520 = vmatmul.mubr.bf16.gmra.mrb[0].mxu0 %v2241
      %v2521 = vpop.f32.mrb[0].mxu0
      %v2522 = vadd.f32 0.0, %v2521
      %v2523 = vpop.f32.mrb[0].mxu0
      %v2524 = vadd.f32 0.0, %v2523
      %v2525 = vpop.f32.mrb[0].mxu0
      %v2526 = vpop.f32.mrb[0].mxu0
      %v2527 = vadd.f32 0.0, %v2526
      %2528 = vmatprep.mubr.bf16.mxu0 0
      %2529 = vmatmul.mubr.bf16.gmra.mrb[0].mxu0 %v2242
      %v2530 = vpop.f32.mrb[0].mxu0
      %v2531 = vadd.f32 0.0, %v2530
      %v2532 = vpop.f32.mrb[0].mxu0
      %v2533 = vadd.f32 0.0, %v2532
      %v2534 = vpop.f32.mrb[0].mxu0
      %v2535 = vadd.f32 0.0, %v2534
      %v2536 = vpop.f32.mrb[0].mxu0
      %v2537 = vadd.f32 0.0, %v2536
      %2538 = vmatprep.mubr.bf16.mxu0 0
      %2539 = vmatmul.mubr.bf16.gmra.mrb[0].mxu0 %v2243
      %v2540 = vpop.f32.mrb[0].mxu0
      %v2541 = vadd.f32 0.0, %v2540
      %v2542 = vpop.f32.mrb[0].mxu0
      %v2543 = vadd.f32 0.0, %v2542
      %v2544 = vpop.f32.mrb[0].mxu0
      %v2545 = vadd.f32 0.0, %v2544
      %v2546 = vpop.f32.mrb[0].mxu0
      %v2547 = vadd.f32 0.0, %v2546
      %2548 = vmatprep.mubr.bf16.mxu0 0
      %2549 = vmatmul.mubr.bf16.gmra.mrb[0].mxu0 %v2244
      %v2550 = vpop.f32.mrb[0].mxu0
      %v2551 = vpop.f32.mrb[0].mxu0
      %v2552 = vadd.f32 0.0, %v2551
      %v2553 = vpop.f32.mrb[0].mxu0
      %v2554 = vadd.f32 0.0, %v2553
      %v2555 = vpop.f32.mrb[0].mxu0
      %v2556 = vadd.f32 0.0, %v2555
      %2557 = vmatprep.mubr.bf16.mxu0 0
      %2558 = vmatmul.mubr.bf16.gmra.mrb[0].mxu0 %v2245
      %v2559 = vpop.f32.mrb[0].mxu0
      %v2560 = vadd.f32 0.0, %v2559
      %v2561 = vpop.f32.mrb[0].mxu0
      %v2562 = vadd.f32 0.0, %v2561
      %v2563 = vpop.f32.mrb[0].mxu0
      %v2564 = vadd.f32 0.0, %v2563
      %v2565 = vpop.f32.mrb[0].mxu0
      %v2566 = vadd.f32 0.0, %v2565
      %2567 = vmatprep.mubr.bf16.mxu0 0
      %2568 = vmatmul.mubr.bf16.gmra.mrb[0].mxu0 %v2246
      %v2569 = vpop.f32.mrb[0].mxu0
      %v2570 = vadd.f32 0.0, %v2569
      %v2571 = vpop.f32.mrb[0].mxu0
      %v2572 = vadd.f32 0.0, %v2571
      %v2573 = vpop.f32.mrb[0].mxu0
      %v2574 = vpop.f32.mrb[0].mxu0
      %v2575 = vadd.f32 0.0, %v2574
      %2576 = vmatprep.mubr.bf16.mxu0 0
      %2577 = vmatmul.mubr.bf16.gmra.mrb[0].mxu0 %v2247
      %v2578 = vpop.f32.mrb[0].mxu0
      %v2579 = vadd.f32 0.0, %v2578
      %v2580 = vpop.f32.mrb[0].mxu0
      %v2581 = vadd.f32 0.0, %v2580
      %v2582 = vpop.f32.mrb[0].mxu0
      %v2583 = vadd.f32 0.0, %v2582
      %v2584 = vpop.f32.mrb[0].mxu0
      %v2585 = vadd.f32 0.0, %v2584
      %2586 = vmatprep.mubr.bf16.mxu0 0
      %2587 = vmatmul.mubr.bf16.gmra.mrb[0].mxu0 %v2248
      %v2588 = vpop.f32.mrb[0].mxu0
      %v2589 = vadd.f32 0.0, %v2588
      %v2590 = vpop.f32.mrb[0].mxu0
      %v2591 = vadd.f32 0.0, %v2590
      %v2592 = vpop.f32.mrb[0].mxu0
      %v2593 = vadd.f32 0.0, %v2592
      %v2594 = vpop.f32.mrb[0].mxu0
      %v2595 = vadd.f32 0.0, %v2594
      %2596 = vmatprep.mubr.bf16.mxu0 0
      %2597 = vmatmul.mubr.bf16.gmra.mrb[0].mxu0 %v2249
      %v2598 = vpop.f32.mrb[0].mxu0
      %v2599 = vpop.f32.mrb[0].mxu0
      %v2600 = vadd.f32 0.0, %v2599
      %v2601 = vpop.f32.mrb[0].mxu0
      %v2602 = vadd.f32 0.0, %v2601
      %v2603 = vpop.f32.mrb[0].mxu0
      %v2604 = vadd.f32 0.0, %v2603
      %2605 = vmatprep.mubr.bf16.mxu0 0
      %2606 = vmatmul.mubr.bf16.gmra.mrb[0].mxu0 %v2250
      %v2607 = vpop.f32.mrb[0].mxu0
      %v2608 = vadd.f32 0.0, %v2607
      %v2609 = vpop.f32.mrb[0].mxu0
      %v2610 = vadd.f32 0.0, %v2609
      %v2611 = vpop.f32.mrb[0].mxu0
      %v2612 = vadd.f32 0.0, %v2611
      %v2613 = vpop.f32.mrb[0].mxu0
      %v2614 = vadd.f32 0.0, %v2613
      %2615 = vmatprep.mubr.bf16.mxu0 0
      %2616 = vmatmul.mubr.bf16.gmra.mrb[0].mxu0 %v2251
      %v2617 = vpop.f32.mrb[0].mxu0
      %v2618 = vadd.f32 0.0, %v2617
      %v2619 = vpop.f32.mrb[0].mxu0
      %v2620 = vadd.f32 0.0, %v2619
      %v2621 = vpop.f32.mrb[0].mxu0
      %v2622 = vpop.f32.mrb[0].mxu0
      %v2623 = vadd.f32 0.0, %v2622
      %2624 = vdwg.mxu0
      %2625 = vmatprep.subr.bf16.mxu0 0
      %2626 = vmatpush1.bf16.msra.mxu0 %v2354
      %2627 = vmatprep.subr.bf16.mxu0 0
      %2628 = vmatpush1.bf16.msra.mxu0 %v2357
      %2629 = vmatprep.subr.bf16.mxu0 0
      %2630 = vmatpush1.bf16.msra.mxu0 %v2360
      %2631 = vmatprep.subr.bf16.mxu0 0
      %2632 = vmatpush1.bf16.msra.mxu0 %v2363
      %2633 = vmatprep.subr.bf16.mxu0 0
      %2634 = vmatpush1.bf16.msra.mxu0 %v2366
      %2635 = vmatprep.subr.bf16.mxu0 0
      %2636 = vmatpush1.bf16.msra.mxu0 %v2369
      %2637 = vmatprep.subr.bf16.mxu0 0
      %2638 = vmatpush1.bf16.msra.mxu0 %v2372
      %2639 = vmatprep.subr.bf16.mxu0 0
      %2640 = vmatpush1.bf16.msra.mxu0 %v2375
      %2641 = vmatprep.subr.bf16.mxu0 0
      %2642 = vmatpush1.bf16.msra.mxu0 0
      %2643 = vmatprep.subr.bf16.mxu0 0
      %2644 = vmatpush1.bf16.msra.mxu0 0
      %2645 = vmatprep.subr.bf16.mxu0 0
      %2646 = vmatpush1.bf16.msra.mxu0 0
      %2647 = vmatprep.subr.bf16.mxu0 0
      %2648 = vmatpush1.bf16.msra.mxu0 0
      %2649 = vmatprep.subr.bf16.mxu0 0
      %2650 = vmatpush1.bf16.msra.mxu0 0
      %2651 = vmatprep.subr.bf16.mxu0 0
      %2652 = vmatpush1.bf16.msra.mxu0 0
      %2653 = vmatprep.subr.bf16.mxu0 0
      %2654 = vmatpush1.bf16.msra.mxu0 0
      %2655 = vmatprep.subr.bf16.mxu0 0
      %2656 = vmatpush1.bf16.msra.mxu0 0
      %2657 = vmatprep.mubr.bf16.mxu0 0
      %2658 = vmatmul.mubr.bf16.gmra.mrb[0].mxu0 %v2232
      %v2659 = vpop.f32.mrb[0].mxu0
      %v2660 = vadd.f32 0.0, %v2659
      %v2661 = vpop.f32.mrb[0].mxu0
      %v2662 = vpop.f32.mrb[0].mxu0
      %v2663 = vadd.f32 0.0, %v2662
      %v2664 = vpop.f32.mrb[0].mxu0
      %2665 = vmatprep.mubr.bf16.mxu0 0
      %2666 = vmatmul.mubr.bf16.gmra.mrb[0].mxu0 %v2233
      %v2667 = vpop.f32.mrb[0].mxu0
      %v2668 = vadd.f32 0.0, %v2667
      %v2669 = vpop.f32.mrb[0].mxu0
      %v2670 = vpop.f32.mrb[0].mxu0
      %v2671 = vadd.f32 0.0, %v2670
      %v2672 = vpop.f32.mrb[0].mxu0
      %2673 = vmatprep.mubr.bf16.mxu0 0
      %2674 = vmatmul.mubr.bf16.gmra.mrb[0].mxu0 %v2234
      %v2675 = vpop.f32.mrb[0].mxu0
      %v2676 = vadd.f32 0.0, %v2675
      %v2677 = vpop.f32.mrb[0].mxu0
      %v2678 = vpop.f32.mrb[0].mxu0
      %v2679 = vadd.f32 0.0, %v2678
      %v2680 = vpop.f32.mrb[0].mxu0
      %2681 = vmatprep.mubr.bf16.mxu0 0
      %2682 = vmatmul.mubr.bf16.gmra.mrb[0].mxu0 %v2235
      %v2683 = vpop.f32.mrb[0].mxu0
      %v2684 = vadd.f32 0.0, %v2683
      %v2685 = vpop.f32.mrb[0].mxu0
      %v2686 = vpop.f32.mrb[0].mxu0
      %v2687 = vadd.f32 0.0, %v2686
      %v2688 = vpop.f32.mrb[0].mxu0
      %2689 = vmatprep.mubr.bf16.mxu0 0
      %2690 = vmatmul.mubr.bf16.gmra.mrb[0].mxu0 %v2236
      %v2691 = vpop.f32.mrb[0].mxu0
      %v2692 = vadd.f32 0.0, %v2691
      %v2693 = vpop.f32.mrb[0].mxu0
      %v2694 = vpop.f32.mrb[0].mxu0
      %v2695 = vadd.f32 0.0, %v2694
      %v2696 = vpop.f32.mrb[0].mxu0
      %2697 = vmatprep.mubr.bf16.mxu0 0
      %2698 = vmatmul.mubr.bf16.gmra.mrb[0].mxu0 %v2237
      %v2699 = vpop.f32.mrb[0].mxu0
      %v2700 = vadd.f32 0.0, %v2699
      %v2701 = vpop.f32.mrb[0].mxu0
      %v2702 = vpop.f32.mrb[0].mxu0
      %v2703 = vadd.f32 0.0, %v2702
      %v2704 = vpop.f32.mrb[0].mxu0
      %2705 = vmatprep.mubr.bf16.mxu0 0
      %2706 = vmatmul.mubr.bf16.gmra.mrb[0].mxu0 %v2238
      %v2707 = vpop.f32.mrb[0].mxu0
      %v2708 = vadd.f32 0.0, %v2707
      %v2709 = vpop.f32.mrb[0].mxu0
      %v2710 = vpop.f32.mrb[0].mxu0
      %v2711 = vadd.f32 0.0, %v2710
      %v2712 = vpop.f32.mrb[0].mxu0
      %2713 = vmatprep.mubr.bf16.mxu0 0
      %2714 = vmatmul.mubr.bf16.gmra.mrb[0].mxu0 %v2239
      %v2715 = vpop.f32.mrb[0].mxu0
      %v2716 = vadd.f32 0.0, %v2715
      %v2717 = vpop.f32.mrb[0].mxu0
      %v2718 = vpop.f32.mrb[0].mxu0
      %v2719 = vadd.f32 0.0, %v2718
      %v2720 = vpop.f32.mrb[0].mxu0
      %2721 = vmatprep.mubr.bf16.mxu0 0
      %2722 = vmatmul.mubr.bf16.gmra.mrb[0].mxu0 %v2240
      %v2723 = vpop.f32.mrb[0].mxu0
      %v2724 = vadd.f32 0.0, %v2723
      %v2725 = vpop.f32.mrb[0].mxu0
      %v2726 = vpop.f32.mrb[0].mxu0
      %v2727 = vadd.f32 0.0, %v2726
      %v2728 = vpop.f32.mrb[0].mxu0
      %2729 = vmatprep.mubr.bf16.mxu0 0
      %2730 = vmatmul.mubr.bf16.gmra.mrb[0].mxu0 %v2241
      %v2731 = vpop.f32.mrb[0].mxu0
      %v2732 = vadd.f32 0.0, %v2731
      %v2733 = vpop.f32.mrb[0].mxu0
      %v2734 = vpop.f32.mrb[0].mxu0
      %v2735 = vadd.f32 0.0, %v2734
      %v2736 = vpop.f32.mrb[0].mxu0
      %2737 = vmatprep.mubr.bf16.mxu0 0
      %2738 = vmatmul.mubr.bf16.gmra.mrb[0].mxu0 %v2242
      %v2739 = vpop.f32.mrb[0].mxu0
      %v2740 = vadd.f32 0.0, %v2739
      %v2741 = vpop.f32.mrb[0].mxu0
      %v2742 = vpop.f32.mrb[0].mxu0
      %v2743 = vadd.f32 0.0, %v2742
      %v2744 = vpop.f32.mrb[0].mxu0
      %2745 = vmatprep.mubr.bf16.mxu0 0
      %2746 = vmatmul.mubr.bf16.gmra.mrb[0].mxu0 %v2243
      %v2747 = vpop.f32.mrb[0].mxu0
      %v2748 = vadd.f32 0.0, %v2747
      %v2749 = vpop.f32.mrb[0].mxu0
      %v2750 = vpop.f32.mrb[0].mxu0
      %v2751 = vadd.f32 0.0, %v2750
      %v2752 = vpop.f32.mrb[0].mxu0
      %2753 = vmatprep.mubr.bf16.mxu0 0
      %2754 = vmatmul.mubr.bf16.gmra.mrb[0].mxu0 %v2244
      %v2755 = vpop.f32.mrb[0].mxu0
      %v2756 = vadd.f32 0.0, %v2755
      %v2757 = vpop.f32.mrb[0].mxu0
      %v2758 = vpop.f32.mrb[0].mxu0
      %v2759 = vadd.f32 0.0, %v2758
      %v2760 = vpop.f32.mrb[0].mxu0
      %2761 = vmatprep.mubr.bf16.mxu0 0
      %2762 = vmatmul.mubr.bf16.gmra.mrb[0].mxu0 %v2245
      %v2763 = vpop.f32.mrb[0].mxu0
      %v2764 = vadd.f32 0.0, %v2763
      %v2765 = vpop.f32.mrb[0].mxu0
      %v2766 = vpop.f32.mrb[0].mxu0
      %v2767 = vadd.f32 0.0, %v2766
      %v2768 = vpop.f32.mrb[0].mxu0
      %2769 = vmatprep.mubr.bf16.mxu0 0
      %2770 = vmatmul.mubr.bf16.gmra.mrb[0].mxu0 %v2246
      %v2771 = vpop.f32.mrb[0].mxu0
      %v2772 = vadd.f32 0.0, %v2771
      %v2773 = vpop.f32.mrb[0].mxu0
      %v2774 = vpop.f32.mrb[0].mxu0
      %v2775 = vadd.f32 0.0, %v2774
      %v2776 = vpop.f32.mrb[0].mxu0
      %2777 = vmatprep.mubr.bf16.mxu0 0
      %2778 = vmatmul.mubr.bf16.gmra.mrb[0].mxu0 %v2247
      %v2779 = vpop.f32.mrb[0].mxu0
      %v2780 = vadd.f32 0.0, %v2779
      %v2781 = vpop.f32.mrb[0].mxu0
      %v2782 = vpop.f32.mrb[0].mxu0
      %v2783 = vadd.f32 0.0, %v2782
      %v2784 = vpop.f32.mrb[0].mxu0
      %2785 = vmatprep.mubr.bf16.mxu0 0
      %2786 = vmatmul.mubr.bf16.gmra.mrb[0].mxu0 %v2248
      %v2787 = vpop.f32.mrb[0].mxu0
      %v2788 = vadd.f32 0.0, %v2787
      %v2789 = vpop.f32.mrb[0].mxu0
      %v2790 = vpop.f32.mrb[0].mxu0
      %v2791 = vadd.f32 0.0, %v2790
      %v2792 = vpop.f32.mrb[0].mxu0
      %2793 = vmatprep.mubr.bf16.mxu0 0
      %2794 = vmatmul.mubr.bf16.gmra.mrb[0].mxu0 %v2249
      %v2795 = vpop.f32.mrb[0].mxu0
      %v2796 = vadd.f32 0.0, %v2795
      %v2797 = vpop.f32.mrb[0].mxu0
      %v2798 = vpop.f32.mrb[0].mxu0
      %v2799 = vadd.f32 0.0, %v2798
      %v2800 = vpop.f32.mrb[0].mxu0
      %2801 = vmatprep.mubr.bf16.mxu0 0
      %2802 = vmatmul.mubr.bf16.gmra.mrb[0].mxu0 %v2250
      %v2803 = vpop.f32.mrb[0].mxu0
      %v2804 = vadd.f32 0.0, %v2803
      %v2805 = vpop.f32.mrb[0].mxu0
      %v2806 = vpop.f32.mrb[0].mxu0
      %v2807 = vadd.f32 0.0, %v2806
      %v2808 = vpop.f32.mrb[0].mxu0
      %2809 = vmatprep.mubr.bf16.mxu0 0
      %2810 = vmatmul.mubr.bf16.gmra.mrb[0].mxu0 %v2251
      %v2811 = vpop.f32.mrb[0].mxu0
      %v2812 = vadd.f32 0.0, %v2811
      %v2813 = vpop.f32.mrb[0].mxu0
      %v2814 = vpop.f32.mrb[0].mxu0
      %v2815 = vadd.f32 0.0, %v2814
      %v2816 = vpop.f32.mrb[0].mxu0
      %2817 = vdwg.mxu0
      %v2818 = vadd.f32 %v2435, 0.0
      %v2819 = vadd.f32 %v2439, 0.0
      %v2820 = vadd.f32 %v2445, 0.0
      %v2821 = vadd.f32 %v2449, 0.0
      %v2822 = vadd.f32 %v2458, 0.0
      %v2823 = vadd.f32 %v2464, 0.0
      %v2824 = vadd.f32 %v2468, 0.0
      %v2825 = vadd.f32 %v2474, 0.0
      %v2826 = vadd.f32 %v2483, 0.0
      %v2827 = vadd.f32 %v2487, 0.0
      %v2828 = vadd.f32 %v2493, 0.0
      %v2829 = vadd.f32 %v2497, 0.0
      %v2830 = vadd.f32 %v2506, 0.0
      %v2831 = vadd.f32 %v2512, 0.0
      %v2832 = vadd.f32 %v2516, 0.0
      %v2833 = vadd.f32 %v2522, 0.0
      %v2834 = vadd.f32 %v2531, 0.0
      %v2835 = vadd.f32 %v2535, 0.0
      %v2836 = vadd.f32 %v2541, 0.0
      %v2837 = vadd.f32 %v2545, 0.0
      %v2838 = vadd.f32 %v2554, 0.0
      %v2839 = vadd.f32 %v2560, 0.0
      %v2840 = vadd.f32 %v2564, 0.0
      %v2841 = vadd.f32 %v2570, 0.0
      %v2842 = vadd.f32 %v2579, 0.0
      %v2843 = vadd.f32 %v2583, 0.0
      %v2844 = vadd.f32 %v2589, 0.0
      %v2845 = vadd.f32 %v2593, 0.0
      %v2846 = vadd.f32 %v2602, 0.0
      %v2847 = vadd.f32 %v2608, 0.0
      %v2848 = vadd.f32 %v2612, 0.0
      %v2849 = vadd.f32 %v2618, 0.0
      %vm2890 = vcmask 1046528
      %v2891 = vrot.slane %v2437, 1
      %v2892 = vrot.slane %v2441, 1
      %v2893 = vsel %vm2890, %v2891, %v2892
      %v2894 = vrot.slane %v2447, 1
      %v2895 = vsel %vm2890, %v2892, %v2894
      %v2896 = vrot.slane %v2451, 1
      %v2897 = vsel %vm2890, %v2894, %v2896
      %v2898 = vrot.slane %v2456, 1
      %v2899 = vsel %vm2890, %v2896, %v2898
      %v2900 = vrot.slane %v2460, 1
      %v2901 = vrot.slane %v2466, 1
      %v2902 = vsel %vm2890, %v2900, %v2901
      %v2903 = vrot.slane %v2470, 1
      %v2904 = vsel %vm2890, %v2901, %v2903
      %v2905 = vrot.slane %v2476, 1
      %v2906 = vsel %vm2890, %v2903, %v2905
      %v2907 = vrot.slane %v2479, 1
      %v2908 = vsel %vm2890, %v2905, %v2907
      %v2909 = vrot.slane %v2485, 1
      %v2910 = vrot.slane %v2489, 1
      %v2911 = vsel %vm2890, %v2909, %v2910
      %v2912 = vrot.slane %v2495, 1
      %v2913 = vsel %vm2890, %v2910, %v2912
      %v2914 = vrot.slane %v2499, 1
      %v2915 = vsel %vm2890, %v2912, %v2914
      %v2916 = vrot.slane %v2504, 1
      %v2917 = vsel %vm2890, %v2914, %v2916
      %v2918 = vrot.slane %v2508, 1
      %v2919 = vrot.slane %v2514, 1
      %v2920 = vsel %vm2890, %v2918, %v2919
      %v2921 = vrot.slane %v2518, 1
      %v2922 = vsel %vm2890, %v2919, %v2921
      %v2923 = vrot.slane %v2524, 1
      %v2924 = vsel %vm2890, %v2921, %v2923
      %v2925 = vrot.slane %v2527, 1
      %v2926 = vsel %vm2890, %v2923, %v2925
      %v2927 = vrot.slane %v2533, 1
      %v2928 = vrot.slane %v2537, 1
      %v2929 = vsel %vm2890, %v2927, %v2928
      %v2930 = vrot.slane %v2543, 1
      %v2931 = vsel %vm2890, %v2928, %v2930
      %v2932 = vrot.slane %v2547, 1
      %v2933 = vsel %vm2890, %v2930, %v2932
      %v2934 = vrot.slane %v2552, 1
      %v2935 = vsel %vm2890, %v2932, %v2934
      %v2936 = vrot.slane %v2556, 1
      %v2937 = vrot.slane %v2562, 1
      %v2938 = vsel %vm2890, %v2936, %v2937
      %v2939 = vrot.slane %v2566, 1
      %v2940 = vsel %vm2890, %v2937, %v2939
      %v2941 = vrot.slane %v2572, 1
      %v2942 = vsel %vm2890, %v2939, %v2941
      %v2943 = vrot.slane %v2575, 1
      %v2944 = vsel %vm2890, %v2941, %v2943
      %v2945 = vrot.slane %v2581, 1
      %v2946 = vrot.slane %v2585, 1
      %v2947 = vsel %vm2890, %v2945, %v2946
      %v2948 = vrot.slane %v2591, 1
      %v2949 = vsel %vm2890, %v2946, %v2948
      %v2950 = vrot.slane %v2595, 1
      %v2951 = vsel %vm2890, %v2948, %v2950
      %v2952 = vrot.slane %v2600, 1
      %v2953 = vsel %vm2890, %v2950, %v2952
      %v2954 = vrot.slane %v2604, 1
      %v2955 = vrot.slane %v2610, 1
      %v2956 = vsel %vm2890, %v2954, %v2955
      %v2957 = vrot.slane %v2614, 1
      %v2958 = vsel %vm2890, %v2955, %v2957
      %v2959 = vrot.slane %v2620, 1
      %v2960 = vsel %vm2890, %v2957, %v2959
      %v2961 = vrot.slane %v2623, 1
      %v2962 = vsel %vm2890, %v2959, %v2961
      %v2995 = vadd.f32 %v2818, %v2893
      %v2996 = vadd.f32 %v2819, %v2895
      %v2997 = vadd.f32 %v2820, %v2897
      %v2998 = vadd.f32 %v2821, %v2899
      %v2999 = vadd.f32 %v2822, %v2902
      %v3000 = vadd.f32 %v2823, %v2904
      %v3001 = vadd.f32 %v2824, %v2906
      %v3002 = vadd.f32 %v2825, %v2908
      %v3003 = vadd.f32 %v2826, %v2911
      %v3004 = vadd.f32 %v2827, %v2913
      %v3005 = vadd.f32 %v2828, %v2915
      %v3006 = vadd.f32 %v2829, %v2917
      %v3007 = vadd.f32 %v2830, %v2920
      %v3008 = vadd.f32 %v2831, %v2922
      %v3009 = vadd.f32 %v2832, %v2924
      %v3010 = vadd.f32 %v2833, %v2926
      %v3011 = vadd.f32 %v2834, %v2929
      %v3012 = vadd.f32 %v2835, %v2931
      %v3013 = vadd.f32 %v2836, %v2933
      %v3014 = vadd.f32 %v2837, %v2935
      %v3015 = vadd.f32 %v2838, %v2938
      %v3016 = vadd.f32 %v2839, %v2940
      %v3017 = vadd.f32 %v2840, %v2942
      %v3018 = vadd.f32 %v2841, %v2944
      %v3019 = vadd.f32 %v2842, %v2947
      %v3020 = vadd.f32 %v2843, %v2949
      %v3021 = vadd.f32 %v2844, %v2951
      %v3022 = vadd.f32 %v2845, %v2953
      %v3023 = vadd.f32 %v2846, %v2956
      %v3024 = vadd.f32 %v2847, %v2958
      %v3025 = vadd.f32 %v2848, %v2960
      %v3026 = vadd.f32 %v2849, %v2962
      %vm3067 = vcmask 1045504
      %v3068 = vrot.slane %v2660, 2
      %v3069 = vrot.slane %v2663, 2
      %v3070 = vsel %vm3067, %v3068, %v3069
      %v3071 = vrot.slane %v2668, 2
      %v3072 = vsel %vm3067, %v3069, %v3071
      %v3073 = vrot.slane %v2671, 2
      %v3074 = vsel %vm3067, %v3071, %v3073
      %v3075 = vrot.slane %v2676, 2
      %v3076 = vsel %vm3067, %v3073, %v3075
      %v3077 = vrot.slane %v2679, 2
      %v3078 = vrot.slane %v2684, 2
      %v3079 = vsel %vm3067, %v3077, %v3078
      %v3080 = vrot.slane %v2687, 2
      %v3081 = vsel %vm3067, %v3078, %v3080
      %v3082 = vrot.slane %v2692, 2
      %v3083 = vsel %vm3067, %v3080, %v3082
      %v3084 = vrot.slane %v2695, 2
      %v3085 = vsel %vm3067, %v3082, %v3084
      %v3086 = vrot.slane %v2700, 2
      %v3087 = vrot.slane %v2703, 2
      %v3088 = vsel %vm3067, %v3086, %v3087
      %v3089 = vrot.slane %v2708, 2
      %v3090 = vsel %vm3067, %v3087, %v3089
      %v3091 = vrot.slane %v2711, 2
      %v3092 = vsel %vm3067, %v3089, %v3091
      %v3093 = vrot.slane %v2716, 2
      %v3094 = vsel %vm3067, %v3091, %v3093
      %v3095 = vrot.slane %v2719, 2
      %v3096 = vrot.slane %v2724, 2
      %v3097 = vsel %vm3067, %v3095, %v3096
      %v3098 = vrot.slane %v2727, 2
      %v3099 = vsel %vm3067, %v3096, %v3098
      %v3100 = vrot.slane %v2732, 2
      %v3101 = vsel %vm3067, %v3098, %v3100
      %v3102 = vrot.slane %v2735, 2
      %v3103 = vsel %vm3067, %v3100, %v3102
      %v3104 = vrot.slane %v2740, 2
      %v3105 = vrot.slane %v2743, 2
      %v3106 = vsel %vm3067, %v3104, %v3105
      %v3107 = vrot.slane %v2748, 2
      %v3108 = vsel %vm3067, %v3105, %v3107
      %v3109 = vrot.slane %v2751, 2
      %v3110 = vsel %vm3067, %v3107, %v3109
      %v3111 = vrot.slane %v2756, 2
      %v3112 = vsel %vm3067, %v3109, %v3111
      %v3113 = vrot.slane %v2759, 2
      %v3114 = vrot.slane %v2764, 2
      %v3115 = vsel %vm3067, %v3113, %v3114
      %v3116 = vrot.slane %v2767, 2
      %v3117 = vsel %vm3067, %v3114, %v3116
      %v3118 = vrot.slane %v2772, 2
      %v3119 = vsel %vm3067, %v3116, %v3118
      %v3120 = vrot.slane %v2775, 2
      %v3121 = vsel %vm3067, %v3118, %v3120
      %v3122 = vrot.slane %v2780, 2
      %v3123 = vrot.slane %v2783, 2
      %v3124 = vsel %vm3067, %v3122, %v3123
      %v3125 = vrot.slane %v2788, 2
      %v3126 = vsel %vm3067, %v3123, %v3125
      %v3127 = vrot.slane %v2791, 2
      %v3128 = vsel %vm3067, %v3125, %v3127
      %v3129 = vrot.slane %v2796, 2
      %v3130 = vsel %vm3067, %v3127, %v3129
      %v3131 = vrot.slane %v2799, 2
      %v3132 = vrot.slane %v2804, 2
      %v3133 = vsel %vm3067, %v3131, %v3132
      %v3134 = vrot.slane %v2807, 2
      %v3135 = vsel %vm3067, %v3132, %v3134
      %v3136 = vrot.slane %v2812, 2
      %v3137 = vsel %vm3067, %v3134, %v3136
      %v3138 = vrot.slane %v2815, 2
      %v3139 = vsel %vm3067, %v3136, %v3138
      %v3172 = vadd.f32 %v2995, %v3070
      %v3173 = vadd.f32 %v2996, %v3072
      %v3174 = vadd.f32 %v2997, %v3074
      %v3175 = vadd.f32 %v2998, %v3076
      %v3176 = vadd.f32 %v2999, %v3079
      %v3177 = vadd.f32 %v3000, %v3081
      %v3178 = vadd.f32 %v3001, %v3083
      %v3179 = vadd.f32 %v3002, %v3085
      %v3180 = vadd.f32 %v3003, %v3088
      %v3181 = vadd.f32 %v3004, %v3090
      %v3182 = vadd.f32 %v3005, %v3092
      %v3183 = vadd.f32 %v3006, %v3094
      %v3184 = vadd.f32 %v3007, %v3097
      %v3185 = vadd.f32 %v3008, %v3099
      %v3186 = vadd.f32 %v3009, %v3101
      %v3187 = vadd.f32 %v3010, %v3103
      %v3188 = vadd.f32 %v3011, %v3106
      %v3189 = vadd.f32 %v3012, %v3108
      %v3190 = vadd.f32 %v3013, %v3110
      %v3191 = vadd.f32 %v3014, %v3112
      %v3192 = vadd.f32 %v3015, %v3115
      %v3193 = vadd.f32 %v3016, %v3117
      %v3194 = vadd.f32 %v3017, %v3119
      %v3195 = vadd.f32 %v3018, %v3121
      %v3196 = vadd.f32 %v3019, %v3124
      %v3197 = vadd.f32 %v3020, %v3126
      %v3198 = vadd.f32 %v3021, %v3128
      %v3199 = vadd.f32 %v3022, %v3130
      %v3200 = vadd.f32 %v3023, %v3133
      %v3201 = vadd.f32 %v3024, %v3135
      %v3202 = vadd.f32 %v3025, %v3137
      %v3203 = vadd.f32 %v3026, %v3139
      %s3204 = sadd.s32 %s2076, 1
      %s3205 = smul.u32 %s3204, 5
      %s3206 = smul.addr %s3205, 4
      %s3207 = scalar_lea.vmem [#allocation2], %s3206
      %v3208 = vld [vmem:[%s3207] sm:$0xf]
      %v3209 = vld [vmem:[%s3207 + $0x4] sm:$0xf]
      %v3210 = vld [vmem:[%s3207 + $0x8] sm:$0xf]
      %v3211 = vld [vmem:[%s3207 + $0xc] sm:$0xf]
      %v3212 = vld [vmem:[%s3207 + $0x10] sm:$0xf]
      %v3213 = vld [vmem:[%s3207 + $0x14] sm:$0xf]
      %v3214 = vld [vmem:[%s3207 + $0x18] sm:$0xf]
      %v3215 = vld [vmem:[%s3207 + $0x1c] sm:$0xf]
      %v3216 = vld [vmem:[%s3207 + $0x20] sm:$0xf]
      %v3217 = vld [vmem:[%s3207 + $0x24] sm:$0xf]
      %v3218 = vld [vmem:[%s3207 + $0x28] sm:$0xf]
      %v3219 = vld [vmem:[%s3207 + $0x2c] sm:$0xf]
      %v3220 = vld [vmem:[%s3207 + $0x30] sm:$0xf]
      %v3221 = vld [vmem:[%s3207 + $0x34] sm:$0xf]
      %v3222 = vld [vmem:[%s3207 + $0x38] sm:$0xf]
      %v3223 = vld [vmem:[%s3207 + $0x3c] sm:$0xf]
      %v3224 = vld [vmem:[%s3207 + $0x40] sm:$0xf]
      %v3225 = vld [vmem:[%s3207 + $0x44] sm:$0xf]
      %v3226 = vld [vmem:[%s3207 + $0x48] sm:$0xf]
      %v3227 = vld [vmem:[%s3207 + $0x4c] sm:$0xf]
      %v3228 = vld [vmem:[%s3207 + $0x50] sm:$0xf]
      %v3229 = vld [vmem:[%s3207 + $0x54] sm:$0xf]
      %v3230 = vld [vmem:[%s3207 + $0x58] sm:$0xf]
      %v3231 = vld [vmem:[%s3207 + $0x5c] sm:$0xf]
      %v3232 = vld [vmem:[%s3207 + $0x60] sm:$0xf]
      %v3233 = vld [vmem:[%s3207 + $0x64] sm:$0xf]
      %v3234 = vld [vmem:[%s3207 + $0x68] sm:$0xf]
      %v3235 = vld [vmem:[%s3207 + $0x6c] sm:$0xf]
      %v3236 = vld [vmem:[%s3207 + $0x70] sm:$0xf]
      %v3237 = vld [vmem:[%s3207 + $0x74] sm:$0xf]
      %v3238 = vld [vmem:[%s3207 + $0x78] sm:$0xf]
      %v3239 = vld [vmem:[%s3207 + $0x7c] sm:$0xf]
      %v3240 = vld [vmem:[%s3207 + $0x80] sm:$0xf]
      %v3241 = vld [vmem:[%s3207 + $0x84] sm:$0xf]
      %v3242 = vld [vmem:[%s3207 + $0x88] sm:$0xf]
      %v3243 = vld [vmem:[%s3207 + $0x8c] sm:$0xf]
      %v3244 = vld [vmem:[%s3207 + $0x90] sm:$0xf]
      %v3245 = vld [vmem:[%s3207 + $0x94] sm:$0xf]
      %v3246 = vld [vmem:[%s3207 + $0x98] sm:$0xf]
      %v3247 = vld [vmem:[%s3207 + $0x9c] sm:$0xf]
      %s3248 = scalar_lea.vmem %s1, 192
      %v3249 = vld [vmem:[%s3248] sm:$0xff]
      %v3250 = vld [vmem:[%s3248 + $0x8] sm:$0xf]
      %v3251 = vld [vmem:[%s3248 + $0xc] sm:$0xff]
      %v3252 = vld [vmem:[%s3248 + $0x14] sm:$0xf]
      %v3253 = vld [vmem:[%s3248 + $0x18] sm:$0xff]
      %v3254 = vld [vmem:[%s3248 + $0x20] sm:$0xf]
      %v3255 = vld [vmem:[%s3248 + $0x24] sm:$0xff]
      %v3256 = vld [vmem:[%s3248 + $0x2c] sm:$0xf]
      %v3257 = vld [vmem:[%s3248 + $0x30] sm:$0xff]
      %v3258 = vld [vmem:[%s3248 + $0x38] sm:$0xf]
      %v3259 = vld [vmem:[%s3248 + $0x3c] sm:$0xff]
      %v3260 = vld [vmem:[%s3248 + $0x44] sm:$0xf]
      %v3261 = vld [vmem:[%s3248 + $0x48] sm:$0xff]
      %v3262 = vld [vmem:[%s3248 + $0x50] sm:$0xf]
      %v3263 = vld [vmem:[%s3248 + $0x54] sm:$0xff]
      %v3264 = vld [vmem:[%s3248 + $0x5c] sm:$0xf]
      %v3265 = vld [vmem:[%s3248 + $0x60] sm:$0xff]
      %v3266 = vld [vmem:[%s3248 + $0x68] sm:$0xf]
      %v3267 = vld [vmem:[%s3248 + $0x6c] sm:$0xff]
      %v3268 = vld [vmem:[%s3248 + $0x74] sm:$0xf]
      %v3269 = vld [vmem:[%s3248 + $0x78] sm:$0xff]
      %v3270 = vld [vmem:[%s3248 + $0x80] sm:$0xf]
      %v3271 = vld [vmem:[%s3248 + $0x84] sm:$0xff]
      %v3272 = vld [vmem:[%s3248 + $0x8c] sm:$0xf]
      %v3273 = vld [vmem:[%s3248 + $0x90] sm:$0xff]
      %v3274 = vld [vmem:[%s3248 + $0x98] sm:$0xf]
      %v3275 = vld [vmem:[%s3248 + $0x9c] sm:$0xff]
      %v3276 = vld [vmem:[%s3248 + $0xa4] sm:$0xf]
      %v3277 = vld [vmem:[%s3248 + $0xa8] sm:$0xff]
      %v3278 = vld [vmem:[%s3248 + $0xb0] sm:$0xf]
      %v3279 = vld [vmem:[%s3248 + $0xb4] sm:$0xff]
      %v3280 = vld [vmem:[%s3248 + $0xbc] sm:$0xf]
      %v3321 = vunpack.c.l.b16 %v3208
      %v3322 = vunpack.c.l.b16 %v3209
      %v3323 = vunpack.c.l.b16 %v3210
      %v3324 = vunpack.c.l.b16 %v3211
      %v3325 = vunpack.c.l.b16 %v3212
      %v3326 = vunpack.c.l.b16 %v3213
      %v3327 = vunpack.c.l.b16 %v3214
      %v3328 = vunpack.c.l.b16 %v3215
      %v3329 = vunpack.c.l.b16 %v3216
      %v3330 = vunpack.c.l.b16 %v3217
      %v3331 = vunpack.c.l.b16 %v3218
      %v3332 = vunpack.c.l.b16 %v3219
      %v3333 = vunpack.c.l.b16 %v3220
      %v3334 = vunpack.c.l.b16 %v3221
      %v3335 = vunpack.c.l.b16 %v3222
      %v3336 = vunpack.c.l.b16 %v3223
      %v3337 = vunpack.c.l.b16 %v3224
      %v3338 = vunpack.c.l.b16 %v3225
      %v3339 = vunpack.c.l.b16 %v3226
      %v3340 = vunpack.c.l.b16 %v3227
      %v3341 = vunpack.c.l.b16 %v3228
      %v3342 = vunpack.c.l.b16 %v3229
      %v3343 = vunpack.c.l.b16 %v3230
      %v3344 = vunpack.c.l.b16 %v3231
      %v3345 = vunpack.c.l.b16 %v3232
      %v3346 = vunpack.c.l.b16 %v3233
      %v3347 = vunpack.c.l.b16 %v3234
      %v3348 = vunpack.c.l.b16 %v3235
      %v3349 = vunpack.c.l.b16 %v3236
      %v3350 = vunpack.c.l.b16 %v3237
      %v3351 = vunpack.c.l.b16 %v3238
      %v3352 = vunpack.c.l.b16 %v3239
      %v3353 = vunpack.c.l.b16 %v3240
      %v3354 = vunpack.c.l.b16 %v3241
      %v3355 = vunpack.c.l.b16 %v3242
      %v3356 = vunpack.c.l.b16 %v3243
      %v3357 = vunpack.c.l.b16 %v3244
      %v3358 = vunpack.c.l.b16 %v3245
      %v3359 = vunpack.c.l.b16 %v3246
      %v3360 = vunpack.c.l.b16 %v3247
      %v3361 = vpack.c.b16 %v3322, %v3321
      %v3362 = vpack.c.b16 %v3324, %v3323
      %v3363 = vpack.c.b16 %v3326, %v3325
      %v3364 = vpack.c.b16 %v3328, %v3327
      %v3365 = vpack.c.b16 %v3330, %v3329
      %v3366 = vpack.c.b16 %v3332, %v3331
      %v3367 = vpack.c.b16 %v3334, %v3333
      %v3368 = vpack.c.b16 %v3336, %v3335
      %v3369 = vpack.c.b16 %v3338, %v3337
      %v3370 = vpack.c.b16 %v3340, %v3339
      %v3371 = vpack.c.b16 %v3342, %v3341
      %v3372 = vpack.c.b16 %v3344, %v3343
      %v3373 = vpack.c.b16 %v3346, %v3345
      %v3374 = vpack.c.b16 %v3348, %v3347
      %v3375 = vpack.c.b16 %v3350, %v3349
      %v3376 = vpack.c.b16 %v3352, %v3351
      %v3377 = vpack.c.b16 %v3354, %v3353
      %v3378 = vpack.c.b16 %v3356, %v3355
      %v3379 = vpack.c.b16 %v3358, %v3357
      %v3380 = vpack.c.b16 %v3360, %v3359
      %v3433 = vunpack.c.l.b16 %v3249
      %v3434 = vunpack.c.h.b16 %v3249
      %v3435 = vunpack.c.l.b16 %v3250
      %v3436 = vunpack.c.l.b16 %v3251
      %v3437 = vunpack.c.h.b16 %v3251
      %v3438 = vunpack.c.l.b16 %v3252
      %v3439 = vunpack.c.l.b16 %v3253
      %v3440 = vunpack.c.h.b16 %v3253
      %v3441 = vunpack.c.l.b16 %v3254
      %v3442 = vunpack.c.l.b16 %v3255
      %v3443 = vunpack.c.h.b16 %v3255
      %v3444 = vunpack.c.l.b16 %v3256
      %v3445 = vunpack.c.l.b16 %v3257
      %v3446 = vunpack.c.h.b16 %v3257
      %v3447 = vunpack.c.l.b16 %v3258
      %v3448 = vunpack.c.l.b16 %v3259
      %v3449 = vunpack.c.h.b16 %v3259
      %v3450 = vunpack.c.l.b16 %v3260
      %v3451 = vunpack.c.l.b16 %v3261
      %v3452 = vunpack.c.h.b16 %v3261
      %v3453 = vunpack.c.l.b16 %v3262
      %v3454 = vunpack.c.l.b16 %v3263
      %v3455 = vunpack.c.h.b16 %v3263
      %v3456 = vunpack.c.l.b16 %v3264
      %v3457 = vunpack.c.l.b16 %v3265
      %v3458 = vunpack.c.h.b16 %v3265
      %v3459 = vunpack.c.l.b16 %v3266
      %v3460 = vunpack.c.l.b16 %v3267
      %v3461 = vunpack.c.h.b16 %v3267
      %v3462 = vunpack.c.l.b16 %v3268
      %v3463 = vunpack.c.l.b16 %v3269
      %v3464 = vunpack.c.h.b16 %v3269
      %v3465 = vunpack.c.l.b16 %v3270
      %v3466 = vunpack.c.l.b16 %v3271
      %v3467 = vunpack.c.h.b16 %v3271
      %v3468 = vunpack.c.l.b16 %v3272
      %v3469 = vunpack.c.l.b16 %v3273
      %v3470 = vunpack.c.h.b16 %v3273
      %v3471 = vunpack.c.l.b16 %v3274
      %v3472 = vunpack.c.l.b16 %v3275
      %v3473 = vunpack.c.h.b16 %v3275
      %v3474 = vunpack.c.l.b16 %v3276
      %v3475 = vunpack.c.l.b16 %v3277
      %v3476 = vunpack.c.h.b16 %v3277
      %v3477 = vunpack.c.l.b16 %v3278
      %v3478 = vunpack.c.l.b16 %v3279
      %v3479 = vunpack.c.h.b16 %v3279
      %v3480 = vunpack.c.l.b16 %v3280
      %v3481 = vpack.c.b16 %v3436, %v3433
      %v3482 = vpack.c.b16 %v3437, %v3434
      %v3483 = vpack.c.b16 %v3438, %v3435
      %v3484 = vpack.c.b16 %v3442, %v3439
      %v3485 = vpack.c.b16 %v3443, %v3440
      %v3486 = vpack.c.b16 %v3444, %v3441
      %v3487 = vpack.c.b16 %v3448, %v3445
      %v3488 = vpack.c.b16 %v3449, %v3446
      %v3489 = vpack.c.b16 %v3450, %v3447
      %v3490 = vpack.c.b16 %v3454, %v3451
      %v3491 = vpack.c.b16 %v3455, %v3452
      %v3492 = vpack.c.b16 %v3456, %v3453
      %v3493 = vpack.c.b16 %v3460, %v3457
      %v3494 = vpack.c.b16 %v3461, %v3458
      %v3495 = vpack.c.b16 %v3462, %v3459
      %v3496 = vpack.c.b16 %v3466, %v3463
      %v3497 = vpack.c.b16 %v3467, %v3464
      %v3498 = vpack.c.b16 %v3468, %v3465
      %v3499 = vpack.c.b16 %v3472, %v3469
      %v3500 = vpack.c.b16 %v3473, %v3470
      %v3501 = vpack.c.b16 %v3474, %v3471
      %v3502 = vpack.c.b16 %v3478, %v3475
      %v3503 = vpack.c.b16 %v3479, %v3476
      %v3504 = vpack.c.b16 %v3480, %v3477
      %3529 = vmatprep.subr.bf16.mxu0 %v3482
      %3530 = vmatpush1.bf16.msra.mxu0 %v3481
      %3531 = vmatprep.subr.bf16.mxu0 %v3485
      %3532 = vmatpush1.bf16.msra.mxu0 %v3484
      %3533 = vmatprep.subr.bf16.mxu0 %v3488
      %3534 = vmatpush1.bf16.msra.mxu0 %v3487
      %3535 = vmatprep.subr.bf16.mxu0 %v3491
      %3536 = vmatpush1.bf16.msra.mxu0 %v3490
      %3537 = vmatprep.subr.bf16.mxu0 %v3494
      %3538 = vmatpush1.bf16.msra.mxu0 %v3493
      %3539 = vmatprep.subr.bf16.mxu0 %v3497
      %3540 = vmatpush1.bf16.msra.mxu0 %v3496
      %3541 = vmatprep.subr.bf16.mxu0 %v3500
      %3542 = vmatpush1.bf16.msra.mxu0 %v3499
      %3543 = vmatprep.subr.bf16.mxu0 %v3503
      %3544 = vmatpush1.bf16.msra.mxu0 %v3502
      %3545 = vmatprep.subr.bf16.mxu0 0
      %3546 = vmatpush1.bf16.msra.mxu0 0
      %3547 = vmatprep.subr.bf16.mxu0 0
      %3548 = vmatpush1.bf16.msra.mxu0 0
      %3549 = vmatprep.subr.bf16.mxu0 0
      %3550 = vmatpush1.bf16.msra.mxu0 0
      %3551 = vmatprep.subr.bf16.mxu0 0
      %3552 = vmatpush1.bf16.msra.mxu0 0
      %3553 = vmatprep.subr.bf16.mxu0 0
      %3554 = vmatpush1.bf16.msra.mxu0 0
      %3555 = vmatprep.subr.bf16.mxu0 0
      %3556 = vmatpush1.bf16.msra.mxu0 0
      %3557 = vmatprep.subr.bf16.mxu0 0
      %3558 = vmatpush1.bf16.msra.mxu0 0
      %3559 = vmatprep.subr.bf16.mxu0 0
      %3560 = vmatpush1.bf16.msra.mxu0 0
      %3561 = vmatprep.mubr.bf16.mxu0 0
      %3562 = vmatmul.mubr.bf16.gmra.mrb[0].mxu0 %v3361
      %v3563 = vpop.f32.mrb[0].mxu0
      %v3564 = vadd.f32 0.0, %v3563
      %v3565 = vpop.f32.mrb[0].mxu0
      %v3566 = vadd.f32 0.0, %v3565
      %v3567 = vpop.f32.mrb[0].mxu0
      %v3568 = vadd.f32 0.0, %v3567
      %v3569 = vpop.f32.mrb[0].mxu0
      %v3570 = vadd.f32 0.0, %v3569
      %3571 = vmatprep.mubr.bf16.mxu0 0
      %3572 = vmatmul.mubr.bf16.gmra.mrb[0].mxu0 %v3362
      %v3573 = vpop.f32.mrb[0].mxu0
      %v3574 = vadd.f32 0.0, %v3573
      %v3575 = vpop.f32.mrb[0].mxu0
      %v3576 = vadd.f32 0.0, %v3575
      %v3577 = vpop.f32.mrb[0].mxu0
      %v3578 = vadd.f32 0.0, %v3577
      %v3579 = vpop.f32.mrb[0].mxu0
      %v3580 = vadd.f32 0.0, %v3579
      %3581 = vmatprep.mubr.bf16.mxu0 0
      %3582 = vmatmul.mubr.bf16.gmra.mrb[0].mxu0 %v3363
      %v3583 = vpop.f32.mrb[0].mxu0
      %v3584 = vpop.f32.mrb[0].mxu0
      %v3585 = vadd.f32 0.0, %v3584
      %v3586 = vpop.f32.mrb[0].mxu0
      %v3587 = vadd.f32 0.0, %v3586
      %v3588 = vpop.f32.mrb[0].mxu0
      %v3589 = vadd.f32 0.0, %v3588
      %3590 = vmatprep.mubr.bf16.mxu0 0
      %3591 = vmatmul.mubr.bf16.gmra.mrb[0].mxu0 %v3364
      %v3592 = vpop.f32.mrb[0].mxu0
      %v3593 = vadd.f32 0.0, %v3592
      %v3594 = vpop.f32.mrb[0].mxu0
      %v3595 = vadd.f32 0.0, %v3594
      %v3596 = vpop.f32.mrb[0].mxu0
      %v3597 = vadd.f32 0.0, %v3596
      %v3598 = vpop.f32.mrb[0].mxu0
      %v3599 = vadd.f32 0.0, %v3598
      %3600 = vmatprep.mubr.bf16.mxu0 0
      %3601 = vmatmul.mubr.bf16.gmra.mrb[0].mxu0 %v3365
      %v3602 = vpop.f32.mrb[0].mxu0
      %v3603 = vadd.f32 0.0, %v3602
      %v3604 = vpop.f32.mrb[0].mxu0
      %v3605 = vadd.f32 0.0, %v3604
      %v3606 = vpop.f32.mrb[0].mxu0
      %v3607 = vpop.f32.mrb[0].mxu0
      %v3608 = vadd.f32 0.0, %v3607
      %3609 = vmatprep.mubr.bf16.mxu0 0
      %3610 = vmatmul.mubr.bf16.gmra.mrb[0].mxu0 %v3366
      %v3611 = vpop.f32.mrb[0].mxu0
      %v3612 = vadd.f32 0.0, %v3611
      %v3613 = vpop.f32.mrb[0].mxu0
      %v3614 = vadd.f32 0.0, %v3613
      %v3615 = vpop.f32.mrb[0].mxu0
      %v3616 = vadd.f32 0.0, %v3615
      %v3617 = vpop.f32.mrb[0].mxu0
      %v3618 = vadd.f32 0.0, %v3617
      %3619 = vmatprep.mubr.bf16.mxu0 0
      %3620 = vmatmul.mubr.bf16.gmra.mrb[0].mxu0 %v3367
      %v3621 = vpop.f32.mrb[0].mxu0
      %v3622 = vadd.f32 0.0, %v3621
      %v3623 = vpop.f32.mrb[0].mxu0
      %v3624 = vadd.f32 0.0, %v3623
      %v3625 = vpop.f32.mrb[0].mxu0
      %v3626 = vadd.f32 0.0, %v3625
      %v3627 = vpop.f32.mrb[0].mxu0
      %v3628 = vadd.f32 0.0, %v3627
      %3629 = vmatprep.mubr.bf16.mxu0 0
      %3630 = vmatmul.mubr.bf16.gmra.mrb[0].mxu0 %v3368
      %v3631 = vpop.f32.mrb[0].mxu0
      %v3632 = vpop.f32.mrb[0].mxu0
      %v3633 = vadd.f32 0.0, %v3632
      %v3634 = vpop.f32.mrb[0].mxu0
      %v3635 = vadd.f32 0.0, %v3634
      %v3636 = vpop.f32.mrb[0].mxu0
      %v3637 = vadd.f32 0.0, %v3636
      %3638 = vmatprep.mubr.bf16.mxu0 0
      %3639 = vmatmul.mubr.bf16.gmra.mrb[0].mxu0 %v3369
      %v3640 = vpop.f32.mrb[0].mxu0
      %v3641 = vadd.f32 0.0, %v3640
      %v3642 = vpop.f32.mrb[0].mxu0
      %v3643 = vadd.f32 0.0, %v3642
      %v3644 = vpop.f32.mrb[0].mxu0
      %v3645 = vadd.f32 0.0, %v3644
      %v3646 = vpop.f32.mrb[0].mxu0
      %v3647 = vadd.f32 0.0, %v3646
      %3648 = vmatprep.mubr.bf16.mxu0 0
      %3649 = vmatmul.mubr.bf16.gmra.mrb[0].mxu0 %v3370
      %v3650 = vpop.f32.mrb[0].mxu0
      %v3651 = vadd.f32 0.0, %v3650
      %v3652 = vpop.f32.mrb[0].mxu0
      %v3653 = vadd.f32 0.0, %v3652
      %v3654 = vpop.f32.mrb[0].mxu0
      %v3655 = vpop.f32.mrb[0].mxu0
      %v3656 = vadd.f32 0.0, %v3655
      %3657 = vmatprep.mubr.bf16.mxu0 0
      %3658 = vmatmul.mubr.bf16.gmra.mrb[0].mxu0 %v3371
      %v3659 = vpop.f32.mrb[0].mxu0
      %v3660 = vadd.f32 0.0, %v3659
      %v3661 = vpop.f32.mrb[0].mxu0
      %v3662 = vadd.f32 0.0, %v3661
      %v3663 = vpop.f32.mrb[0].mxu0
      %v3664 = vadd.f32 0.0, %v3663
      %v3665 = vpop.f32.mrb[0].mxu0
      %v3666 = vadd.f32 0.0, %v3665
      %3667 = vmatprep.mubr.bf16.mxu0 0
      %3668 = vmatmul.mubr.bf16.gmra.mrb[0].mxu0 %v3372
      %v3669 = vpop.f32.mrb[0].mxu0
      %v3670 = vadd.f32 0.0, %v3669
      %v3671 = vpop.f32.mrb[0].mxu0
      %v3672 = vadd.f32 0.0, %v3671
      %v3673 = vpop.f32.mrb[0].mxu0
      %v3674 = vadd.f32 0.0, %v3673
      %v3675 = vpop.f32.mrb[0].mxu0
      %v3676 = vadd.f32 0.0, %v3675
      %3677 = vmatprep.mubr.bf16.mxu0 0
      %3678 = vmatmul.mubr.bf16.gmra.mrb[0].mxu0 %v3373
      %v3679 = vpop.f32.mrb[0].mxu0
      %v3680 = vpop.f32.mrb[0].mxu0
      %v3681 = vadd.f32 0.0, %v3680
      %v3682 = vpop.f32.mrb[0].mxu0
      %v3683 = vadd.f32 0.0, %v3682
      %v3684 = vpop.f32.mrb[0].mxu0
      %v3685 = vadd.f32 0.0, %v3684
      %3686 = vmatprep.mubr.bf16.mxu0 0
      %3687 = vmatmul.mubr.bf16.gmra.mrb[0].mxu0 %v3374
      %v3688 = vpop.f32.mrb[0].mxu0
      %v3689 = vadd.f32 0.0, %v3688
      %v3690 = vpop.f32.mrb[0].mxu0
      %v3691 = vadd.f32 0.0, %v3690
      %v3692 = vpop.f32.mrb[0].mxu0
      %v3693 = vadd.f32 0.0, %v3692
      %v3694 = vpop.f32.mrb[0].mxu0
      %v3695 = vadd.f32 0.0, %v3694
      %3696 = vmatprep.mubr.bf16.mxu0 0
      %3697 = vmatmul.mubr.bf16.gmra.mrb[0].mxu0 %v3375
      %v3698 = vpop.f32.mrb[0].mxu0
      %v3699 = vadd.f32 0.0, %v3698
      %v3700 = vpop.f32.mrb[0].mxu0
      %v3701 = vadd.f32 0.0, %v3700
      %v3702 = vpop.f32.mrb[0].mxu0
      %v3703 = vpop.f32.mrb[0].mxu0
      %v3704 = vadd.f32 0.0, %v3703
      %3705 = vmatprep.mubr.bf16.mxu0 0
      %3706 = vmatmul.mubr.bf16.gmra.mrb[0].mxu0 %v3376
      %v3707 = vpop.f32.mrb[0].mxu0
      %v3708 = vadd.f32 0.0, %v3707
      %v3709 = vpop.f32.mrb[0].mxu0
      %v3710 = vadd.f32 0.0, %v3709
      %v3711 = vpop.f32.mrb[0].mxu0
      %v3712 = vadd.f32 0.0, %v3711
      %v3713 = vpop.f32.mrb[0].mxu0
      %v3714 = vadd.f32 0.0, %v3713
      %3715 = vmatprep.mubr.bf16.mxu0 0
      %3716 = vmatmul.mubr.bf16.gmra.mrb[0].mxu0 %v3377
      %v3717 = vpop.f32.mrb[0].mxu0
      %v3718 = vadd.f32 0.0, %v3717
      %v3719 = vpop.f32.mrb[0].mxu0
      %v3720 = vadd.f32 0.0, %v3719
      %v3721 = vpop.f32.mrb[0].mxu0
      %v3722 = vadd.f32 0.0, %v3721
      %v3723 = vpop.f32.mrb[0].mxu0
      %v3724 = vadd.f32 0.0, %v3723
      %3725 = vmatprep.mubr.bf16.mxu0 0
      %3726 = vmatmul.mubr.bf16.gmra.mrb[0].mxu0 %v3378
      %v3727 = vpop.f32.mrb[0].mxu0
      %v3728 = vpop.f32.mrb[0].mxu0
      %v3729 = vadd.f32 0.0, %v3728
      %v3730 = vpop.f32.mrb[0].mxu0
      %v3731 = vadd.f32 0.0, %v3730
      %v3732 = vpop.f32.mrb[0].mxu0
      %v3733 = vadd.f32 0.0, %v3732
      %3734 = vmatprep.mubr.bf16.mxu0 0
      %3735 = vmatmul.mubr.bf16.gmra.mrb[0].mxu0 %v3379
      %v3736 = vpop.f32.mrb[0].mxu0
      %v3737 = vadd.f32 0.0, %v3736
      %v3738 = vpop.f32.mrb[0].mxu0
      %v3739 = vadd.f32 0.0, %v3738
      %v3740 = vpop.f32.mrb[0].mxu0
      %v3741 = vadd.f32 0.0, %v3740
      %v3742 = vpop.f32.mrb[0].mxu0
      %v3743 = vadd.f32 0.0, %v3742
      %3744 = vmatprep.mubr.bf16.mxu0 0
      %3745 = vmatmul.mubr.bf16.gmra.mrb[0].mxu0 %v3380
      %v3746 = vpop.f32.mrb[0].mxu0
      %v3747 = vadd.f32 0.0, %v3746
      %v3748 = vpop.f32.mrb[0].mxu0
      %v3749 = vadd.f32 0.0, %v3748
      %v3750 = vpop.f32.mrb[0].mxu0
      %v3751 = vpop.f32.mrb[0].mxu0
      %v3752 = vadd.f32 0.0, %v3751
      %3753 = vdwg.mxu0
      %3754 = vmatprep.subr.bf16.mxu0 0
      %3755 = vmatpush1.bf16.msra.mxu0 %v3483
      %3756 = vmatprep.subr.bf16.mxu0 0
      %3757 = vmatpush1.bf16.msra.mxu0 %v3486
      %3758 = vmatprep.subr.bf16.mxu0 0
      %3759 = vmatpush1.bf16.msra.mxu0 %v3489
      %3760 = vmatprep.subr.bf16.mxu0 0
      %3761 = vmatpush1.bf16.msra.mxu0 %v3492
      %3762 = vmatprep.subr.bf16.mxu0 0
      %3763 = vmatpush1.bf16.msra.mxu0 %v3495
      %3764 = vmatprep.subr.bf16.mxu0 0
      %3765 = vmatpush1.bf16.msra.mxu0 %v3498
      %3766 = vmatprep.subr.bf16.mxu0 0
      %3767 = vmatpush1.bf16.msra.mxu0 %v3501
      %3768 = vmatprep.subr.bf16.mxu0 0
      %3769 = vmatpush1.bf16.msra.mxu0 %v3504
      %3770 = vmatprep.subr.bf16.mxu0 0
      %3771 = vmatpush1.bf16.msra.mxu0 0
      %3772 = vmatprep.subr.bf16.mxu0 0
      %3773 = vmatpush1.bf16.msra.mxu0 0
      %3774 = vmatprep.subr.bf16.mxu0 0
      %3775 = vmatpush1.bf16.msra.mxu0 0
      %3776 = vmatprep.subr.bf16.mxu0 0
      %3777 = vmatpush1.bf16.msra.mxu0 0
      %3778 = vmatprep.subr.bf16.mxu0 0
      %3779 = vmatpush1.bf16.msra.mxu0 0
      %3780 = vmatprep.subr.bf16.mxu0 0
      %3781 = vmatpush1.bf16.msra.mxu0 0
      %3782 = vmatprep.subr.bf16.mxu0 0
      %3783 = vmatpush1.bf16.msra.mxu0 0
      %3784 = vmatprep.subr.bf16.mxu0 0
      %3785 = vmatpush1.bf16.msra.mxu0 0
      %3786 = vmatprep.mubr.bf16.mxu0 0
      %3787 = vmatmul.mubr.bf16.gmra.mrb[0].mxu0 %v3361
      %v3788 = vpop.f32.mrb[0].mxu0
      %v3789 = vadd.f32 0.0, %v3788
      %v3790 = vpop.f32.mrb[0].mxu0
      %v3791 = vpop.f32.mrb[0].mxu0
      %v3792 = vadd.f32 0.0, %v3791
      %v3793 = vpop.f32.mrb[0].mxu0
      %3794 = vmatprep.mubr.bf16.mxu0 0
      %3795 = vmatmul.mubr.bf16.gmra.mrb[0].mxu0 %v3362
      %v3796 = vpop.f32.mrb[0].mxu0
      %v3797 = vadd.f32 0.0, %v3796
      %v3798 = vpop.f32.mrb[0].mxu0
      %v3799 = vpop.f32.mrb[0].mxu0
      %v3800 = vadd.f32 0.0, %v3799
      %v3801 = vpop.f32.mrb[0].mxu0
      %3802 = vmatprep.mubr.bf16.mxu0 0
      %3803 = vmatmul.mubr.bf16.gmra.mrb[0].mxu0 %v3363
      %v3804 = vpop.f32.mrb[0].mxu0
      %v3805 = vadd.f32 0.0, %v3804
      %v3806 = vpop.f32.mrb[0].mxu0
      %v3807 = vpop.f32.mrb[0].mxu0
      %v3808 = vadd.f32 0.0, %v3807
      %v3809 = vpop.f32.mrb[0].mxu0
      %3810 = vmatprep.mubr.bf16.mxu0 0
      %3811 = vmatmul.mubr.bf16.gmra.mrb[0].mxu0 %v3364
      %v3812 = vpop.f32.mrb[0].mxu0
      %v3813 = vadd.f32 0.0, %v3812
      %v3814 = vpop.f32.mrb[0].mxu0
      %v3815 = vpop.f32.mrb[0].mxu0
      %v3816 = vadd.f32 0.0, %v3815
      %v3817 = vpop.f32.mrb[0].mxu0
      %3818 = vmatprep.mubr.bf16.mxu0 0
      %3819 = vmatmul.mubr.bf16.gmra.mrb[0].mxu0 %v3365
      %v3820 = vpop.f32.mrb[0].mxu0
      %v3821 = vadd.f32 0.0, %v3820
      %v3822 = vpop.f32.mrb[0].mxu0
      %v3823 = vpop.f32.mrb[0].mxu0
      %v3824 = vadd.f32 0.0, %v3823
      %v3825 = vpop.f32.mrb[0].mxu0
      %3826 = vmatprep.mubr.bf16.mxu0 0
      %3827 = vmatmul.mubr.bf16.gmra.mrb[0].mxu0 %v3366
      %v3828 = vpop.f32.mrb[0].mxu0
      %v3829 = vadd.f32 0.0, %v3828
      %v3830 = vpop.f32.mrb[0].mxu0
      %v3831 = vpop.f32.mrb[0].mxu0
      %v3832 = vadd.f32 0.0, %v3831
      %v3833 = vpop.f32.mrb[0].mxu0
      %3834 = vmatprep.mubr.bf16.mxu0 0
      %3835 = vmatmul.mubr.bf16.gmra.mrb[0].mxu0 %v3367
      %v3836 = vpop.f32.mrb[0].mxu0
      %v3837 = vadd.f32 0.0, %v3836
      %v3838 = vpop.f32.mrb[0].mxu0
      %v3839 = vpop.f32.mrb[0].mxu0
      %v3840 = vadd.f32 0.0, %v3839
      %v3841 = vpop.f32.mrb[0].mxu0
      %3842 = vmatprep.mubr.bf16.mxu0 0
      %3843 = vmatmul.mubr.bf16.gmra.mrb[0].mxu0 %v3368
      %v3844 = vpop.f32.mrb[0].mxu0
      %v3845 = vadd.f32 0.0, %v3844
      %v3846 = vpop.f32.mrb[0].mxu0
      %v3847 = vpop.f32.mrb[0].mxu0
      %v3848 = vadd.f32 0.0, %v3847
      %v3849 = vpop.f32.mrb[0].mxu0
      %3850 = vmatprep.mubr.bf16.mxu0 0
      %3851 = vmatmul.mubr.bf16.gmra.mrb[0].mxu0 %v3369
      %v3852 = vpop.f32.mrb[0].mxu0
      %v3853 = vadd.f32 0.0, %v3852
      %v3854 = vpop.f32.mrb[0].mxu0
      %v3855 = vpop.f32.mrb[0].mxu0
      %v3856 = vadd.f32 0.0, %v3855
      %v3857 = vpop.f32.mrb[0].mxu0
      %3858 = vmatprep.mubr.bf16.mxu0 0
      %3859 = vmatmul.mubr.bf16.gmra.mrb[0].mxu0 %v3370
      %v3860 = vpop.f32.mrb[0].mxu0
      %v3861 = vadd.f32 0.0, %v3860
      %v3862 = vpop.f32.mrb[0].mxu0
      %v3863 = vpop.f32.mrb[0].mxu0
      %v3864 = vadd.f32 0.0, %v3863
      %v3865 = vpop.f32.mrb[0].mxu0
      %3866 = vmatprep.mubr.bf16.mxu0 0
      %3867 = vmatmul.mubr.bf16.gmra.mrb[0].mxu0 %v3371
      %v3868 = vpop.f32.mrb[0].mxu0
      %v3869 = vadd.f32 0.0, %v3868
      %v3870 = vpop.f32.mrb[0].mxu0
      %v3871 = vpop.f32.mrb[0].mxu0
      %v3872 = vadd.f32 0.0, %v3871
      %v3873 = vpop.f32.mrb[0].mxu0
      %3874 = vmatprep.mubr.bf16.mxu0 0
      %3875 = vmatmul.mubr.bf16.gmra.mrb[0].mxu0 %v3372
      %v3876 = vpop.f32.mrb[0].mxu0
      %v3877 = vadd.f32 0.0, %v3876
      %v3878 = vpop.f32.mrb[0].mxu0
      %v3879 = vpop.f32.mrb[0].mxu0
      %v3880 = vadd.f32 0.0, %v3879
      %v3881 = vpop.f32.mrb[0].mxu0
      %3882 = vmatprep.mubr.bf16.mxu0 0
      %3883 = vmatmul.mubr.bf16.gmra.mrb[0].mxu0 %v3373
      %v3884 = vpop.f32.mrb[0].mxu0
      %v3885 = vadd.f32 0.0, %v3884
      %v3886 = vpop.f32.mrb[0].mxu0
      %v3887 = vpop.f32.mrb[0].mxu0
      %v3888 = vadd.f32 0.0, %v3887
      %v3889 = vpop.f32.mrb[0].mxu0
      %3890 = vmatprep.mubr.bf16.mxu0 0
      %3891 = vmatmul.mubr.bf16.gmra.mrb[0].mxu0 %v3374
      %v3892 = vpop.f32.mrb[0].mxu0
      %v3893 = vadd.f32 0.0, %v3892
      %v3894 = vpop.f32.mrb[0].mxu0
      %v3895 = vpop.f32.mrb[0].mxu0
      %v3896 = vadd.f32 0.0, %v3895
      %v3897 = vpop.f32.mrb[0].mxu0
      %3898 = vmatprep.mubr.bf16.mxu0 0
      %3899 = vmatmul.mubr.bf16.gmra.mrb[0].mxu0 %v3375
      %v3900 = vpop.f32.mrb[0].mxu0
      %v3901 = vadd.f32 0.0, %v3900
      %v3902 = vpop.f32.mrb[0].mxu0
      %v3903 = vpop.f32.mrb[0].mxu0
      %v3904 = vadd.f32 0.0, %v3903
      %v3905 = vpop.f32.mrb[0].mxu0
      %3906 = vmatprep.mubr.bf16.mxu0 0
      %3907 = vmatmul.mubr.bf16.gmra.mrb[0].mxu0 %v3376
      %v3908 = vpop.f32.mrb[0].mxu0
      %v3909 = vadd.f32 0.0, %v3908
      %v3910 = vpop.f32.mrb[0].mxu0
      %v3911 = vpop.f32.mrb[0].mxu0
      %v3912 = vadd.f32 0.0, %v3911
      %v3913 = vpop.f32.mrb[0].mxu0
      %3914 = vmatprep.mubr.bf16.mxu0 0
      %3915 = vmatmul.mubr.bf16.gmra.mrb[0].mxu0 %v3377
      %v3916 = vpop.f32.mrb[0].mxu0
      %v3917 = vadd.f32 0.0, %v3916
      %v3918 = vpop.f32.mrb[0].mxu0
      %v3919 = vpop.f32.mrb[0].mxu0
      %v3920 = vadd.f32 0.0, %v3919
      %v3921 = vpop.f32.mrb[0].mxu0
      %3922 = vmatprep.mubr.bf16.mxu0 0
      %3923 = vmatmul.mubr.bf16.gmra.mrb[0].mxu0 %v3378
      %v3924 = vpop.f32.mrb[0].mxu0
      %v3925 = vadd.f32 0.0, %v3924
      %v3926 = vpop.f32.mrb[0].mxu0
      %v3927 = vpop.f32.mrb[0].mxu0
      %v3928 = vadd.f32 0.0, %v3927
      %v3929 = vpop.f32.mrb[0].mxu0
      %3930 = vmatprep.mubr.bf16.mxu0 0
      %3931 = vmatmul.mubr.bf16.gmra.mrb[0].mxu0 %v3379
      %v3932 = vpop.f32.mrb[0].mxu0
      %v3933 = vadd.f32 0.0, %v3932
      %v3934 = vpop.f32.mrb[0].mxu0
      %v3935 = vpop.f32.mrb[0].mxu0
      %v3936 = vadd.f32 0.0, %v3935
      %v3937 = vpop.f32.mrb[0].mxu0
      %3938 = vmatprep.mubr.bf16.mxu0 0
      %3939 = vmatmul.mubr.bf16.gmra.mrb[0].mxu0 %v3380
      %v3940 = vpop.f32.mrb[0].mxu0
      %v3941 = vadd.f32 0.0, %v3940
      %v3942 = vpop.f32.mrb[0].mxu0
      %v3943 = vpop.f32.mrb[0].mxu0
      %v3944 = vadd.f32 0.0, %v3943
      %v3945 = vpop.f32.mrb[0].mxu0
      %3946 = vdwg.mxu0
      %v3947 = vadd.f32 %v3172, %v3564
      %v3948 = vadd.f32 %v3173, %v3568
      %v3949 = vadd.f32 %v3174, %v3574
      %v3950 = vadd.f32 %v3175, %v3578
      %v3951 = vadd.f32 %v3176, %v3587
      %v3952 = vadd.f32 %v3177, %v3593
      %v3953 = vadd.f32 %v3178, %v3597
      %v3954 = vadd.f32 %v3179, %v3603
      %v3955 = vadd.f32 %v3180, %v3612
      %v3956 = vadd.f32 %v3181, %v3616
      %v3957 = vadd.f32 %v3182, %v3622
      %v3958 = vadd.f32 %v3183, %v3626
      %v3959 = vadd.f32 %v3184, %v3635
      %v3960 = vadd.f32 %v3185, %v3641
      %v3961 = vadd.f32 %v3186, %v3645
      %v3962 = vadd.f32 %v3187, %v3651
      %v3963 = vadd.f32 %v3188, %v3660
      %v3964 = vadd.f32 %v3189, %v3664
      %v3965 = vadd.f32 %v3190, %v3670
      %v3966 = vadd.f32 %v3191, %v3674
      %v3967 = vadd.f32 %v3192, %v3683
      %v3968 = vadd.f32 %v3193, %v3689
      %v3969 = vadd.f32 %v3194, %v3693
      %v3970 = vadd.f32 %v3195, %v3699
      %v3971 = vadd.f32 %v3196, %v3708
      %v3972 = vadd.f32 %v3197, %v3712
      %v3973 = vadd.f32 %v3198, %v3718
      %v3974 = vadd.f32 %v3199, %v3722
      %v3975 = vadd.f32 %v3200, %v3731
      %v3976 = vadd.f32 %v3201, %v3737
      %v3977 = vadd.f32 %v3202, %v3741
      %v3978 = vadd.f32 %v3203, %v3747
      %v4019 = vrot.slane %v3566, 1
      %v4020 = vrot.slane %v3570, 1
      %v4021 = vsel %vm2890, %v4019, %v4020
      %v4022 = vrot.slane %v3576, 1
      %v4023 = vsel %vm2890, %v4020, %v4022
      %v4024 = vrot.slane %v3580, 1
      %v4025 = vsel %vm2890, %v4022, %v4024
      %v4026 = vrot.slane %v3585, 1
      %v4027 = vsel %vm2890, %v4024, %v4026
      %v4028 = vrot.slane %v3589, 1
      %v4029 = vrot.slane %v3595, 1
      %v4030 = vsel %vm2890, %v4028, %v4029
      %v4031 = vrot.slane %v3599, 1
      %v4032 = vsel %vm2890, %v4029, %v4031
      %v4033 = vrot.slane %v3605, 1
      %v4034 = vsel %vm2890, %v4031, %v4033
      %v4035 = vrot.slane %v3608, 1
      %v4036 = vsel %vm2890, %v4033, %v4035
      %v4037 = vrot.slane %v3614, 1
      %v4038 = vrot.slane %v3618, 1
      %v4039 = vsel %vm2890, %v4037, %v4038
      %v4040 = vrot.slane %v3624, 1
      %v4041 = vsel %vm2890, %v4038, %v4040
      %v4042 = vrot.slane %v3628, 1
      %v4043 = vsel %vm2890, %v4040, %v4042
      %v4044 = vrot.slane %v3633, 1
      %v4045 = vsel %vm2890, %v4042, %v4044
      %v4046 = vrot.slane %v3637, 1
      %v4047 = vrot.slane %v3643, 1
      %v4048 = vsel %vm2890, %v4046, %v4047
      %v4049 = vrot.slane %v3647, 1
      %v4050 = vsel %vm2890, %v4047, %v4049
      %v4051 = vrot.slane %v3653, 1
      %v4052 = vsel %vm2890, %v4049, %v4051
      %v4053 = vrot.slane %v3656, 1
      %v4054 = vsel %vm2890, %v4051, %v4053
      %v4055 = vrot.slane %v3662, 1
      %v4056 = vrot.slane %v3666, 1
      %v4057 = vsel %vm2890, %v4055, %v4056
      %v4058 = vrot.slane %v3672, 1
      %v4059 = vsel %vm2890, %v4056, %v4058
      %v4060 = vrot.slane %v3676, 1
      %v4061 = vsel %vm2890, %v4058, %v4060
      %v4062 = vrot.slane %v3681, 1
      %v4063 = vsel %vm2890, %v4060, %v4062
      %v4064 = vrot.slane %v3685, 1
      %v4065 = vrot.slane %v3691, 1
      %v4066 = vsel %vm2890, %v4064, %v4065
      %v4067 = vrot.slane %v3695, 1
      %v4068 = vsel %vm2890, %v4065, %v4067
      %v4069 = vrot.slane %v3701, 1
      %v4070 = vsel %vm2890, %v4067, %v4069
      %v4071 = vrot.slane %v3704, 1
      %v4072 = vsel %vm2890, %v4069, %v4071
      %v4073 = vrot.slane %v3710, 1
      %v4074 = vrot.slane %v3714, 1
      %v4075 = vsel %vm2890, %v4073, %v4074
      %v4076 = vrot.slane %v3720, 1
      %v4077 = vsel %vm2890, %v4074, %v4076
      %v4078 = vrot.slane %v3724, 1
      %v4079 = vsel %vm2890, %v4076, %v4078
      %v4080 = vrot.slane %v3729, 1
      %v4081 = vsel %vm2890, %v4078, %v4080
      %v4082 = vrot.slane %v3733, 1
      %v4083 = vrot.slane %v3739, 1
      %v4084 = vsel %vm2890, %v4082, %v4083
      %v4085 = vrot.slane %v3743, 1
      %v4086 = vsel %vm2890, %v4083, %v4085
      %v4087 = vrot.slane %v3749, 1
      %v4088 = vsel %vm2890, %v4085, %v4087
      %v4089 = vrot.slane %v3752, 1
      %v4090 = vsel %vm2890, %v4087, %v4089
      %v4123 = vadd.f32 %v3947, %v4021
      %v4124 = vadd.f32 %v3948, %v4023
      %v4125 = vadd.f32 %v3949, %v4025
      %v4126 = vadd.f32 %v3950, %v4027
      %v4127 = vadd.f32 %v3951, %v4030
      %v4128 = vadd.f32 %v3952, %v4032
      %v4129 = vadd.f32 %v3953, %v4034
      %v4130 = vadd.f32 %v3954, %v4036
      %v4131 = vadd.f32 %v3955, %v4039
      %v4132 = vadd.f32 %v3956, %v4041
      %v4133 = vadd.f32 %v3957, %v4043
      %v4134 = vadd.f32 %v3958, %v4045
      %v4135 = vadd.f32 %v3959, %v4048
      %v4136 = vadd.f32 %v3960, %v4050
      %v4137 = vadd.f32 %v3961, %v4052
      %v4138 = vadd.f32 %v3962, %v4054
      %v4139 = vadd.f32 %v3963, %v4057
      %v4140 = vadd.f32 %v3964, %v4059
      %v4141 = vadd.f32 %v3965, %v4061
      %v4142 = vadd.f32 %v3966, %v4063
      %v4143 = vadd.f32 %v3967, %v4066
      %v4144 = vadd.f32 %v3968, %v4068
      %v4145 = vadd.f32 %v3969, %v4070
      %v4146 = vadd.f32 %v3970, %v4072
      %v4147 = vadd.f32 %v3971, %v4075
      %v4148 = vadd.f32 %v3972, %v4077
      %v4149 = vadd.f32 %v3973, %v4079
      %v4150 = vadd.f32 %v3974, %v4081
      %v4151 = vadd.f32 %v3975, %v4084
      %v4152 = vadd.f32 %v3976, %v4086
      %v4153 = vadd.f32 %v3977, %v4088
      %v4154 = vadd.f32 %v3978, %v4090
      %v4195 = vrot.slane %v3789, 2
      %v4196 = vrot.slane %v3792, 2
      %v4197 = vsel %vm3067, %v4195, %v4196
      %v4198 = vrot.slane %v3797, 2
      %v4199 = vsel %vm3067, %v4196, %v4198
      %v4200 = vrot.slane %v3800, 2
      %v4201 = vsel %vm3067, %v4198, %v4200
      %v4202 = vrot.slane %v3805, 2
      %v4203 = vsel %vm3067, %v4200, %v4202
      %v4204 = vrot.slane %v3808, 2
      %v4205 = vrot.slane %v3813, 2
      %v4206 = vsel %vm3067, %v4204, %v4205
      %v4207 = vrot.slane %v3816, 2
      %v4208 = vsel %vm3067, %v4205, %v4207
      %v4209 = vrot.slane %v3821, 2
      %v4210 = vsel %vm3067, %v4207, %v4209
      %v4211 = vrot.slane %v3824, 2
      %v4212 = vsel %vm3067, %v4209, %v4211
      %v4213 = vrot.slane %v3829, 2
      %v4214 = vrot.slane %v3832, 2
      %v4215 = vsel %vm3067, %v4213, %v4214
      %v4216 = vrot.slane %v3837, 2
      %v4217 = vsel %vm3067, %v4214, %v4216
      %v4218 = vrot.slane %v3840, 2
      %v4219 = vsel %vm3067, %v4216, %v4218
      %v4220 = vrot.slane %v3845, 2
      %v4221 = vsel %vm3067, %v4218, %v4220
      %v4222 = vrot.slane %v3848, 2
      %v4223 = vrot.slane %v3853, 2
      %v4224 = vsel %vm3067, %v4222, %v4223
      %v4225 = vrot.slane %v3856, 2
      %v4226 = vsel %vm3067, %v4223, %v4225
      %v4227 = vrot.slane %v3861, 2
      %v4228 = vsel %vm3067, %v4225, %v4227
      %v4229 = vrot.slane %v3864, 2
      %v4230 = vsel %vm3067, %v4227, %v4229
      %v4231 = vrot.slane %v3869, 2
      %v4232 = vrot.slane %v3872, 2
      %v4233 = vsel %vm3067, %v4231, %v4232
      %v4234 = vrot.slane %v3877, 2
      %v4235 = vsel %vm3067, %v4232, %v4234
      %v4236 = vrot.slane %v3880, 2
      %v4237 = vsel %vm3067, %v4234, %v4236
      %v4238 = vrot.slane %v3885, 2
      %v4239 = vsel %vm3067, %v4236, %v4238
      %v4240 = vrot.slane %v3888, 2
      %v4241 = vrot.slane %v3893, 2
      %v4242 = vsel %vm3067, %v4240, %v4241
      %v4243 = vrot.slane %v3896, 2
      %v4244 = vsel %vm3067, %v4241, %v4243
      %v4245 = vrot.slane %v3901, 2
      %v4246 = vsel %vm3067, %v4243, %v4245
      %v4247 = vrot.slane %v3904, 2
      %v4248 = vsel %vm3067, %v4245, %v4247
      %v4249 = vrot.slane %v3909, 2
      %v4250 = vrot.slane %v3912, 2
      %v4251 = vsel %vm3067, %v4249, %v4250
      %v4252 = vrot.slane %v3917, 2
      %v4253 = vsel %vm3067, %v4250, %v4252
      %v4254 = vrot.slane %v3920, 2
      %v4255 = vsel %vm3067, %v4252, %v4254
      %v4256 = vrot.slane %v3925, 2
      %v4257 = vsel %vm3067, %v4254, %v4256
      %v4258 = vrot.slane %v3928, 2
      %v4259 = vrot.slane %v3933, 2
      %v4260 = vsel %vm3067, %v4258, %v4259
      %v4261 = vrot.slane %v3936, 2
      %v4262 = vsel %vm3067, %v4259, %v4261
      %v4263 = vrot.slane %v3941, 2
      %v4264 = vsel %vm3067, %v4261, %v4263
      %v4265 = vrot.slane %v3944, 2
      %v4266 = vsel %vm3067, %v4263, %v4265
      %v4299 = vadd.f32 %v4123, %v4197
      %v4300 = vadd.f32 %v4124, %v4199
      %v4301 = vadd.f32 %v4125, %v4201
      %v4302 = vadd.f32 %v4126, %v4203
      %v4303 = vadd.f32 %v4127, %v4206
      %v4304 = vadd.f32 %v4128, %v4208
      %v4305 = vadd.f32 %v4129, %v4210
      %v4306 = vadd.f32 %v4130, %v4212
      %v4307 = vadd.f32 %v4131, %v4215
      %v4308 = vadd.f32 %v4132, %v4217
      %v4309 = vadd.f32 %v4133, %v4219
      %v4310 = vadd.f32 %v4134, %v4221
      %v4311 = vadd.f32 %v4135, %v4224
      %v4312 = vadd.f32 %v4136, %v4226
      %v4313 = vadd.f32 %v4137, %v4228
      %v4314 = vadd.f32 %v4138, %v4230
      %v4315 = vadd.f32 %v4139, %v4233
      %v4316 = vadd.f32 %v4140, %v4235
      %v4317 = vadd.f32 %v4141, %v4237
      %v4318 = vadd.f32 %v4142, %v4239
      %v4319 = vadd.f32 %v4143, %v4242
      %v4320 = vadd.f32 %v4144, %v4244
      %v4321 = vadd.f32 %v4145, %v4246
      %v4322 = vadd.f32 %v4146, %v4248
      %v4323 = vadd.f32 %v4147, %v4251
      %v4324 = vadd.f32 %v4148, %v4253
      %v4325 = vadd.f32 %v4149, %v4255
      %v4326 = vadd.f32 %v4150, %v4257
      %v4327 = vadd.f32 %v4151, %v4260
      %v4328 = vadd.f32 %v4152, %v4262
      %v4329 = vadd.f32 %v4153, %v4264
      %v4330 = vadd.f32 %v4154, %v4266
      %s4331 = sadd.s32 %s2076, 2
      %s4332 = smul.u32 %s4331, 5
      %s4333 = smul.addr %s4332, 4
      %s4334 = scalar_lea.vmem [#allocation2], %s4333
      %v4335 = vld [vmem:[%s4334] sm:$0xf]
      %v4336 = vld [vmem:[%s4334 + $0x4] sm:$0xf]
      %v4337 = vld [vmem:[%s4334 + $0x8] sm:$0xf]
      %v4338 = vld [vmem:[%s4334 + $0xc] sm:$0xf]
      %v4339 = vld [vmem:[%s4334 + $0x10] sm:$0xf]
      %v4340 = vld [vmem:[%s4334 + $0x14] sm:$0xf]
      %v4341 = vld [vmem:[%s4334 + $0x18] sm:$0xf]
      %v4342 = vld [vmem:[%s4334 + $0x1c] sm:$0xf]
      %v4343 = vld [vmem:[%s4334 + $0x20] sm:$0xf]
      %v4344 = vld [vmem:[%s4334 + $0x24] sm:$0xf]
      %v4345 = vld [vmem:[%s4334 + $0x28] sm:$0xf]
      %v4346 = vld [vmem:[%s4334 + $0x2c] sm:$0xf]
      %v4347 = vld [vmem:[%s4334 + $0x30] sm:$0xf]
      %v4348 = vld [vmem:[%s4334 + $0x34] sm:$0xf]
      %v4349 = vld [vmem:[%s4334 + $0x38] sm:$0xf]
      %v4350 = vld [vmem:[%s4334 + $0x3c] sm:$0xf]
      %v4351 = vld [vmem:[%s4334 + $0x40] sm:$0xf]
      %v4352 = vld [vmem:[%s4334 + $0x44] sm:$0xf]
      %v4353 = vld [vmem:[%s4334 + $0x48] sm:$0xf]
      %v4354 = vld [vmem:[%s4334 + $0x4c] sm:$0xf]
      %v4355 = vld [vmem:[%s4334 + $0x50] sm:$0xf]
      %v4356 = vld [vmem:[%s4334 + $0x54] sm:$0xf]
      %v4357 = vld [vmem:[%s4334 + $0x58] sm:$0xf]
      %v4358 = vld [vmem:[%s4334 + $0x5c] sm:$0xf]
      %v4359 = vld [vmem:[%s4334 + $0x60] sm:$0xf]
      %v4360 = vld [vmem:[%s4334 + $0x64] sm:$0xf]
      %v4361 = vld [vmem:[%s4334 + $0x68] sm:$0xf]
      %v4362 = vld [vmem:[%s4334 + $0x6c] sm:$0xf]
      %v4363 = vld [vmem:[%s4334 + $0x70] sm:$0xf]
      %v4364 = vld [vmem:[%s4334 + $0x74] sm:$0xf]
      %v4365 = vld [vmem:[%s4334 + $0x78] sm:$0xf]
      %v4366 = vld [vmem:[%s4334 + $0x7c] sm:$0xf]
      %v4367 = vld [vmem:[%s4334 + $0x80] sm:$0xf]
      %v4368 = vld [vmem:[%s4334 + $0x84] sm:$0xf]
      %v4369 = vld [vmem:[%s4334 + $0x88] sm:$0xf]
      %v4370 = vld [vmem:[%s4334 + $0x8c] sm:$0xf]
      %v4371 = vld [vmem:[%s4334 + $0x90] sm:$0xf]
      %v4372 = vld [vmem:[%s4334 + $0x94] sm:$0xf]
      %v4373 = vld [vmem:[%s4334 + $0x98] sm:$0xf]
      %v4374 = vld [vmem:[%s4334 + $0x9c] sm:$0xf]
      %s4375 = scalar_lea.vmem %s1, 384
      %v4376 = vld [vmem:[%s4375] sm:$0xff]
      %v4377 = vld [vmem:[%s4375 + $0x8] sm:$0xf]
      %v4378 = vld [vmem:[%s4375 + $0xc] sm:$0xff]
      %v4379 = vld [vmem:[%s4375 + $0x14] sm:$0xf]
      %v4380 = vld [vmem:[%s4375 + $0x18] sm:$0xff]
      %v4381 = vld [vmem:[%s4375 + $0x20] sm:$0xf]
      %v4382 = vld [vmem:[%s4375 + $0x24] sm:$0xff]
      %v4383 = vld [vmem:[%s4375 + $0x2c] sm:$0xf]
      %v4384 = vld [vmem:[%s4375 + $0x30] sm:$0xff]
      %v4385 = vld [vmem:[%s4375 + $0x38] sm:$0xf]
      %v4386 = vld [vmem:[%s4375 + $0x3c] sm:$0xff]
      %v4387 = vld [vmem:[%s4375 + $0x44] sm:$0xf]
      %v4388 = vld [vmem:[%s4375 + $0x48] sm:$0xff]
      %v4389 = vld [vmem:[%s4375 + $0x50] sm:$0xf]
      %v4390 = vld [vmem:[%s4375 + $0x54] sm:$0xff]
      %v4391 = vld [vmem:[%s4375 + $0x5c] sm:$0xf]
      %v4392 = vld [vmem:[%s4375 + $0x60] sm:$0xff]
      %v4393 = vld [vmem:[%s4375 + $0x68] sm:$0xf]
      %v4394 = vld [vmem:[%s4375 + $0x6c] sm:$0xff]
      %v4395 = vld [vmem:[%s4375 + $0x74] sm:$0xf]
      %v4396 = vld [vmem:[%s4375 + $0x78] sm:$0xff]
      %v4397 = vld [vmem:[%s4375 + $0x80] sm:$0xf]
      %v4398 = vld [vmem:[%s4375 + $0x84] sm:$0xff]
      %v4399 = vld [vmem:[%s4375 + $0x8c] sm:$0xf]
      %v4400 = vld [vmem:[%s4375 + $0x90] sm:$0xff]
      %v4401 = vld [vmem:[%s4375 + $0x98] sm:$0xf]
      %v4402 = vld [vmem:[%s4375 + $0x9c] sm:$0xff]
      %v4403 = vld [vmem:[%s4375 + $0xa4] sm:$0xf]
      %v4404 = vld [vmem:[%s4375 + $0xa8] sm:$0xff]
      %v4405 = vld [vmem:[%s4375 + $0xb0] sm:$0xf]
      %v4406 = vld [vmem:[%s4375 + $0xb4] sm:$0xff]
      %v4407 = vld [vmem:[%s4375 + $0xbc] sm:$0xf]
      %v4448 = vunpack.c.l.b16 %v4335
      %v4449 = vunpack.c.l.b16 %v4336
      %v4450 = vunpack.c.l.b16 %v4337
      %v4451 = vunpack.c.l.b16 %v4338
      %v4452 = vunpack.c.l.b16 %v4339
      %v4453 = vunpack.c.l.b16 %v4340
      %v4454 = vunpack.c.l.b16 %v4341
      %v4455 = vunpack.c.l.b16 %v4342
      %v4456 = vunpack.c.l.b16 %v4343
      %v4457 = vunpack.c.l.b16 %v4344
      %v4458 = vunpack.c.l.b16 %v4345
      %v4459 = vunpack.c.l.b16 %v4346
      %v4460 = vunpack.c.l.b16 %v4347
      %v4461 = vunpack.c.l.b16 %v4348
      %v4462 = vunpack.c.l.b16 %v4349
      %v4463 = vunpack.c.l.b16 %v4350
      %v4464 = vunpack.c.l.b16 %v4351
      %v4465 = vunpack.c.l.b16 %v4352
      %v4466 = vunpack.c.l.b16 %v4353
      %v4467 = vunpack.c.l.b16 %v4354
      %v4468 = vunpack.c.l.b16 %v4355
      %v4469 = vunpack.c.l.b16 %v4356
      %v4470 = vunpack.c.l.b16 %v4357
      %v4471 = vunpack.c.l.b16 %v4358
      %v4472 = vunpack.c.l.b16 %v4359
      %v4473 = vunpack.c.l.b16 %v4360
      %v4474 = vunpack.c.l.b16 %v4361
      %v4475 = vunpack.c.l.b16 %v4362
      %v4476 = vunpack.c.l.b16 %v4363
      %v4477 = vunpack.c.l.b16 %v4364
      %v4478 = vunpack.c.l.b16 %v4365
      %v4479 = vunpack.c.l.b16 %v4366
      %v4480 = vunpack.c.l.b16 %v4367
      %v4481 = vunpack.c.l.b16 %v4368
      %v4482 = vunpack.c.l.b16 %v4369
      %v4483 = vunpack.c.l.b16 %v4370
      %v4484 = vunpack.c.l.b16 %v4371
      %v4485 = vunpack.c.l.b16 %v4372
      %v4486 = vunpack.c.l.b16 %v4373
      %v4487 = vunpack.c.l.b16 %v4374
      %v4488 = vpack.c.b16 %v4449, %v4448
      %v4489 = vpack.c.b16 %v4451, %v4450
      %v4490 = vpack.c.b16 %v4453, %v4452
      %v4491 = vpack.c.b16 %v4455, %v4454
      %v4492 = vpack.c.b16 %v4457, %v4456
      %v4493 = vpack.c.b16 %v4459, %v4458
      %v4494 = vpack.c.b16 %v4461, %v4460
      %v4495 = vpack.c.b16 %v4463, %v4462
      %v4496 = vpack.c.b16 %v4465, %v4464
      %v4497 = vpack.c.b16 %v4467, %v4466
      %v4498 = vpack.c.b16 %v4469, %v4468
      %v4499 = vpack.c.b16 %v4471, %v4470
      %v4500 = vpack.c.b16 %v4473, %v4472
      %v4501 = vpack.c.b16 %v4475, %v4474
      %v4502 = vpack.c.b16 %v4477, %v4476
      %v4503 = vpack.c.b16 %v4479, %v4478
      %v4504 = vpack.c.b16 %v4481, %v4480
      %v4505 = vpack.c.b16 %v4483, %v4482
      %v4506 = vpack.c.b16 %v4485, %v4484
      %v4507 = vpack.c.b16 %v4487, %v4486
      %v4560 = vunpack.c.l.b16 %v4376
      %v4561 = vunpack.c.h.b16 %v4376
      %v4562 = vunpack.c.l.b16 %v4377
      %v4563 = vunpack.c.l.b16 %v4378
      %v4564 = vunpack.c.h.b16 %v4378
      %v4565 = vunpack.c.l.b16 %v4379
      %v4566 = vunpack.c.l.b16 %v4380
      %v4567 = vunpack.c.h.b16 %v4380
      %v4568 = vunpack.c.l.b16 %v4381
      %v4569 = vunpack.c.l.b16 %v4382
      %v4570 = vunpack.c.h.b16 %v4382
      %v4571 = vunpack.c.l.b16 %v4383
      %v4572 = vunpack.c.l.b16 %v4384
      %v4573 = vunpack.c.h.b16 %v4384
      %v4574 = vunpack.c.l.b16 %v4385
      %v4575 = vunpack.c.l.b16 %v4386
      %v4576 = vunpack.c.h.b16 %v4386
      %v4577 = vunpack.c.l.b16 %v4387
      %v4578 = vunpack.c.l.b16 %v4388
      %v4579 = vunpack.c.h.b16 %v4388
      %v4580 = vunpack.c.l.b16 %v4389
      %v4581 = vunpack.c.l.b16 %v4390
      %v4582 = vunpack.c.h.b16 %v4390
      %v4583 = vunpack.c.l.b16 %v4391
      %v4584 = vunpack.c.l.b16 %v4392
      %v4585 = vunpack.c.h.b16 %v4392
      %v4586 = vunpack.c.l.b16 %v4393
      %v4587 = vunpack.c.l.b16 %v4394
      %v4588 = vunpack.c.h.b16 %v4394
      %v4589 = vunpack.c.l.b16 %v4395
      %v4590 = vunpack.c.l.b16 %v4396
      %v4591 = vunpack.c.h.b16 %v4396
      %v4592 = vunpack.c.l.b16 %v4397
      %v4593 = vunpack.c.l.b16 %v4398
      %v4594 = vunpack.c.h.b16 %v4398
      %v4595 = vunpack.c.l.b16 %v4399
      %v4596 = vunpack.c.l.b16 %v4400
      %v4597 = vunpack.c.h.b16 %v4400
      %v4598 = vunpack.c.l.b16 %v4401
      %v4599 = vunpack.c.l.b16 %v4402
      %v4600 = vunpack.c.h.b16 %v4402
      %v4601 = vunpack.c.l.b16 %v4403
      %v4602 = vunpack.c.l.b16 %v4404
      %v4603 = vunpack.c.h.b16 %v4404
      %v4604 = vunpack.c.l.b16 %v4405
      %v4605 = vunpack.c.l.b16 %v4406
      %v4606 = vunpack.c.h.b16 %v4406
      %v4607 = vunpack.c.l.b16 %v4407
      %v4608 = vpack.c.b16 %v4563, %v4560
      %v4609 = vpack.c.b16 %v4564, %v4561
      %v4610 = vpack.c.b16 %v4565, %v4562
      %v4611 = vpack.c.b16 %v4569, %v4566
      %v4612 = vpack.c.b16 %v4570, %v4567
      %v4613 = vpack.c.b16 %v4571, %v4568
      %v4614 = vpack.c.b16 %v4575, %v4572
      %v4615 = vpack.c.b16 %v4576, %v4573
      %v4616 = vpack.c.b16 %v4577, %v4574
      %v4617 = vpack.c.b16 %v4581, %v4578
      %v4618 = vpack.c.b16 %v4582, %v4579
      %v4619 = vpack.c.b16 %v4583, %v4580
      %v4620 = vpack.c.b16 %v4587, %v4584
      %v4621 = vpack.c.b16 %v4588, %v4585
      %v4622 = vpack.c.b16 %v4589, %v4586
      %v4623 = vpack.c.b16 %v4593, %v4590
      %v4624 = vpack.c.b16 %v4594, %v4591
      %v4625 = vpack.c.b16 %v4595, %v4592
      %v4626 = vpack.c.b16 %v4599, %v4596
      %v4627 = vpack.c.b16 %v4600, %v4597
      %v4628 = vpack.c.b16 %v4601, %v4598
      %v4629 = vpack.c.b16 %v4605, %v4602
      %v4630 = vpack.c.b16 %v4606, %v4603
      %v4631 = vpack.c.b16 %v4607, %v4604
      %4656 = vmatprep.subr.bf16.mxu0 %v4609
      %4657 = vmatpush1.bf16.msra.mxu0 %v4608
      %4658 = vmatprep.subr.bf16.mxu0 %v4612
      %4659 = vmatpush1.bf16.msra.mxu0 %v4611
      %4660 = vmatprep.subr.bf16.mxu0 %v4615
      %4661 = vmatpush1.bf16.msra.mxu0 %v4614
      %4662 = vmatprep.subr.bf16.mxu0 %v4618
      %4663 = vmatpush1.bf16.msra.mxu0 %v4617
      %4664 = vmatprep.subr.bf16.mxu0 %v4621
      %4665 = vmatpush1.bf16.msra.mxu0 %v4620
      %4666 = vmatprep.subr.bf16.mxu0 %v4624
      %4667 = vmatpush1.bf16.msra.mxu0 %v4623
      %4668 = vmatprep.subr.bf16.mxu0 %v4627
      %4669 = vmatpush1.bf16.msra.mxu0 %v4626
      %4670 = vmatprep.subr.bf16.mxu0 %v4630
      %4671 = vmatpush1.bf16.msra.mxu0 %v4629
      %4672 = vmatprep.subr.bf16.mxu0 0
      %4673 = vmatpush1.bf16.msra.mxu0 0
      %4674 = vmatprep.subr.bf16.mxu0 0
      %4675 = vmatpush1.bf16.msra.mxu0 0
      %4676 = vmatprep.subr.bf16.mxu0 0
      %4677 = vmatpush1.bf16.msra.mxu0 0
      %4678 = vmatprep.subr.bf16.mxu0 0
      %4679 = vmatpush1.bf16.msra.mxu0 0
      %4680 = vmatprep.subr.bf16.mxu0 0
      %4681 = vmatpush1.bf16.msra.mxu0 0
      %4682 = vmatprep.subr.bf16.mxu0 0
      %4683 = vmatpush1.bf16.msra.mxu0 0
      %4684 = vmatprep.subr.bf16.mxu0 0
      %4685 = vmatpush1.bf16.msra.mxu0 0
      %4686 = vmatprep.subr.bf16.mxu0 0
      %4687 = vmatpush1.bf16.msra.mxu0 0
      %4688 = vmatprep.mubr.bf16.mxu0 0
      %4689 = vmatmul.mubr.bf16.gmra.mrb[0].mxu0 %v4488
      %v4690 = vpop.f32.mrb[0].mxu0
      %v4691 = vadd.f32 0.0, %v4690
      %v4692 = vpop.f32.mrb[0].mxu0
      %v4693 = vadd.f32 0.0, %v4692
      %v4694 = vpop.f32.mrb[0].mxu0
      %v4695 = vadd.f32 0.0, %v4694
      %v4696 = vpop.f32.mrb[0].mxu0
      %v4697 = vadd.f32 0.0, %v4696
      %4698 = vmatprep.mubr.bf16.mxu0 0
      %4699 = vmatmul.mubr.bf16.gmra.mrb[0].mxu0 %v4489
      %v4700 = vpop.f32.mrb[0].mxu0
      %v4701 = vadd.f32 0.0, %v4700
      %v4702 = vpop.f32.mrb[0].mxu0
      %v4703 = vadd.f32 0.0, %v4702
      %v4704 = vpop.f32.mrb[0].mxu0
      %v4705 = vadd.f32 0.0, %v4704
      %v4706 = vpop.f32.mrb[0].mxu0
      %v4707 = vadd.f32 0.0, %v4706
      %4708 = vmatprep.mubr.bf16.mxu0 0
      %4709 = vmatmul.mubr.bf16.gmra.mrb[0].mxu0 %v4490
      %v4710 = vpop.f32.mrb[0].mxu0
      %v4711 = vpop.f32.mrb[0].mxu0
      %v4712 = vadd.f32 0.0, %v4711
      %v4713 = vpop.f32.mrb[0].mxu0
      %v4714 = vadd.f32 0.0, %v4713
      %v4715 = vpop.f32.mrb[0].mxu0
      %v4716 = vadd.f32 0.0, %v4715
      %4717 = vmatprep.mubr.bf16.mxu0 0
      %4718 = vmatmul.mubr.bf16.gmra.mrb[0].mxu0 %v4491
      %v4719 = vpop.f32.mrb[0].mxu0
      %v4720 = vadd.f32 0.0, %v4719
      %v4721 = vpop.f32.mrb[0].mxu0
      %v4722 = vadd.f32 0.0, %v4721
      %v4723 = vpop.f32.mrb[0].mxu0
      %v4724 = vadd.f32 0.0, %v4723
      %v4725 = vpop.f32.mrb[0].mxu0
      %v4726 = vadd.f32 0.0, %v4725
      %4727 = vmatprep.mubr.bf16.mxu0 0
      %4728 = vmatmul.mubr.bf16.gmra.mrb[0].mxu0 %v4492
      %v4729 = vpop.f32.mrb[0].mxu0
      %v4730 = vadd.f32 0.0, %v4729
      %v4731 = vpop.f32.mrb[0].mxu0
      %v4732 = vadd.f32 0.0, %v4731
      %v4733 = vpop.f32.mrb[0].mxu0
      %v4734 = vpop.f32.mrb[0].mxu0
      %v4735 = vadd.f32 0.0, %v4734
      %4736 = vmatprep.mubr.bf16.mxu0 0
      %4737 = vmatmul.mubr.bf16.gmra.mrb[0].mxu0 %v4493
      %v4738 = vpop.f32.mrb[0].mxu0
      %v4739 = vadd.f32 0.0, %v4738
      %v4740 = vpop.f32.mrb[0].mxu0
      %v4741 = vadd.f32 0.0, %v4740
      %v4742 = vpop.f32.mrb[0].mxu0
      %v4743 = vadd.f32 0.0, %v4742
      %v4744 = vpop.f32.mrb[0].mxu0
      %v4745 = vadd.f32 0.0, %v4744
      %4746 = vmatprep.mubr.bf16.mxu0 0
      %4747 = vmatmul.mubr.bf16.gmra.mrb[0].mxu0 %v4494
      %v4748 = vpop.f32.mrb[0].mxu0
      %v4749 = vadd.f32 0.0, %v4748
      %v4750 = vpop.f32.mrb[0].mxu0
      %v4751 = vadd.f32 0.0, %v4750
      %v4752 = vpop.f32.mrb[0].mxu0
      %v4753 = vadd.f32 0.0, %v4752
      %v4754 = vpop.f32.mrb[0].mxu0
      %v4755 = vadd.f32 0.0, %v4754
      %4756 = vmatprep.mubr.bf16.mxu0 0
      %4757 = vmatmul.mubr.bf16.gmra.mrb[0].mxu0 %v4495
      %v4758 = vpop.f32.mrb[0].mxu0
      %v4759 = vpop.f32.mrb[0].mxu0
      %v4760 = vadd.f32 0.0, %v4759
      %v4761 = vpop.f32.mrb[0].mxu0
      %v4762 = vadd.f32 0.0, %v4761
      %v4763 = vpop.f32.mrb[0].mxu0
      %v4764 = vadd.f32 0.0, %v4763
      %4765 = vmatprep.mubr.bf16.mxu0 0
      %4766 = vmatmul.mubr.bf16.gmra.mrb[0].mxu0 %v4496
      %v4767 = vpop.f32.mrb[0].mxu0
      %v4768 = vadd.f32 0.0, %v4767
      %v4769 = vpop.f32.mrb[0].mxu0
      %v4770 = vadd.f32 0.0, %v4769
      %v4771 = vpop.f32.mrb[0].mxu0
      %v4772 = vadd.f32 0.0, %v4771
      %v4773 = vpop.f32.mrb[0].mxu0
      %v4774 = vadd.f32 0.0, %v4773
      %4775 = vmatprep.mubr.bf16.mxu0 0
      %4776 = vmatmul.mubr.bf16.gmra.mrb[0].mxu0 %v4497
      %v4777 = vpop.f32.mrb[0].mxu0
      %v4778 = vadd.f32 0.0, %v4777
      %v4779 = vpop.f32.mrb[0].mxu0
      %v4780 = vadd.f32 0.0, %v4779
      %v4781 = vpop.f32.mrb[0].mxu0
      %v4782 = vpop.f32.mrb[0].mxu0
      %v4783 = vadd.f32 0.0, %v4782
      %4784 = vmatprep.mubr.bf16.mxu0 0
      %4785 = vmatmul.mubr.bf16.gmra.mrb[0].mxu0 %v4498
      %v4786 = vpop.f32.mrb[0].mxu0
      %v4787 = vadd.f32 0.0, %v4786
      %v4788 = vpop.f32.mrb[0].mxu0
      %v4789 = vadd.f32 0.0, %v4788
      %v4790 = vpop.f32.mrb[0].mxu0
      %v4791 = vadd.f32 0.0, %v4790
      %v4792 = vpop.f32.mrb[0].mxu0
      %v4793 = vadd.f32 0.0, %v4792
      %4794 = vmatprep.mubr.bf16.mxu0 0
      %4795 = vmatmul.mubr.bf16.gmra.mrb[0].mxu0 %v4499
      %v4796 = vpop.f32.mrb[0].mxu0
      %v4797 = vadd.f32 0.0, %v4796
      %v4798 = vpop.f32.mrb[0].mxu0
      %v4799 = vadd.f32 0.0, %v4798
      %v4800 = vpop.f32.mrb[0].mxu0
      %v4801 = vadd.f32 0.0, %v4800
      %v4802 = vpop.f32.mrb[0].mxu0
      %v4803 = vadd.f32 0.0, %v4802
      %4804 = vmatprep.mubr.bf16.mxu0 0
      %4805 = vmatmul.mubr.bf16.gmra.mrb[0].mxu0 %v4500
      %v4806 = vpop.f32.mrb[0].mxu0
      %v4807 = vpop.f32.mrb[0].mxu0
      %v4808 = vadd.f32 0.0, %v4807
      %v4809 = vpop.f32.mrb[0].mxu0
      %v4810 = vadd.f32 0.0, %v4809
      %v4811 = vpop.f32.mrb[0].mxu0
      %v4812 = vadd.f32 0.0, %v4811
      %4813 = vmatprep.mubr.bf16.mxu0 0
      %4814 = vmatmul.mubr.bf16.gmra.mrb[0].mxu0 %v4501
      %v4815 = vpop.f32.mrb[0].mxu0
      %v4816 = vadd.f32 0.0, %v4815
      %v4817 = vpop.f32.mrb[0].mxu0
      %v4818 = vadd.f32 0.0, %v4817
      %v4819 = vpop.f32.mrb[0].mxu0
      %v4820 = vadd.f32 0.0, %v4819
      %v4821 = vpop.f32.mrb[0].mxu0
      %v4822 = vadd.f32 0.0, %v4821
      %4823 = vmatprep.mubr.bf16.mxu0 0
      %4824 = vmatmul.mubr.bf16.gmra.mrb[0].mxu0 %v4502
      %v4825 = vpop.f32.mrb[0].mxu0
      %v4826 = vadd.f32 0.0, %v4825
      %v4827 = vpop.f32.mrb[0].mxu0
      %v4828 = vadd.f32 0.0, %v4827
      %v4829 = vpop.f32.mrb[0].mxu0
      %v4830 = vpop.f32.mrb[0].mxu0
      %v4831 = vadd.f32 0.0, %v4830
      %4832 = vmatprep.mubr.bf16.mxu0 0
      %4833 = vmatmul.mubr.bf16.gmra.mrb[0].mxu0 %v4503
      %v4834 = vpop.f32.mrb[0].mxu0
      %v4835 = vadd.f32 0.0, %v4834
      %v4836 = vpop.f32.mrb[0].mxu0
      %v4837 = vadd.f32 0.0, %v4836
      %v4838 = vpop.f32.mrb[0].mxu0
      %v4839 = vadd.f32 0.0, %v4838
      %v4840 = vpop.f32.mrb[0].mxu0
      %v4841 = vadd.f32 0.0, %v4840
      %4842 = vmatprep.mubr.bf16.mxu0 0
      %4843 = vmatmul.mubr.bf16.gmra.mrb[0].mxu0 %v4504
      %v4844 = vpop.f32.mrb[0].mxu0
      %v4845 = vadd.f32 0.0, %v4844
      %v4846 = vpop.f32.mrb[0].mxu0
      %v4847 = vadd.f32 0.0, %v4846
      %v4848 = vpop.f32.mrb[0].mxu0
      %v4849 = vadd.f32 0.0, %v4848
      %v4850 = vpop.f32.mrb[0].mxu0
      %v4851 = vadd.f32 0.0, %v4850
      %4852 = vmatprep.mubr.bf16.mxu0 0
      %4853 = vmatmul.mubr.bf16.gmra.mrb[0].mxu0 %v4505
      %v4854 = vpop.f32.mrb[0].mxu0
      %v4855 = vpop.f32.mrb[0].mxu0
      %v4856 = vadd.f32 0.0, %v4855
      %v4857 = vpop.f32.mrb[0].mxu0
      %v4858 = vadd.f32 0.0, %v4857
      %v4859 = vpop.f32.mrb[0].mxu0
      %v4860 = vadd.f32 0.0, %v4859
      %4861 = vmatprep.mubr.bf16.mxu0 0
      %4862 = vmatmul.mubr.bf16.gmra.mrb[0].mxu0 %v4506
      %v4863 = vpop.f32.mrb[0].mxu0
      %v4864 = vadd.f32 0.0, %v4863
      %v4865 = vpop.f32.mrb[0].mxu0
      %v4866 = vadd.f32 0.0, %v4865
      %v4867 = vpop.f32.mrb[0].mxu0
      %v4868 = vadd.f32 0.0, %v4867
      %v4869 = vpop.f32.mrb[0].mxu0
      %v4870 = vadd.f32 0.0, %v4869
      %4871 = vmatprep.mubr.bf16.mxu0 0
      %4872 = vmatmul.mubr.bf16.gmra.mrb[0].mxu0 %v4507
      %v4873 = vpop.f32.mrb[0].mxu0
      %v4874 = vadd.f32 0.0, %v4873
      %v4875 = vpop.f32.mrb[0].mxu0
      %v4876 = vadd.f32 0.0, %v4875
      %v4877 = vpop.f32.mrb[0].mxu0
      %v4878 = vpop.f32.mrb[0].mxu0
      %v4879 = vadd.f32 0.0, %v4878
      %4880 = vdwg.mxu0
      %4881 = vmatprep.subr.bf16.mxu0 0
      %4882 = vmatpush1.bf16.msra.mxu0 %v4610
      %4883 = vmatprep.subr.bf16.mxu0 0
      %4884 = vmatpush1.bf16.msra.mxu0 %v4613
      %4885 = vmatprep.subr.bf16.mxu0 0
      %4886 = vmatpush1.bf16.msra.mxu0 %v4616
      %4887 = vmatprep.subr.bf16.mxu0 0
      %4888 = vmatpush1.bf16.msra.mxu0 %v4619
      %4889 = vmatprep.subr.bf16.mxu0 0
      %4890 = vmatpush1.bf16.msra.mxu0 %v4622
      %4891 = vmatprep.subr.bf16.mxu0 0
      %4892 = vmatpush1.bf16.msra.mxu0 %v4625
      %4893 = vmatprep.subr.bf16.mxu0 0
      %4894 = vmatpush1.bf16.msra.mxu0 %v4628
      %4895 = vmatprep.subr.bf16.mxu0 0
      %4896 = vmatpush1.bf16.msra.mxu0 %v4631
      %4897 = vmatprep.subr.bf16.mxu0 0
      %4898 = vmatpush1.bf16.msra.mxu0 0
      %4899 = vmatprep.subr.bf16.mxu0 0
      %4900 = vmatpush1.bf16.msra.mxu0 0
      %4901 = vmatprep.subr.bf16.mxu0 0
      %4902 = vmatpush1.bf16.msra.mxu0 0
      %4903 = vmatprep.subr.bf16.mxu0 0
      %4904 = vmatpush1.bf16.msra.mxu0 0
      %4905 = vmatprep.subr.bf16.mxu0 0
      %4906 = vmatpush1.bf16.msra.mxu0 0
      %4907 = vmatprep.subr.bf16.mxu0 0
      %4908 = vmatpush1.bf16.msra.mxu0 0
      %4909 = vmatprep.subr.bf16.mxu0 0
      %4910 = vmatpush1.bf16.msra.mxu0 0
      %4911 = vmatprep.subr.bf16.mxu0 0
      %4912 = vmatpush1.bf16.msra.mxu0 0
      %4913 = vmatprep.mubr.bf16.mxu0 0
      %4914 = vmatmul.mubr.bf16.gmra.mrb[0].mxu0 %v4488
      %v4915 = vpop.f32.mrb[0].mxu0
      %v4916 = vadd.f32 0.0, %v4915
      %v4917 = vpop.f32.mrb[0].mxu0
      %v4918 = vpop.f32.mrb[0].mxu0
      %v4919 = vadd.f32 0.0, %v4918
      %v4920 = vpop.f32.mrb[0].mxu0
      %4921 = vmatprep.mubr.bf16.mxu0 0
      %4922 = vmatmul.mubr.bf16.gmra.mrb[0].mxu0 %v4489
      %v4923 = vpop.f32.mrb[0].mxu0
      %v4924 = vadd.f32 0.0, %v4923
      %v4925 = vpop.f32.mrb[0].mxu0
      %v4926 = vpop.f32.mrb[0].mxu0
      %v4927 = vadd.f32 0.0, %v4926
      %v4928 = vpop.f32.mrb[0].mxu0
      %4929 = vmatprep.mubr.bf16.mxu0 0
      %4930 = vmatmul.mubr.bf16.gmra.mrb[0].mxu0 %v4490
      %v4931 = vpop.f32.mrb[0].mxu0
      %v4932 = vadd.f32 0.0, %v4931
      %v4933 = vpop.f32.mrb[0].mxu0
      %v4934 = vpop.f32.mrb[0].mxu0
      %v4935 = vadd.f32 0.0, %v4934
      %v4936 = vpop.f32.mrb[0].mxu0
      %4937 = vmatprep.mubr.bf16.mxu0 0
      %4938 = vmatmul.mubr.bf16.gmra.mrb[0].mxu0 %v4491
      %v4939 = vpop.f32.mrb[0].mxu0
      %v4940 = vadd.f32 0.0, %v4939
      %v4941 = vpop.f32.mrb[0].mxu0
      %v4942 = vpop.f32.mrb[0].mxu0
      %v4943 = vadd.f32 0.0, %v4942
      %v4944 = vpop.f32.mrb[0].mxu0
      %4945 = vmatprep.mubr.bf16.mxu0 0
      %4946 = vmatmul.mubr.bf16.gmra.mrb[0].mxu0 %v4492
      %v4947 = vpop.f32.mrb[0].mxu0
      %v4948 = vadd.f32 0.0, %v4947
      %v4949 = vpop.f32.mrb[0].mxu0
      %v4950 = vpop.f32.mrb[0].mxu0
      %v4951 = vadd.f32 0.0, %v4950
      %v4952 = vpop.f32.mrb[0].mxu0
      %4953 = vmatprep.mubr.bf16.mxu0 0
      %4954 = vmatmul.mubr.bf16.gmra.mrb[0].mxu0 %v4493
      %v4955 = vpop.f32.mrb[0].mxu0
      %v4956 = vadd.f32 0.0, %v4955
      %v4957 = vpop.f32.mrb[0].mxu0
      %v4958 = vpop.f32.mrb[0].mxu0
      %v4959 = vadd.f32 0.0, %v4958
      %v4960 = vpop.f32.mrb[0].mxu0
      %4961 = vmatprep.mubr.bf16.mxu0 0
      %4962 = vmatmul.mubr.bf16.gmra.mrb[0].mxu0 %v4494
      %v4963 = vpop.f32.mrb[0].mxu0
      %v4964 = vadd.f32 0.0, %v4963
      %v4965 = vpop.f32.mrb[0].mxu0
      %v4966 = vpop.f32.mrb[0].mxu0
      %v4967 = vadd.f32 0.0, %v4966
      %v4968 = vpop.f32.mrb[0].mxu0
      %4969 = vmatprep.mubr.bf16.mxu0 0
      %4970 = vmatmul.mubr.bf16.gmra.mrb[0].mxu0 %v4495
      %v4971 = vpop.f32.mrb[0].mxu0
      %v4972 = vadd.f32 0.0, %v4971
      %v4973 = vpop.f32.mrb[0].mxu0
      %v4974 = vpop.f32.mrb[0].mxu0
      %v4975 = vadd.f32 0.0, %v4974
      %v4976 = vpop.f32.mrb[0].mxu0
      %4977 = vmatprep.mubr.bf16.mxu0 0
      %4978 = vmatmul.mubr.bf16.gmra.mrb[0].mxu0 %v4496
      %v4979 = vpop.f32.mrb[0].mxu0
      %v4980 = vadd.f32 0.0, %v4979
      %v4981 = vpop.f32.mrb[0].mxu0
      %v4982 = vpop.f32.mrb[0].mxu0
      %v4983 = vadd.f32 0.0, %v4982
      %v4984 = vpop.f32.mrb[0].mxu0
      %4985 = vmatprep.mubr.bf16.mxu0 0
      %4986 = vmatmul.mubr.bf16.gmra.mrb[0].mxu0 %v4497
      %v4987 = vpop.f32.mrb[0].mxu0
      %v4988 = vadd.f32 0.0, %v4987
      %v4989 = vpop.f32.mrb[0].mxu0
      %v4990 = vpop.f32.mrb[0].mxu0
      %v4991 = vadd.f32 0.0, %v4990
      %v4992 = vpop.f32.mrb[0].mxu0
      %4993 = vmatprep.mubr.bf16.mxu0 0
      %4994 = vmatmul.mubr.bf16.gmra.mrb[0].mxu0 %v4498
      %v4995 = vpop.f32.mrb[0].mxu0
      %v4996 = vadd.f32 0.0, %v4995
      %v4997 = vpop.f32.mrb[0].mxu0
      %v4998 = vpop.f32.mrb[0].mxu0
      %v4999 = vadd.f32 0.0, %v4998
      %v5000 = vpop.f32.mrb[0].mxu0
      %5001 = vmatprep.mubr.bf16.mxu0 0
      %5002 = vmatmul.mubr.bf16.gmra.mrb[0].mxu0 %v4499
      %v5003 = vpop.f32.mrb[0].mxu0
      %v5004 = vadd.f32 0.0, %v5003
      %v5005 = vpop.f32.mrb[0].mxu0
      %v5006 = vpop.f32.mrb[0].mxu0
      %v5007 = vadd.f32 0.0, %v5006
      %v5008 = vpop.f32.mrb[0].mxu0
      %5009 = vmatprep.mubr.bf16.mxu0 0
      %5010 = vmatmul.mubr.bf16.gmra.mrb[0].mxu0 %v4500
      %v5011 = vpop.f32.mrb[0].mxu0
      %v5012 = vadd.f32 0.0, %v5011
      %v5013 = vpop.f32.mrb[0].mxu0
      %v5014 = vpop.f32.mrb[0].mxu0
      %v5015 = vadd.f32 0.0, %v5014
      %v5016 = vpop.f32.mrb[0].mxu0
      %5017 = vmatprep.mubr.bf16.mxu0 0
      %5018 = vmatmul.mubr.bf16.gmra.mrb[0].mxu0 %v4501
      %v5019 = vpop.f32.mrb[0].mxu0
      %v5020 = vadd.f32 0.0, %v5019
      %v5021 = vpop.f32.mrb[0].mxu0
      %v5022 = vpop.f32.mrb[0].mxu0
      %v5023 = vadd.f32 0.0, %v5022
      %v5024 = vpop.f32.mrb[0].mxu0
      %5025 = vmatprep.mubr.bf16.mxu0 0
      %5026 = vmatmul.mubr.bf16.gmra.mrb[0].mxu0 %v4502
      %v5027 = vpop.f32.mrb[0].mxu0
      %v5028 = vadd.f32 0.0, %v5027
      %v5029 = vpop.f32.mrb[0].mxu0
      %v5030 = vpop.f32.mrb[0].mxu0
      %v5031 = vadd.f32 0.0, %v5030
      %v5032 = vpop.f32.mrb[0].mxu0
      %5033 = vmatprep.mubr.bf16.mxu0 0
      %5034 = vmatmul.mubr.bf16.gmra.mrb[0].mxu0 %v4503
      %v5035 = vpop.f32.mrb[0].mxu0
      %v5036 = vadd.f32 0.0, %v5035
      %v5037 = vpop.f32.mrb[0].mxu0
      %v5038 = vpop.f32.mrb[0].mxu0
      %v5039 = vadd.f32 0.0, %v5038
      %v5040 = vpop.f32.mrb[0].mxu0
      %5041 = vmatprep.mubr.bf16.mxu0 0
      %5042 = vmatmul.mubr.bf16.gmra.mrb[0].mxu0 %v4504
      %v5043 = vpop.f32.mrb[0].mxu0
      %v5044 = vadd.f32 0.0, %v5043
      %v5045 = vpop.f32.mrb[0].mxu0
      %v5046 = vpop.f32.mrb[0].mxu0
      %v5047 = vadd.f32 0.0, %v5046
      %v5048 = vpop.f32.mrb[0].mxu0
      %5049 = vmatprep.mubr.bf16.mxu0 0
      %5050 = vmatmul.mubr.bf16.gmra.mrb[0].mxu0 %v4505
      %v5051 = vpop.f32.mrb[0].mxu0
      %v5052 = vadd.f32 0.0, %v5051
      %v5053 = vpop.f32.mrb[0].mxu0
      %v5054 = vpop.f32.mrb[0].mxu0
      %v5055 = vadd.f32 0.0, %v5054
      %v5056 = vpop.f32.mrb[0].mxu0
      %5057 = vmatprep.mubr.bf16.mxu0 0
      %5058 = vmatmul.mubr.bf16.gmra.mrb[0].mxu0 %v4506
      %v5059 = vpop.f32.mrb[0].mxu0
      %v5060 = vadd.f32 0.0, %v5059
      %v5061 = vpop.f32.mrb[0].mxu0
      %v5062 = vpop.f32.mrb[0].mxu0
      %v5063 = vadd.f32 0.0, %v5062
      %v5064 = vpop.f32.mrb[0].mxu0
      %5065 = vmatprep.mubr.bf16.mxu0 0
      %5066 = vmatmul.mubr.bf16.gmra.mrb[0].mxu0 %v4507
      %v5067 = vpop.f32.mrb[0].mxu0
      %v5068 = vadd.f32 0.0, %v5067
      %v5069 = vpop.f32.mrb[0].mxu0
      %v5070 = vpop.f32.mrb[0].mxu0
      %v5071 = vadd.f32 0.0, %v5070
      %v5072 = vpop.f32.mrb[0].mxu0
      %5073 = vdwg.mxu0
      %v5074 = vadd.f32 %v4299, %v4691
      %v5075 = vadd.f32 %v4300, %v4695
      %v5076 = vadd.f32 %v4301, %v4701
      %v5077 = vadd.f32 %v4302, %v4705
      %v5078 = vadd.f32 %v4303, %v4714
      %v5079 = vadd.f32 %v4304, %v4720
      %v5080 = vadd.f32 %v4305, %v4724
      %v5081 = vadd.f32 %v4306, %v4730
      %v5082 = vadd.f32 %v4307, %v4739
      %v5083 = vadd.f32 %v4308, %v4743
      %v5084 = vadd.f32 %v4309, %v4749
      %v5085 = vadd.f32 %v4310, %v4753
      %v5086 = vadd.f32 %v4311, %v4762
      %v5087 = vadd.f32 %v4312, %v4768
      %v5088 = vadd.f32 %v4313, %v4772
      %v5089 = vadd.f32 %v4314, %v4778
      %v5090 = vadd.f32 %v4315, %v4787
      %v5091 = vadd.f32 %v4316, %v4791
      %v5092 = vadd.f32 %v4317, %v4797
      %v5093 = vadd.f32 %v4318, %v4801
      %v5094 = vadd.f32 %v4319, %v4810
      %v5095 = vadd.f32 %v4320, %v4816
      %v5096 = vadd.f32 %v4321, %v4820
      %v5097 = vadd.f32 %v4322, %v4826
      %v5098 = vadd.f32 %v4323, %v4835
      %v5099 = vadd.f32 %v4324, %v4839
      %v5100 = vadd.f32 %v4325, %v4845
      %v5101 = vadd.f32 %v4326, %v4849
      %v5102 = vadd.f32 %v4327, %v4858
      %v5103 = vadd.f32 %v4328, %v4864
      %v5104 = vadd.f32 %v4329, %v4868
      %v5105 = vadd.f32 %v4330, %v4874
      %v5146 = vrot.slane %v4693, 1
      %v5147 = vrot.slane %v4697, 1
      %v5148 = vsel %vm2890, %v5146, %v5147
      %v5149 = vrot.slane %v4703, 1
      %v5150 = vsel %vm2890, %v5147, %v5149
      %v5151 = vrot.slane %v4707, 1
      %v5152 = vsel %vm2890, %v5149, %v5151
      %v5153 = vrot.slane %v4712, 1
      %v5154 = vsel %vm2890, %v5151, %v5153
      %v5155 = vrot.slane %v4716, 1
      %v5156 = vrot.slane %v4722, 1
      %v5157 = vsel %vm2890, %v5155, %v5156
      %v5158 = vrot.slane %v4726, 1
      %v5159 = vsel %vm2890, %v5156, %v5158
      %v5160 = vrot.slane %v4732, 1
      %v5161 = vsel %vm2890, %v5158, %v5160
      %v5162 = vrot.slane %v4735, 1
      %v5163 = vsel %vm2890, %v5160, %v5162
      %v5164 = vrot.slane %v4741, 1
      %v5165 = vrot.slane %v4745, 1
      %v5166 = vsel %vm2890, %v5164, %v5165
      %v5167 = vrot.slane %v4751, 1
      %v5168 = vsel %vm2890, %v5165, %v5167
      %v5169 = vrot.slane %v4755, 1
      %v5170 = vsel %vm2890, %v5167, %v5169
      %v5171 = vrot.slane %v4760, 1
      %v5172 = vsel %vm2890, %v5169, %v5171
      %v5173 = vrot.slane %v4764, 1
      %v5174 = vrot.slane %v4770, 1
      %v5175 = vsel %vm2890, %v5173, %v5174
      %v5176 = vrot.slane %v4774, 1
      %v5177 = vsel %vm2890, %v5174, %v5176
      %v5178 = vrot.slane %v4780, 1
      %v5179 = vsel %vm2890, %v5176, %v5178
      %v5180 = vrot.slane %v4783, 1
      %v5181 = vsel %vm2890, %v5178, %v5180
      %v5182 = vrot.slane %v4789, 1
      %v5183 = vrot.slane %v4793, 1
      %v5184 = vsel %vm2890, %v5182, %v5183
      %v5185 = vrot.slane %v4799, 1
      %v5186 = vsel %vm2890, %v5183, %v5185
      %v5187 = vrot.slane %v4803, 1
      %v5188 = vsel %vm2890, %v5185, %v5187
      %v5189 = vrot.slane %v4808, 1
      %v5190 = vsel %vm2890, %v5187, %v5189
      %v5191 = vrot.slane %v4812, 1
      %v5192 = vrot.slane %v4818, 1
      %v5193 = vsel %vm2890, %v5191, %v5192
      %v5194 = vrot.slane %v4822, 1
      %v5195 = vsel %vm2890, %v5192, %v5194
      %v5196 = vrot.slane %v4828, 1
      %v5197 = vsel %vm2890, %v5194, %v5196
      %v5198 = vrot.slane %v4831, 1
      %v5199 = vsel %vm2890, %v5196, %v5198
      %v5200 = vrot.slane %v4837, 1
      %v5201 = vrot.slane %v4841, 1
      %v5202 = vsel %vm2890, %v5200, %v5201
      %v5203 = vrot.slane %v4847, 1
      %v5204 = vsel %vm2890, %v5201, %v5203
      %v5205 = vrot.slane %v4851, 1
      %v5206 = vsel %vm2890, %v5203, %v5205
      %v5207 = vrot.slane %v4856, 1
      %v5208 = vsel %vm2890, %v5205, %v5207
      %v5209 = vrot.slane %v4860, 1
      %v5210 = vrot.slane %v4866, 1
      %v5211 = vsel %vm2890, %v5209, %v5210
      %v5212 = vrot.slane %v4870, 1
      %v5213 = vsel %vm2890, %v5210, %v5212
      %v5214 = vrot.slane %v4876, 1
      %v5215 = vsel %vm2890, %v5212, %v5214
      %v5216 = vrot.slane %v4879, 1
      %v5217 = vsel %vm2890, %v5214, %v5216
      %v5250 = vadd.f32 %v5074, %v5148
      %v5251 = vadd.f32 %v5075, %v5150
      %v5252 = vadd.f32 %v5076, %v5152
      %v5253 = vadd.f32 %v5077, %v5154
      %v5254 = vadd.f32 %v5078, %v5157
      %v5255 = vadd.f32 %v5079, %v5159
      %v5256 = vadd.f32 %v5080, %v5161
      %v5257 = vadd.f32 %v5081, %v5163
      %v5258 = vadd.f32 %v5082, %v5166
      %v5259 = vadd.f32 %v5083, %v5168
      %v5260 = vadd.f32 %v5084, %v5170
      %v5261 = vadd.f32 %v5085, %v5172
      %v5262 = vadd.f32 %v5086, %v5175
      %v5263 = vadd.f32 %v5087, %v5177
      %v5264 = vadd.f32 %v5088, %v5179
      %v5265 = vadd.f32 %v5089, %v5181
      %v5266 = vadd.f32 %v5090, %v5184
      %v5267 = vadd.f32 %v5091, %v5186
      %v5268 = vadd.f32 %v5092, %v5188
      %v5269 = vadd.f32 %v5093, %v5190
      %v5270 = vadd.f32 %v5094, %v5193
      %v5271 = vadd.f32 %v5095, %v5195
      %v5272 = vadd.f32 %v5096, %v5197
      %v5273 = vadd.f32 %v5097, %v5199
      %v5274 = vadd.f32 %v5098, %v5202
      %v5275 = vadd.f32 %v5099, %v5204
      %v5276 = vadd.f32 %v5100, %v5206
      %v5277 = vadd.f32 %v5101, %v5208
      %v5278 = vadd.f32 %v5102, %v5211
      %v5279 = vadd.f32 %v5103, %v5213
      %v5280 = vadd.f32 %v5104, %v5215
      %v5281 = vadd.f32 %v5105, %v5217
      %v5322 = vrot.slane %v4916, 2
      %v5323 = vrot.slane %v4919, 2
      %v5324 = vsel %vm3067, %v5322, %v5323
      %v5325 = vrot.slane %v4924, 2
      %v5326 = vsel %vm3067, %v5323, %v5325
      %v5327 = vrot.slane %v4927, 2
      %v5328 = vsel %vm3067, %v5325, %v5327
      %v5329 = vrot.slane %v4932, 2
      %v5330 = vsel %vm3067, %v5327, %v5329
      %v5331 = vrot.slane %v4935, 2
      %v5332 = vrot.slane %v4940, 2
      %v5333 = vsel %vm3067, %v5331, %v5332
      %v5334 = vrot.slane %v4943, 2
      %v5335 = vsel %vm3067, %v5332, %v5334
      %v5336 = vrot.slane %v4948, 2
      %v5337 = vsel %vm3067, %v5334, %v5336
      %v5338 = vrot.slane %v4951, 2
      %v5339 = vsel %vm3067, %v5336, %v5338
      %v5340 = vrot.slane %v4956, 2
      %v5341 = vrot.slane %v4959, 2
      %v5342 = vsel %vm3067, %v5340, %v5341
      %v5343 = vrot.slane %v4964, 2
      %v5344 = vsel %vm3067, %v5341, %v5343
      %v5345 = vrot.slane %v4967, 2
      %v5346 = vsel %vm3067, %v5343, %v5345
      %v5347 = vrot.slane %v4972, 2
      %v5348 = vsel %vm3067, %v5345, %v5347
      %v5349 = vrot.slane %v4975, 2
      %v5350 = vrot.slane %v4980, 2
      %v5351 = vsel %vm3067, %v5349, %v5350
      %v5352 = vrot.slane %v4983, 2
      %v5353 = vsel %vm3067, %v5350, %v5352
      %v5354 = vrot.slane %v4988, 2
      %v5355 = vsel %vm3067, %v5352, %v5354
      %v5356 = vrot.slane %v4991, 2
      %v5357 = vsel %vm3067, %v5354, %v5356
      %v5358 = vrot.slane %v4996, 2
      %v5359 = vrot.slane %v4999, 2
      %v5360 = vsel %vm3067, %v5358, %v5359
      %v5361 = vrot.slane %v5004, 2
      %v5362 = vsel %vm3067, %v5359, %v5361
      %v5363 = vrot.slane %v5007, 2
      %v5364 = vsel %vm3067, %v5361, %v5363
      %v5365 = vrot.slane %v5012, 2
      %v5366 = vsel %vm3067, %v5363, %v5365
      %v5367 = vrot.slane %v5015, 2
      %v5368 = vrot.slane %v5020, 2
      %v5369 = vsel %vm3067, %v5367, %v5368
      %v5370 = vrot.slane %v5023, 2
      %v5371 = vsel %vm3067, %v5368, %v5370
      %v5372 = vrot.slane %v5028, 2
      %v5373 = vsel %vm3067, %v5370, %v5372
      %v5374 = vrot.slane %v5031, 2
      %v5375 = vsel %vm3067, %v5372, %v5374
      %v5376 = vrot.slane %v5036, 2
      %v5377 = vrot.slane %v5039, 2
      %v5378 = vsel %vm3067, %v5376, %v5377
      %v5379 = vrot.slane %v5044, 2
      %v5380 = vsel %vm3067, %v5377, %v5379
      %v5381 = vrot.slane %v5047, 2
      %v5382 = vsel %vm3067, %v5379, %v5381
      %v5383 = vrot.slane %v5052, 2
      %v5384 = vsel %vm3067, %v5381, %v5383
      %v5385 = vrot.slane %v5055, 2
      %v5386 = vrot.slane %v5060, 2
      %v5387 = vsel %vm3067, %v5385, %v5386
      %v5388 = vrot.slane %v5063, 2
      %v5389 = vsel %vm3067, %v5386, %v5388
      %v5390 = vrot.slane %v5068, 2
      %v5391 = vsel %vm3067, %v5388, %v5390
      %v5392 = vrot.slane %v5071, 2
      %v5393 = vsel %vm3067, %v5390, %v5392
      %v5426 = vadd.f32 %v5250, %v5324
      %v5427 = vadd.f32 %v5251, %v5326
      %v5428 = vadd.f32 %v5252, %v5328
      %v5429 = vadd.f32 %v5253, %v5330
      %v5430 = vadd.f32 %v5254, %v5333
      %v5431 = vadd.f32 %v5255, %v5335
      %v5432 = vadd.f32 %v5256, %v5337
      %v5433 = vadd.f32 %v5257, %v5339
      %v5434 = vadd.f32 %v5258, %v5342
      %v5435 = vadd.f32 %v5259, %v5344
      %v5436 = vadd.f32 %v5260, %v5346
      %v5437 = vadd.f32 %v5261, %v5348
      %v5438 = vadd.f32 %v5262, %v5351
      %v5439 = vadd.f32 %v5263, %v5353
      %v5440 = vadd.f32 %v5264, %v5355
      %v5441 = vadd.f32 %v5265, %v5357
      %v5442 = vadd.f32 %v5266, %v5360
      %v5443 = vadd.f32 %v5267, %v5362
      %v5444 = vadd.f32 %v5268, %v5364
      %v5445 = vadd.f32 %v5269, %v5366
      %v5446 = vadd.f32 %v5270, %v5369
      %v5447 = vadd.f32 %v5271, %v5371
      %v5448 = vadd.f32 %v5272, %v5373
      %v5449 = vadd.f32 %v5273, %v5375
      %v5450 = vadd.f32 %v5274, %v5378
      %v5451 = vadd.f32 %v5275, %v5380
      %v5452 = vadd.f32 %v5276, %v5382
      %v5453 = vadd.f32 %v5277, %v5384
      %v5454 = vadd.f32 %v5278, %v5387
      %v5455 = vadd.f32 %v5279, %v5389
      %v5456 = vadd.f32 %v5280, %v5391
      %v5457 = vadd.f32 %v5281, %v5393
      %v5458 = vld [vmem:[%s2] sm:$0x1]
      %v5460 = vlaneseq
      %v5461 = vshrl.u32 %v5460, 7
      %v5462 = vsub.s32 0, %v5461
      %v5463 = vrot.slane %v5458, %v5462
      %v5465 = vadd.f32 %v5426, %v5463
      %v5466 = vadd.f32 %v5427, %v5463
      %v5467 = vadd.f32 %v5428, %v5463
      %v5468 = vadd.f32 %v5429, %v5463
      %v5469 = vadd.f32 %v5430, %v5463
      %v5470 = vadd.f32 %v5431, %v5463
      %v5471 = vadd.f32 %v5432, %v5463
      %v5472 = vadd.f32 %v5433, %v5463
      %v5473 = vadd.f32 %v5434, %v5463
      %v5474 = vadd.f32 %v5435, %v5463
      %v5475 = vadd.f32 %v5436, %v5463
      %v5476 = vadd.f32 %v5437, %v5463
      %v5477 = vadd.f32 %v5438, %v5463
      %v5478 = vadd.f32 %v5439, %v5463
      %v5479 = vadd.f32 %v5440, %v5463
      %v5480 = vadd.f32 %v5441, %v5463
      %v5481 = vadd.f32 %v5442, %v5463
      %v5482 = vadd.f32 %v5443, %v5463
      %v5483 = vadd.f32 %v5444, %v5463
      %v5484 = vadd.f32 %v5445, %v5463
      %v5485 = vadd.f32 %v5446, %v5463
      %v5486 = vadd.f32 %v5447, %v5463
      %v5487 = vadd.f32 %v5448, %v5463
      %v5488 = vadd.f32 %v5449, %v5463
      %v5489 = vadd.f32 %v5450, %v5463
      %v5490 = vadd.f32 %v5451, %v5463
      %v5491 = vadd.f32 %v5452, %v5463
      %v5492 = vadd.f32 %v5453, %v5463
      %v5493 = vadd.f32 %v5454, %v5463
      %v5494 = vadd.f32 %v5455, %v5463
      %v5495 = vadd.f32 %v5456, %v5463
      %v5496 = vadd.f32 %v5457, %v5463
      %v5497 = vmax.f32 %v5465, 0.0
      %v5498 = vmax.f32 %v5466, 0.0
      %v5499 = vmax.f32 %v5467, 0.0
      %v5500 = vmax.f32 %v5468, 0.0
      %v5501 = vmax.f32 %v5469, 0.0
      %v5502 = vmax.f32 %v5470, 0.0
      %v5503 = vmax.f32 %v5471, 0.0
      %v5504 = vmax.f32 %v5472, 0.0
      %v5505 = vmax.f32 %v5473, 0.0
      %v5506 = vmax.f32 %v5474, 0.0
      %v5507 = vmax.f32 %v5475, 0.0
      %v5508 = vmax.f32 %v5476, 0.0
      %v5509 = vmax.f32 %v5477, 0.0
      %v5510 = vmax.f32 %v5478, 0.0
      %v5511 = vmax.f32 %v5479, 0.0
      %v5512 = vmax.f32 %v5480, 0.0
      %v5513 = vmax.f32 %v5481, 0.0
      %v5514 = vmax.f32 %v5482, 0.0
      %v5515 = vmax.f32 %v5483, 0.0
      %v5516 = vmax.f32 %v5484, 0.0
      %v5517 = vmax.f32 %v5485, 0.0
      %v5518 = vmax.f32 %v5486, 0.0
      %v5519 = vmax.f32 %v5487, 0.0
      %v5520 = vmax.f32 %v5488, 0.0
      %v5521 = vmax.f32 %v5489, 0.0
      %v5522 = vmax.f32 %v5490, 0.0
      %v5523 = vmax.f32 %v5491, 0.0
      %v5524 = vmax.f32 %v5492, 0.0
      %v5525 = vmax.f32 %v5493, 0.0
      %v5526 = vmax.f32 %v5494, 0.0
      %v5527 = vmax.f32 %v5495, 0.0
      %v5528 = vmax.f32 %v5496, 0.0
      %v5529 = vpack.c.bf16 %v5498, %v5497
      %v5530 = vpack.c.bf16 %v5500, %v5499
      %v5531 = vpack.c.bf16 %v5502, %v5501
      %v5532 = vpack.c.bf16 %v5504, %v5503
      %v5533 = vpack.c.bf16 %v5506, %v5505
      %v5534 = vpack.c.bf16 %v5508, %v5507
      %v5535 = vpack.c.bf16 %v5510, %v5509
      %v5536 = vpack.c.bf16 %v5512, %v5511
      %v5537 = vpack.c.bf16 %v5514, %v5513
      %v5538 = vpack.c.bf16 %v5516, %v5515
      %v5539 = vpack.c.bf16 %v5518, %v5517
      %v5540 = vpack.c.bf16 %v5520, %v5519
      %v5541 = vpack.c.bf16 %v5522, %v5521
      %v5542 = vpack.c.bf16 %v5524, %v5523
      %v5543 = vpack.c.bf16 %v5526, %v5525
      %v5544 = vpack.c.bf16 %v5528, %v5527
      %v5561 = vunpack.c.l.b16 %v5529
      %v5562 = vunpack.c.h.b16 %v5529
      %v5563 = vunpack.c.l.b16 %v5530
      %v5564 = vunpack.c.h.b16 %v5530
      %v5565 = vunpack.c.l.b16 %v5531
      %v5566 = vunpack.c.h.b16 %v5531
      %v5567 = vunpack.c.l.b16 %v5532
      %v5568 = vunpack.c.h.b16 %v5532
      %v5569 = vunpack.c.l.b16 %v5533
      %v5570 = vunpack.c.h.b16 %v5533
      %v5571 = vunpack.c.l.b16 %v5534
      %v5572 = vunpack.c.h.b16 %v5534
      %v5573 = vunpack.c.l.b16 %v5535
      %v5574 = vunpack.c.h.b16 %v5535
      %v5575 = vunpack.c.l.b16 %v5536
      %v5576 = vunpack.c.h.b16 %v5536
      %v5577 = vunpack.c.l.b16 %v5537
      %v5578 = vunpack.c.h.b16 %v5537
      %v5579 = vunpack.c.l.b16 %v5538
      %v5580 = vunpack.c.h.b16 %v5538
      %v5581 = vunpack.c.l.b16 %v5539
      %v5582 = vunpack.c.h.b16 %v5539
      %v5583 = vunpack.c.l.b16 %v5540
      %v5584 = vunpack.c.h.b16 %v5540
      %v5585 = vunpack.c.l.b16 %v5541
      %v5586 = vunpack.c.h.b16 %v5541
      %v5587 = vunpack.c.l.b16 %v5542
      %v5588 = vunpack.c.h.b16 %v5542
      %v5589 = vunpack.c.l.b16 %v5543
      %v5590 = vunpack.c.h.b16 %v5543
      %v5591 = vunpack.c.l.b16 %v5544
      %v5592 = vunpack.c.h.b16 %v5544
      %v5593 = vpack.c.b16 %v5561, %v5561
      %v5594 = vpack.c.b16 %v5562, %v5562
      %v5595 = vpack.c.b16 %v5563, %v5563
      %v5596 = vpack.c.b16 %v5564, %v5564
      %v5597 = vpack.c.b16 %v5565, %v5565
      %v5598 = vpack.c.b16 %v5566, %v5566
      %v5599 = vpack.c.b16 %v5567, %v5567
      %v5600 = vpack.c.b16 %v5568, %v5568
      %v5601 = vpack.c.b16 %v5569, %v5569
      %v5602 = vpack.c.b16 %v5570, %v5570
      %v5603 = vpack.c.b16 %v5571, %v5571
      %v5604 = vpack.c.b16 %v5572, %v5572
      %v5605 = vpack.c.b16 %v5573, %v5573
      %v5606 = vpack.c.b16 %v5574, %v5574
      %v5607 = vpack.c.b16 %v5575, %v5575
      %v5608 = vpack.c.b16 %v5576, %v5576
      %v5609 = vpack.c.b16 %v5577, %v5577
      %v5610 = vpack.c.b16 %v5578, %v5578
      %v5611 = vpack.c.b16 %v5579, %v5579
      %v5612 = vpack.c.b16 %v5580, %v5580
      %v5613 = vpack.c.b16 %v5581, %v5581
      %v5614 = vpack.c.b16 %v5582, %v5582
      %v5615 = vpack.c.b16 %v5583, %v5583
      %v5616 = vpack.c.b16 %v5584, %v5584
      %v5617 = vpack.c.b16 %v5585, %v5585
      %v5618 = vpack.c.b16 %v5586, %v5586
      %v5619 = vpack.c.b16 %v5587, %v5587
      %v5620 = vpack.c.b16 %v5588, %v5588
      %v5621 = vpack.c.b16 %v5589, %v5589
      %v5622 = vpack.c.b16 %v5590, %v5590
      %v5623 = vpack.c.b16 %v5591, %v5591
      %v5624 = vpack.c.b16 %v5592, %v5592
      %5657 = vst [vmem:[%s194] sm:$0xf] %v5593
      %5658 = vst [vmem:[%s194 + $0x4] sm:$0xf] %v5594
      %5659 = vst [vmem:[%s194 + $0x8] sm:$0xf] %v5595
      %5660 = vst [vmem:[%s194 + $0xc] sm:$0xf] %v5596
      %5661 = vst [vmem:[%s194 + $0x10] sm:$0xf] %v5597
      %5662 = vst [vmem:[%s194 + $0x14] sm:$0xf] %v5598
      %5663 = vst [vmem:[%s194 + $0x18] sm:$0xf] %v5599
      %5664 = vst [vmem:[%s194 + $0x1c] sm:$0xf] %v5600
      %5665 = vst [vmem:[%s194 + $0x20] sm:$0xf] %v5601
      %5666 = vst [vmem:[%s194 + $0x24] sm:$0xf] %v5602
      %5667 = vst [vmem:[%s194 + $0x28] sm:$0xf] %v5603
      %5668 = vst [vmem:[%s194 + $0x2c] sm:$0xf] %v5604
      %5669 = vst [vmem:[%s194 + $0x30] sm:$0xf] %v5605
      %5670 = vst [vmem:[%s194 + $0x34] sm:$0xf] %v5606
      %5671 = vst [vmem:[%s194 + $0x38] sm:$0xf] %v5607
      %5672 = vst [vmem:[%s194 + $0x3c] sm:$0xf] %v5608
      %5673 = vst [vmem:[%s194 + $0x40] sm:$0xf] %v5609
      %5674 = vst [vmem:[%s194 + $0x44] sm:$0xf] %v5610
      %5675 = vst [vmem:[%s194 + $0x48] sm:$0xf] %v5611
      %5676 = vst [vmem:[%s194 + $0x4c] sm:$0xf] %v5612
      %5677 = vst [vmem:[%s194 + $0x50] sm:$0xf] %v5613
      %5678 = vst [vmem:[%s194 + $0x54] sm:$0xf] %v5614
      %5679 = vst [vmem:[%s194 + $0x58] sm:$0xf] %v5615
      %5680 = vst [vmem:[%s194 + $0x5c] sm:$0xf] %v5616
      %5681 = vst [vmem:[%s194 + $0x60] sm:$0xf] %v5617
      %5682 = vst [vmem:[%s194 + $0x64] sm:$0xf] %v5618
      %5683 = vst [vmem:[%s194 + $0x68] sm:$0xf] %v5619
      %5684 = vst [vmem:[%s194 + $0x6c] sm:$0xf] %v5620
      %5685 = vst [vmem:[%s194 + $0x70] sm:$0xf] %v5621
      %5686 = vst [vmem:[%s194 + $0x74] sm:$0xf] %v5622
      %5687 = vst [vmem:[%s194 + $0x78] sm:$0xf] %v5623
      %5688 = vst [vmem:[%s194 + $0x7c] sm:$0xf] %v5624
      %s5689 = smul.u32 8, %s19
      %p5690 = scmp.lt.s32.totalorder %s18, 1
      %s5691 = scalar_select %p5690, %s18, 1
      %p5692 = scmp.lt.s32.totalorder %s5689, 31
      %s5693 = scalar_select %p5692, %s5689, 31
      %s5694 = smul.addr %s5693, 4
      %s5695 = smul.addr %s5691, 128
      %s5696 = sadd.s32 %s5694, %s5695
      %s5697 = smul.addr %s5696, 4
      %s5698 = scalar_lea.vmem %s3, %s5697
      // Predicated region
      $region37: #{a_call__.5} parent=31 // pred_check
        %p5699 = pneg %p114
      $region38: #{a_call__.5} parent=31 // pred_check_branch
        %5701 = sbr.rel (%p5699) target = $region40
      $region39: #{a_call__.5} parent=31 // pred_region
        %s5702 = smul.u32 8, %s19
      $region40: #{a_call__.5} parent=31 // pred_fallthru
        _
    $region32: #{a_call__.5} parent=5 // pred_fallthru
      _
    %p5703 = scmp.le.s32.totalorder 2, %s9
    // Predicated region
    $region41: #{a_call__.5} parent=5 // pred_check
      %p5704 = pneg %p5703
    $region42: #{a_call__.5} parent=5 // pred_check_branch
      %5706 = sbr.rel (%p5704) target = $region44
    $region43: #{a_call__.5} parent=5 // pred_region
      %s5707 = ssub.s32 %s9, 2
      // Predicated region
      $region45: #{a_call__.5} parent=43 // pred_check
        %p5708 = pneg %p120
      $region46: #{a_call__.5} parent=43 // pred_check_branch
        %5710 = sbr.rel (%p5708) target = $region48
      $region47: #{a_call__.5} parent=43 // pred_region
        %s5711 = smul.u32 8, %s21
        %p5712 = scmp.lt.s32.totalorder %s20, 1
        %s5713 = scalar_select %p5712, %s20, 1
        %p5714 = scmp.lt.s32.totalorder %s5711, 31
        %s5715 = scalar_select %p5714, %s5711, 31
        %s5716 = smul.addr %s5715, 4
        %s5717 = smul.addr %s5713, 128
        %s5718 = sadd.s32 %s5716, %s5717
        %s5719 = smul.addr %s5718, 4
        %s5720 = scalar_lea.vmem %s3, %s5719
      $region48: #{a_call__.5} parent=43 // pred_fallthru
        _
    $region44: #{a_call__.5} parent=5 // pred_fallthru
      _
  $region6: #{a_call__.5} parent=0 // loop_footer
    %s13 = sadd.s32 1, %s9
  $region7: #{a_call__.5} parent=0 // loop_footer_branch
    %8 = sbr.rel target = $region3
  $region8: #{a_call__.5} parent=0 // loop_exit
    _

</llo_original>
